<compile_context>
chip_gen: v7x
topology: tpu7x:2x2x1
jax: 0.10.0
libtpu: 0.0.40
codegen_flags: <defaults>
</compile_context>

<pallas_src>
import random

import jax
import jax.numpy as jnp
from jax import lax
from jax.experimental import pallas as pl
from jax.experimental.pallas import tpu as pltpu


def _vmem():
    return pl.BlockSpec(memory_space=pltpu.MemorySpace.VMEM)


def _smem():
    return pl.BlockSpec(memory_space=pltpu.MemorySpace.SMEM)


# ----------------------------- fused encoder kernel ------------------------------

def _encoder_kernel(emb_ref, wih_ref, whh_ref, b_ref,
                    enc_out_ref, hf_ref, cf_ref):
    S, B, _ = emb_ref.shape
    H = whh_ref.shape[0]

    b = b_ref[...]                                    # (1, 4H), hoisted out of the loop

    def step(t, carry):
        h, c = carry
        x = emb_ref[t]                                # (B, E)
        gates = (jnp.dot(x, wih_ref[...], preferred_element_type=jnp.float32)
                 + jnp.dot(h, whh_ref[...], preferred_element_type=jnp.float32)
                 + b)                                 # (B, 4H), gate order i,f,g,o
        i_g = jax.nn.sigmoid(gates[:, 0 * H:1 * H])
        f_g = jax.nn.sigmoid(gates[:, 1 * H:2 * H])
        g_g = jnp.tanh(gates[:, 2 * H:3 * H])
        o_g = jax.nn.sigmoid(gates[:, 3 * H:4 * H])
        c_new = f_g * c + i_g * g_g
        h_new = o_g * jnp.tanh(c_new)
        enc_out_ref[t] = h_new                        # time-indexed store
        return h_new, c_new

    h0 = jnp.zeros((B, H), jnp.float32)
    c0 = jnp.zeros((B, H), jnp.float32)
    h_fin, c_fin = lax.fori_loop(0, S, step, (h0, c0), unroll=True)
    hf_ref[...] = h_fin                               # final state stored once
    cf_ref[...] = c_fin


def encoder_forward(params, src):
    """src: (B, S) int32 -> enc_outputs (S, B, H), (h, c) each (B, H)."""
    B, S = src.shape
    H = params["enc_whh"].shape[0]

    emb_seq = jnp.take(params["enc_emb"], src.T, axis=0)        # (S, B, E)

    enc_out, h, c = pl.pallas_call(
        _encoder_kernel,
        out_shape=(jax.ShapeDtypeStruct((S, B, H), jnp.float32),
                   jax.ShapeDtypeStruct((B, H), jnp.float32),
                   jax.ShapeDtypeStruct((B, H), jnp.float32)),
        in_specs=[_vmem(), _vmem(), _vmem(), _vmem()],
        out_specs=(_vmem(), _vmem(), _vmem()),
    )(emb_seq, params["enc_wih"], params["enc_whh"], params["enc_b"])
    return enc_out, (h, c)


# ----------------------------- fused decoder kernel ------------------------------

def _decoder_kernel(tf_ref, ids_ref, enc_ref, h0_ref, c0_ref, emb_w_ref,
                    w_all_ref, b_ref, fcw_ref, fcb_ref, out_ref):
    steps, B, V = out_ref.shape
    H = h0_ref.shape[-1]

    enc = enc_ref[...]                                # (S, B, H), hoisted
    b = b_ref[...]                                    # (1, 4H)
    fcb = fcb_ref[...]                                # (1, V)
    lane_iota = lax.broadcasted_iota(jnp.int32, (B, V), 1)

    def step(g, carry):
        h, c, prev_oh = carry

        # ---- input token: teacher-forced id vs previous greedy argmax one-hot ----
        ids = ids_ref[g]                                              # (B, 1) int32
        teacher_oh = (lane_iota == ids).astype(jnp.float32)           # (B, V)
        w_tf = (tf_ref[g] != 0).astype(jnp.float32)                   # scalar from SMEM
        x_oh = w_tf * teacher_oh + (1.0 - w_tf) * prev_oh

        # Embedding lookup as a one-hot MXU matmul against the VMEM-resident table.
        # TODO(synk): at V=32k replace with an id-indexed gather (table too big for VMEM).
        emb = jnp.dot(x_oh, emb_w_ref[...], preferred_element_type=jnp.float32)  # (B, E)

        # ---- Luong dot attention (exact softmax) ----
        # TODO(synk): for large S restructure to a lane-dense (B, S) score layout.
        scores = jnp.sum(enc * h, axis=-1, keepdims=True)             # (S, B, 1)
        m = jnp.max(scores, axis=0, keepdims=True)
        e = jnp.exp(scores - m)
        attn = e / jnp.sum(e, axis=0, keepdims=True)                  # (S, B, 1)
        ctx = jnp.sum(attn * enc, axis=0)                             # (B, H)

        # ---- LSTM cell: one fused K = E + 2H gate matmul ----
        x_cat = jnp.concatenate([emb, ctx, h], axis=-1)               # (B, E + 2H)
        gates = jnp.dot(x_cat, w_all_ref[...],
                        preferred_element_type=jnp.float32) + b       # (B, 4H)
        i_g = jax.nn.sigmoid(gates[:, 0 * H:1 * H])
        f_g = jax.nn.sigmoid(gates[:, 1 * H:2 * H])
        g_g = jnp.tanh(gates[:, 2 * H:3 * H])
        o_g = jax.nn.sigmoid(gates[:, 3 * H:4 * H])
        c_new = f_g * c + i_g * g_g
        h_new = o_g * jnp.tanh(c_new)

        # ---- vocab projection, written straight to the time-indexed output block ----
        # TODO(synk): at V=32k tile over a vocab axis with a running max/argmax.
        logits = jnp.dot(h_new, fcw_ref[...],
                         preferred_element_type=jnp.float32) + fcb    # (B, V)
        out_ref[g] = logits

        # ---- greedy argmax (first-max tie-break, exact compare) as next-step one-hot ----
        mx = jnp.max(logits, axis=-1, keepdims=True)
        first_idx = jnp.min(jnp.where(logits == mx, lane_iota, V),
                            axis=-1, keepdims=True)
        next_oh = (lane_iota == first_idx).astype(jnp.float32)
        return h_new, c_new, next_oh

    prev0 = jnp.zeros((B, V), jnp.float32)
    lax.fori_loop(0, steps, step, (h0_ref[...], c0_ref[...], prev0), unroll=True)


def decoder_forward(params, tgt, enc_out, h0, c0, tf_mask):
    """tgt: (B, T) int32; enc_out: (S, B, H); tf_mask: (T-1,) int32.
    Returns outputs (B, T, V) with outputs[:, 0] == 0 (mirrors torch.zeros init)."""
    B, T = tgt.shape
    steps = T - 1
    V, _ = params["dec_emb"].shape

    # teacher-token ids per decode step g (step g uses tgt[:, g] when teacher-forced)
    ids = tgt[:, :steps].T.reshape(steps, B, 1).astype(jnp.int32)

    # stacked gate weight: rows [emb ; ctx ; h]  ->  (E + 2H, 4H)
    w_all = jnp.concatenate([params["dec_wih"], params["dec_whh"]], axis=0)

    logits_tbv = pl.pallas_call(
        _decoder_kernel,
        out_shape=jax.ShapeDtypeStruct((steps, B, V), jnp.float32),
        in_specs=[_smem()] + [_vmem() for _ in range(9)],
        out_specs=_vmem(),
    )(tf_mask, ids, enc_out, h0, c0, params["dec_emb"],
      w_all, params["dec_b"], params["fc_w"], params["fc_b"])

    logits = jnp.transpose(logits_tbv, (1, 0, 2))                 # (B, steps, V)
    outputs = jnp.concatenate([jnp.zeros((B, 1, V), jnp.float32), logits], axis=1)
    return outputs


# ------------------------------- model glue ---------------------------------

def init_params(key, vocab_size, emb_dim, hidden_dim):
    ks = jax.random.split(key, 10)
    s = 0.1
    return {
        # encoder
        "enc_emb": s * jax.random.normal(ks[0], (vocab_size, emb_dim), jnp.float32),
        "enc_wih": s * jax.random.normal(ks[1], (emb_dim, 4 * hidden_dim), jnp.float32),
        "enc_whh": s * jax.random.normal(ks[2], (hidden_dim, 4 * hidden_dim), jnp.float32),
        "enc_b":   s * jax.random.normal(ks[3], (1, 4 * hidden_dim), jnp.float32),
        # decoder (LSTM input = [embedding ; attention context])
        "dec_emb": s * jax.random.normal(ks[4], (vocab_size, emb_dim), jnp.float32),
        "dec_wih": s * jax.random.normal(ks[5], (emb_dim + hidden_dim, 4 * hidden_dim), jnp.float32),
        "dec_whh": s * jax.random.normal(ks[6], (hidden_dim, 4 * hidden_dim), jnp.float32),
        "dec_b":   s * jax.random.normal(ks[7], (1, 4 * hidden_dim), jnp.float32),
        "fc_w":    s * jax.random.normal(ks[8], (hidden_dim, vocab_size), jnp.float32),
        "fc_b":    s * jax.random.normal(ks[9], (1, vocab_size), jnp.float32),
    }


@jax.jit
def _forward_impl(params, src, tgt, tf_mask):
    enc_out, (h, c) = encoder_forward(params, src)
    return decoder_forward(params, tgt, enc_out, h, c, tf_mask)


def seq2seq_forward(params, src, tgt, teacher_forcing=0.5, py_seed=0):
    """Mirror of Seq2Seq.forward.  Teacher-forcing draws use Python `random` exactly like
    the PyTorch loop: one draw per decode iteration (the draw at iteration t selects the
    input of iteration t+1, so the last draw is consumed but unused), then the decisions
    are baked into a per-step mask passed to the kernel via SMEM."""
    _, T = tgt.shape
    steps = T - 1
    random.seed(py_seed)
    draws = [random.random() for _ in range(steps)]   # same consumption order as torch
    # step g input: g==0 -> tgt[:,0] always; g>=1 -> tgt[:,g] if draws[g-1] < p else argmax
    tf_list = [1] + [1 if draws[g - 1] < teacher_forcing else 0 for g in range(1, steps)]
    tf_mask = jnp.asarray(tf_list, dtype=jnp.int32)
    return _forward_impl(params, src, tgt, tf_mask)


# ----------------------------------- main ------------------------------------

if __name__ == "__main__":
    # vreg-aligned small shapes: B multiple of 8 (sublanes), E/H/V multiples of 128 (lanes)
    B = 8
    SRC_LEN = 8
    TGT_LEN = 8
    VOCAB = 128
    EMB = 128
    HIDDEN = 128

    key = jax.random.PRNGKey(0)
    k_param, k_src, k_tgt = jax.random.split(key, 3)

    params = init_params(k_param, VOCAB, EMB, HIDDEN)
    src = jax.random.randint(k_src, (B, SRC_LEN), 0, VOCAB, dtype=jnp.int32)
    tgt = jax.random.randint(k_tgt, (B, TGT_LEN), 0, VOCAB, dtype=jnp.int32)

    outputs = seq2seq_forward(params, src, tgt, teacher_forcing=0.5, py_seed=0)
    outputs = jax.block_until_ready(outputs)

    assert outputs.shape == (B, TGT_LEN, VOCAB)
    assert bool(jnp.all(outputs[:, 0] == 0.0))
    assert bool(jnp.all(jnp.isfinite(outputs)))
    print("KERNEL_OK")
</pallas_src>

<mosaic_0001>
module attributes {stable_mosaic.version = 11 : i64} {
  func.func @_encoder_kernel(%arg0: memref<8x8x128xf32, #tpu.memory_space<vmem>>, %arg1: memref<128x512xf32, #tpu.memory_space<vmem>>, %arg2: memref<128x512xf32, #tpu.memory_space<vmem>>, %arg3: memref<1x512xf32, #tpu.memory_space<vmem>>, %arg4: memref<8x8x128xf32, #tpu.memory_space<vmem>>, %arg5: memref<8x128xf32, #tpu.memory_space<vmem>>, %arg6: memref<8x128xf32, #tpu.memory_space<vmem>>) attributes {dimension_semantics = [], scalar_prefetch = 0 : i64, scratch_operands = 0 : i64, tpu.core_type = #tpu.core_type<tc>} {
    %c0 = arith.constant 0 : index
    %c0_0 = arith.constant 0 : index
    %0 = vector.load %arg3[%c0, %c0_0] : memref<1x512xf32, #tpu.memory_space<vmem>>, vector<1x512xf32>
    %cst = arith.constant 0.000000e+00 : f32
    %1 = vector.broadcast %cst : f32 to vector<8x128xf32>
    %cst_1 = arith.constant 0.000000e+00 : f32
    %2 = vector.broadcast %cst_1 : f32 to vector<8x128xf32>
    %c0_i32 = arith.constant 0 : i32
    %3 = arith.index_cast %c0_i32 : i32 to index
    %c0_2 = arith.constant 0 : index
    %c0_3 = arith.constant 0 : index
    %4 = vector.load %arg0[%3, %c0_2, %c0_3] : memref<8x8x128xf32, #tpu.memory_space<vmem>>, vector<1x8x128xf32>
    %5 = vector.shape_cast %4 : vector<1x8x128xf32> to vector<8x128xf32>
    %c0_4 = arith.constant 0 : index
    %c0_5 = arith.constant 0 : index
    %6 = vector.load %arg1[%c0_4, %c0_5] : memref<128x512xf32, #tpu.memory_space<vmem>>, vector<128x512xf32>
    %cst_6 = arith.constant dense<0.000000e+00> : vector<8x512xf32>
    %7 = tpu.matmul %5, %6, %cst_6 {dimension_numbers = #tpu.dot_dimension_numbers<[1], [0], [0], [1], [0, 0, 1, 1], [], []>} : vector<8x128xf32>, vector<128x512xf32>, vector<8x512xf32> -> vector<8x512xf32>
    %c0_7 = arith.constant 0 : index
    %c0_8 = arith.constant 0 : index
    %8 = vector.load %arg2[%c0_7, %c0_8] : memref<128x512xf32, #tpu.memory_space<vmem>>, vector<128x512xf32>
    %cst_9 = arith.constant dense<0.000000e+00> : vector<8x512xf32>
    %9 = tpu.matmul %1, %8, %cst_9 {dimension_numbers = #tpu.dot_dimension_numbers<[1], [0], [0], [1], [0, 0, 1, 1], [], []>} : vector<8x128xf32>, vector<128x512xf32>, vector<8x512xf32> -> vector<8x512xf32>
    %10 = arith.addf %7, %9 : vector<8x512xf32>
    %11 = vector.broadcast %0 : vector<1x512xf32> to vector<8x512xf32>
    %12 = arith.addf %10, %11 : vector<8x512xf32>
    %13 = vector.extract_strided_slice %12 {offsets = [0, 0], sizes = [8, 128], strides = [1, 1]} : vector<8x512xf32> to vector<8x128xf32>
    %14 = arith.negf %13 : vector<8x128xf32>
    %15 = math.exp %14 : vector<8x128xf32>
    %cst_10 = arith.constant 1.000000e+00 : f32
    %16 = vector.broadcast %cst_10 : f32 to vector<8x128xf32>
    %17 = arith.addf %16, %15 : vector<8x128xf32>
    %18 = arith.divf %16, %17 : vector<8x128xf32>
    %19 = vector.extract_strided_slice %12 {offsets = [0, 128], sizes = [8, 128], strides = [1, 1]} : vector<8x512xf32> to vector<8x128xf32>
    %20 = arith.negf %19 : vector<8x128xf32>
    %21 = math.exp %20 : vector<8x128xf32>
    %cst_11 = arith.constant 1.000000e+00 : f32
    %22 = vector.broadcast %cst_11 : f32 to vector<8x128xf32>
    %23 = arith.addf %22, %21 : vector<8x128xf32>
    %24 = arith.divf %22, %23 : vector<8x128xf32>
    %25 = vector.extract_strided_slice %12 {offsets = [0, 256], sizes = [8, 128], strides = [1, 1]} : vector<8x512xf32> to vector<8x128xf32>
    %26 = math.tanh %25 : vector<8x128xf32>
    %27 = vector.extract_strided_slice %12 {offsets = [0, 384], sizes = [8, 128], strides = [1, 1]} : vector<8x512xf32> to vector<8x128xf32>
    %28 = arith.negf %27 : vector<8x128xf32>
    %29 = math.exp %28 : vector<8x128xf32>
    %cst_12 = arith.constant 1.000000e+00 : f32
    %30 = vector.broadcast %cst_12 : f32 to vector<8x128xf32>
    %31 = arith.addf %30, %29 : vector<8x128xf32>
    %32 = arith.divf %30, %31 : vector<8x128xf32>
    %33 = arith.mulf %24, %2 : vector<8x128xf32>
    %34 = arith.mulf %18, %26 : vector<8x128xf32>
    %35 = arith.addf %33, %34 : vector<8x128xf32>
    %36 = math.tanh %35 : vector<8x128xf32>
    %37 = arith.mulf %32, %36 : vector<8x128xf32>
    %38 = arith.index_cast %c0_i32 : i32 to index
    %c0_13 = arith.constant 0 : index
    %c0_14 = arith.constant 0 : index
    %39 = vector.load %arg4[%38, %c0_13, %c0_14] : memref<8x8x128xf32, #tpu.memory_space<vmem>>, vector<1x8x128xf32>
    %40 = vector.shape_cast %39 : vector<1x8x128xf32> to vector<8x128xf32>
    %41 = vector.shape_cast %37 : vector<8x128xf32> to vector<1x8x128xf32>
    tpu.vector_store %arg4[%38, %c0_13, %c0_14], %41 {strides = array<i32>} : memref<8x8x128xf32, #tpu.memory_space<vmem>>, vector<1x8x128xf32>,
    %c1_i32 = arith.constant 1 : i32
    %42 = arith.index_cast %c1_i32 : i32 to index
    %c0_15 = arith.constant 0 : index
    %c0_16 = arith.constant 0 : index
    %43 = vector.load %arg0[%42, %c0_15, %c0_16] : memref<8x8x128xf32, #tpu.memory_space<vmem>>, vector<1x8x128xf32>
    %44 = vector.shape_cast %43 : vector<1x8x128xf32> to vector<8x128xf32>
    %c0_17 = arith.constant 0 : index
    %c0_18 = arith.constant 0 : index
    %45 = vector.load %arg1[%c0_17, %c0_18] : memref<128x512xf32, #tpu.memory_space<vmem>>, vector<128x512xf32>
    %cst_19 = arith.constant dense<0.000000e+00> : vector<8x512xf32>
    %46 = tpu.matmul %44, %45, %cst_19 {dimension_numbers = #tpu.dot_dimension_numbers<[1], [0], [0], [1], [0, 0, 1, 1], [], []>} : vector<8x128xf32>, vector<128x512xf32>, vector<8x512xf32> -> vector<8x512xf32>
    %c0_20 = arith.constant 0 : index
    %c0_21 = arith.constant 0 : index
    %47 = vector.load %arg2[%c0_20, %c0_21] : memref<128x512xf32, #tpu.memory_space<vmem>>, vector<128x512xf32>
    %cst_22 = arith.constant dense<0.000000e+00> : vector<8x512xf32>
    %48 = tpu.matmul %37, %47, %cst_22 {dimension_numbers = #tpu.dot_dimension_numbers<[1], [0], [0], [1], [0, 0, 1, 1], [], []>} : vector<8x128xf32>, vector<128x512xf32>, vector<8x512xf32> -> vector<8x512xf32>
    %49 = arith.addf %46, %48 : vector<8x512xf32>
    %50 = vector.broadcast %0 : vector<1x512xf32> to vector<8x512xf32>
    %51 = arith.addf %49, %50 : vector<8x512xf32>
    %52 = vector.extract_strided_slice %51 {offsets = [0, 0], sizes = [8, 128], strides = [1, 1]} : vector<8x512xf32> to vector<8x128xf32>
    %53 = arith.negf %52 : vector<8x128xf32>
    %54 = math.exp %53 : vector<8x128xf32>
    %cst_23 = arith.constant 1.000000e+00 : f32
    %55 = vector.broadcast %cst_23 : f32 to vector<8x128xf32>
    %56 = arith.addf %55, %54 : vector<8x128xf32>
    %57 = arith.divf %55, %56 : vector<8x128xf32>
    %58 = vector.extract_strided_slice %51 {offsets = [0, 128], sizes = [8, 128], strides = [1, 1]} : vector<8x512xf32> to vector<8x128xf32>
    %59 = arith.negf %58 : vector<8x128xf32>
    %60 = math.exp %59 : vector<8x128xf32>
    %cst_24 = arith.constant 1.000000e+00 : f32
    %61 = vector.broadcast %cst_24 : f32 to vector<8x128xf32>
    %62 = arith.addf %61, %60 : vector<8x128xf32>
    %63 = arith.divf %61, %62 : vector<8x128xf32>
    %64 = vector.extract_strided_slice %51 {offsets = [0, 256], sizes = [8, 128], strides = [1, 1]} : vector<8x512xf32> to vector<8x128xf32>
    %65 = math.tanh %64 : vector<8x128xf32>
    %66 = vector.extract_strided_slice %51 {offsets = [0, 384], sizes = [8, 128], strides = [1, 1]} : vector<8x512xf32> to vector<8x128xf32>
    %67 = arith.negf %66 : vector<8x128xf32>
    %68 = math.exp %67 : vector<8x128xf32>
    %cst_25 = arith.constant 1.000000e+00 : f32
    %69 = vector.broadcast %cst_25 : f32 to vector<8x128xf32>
    %70 = arith.addf %69, %68 : vector<8x128xf32>
    %71 = arith.divf %69, %70 : vector<8x128xf32>
    %72 = arith.mulf %63, %35 : vector<8x128xf32>
    %73 = arith.mulf %57, %65 : vector<8x128xf32>
    %74 = arith.addf %72, %73 : vector<8x128xf32>
    %75 = math.tanh %74 : vector<8x128xf32>
    %76 = arith.mulf %71, %75 : vector<8x128xf32>
    %77 = arith.index_cast %c1_i32 : i32 to index
    %c0_26 = arith.constant 0 : index
    %c0_27 = arith.constant 0 : index
    %78 = vector.load %arg4[%77, %c0_26, %c0_27] : memref<8x8x128xf32, #tpu.memory_space<vmem>>, vector<1x8x128xf32>
    %79 = vector.shape_cast %78 : vector<1x8x128xf32> to vector<8x128xf32>
    %80 = vector.shape_cast %76 : vector<8x128xf32> to vector<1x8x128xf32>
    tpu.vector_store %arg4[%77, %c0_26, %c0_27], %80 {strides = array<i32>} : memref<8x8x128xf32, #tpu.memory_space<vmem>>, vector<1x8x128xf32>,
    %c2_i32 = arith.constant 2 : i32
    %81 = arith.index_cast %c2_i32 : i32 to index
    %c0_28 = arith.constant 0 : index
    %c0_29 = arith.constant 0 : index
    %82 = vector.load %arg0[%81, %c0_28, %c0_29] : memref<8x8x128xf32, #tpu.memory_space<vmem>>, vector<1x8x128xf32>
    %83 = vector.shape_cast %82 : vector<1x8x128xf32> to vector<8x128xf32>
    %c0_30 = arith.constant 0 : index
    %c0_31 = arith.constant 0 : index
    %84 = vector.load %arg1[%c0_30, %c0_31] : memref<128x512xf32, #tpu.memory_space<vmem>>, vector<128x512xf32>
    %cst_32 = arith.constant dense<0.000000e+00> : vector<8x512xf32>
    %85 = tpu.matmul %83, %84, %cst_32 {dimension_numbers = #tpu.dot_dimension_numbers<[1], [0], [0], [1], [0, 0, 1, 1], [], []>} : vector<8x128xf32>, vector<128x512xf32>, vector<8x512xf32> -> vector<8x512xf32>
    %c0_33 = arith.constant 0 : index
    %c0_34 = arith.constant 0 : index
    %86 = vector.load %arg2[%c0_33, %c0_34] : memref<128x512xf32, #tpu.memory_space<vmem>>, vector<128x512xf32>
    %cst_35 = arith.constant dense<0.000000e+00> : vector<8x512xf32>
    %87 = tpu.matmul %76, %86, %cst_35 {dimension_numbers = #tpu.dot_dimension_numbers<[1], [0], [0], [1], [0, 0, 1, 1], [], []>} : vector<8x128xf32>, vector<128x512xf32>, vector<8x512xf32> -> vector<8x512xf32>
    %88 = arith.addf %85, %87 : vector<8x512xf32>
    %89 = vector.broadcast %0 : vector<1x512xf32> to vector<8x512xf32>
    %90 = arith.addf %88, %89 : vector<8x512xf32>
    %91 = vector.extract_strided_slice %90 {offsets = [0, 0], sizes = [8, 128], strides = [1, 1]} : vector<8x512xf32> to vector<8x128xf32>
    %92 = arith.negf %91 : vector<8x128xf32>
    %93 = math.exp %92 : vector<8x128xf32>
    %cst_36 = arith.constant 1.000000e+00 : f32
    %94 = vector.broadcast %cst_36 : f32 to vector<8x128xf32>
    %95 = arith.addf %94, %93 : vector<8x128xf32>
    %96 = arith.divf %94, %95 : vector<8x128xf32>
    %97 = vector.extract_strided_slice %90 {offsets = [0, 128], sizes = [8, 128], strides = [1, 1]} : vector<8x512xf32> to vector<8x128xf32>
    %98 = arith.negf %97 : vector<8x128xf32>
    %99 = math.exp %98 : vector<8x128xf32>
    %cst_37 = arith.constant 1.000000e+00 : f32
    %100 = vector.broadcast %cst_37 : f32 to vector<8x128xf32>
    %101 = arith.addf %100, %99 : vector<8x128xf32>
    %102 = arith.divf %100, %101 : vector<8x128xf32>
    %103 = vector.extract_strided_slice %90 {offsets = [0, 256], sizes = [8, 128], strides = [1, 1]} : vector<8x512xf32> to vector<8x128xf32>
    %104 = math.tanh %103 : vector<8x128xf32>
    %105 = vector.extract_strided_slice %90 {offsets = [0, 384], sizes = [8, 128], strides = [1, 1]} : vector<8x512xf32> to vector<8x128xf32>
    %106 = arith.negf %105 : vector<8x128xf32>
    %107 = math.exp %106 : vector<8x128xf32>
    %cst_38 = arith.constant 1.000000e+00 : f32
    %108 = vector.broadcast %cst_38 : f32 to vector<8x128xf32>
    %109 = arith.addf %108, %107 : vector<8x128xf32>
    %110 = arith.divf %108, %109 : vector<8x128xf32>
    %111 = arith.mulf %102, %74 : vector<8x128xf32>
    %112 = arith.mulf %96, %104 : vector<8x128xf32>
    %113 = arith.addf %111, %112 : vector<8x128xf32>
    %114 = math.tanh %113 : vector<8x128xf32>
    %115 = arith.mulf %110, %114 : vector<8x128xf32>
    %116 = arith.index_cast %c2_i32 : i32 to index
    %c0_39 = arith.constant 0 : index
    %c0_40 = arith.constant 0 : index
    %117 = vector.load %arg4[%116, %c0_39, %c0_40] : memref<8x8x128xf32, #tpu.memory_space<vmem>>, vector<1x8x128xf32>
    %118 = vector.shape_cast %117 : vector<1x8x128xf32> to vector<8x128xf32>
    %119 = vector.shape_cast %115 : vector<8x128xf32> to vector<1x8x128xf32>
    tpu.vector_store %arg4[%116, %c0_39, %c0_40], %119 {strides = array<i32>} : memref<8x8x128xf32, #tpu.memory_space<vmem>>, vector<1x8x128xf32>,
    %c3_i32 = arith.constant 3 : i32
    %120 = arith.index_cast %c3_i32 : i32 to index
    %c0_41 = arith.constant 0 : index
    %c0_42 = arith.constant 0 : index
    %121 = vector.load %arg0[%120, %c0_41, %c0_42] : memref<8x8x128xf32, #tpu.memory_space<vmem>>, vector<1x8x128xf32>
    %122 = vector.shape_cast %121 : vector<1x8x128xf32> to vector<8x128xf32>
    %c0_43 = arith.constant 0 : index
    %c0_44 = arith.constant 0 : index
    %123 = vector.load %arg1[%c0_43, %c0_44] : memref<128x512xf32, #tpu.memory_space<vmem>>, vector<128x512xf32>
    %cst_45 = arith.constant dense<0.000000e+00> : vector<8x512xf32>
    %124 = tpu.matmul %122, %123, %cst_45 {dimension_numbers = #tpu.dot_dimension_numbers<[1], [0], [0], [1], [0, 0, 1, 1], [], []>} : vector<8x128xf32>, vector<128x512xf32>, vector<8x512xf32> -> vector<8x512xf32>
    %c0_46 = arith.constant 0 : index
    %c0_47 = arith.constant 0 : index
    %125 = vector.load %arg2[%c0_46, %c0_47] : memref<128x512xf32, #tpu.memory_space<vmem>>, vector<128x512xf32>
    %cst_48 = arith.constant dense<0.000000e+00> : vector<8x512xf32>
    %126 = tpu.matmul %115, %125, %cst_48 {dimension_numbers = #tpu.dot_dimension_numbers<[1], [0], [0], [1], [0, 0, 1, 1], [], []>} : vector<8x128xf32>, vector<128x512xf32>, vector<8x512xf32> -> vector<8x512xf32>
    %127 = arith.addf %124, %126 : vector<8x512xf32>
    %128 = vector.broadcast %0 : vector<1x512xf32> to vector<8x512xf32>
    %129 = arith.addf %127, %128 : vector<8x512xf32>
    %130 = vector.extract_strided_slice %129 {offsets = [0, 0], sizes = [8, 128], strides = [1, 1]} : vector<8x512xf32> to vector<8x128xf32>
    %131 = arith.negf %130 : vector<8x128xf32>
    %132 = math.exp %131 : vector<8x128xf32>
    %cst_49 = arith.constant 1.000000e+00 : f32
    %133 = vector.broadcast %cst_49 : f32 to vector<8x128xf32>
    %134 = arith.addf %133, %132 : vector<8x128xf32>
    %135 = arith.divf %133, %134 : vector<8x128xf32>
    %136 = vector.extract_strided_slice %129 {offsets = [0, 128], sizes = [8, 128], strides = [1, 1]} : vector<8x512xf32> to vector<8x128xf32>
    %137 = arith.negf %136 : vector<8x128xf32>
    %138 = math.exp %137 : vector<8x128xf32>
    %cst_50 = arith.constant 1.000000e+00 : f32
    %139 = vector.broadcast %cst_50 : f32 to vector<8x128xf32>
    %140 = arith.addf %139, %138 : vector<8x128xf32>
    %141 = arith.divf %139, %140 : vector<8x128xf32>
    %142 = vector.extract_strided_slice %129 {offsets = [0, 256], sizes = [8, 128], strides = [1, 1]} : vector<8x512xf32> to vector<8x128xf32>
    %143 = math.tanh %142 : vector<8x128xf32>
    %144 = vector.extract_strided_slice %129 {offsets = [0, 384], sizes = [8, 128], strides = [1, 1]} : vector<8x512xf32> to vector<8x128xf32>
    %145 = arith.negf %144 : vector<8x128xf32>
    %146 = math.exp %145 : vector<8x128xf32>
    %cst_51 = arith.constant 1.000000e+00 : f32
    %147 = vector.broadcast %cst_51 : f32 to vector<8x128xf32>
    %148 = arith.addf %147, %146 : vector<8x128xf32>
    %149 = arith.divf %147, %148 : vector<8x128xf32>
    %150 = arith.mulf %141, %113 : vector<8x128xf32>
    %151 = arith.mulf %135, %143 : vector<8x128xf32>
    %152 = arith.addf %150, %151 : vector<8x128xf32>
    %153 = math.tanh %152 : vector<8x128xf32>
    %154 = arith.mulf %149, %153 : vector<8x128xf32>
    %155 = arith.index_cast %c3_i32 : i32 to index
    %c0_52 = arith.constant 0 : index
    %c0_53 = arith.constant 0 : index
    %156 = vector.load %arg4[%155, %c0_52, %c0_53] : memref<8x8x128xf32, #tpu.memory_space<vmem>>, vector<1x8x128xf32>
    %157 = vector.shape_cast %156 : vector<1x8x128xf32> to vector<8x128xf32>
    %158 = vector.shape_cast %154 : vector<8x128xf32> to vector<1x8x128xf32>
    tpu.vector_store %arg4[%155, %c0_52, %c0_53], %158 {strides = array<i32>} : memref<8x8x128xf32, #tpu.memory_space<vmem>>, vector<1x8x128xf32>,
    %c4_i32 = arith.constant 4 : i32
    %159 = arith.index_cast %c4_i32 : i32 to index
    %c0_54 = arith.constant 0 : index
    %c0_55 = arith.constant 0 : index
    %160 = vector.load %arg0[%159, %c0_54, %c0_55] : memref<8x8x128xf32, #tpu.memory_space<vmem>>, vector<1x8x128xf32>
    %161 = vector.shape_cast %160 : vector<1x8x128xf32> to vector<8x128xf32>
    %c0_56 = arith.constant 0 : index
    %c0_57 = arith.constant 0 : index
    %162 = vector.load %arg1[%c0_56, %c0_57] : memref<128x512xf32, #tpu.memory_space<vmem>>, vector<128x512xf32>
    %cst_58 = arith.constant dense<0.000000e+00> : vector<8x512xf32>
    %163 = tpu.matmul %161, %162, %cst_58 {dimension_numbers = #tpu.dot_dimension_numbers<[1], [0], [0], [1], [0, 0, 1, 1], [], []>} : vector<8x128xf32>, vector<128x512xf32>, vector<8x512xf32> -> vector<8x512xf32>
    %c0_59 = arith.constant 0 : index
    %c0_60 = arith.constant 0 : index
    %164 = vector.load %arg2[%c0_59, %c0_60] : memref<128x512xf32, #tpu.memory_space<vmem>>, vector<128x512xf32>
    %cst_61 = arith.constant dense<0.000000e+00> : vector<8x512xf32>
    %165 = tpu.matmul %154, %164, %cst_61 {dimension_numbers = #tpu.dot_dimension_numbers<[1], [0], [0], [1], [0, 0, 1, 1], [], []>} : vector<8x128xf32>, vector<128x512xf32>, vector<8x512xf32> -> vector<8x512xf32>
    %166 = arith.addf %163, %165 : vector<8x512xf32>
    %167 = vector.broadcast %0 : vector<1x512xf32> to vector<8x512xf32>
    %168 = arith.addf %166, %167 : vector<8x512xf32>
    %169 = vector.extract_strided_slice %168 {offsets = [0, 0], sizes = [8, 128], strides = [1, 1]} : vector<8x512xf32> to vector<8x128xf32>
    %170 = arith.negf %169 : vector<8x128xf32>
    %171 = math.exp %170 : vector<8x128xf32>
    %cst_62 = arith.constant 1.000000e+00 : f32
    %172 = vector.broadcast %cst_62 : f32 to vector<8x128xf32>
    %173 = arith.addf %172, %171 : vector<8x128xf32>
    %174 = arith.divf %172, %173 : vector<8x128xf32>
    %175 = vector.extract_strided_slice %168 {offsets = [0, 128], sizes = [8, 128], strides = [1, 1]} : vector<8x512xf32> to vector<8x128xf32>
    %176 = arith.negf %175 : vector<8x128xf32>
    %177 = math.exp %176 : vector<8x128xf32>
    %cst_63 = arith.constant 1.000000e+00 : f32
    %178 = vector.broadcast %cst_63 : f32 to vector<8x128xf32>
    %179 = arith.addf %178, %177 : vector<8x128xf32>
    %180 = arith.divf %178, %179 : vector<8x128xf32>
    %181 = vector.extract_strided_slice %168 {offsets = [0, 256], sizes = [8, 128], strides = [1, 1]} : vector<8x512xf32> to vector<8x128xf32>
    %182 = math.tanh %181 : vector<8x128xf32>
    %183 = vector.extract_strided_slice %168 {offsets = [0, 384], sizes = [8, 128], strides = [1, 1]} : vector<8x512xf32> to vector<8x128xf32>
    %184 = arith.negf %183 : vector<8x128xf32>
    %185 = math.exp %184 : vector<8x128xf32>
    %cst_64 = arith.constant 1.000000e+00 : f32
    %186 = vector.broadcast %cst_64 : f32 to vector<8x128xf32>
    %187 = arith.addf %186, %185 : vector<8x128xf32>
    %188 = arith.divf %186, %187 : vector<8x128xf32>
    %189 = arith.mulf %180, %152 : vector<8x128xf32>
    %190 = arith.mulf %174, %182 : vector<8x128xf32>
    %191 = arith.addf %189, %190 : vector<8x128xf32>
    %192 = math.tanh %191 : vector<8x128xf32>
    %193 = arith.mulf %188, %192 : vector<8x128xf32>
    %194 = arith.index_cast %c4_i32 : i32 to index
    %c0_65 = arith.constant 0 : index
    %c0_66 = arith.constant 0 : index
    %195 = vector.load %arg4[%194, %c0_65, %c0_66] : memref<8x8x128xf32, #tpu.memory_space<vmem>>, vector<1x8x128xf32>
    %196 = vector.shape_cast %195 : vector<1x8x128xf32> to vector<8x128xf32>
    %197 = vector.shape_cast %193 : vector<8x128xf32> to vector<1x8x128xf32>
    tpu.vector_store %arg4[%194, %c0_65, %c0_66], %197 {strides = array<i32>} : memref<8x8x128xf32, #tpu.memory_space<vmem>>, vector<1x8x128xf32>,
    %c5_i32 = arith.constant 5 : i32
    %198 = arith.index_cast %c5_i32 : i32 to index
    %c0_67 = arith.constant 0 : index
    %c0_68 = arith.constant 0 : index
    %199 = vector.load %arg0[%198, %c0_67, %c0_68] : memref<8x8x128xf32, #tpu.memory_space<vmem>>, vector<1x8x128xf32>
    %200 = vector.shape_cast %199 : vector<1x8x128xf32> to vector<8x128xf32>
    %c0_69 = arith.constant 0 : index
    %c0_70 = arith.constant 0 : index
    %201 = vector.load %arg1[%c0_69, %c0_70] : memref<128x512xf32, #tpu.memory_space<vmem>>, vector<128x512xf32>
    %cst_71 = arith.constant dense<0.000000e+00> : vector<8x512xf32>
    %202 = tpu.matmul %200, %201, %cst_71 {dimension_numbers = #tpu.dot_dimension_numbers<[1], [0], [0], [1], [0, 0, 1, 1], [], []>} : vector<8x128xf32>, vector<128x512xf32>, vector<8x512xf32> -> vector<8x512xf32>
    %c0_72 = arith.constant 0 : index
    %c0_73 = arith.constant 0 : index
    %203 = vector.load %arg2[%c0_72, %c0_73] : memref<128x512xf32, #tpu.memory_space<vmem>>, vector<128x512xf32>
    %cst_74 = arith.constant dense<0.000000e+00> : vector<8x512xf32>
    %204 = tpu.matmul %193, %203, %cst_74 {dimension_numbers = #tpu.dot_dimension_numbers<[1], [0], [0], [1], [0, 0, 1, 1], [], []>} : vector<8x128xf32>, vector<128x512xf32>, vector<8x512xf32> -> vector<8x512xf32>
    %205 = arith.addf %202, %204 : vector<8x512xf32>
    %206 = vector.broadcast %0 : vector<1x512xf32> to vector<8x512xf32>
    %207 = arith.addf %205, %206 : vector<8x512xf32>
    %208 = vector.extract_strided_slice %207 {offsets = [0, 0], sizes = [8, 128], strides = [1, 1]} : vector<8x512xf32> to vector<8x128xf32>
    %209 = arith.negf %208 : vector<8x128xf32>
    %210 = math.exp %209 : vector<8x128xf32>
    %cst_75 = arith.constant 1.000000e+00 : f32
    %211 = vector.broadcast %cst_75 : f32 to vector<8x128xf32>
    %212 = arith.addf %211, %210 : vector<8x128xf32>
    %213 = arith.divf %211, %212 : vector<8x128xf32>
    %214 = vector.extract_strided_slice %207 {offsets = [0, 128], sizes = [8, 128], strides = [1, 1]} : vector<8x512xf32> to vector<8x128xf32>
    %215 = arith.negf %214 : vector<8x128xf32>
    %216 = math.exp %215 : vector<8x128xf32>
    %cst_76 = arith.constant 1.000000e+00 : f32
    %217 = vector.broadcast %cst_76 : f32 to vector<8x128xf32>
    %218 = arith.addf %217, %216 : vector<8x128xf32>
    %219 = arith.divf %217, %218 : vector<8x128xf32>
    %220 = vector.extract_strided_slice %207 {offsets = [0, 256], sizes = [8, 128], strides = [1, 1]} : vector<8x512xf32> to vector<8x128xf32>
    %221 = math.tanh %220 : vector<8x128xf32>
    %222 = vector.extract_strided_slice %207 {offsets = [0, 384], sizes = [8, 128], strides = [1, 1]} : vector<8x512xf32> to vector<8x128xf32>
    %223 = arith.negf %222 : vector<8x128xf32>
    %224 = math.exp %223 : vector<8x128xf32>
    %cst_77 = arith.constant 1.000000e+00 : f32
    %225 = vector.broadcast %cst_77 : f32 to vector<8x128xf32>
    %226 = arith.addf %225, %224 : vector<8x128xf32>
    %227 = arith.divf %225, %226 : vector<8x128xf32>
    %228 = arith.mulf %219, %191 : vector<8x128xf32>
    %229 = arith.mulf %213, %221 : vector<8x128xf32>
    %230 = arith.addf %228, %229 : vector<8x128xf32>
    %231 = math.tanh %230 : vector<8x128xf32>
    %232 = arith.mulf %227, %231 : vector<8x128xf32>
    %233 = arith.index_cast %c5_i32 : i32 to index
    %c0_78 = arith.constant 0 : index
    %c0_79 = arith.constant 0 : index
    %234 = vector.load %arg4[%233, %c0_78, %c0_79] : memref<8x8x128xf32, #tpu.memory_space<vmem>>, vector<1x8x128xf32>
    %235 = vector.shape_cast %234 : vector<1x8x128xf32> to vector<8x128xf32>
    %236 = vector.shape_cast %232 : vector<8x128xf32> to vector<1x8x128xf32>
    tpu.vector_store %arg4[%233, %c0_78, %c0_79], %236 {strides = array<i32>} : memref<8x8x128xf32, #tpu.memory_space<vmem>>, vector<1x8x128xf32>,
    %c6_i32 = arith.constant 6 : i32
    %237 = arith.index_cast %c6_i32 : i32 to index
    %c0_80 = arith.constant 0 : index
    %c0_81 = arith.constant 0 : index
    %238 = vector.load %arg0[%237, %c0_80, %c0_81] : memref<8x8x128xf32, #tpu.memory_space<vmem>>, vector<1x8x128xf32>
    %239 = vector.shape_cast %238 : vector<1x8x128xf32> to vector<8x128xf32>
    %c0_82 = arith.constant 0 : index
    %c0_83 = arith.constant 0 : index
    %240 = vector.load %arg1[%c0_82, %c0_83] : memref<128x512xf32, #tpu.memory_space<vmem>>, vector<128x512xf32>
    %cst_84 = arith.constant dense<0.000000e+00> : vector<8x512xf32>
    %241 = tpu.matmul %239, %240, %cst_84 {dimension_numbers = #tpu.dot_dimension_numbers<[1], [0], [0], [1], [0, 0, 1, 1], [], []>} : vector<8x128xf32>, vector<128x512xf32>, vector<8x512xf32> -> vector<8x512xf32>
    %c0_85 = arith.constant 0 : index
    %c0_86 = arith.constant 0 : index
    %242 = vector.load %arg2[%c0_85, %c0_86] : memref<128x512xf32, #tpu.memory_space<vmem>>, vector<128x512xf32>
    %cst_87 = arith.constant dense<0.000000e+00> : vector<8x512xf32>
    %243 = tpu.matmul %232, %242, %cst_87 {dimension_numbers = #tpu.dot_dimension_numbers<[1], [0], [0], [1], [0, 0, 1, 1], [], []>} : vector<8x128xf32>, vector<128x512xf32>, vector<8x512xf32> -> vector<8x512xf32>
    %244 = arith.addf %241, %243 : vector<8x512xf32>
    %245 = vector.broadcast %0 : vector<1x512xf32> to vector<8x512xf32>
    %246 = arith.addf %244, %245 : vector<8x512xf32>
    %247 = vector.extract_strided_slice %246 {offsets = [0, 0], sizes = [8, 128], strides = [1, 1]} : vector<8x512xf32> to vector<8x128xf32>
    %248 = arith.negf %247 : vector<8x128xf32>
    %249 = math.exp %248 : vector<8x128xf32>
    %cst_88 = arith.constant 1.000000e+00 : f32
    %250 = vector.broadcast %cst_88 : f32 to vector<8x128xf32>
    %251 = arith.addf %250, %249 : vector<8x128xf32>
    %252 = arith.divf %250, %251 : vector<8x128xf32>
    %253 = vector.extract_strided_slice %246 {offsets = [0, 128], sizes = [8, 128], strides = [1, 1]} : vector<8x512xf32> to vector<8x128xf32>
    %254 = arith.negf %253 : vector<8x128xf32>
    %255 = math.exp %254 : vector<8x128xf32>
    %cst_89 = arith.constant 1.000000e+00 : f32
    %256 = vector.broadcast %cst_89 : f32 to vector<8x128xf32>
    %257 = arith.addf %256, %255 : vector<8x128xf32>
    %258 = arith.divf %256, %257 : vector<8x128xf32>
    %259 = vector.extract_strided_slice %246 {offsets = [0, 256], sizes = [8, 128], strides = [1, 1]} : vector<8x512xf32> to vector<8x128xf32>
    %260 = math.tanh %259 : vector<8x128xf32>
    %261 = vector.extract_strided_slice %246 {offsets = [0, 384], sizes = [8, 128], strides = [1, 1]} : vector<8x512xf32> to vector<8x128xf32>
    %262 = arith.negf %261 : vector<8x128xf32>
    %263 = math.exp %262 : vector<8x128xf32>
    %cst_90 = arith.constant 1.000000e+00 : f32
    %264 = vector.broadcast %cst_90 : f32 to vector<8x128xf32>
    %265 = arith.addf %264, %263 : vector<8x128xf32>
    %266 = arith.divf %264, %265 : vector<8x128xf32>
    %267 = arith.mulf %258, %230 : vector<8x128xf32>
    %268 = arith.mulf %252, %260 : vector<8x128xf32>
    %269 = arith.addf %267, %268 : vector<8x128xf32>
    %270 = math.tanh %269 : vector<8x128xf32>
    %271 = arith.mulf %266, %270 : vector<8x128xf32>
    %272 = arith.index_cast %c6_i32 : i32 to index
    %c0_91 = arith.constant 0 : index
    %c0_92 = arith.constant 0 : index
    %273 = vector.load %arg4[%272, %c0_91, %c0_92] : memref<8x8x128xf32, #tpu.memory_space<vmem>>, vector<1x8x128xf32>
    %274 = vector.shape_cast %273 : vector<1x8x128xf32> to vector<8x128xf32>
    %275 = vector.shape_cast %271 : vector<8x128xf32> to vector<1x8x128xf32>
    tpu.vector_store %arg4[%272, %c0_91, %c0_92], %275 {strides = array<i32>} : memref<8x8x128xf32, #tpu.memory_space<vmem>>, vector<1x8x128xf32>,
    %c7_i32 = arith.constant 7 : i32
    %276 = arith.index_cast %c7_i32 : i32 to index
    %c0_93 = arith.constant 0 : index
    %c0_94 = arith.constant 0 : index
    %277 = vector.load %arg0[%276, %c0_93, %c0_94] : memref<8x8x128xf32, #tpu.memory_space<vmem>>, vector<1x8x128xf32>
    %278 = vector.shape_cast %277 : vector<1x8x128xf32> to vector<8x128xf32>
    %c0_95 = arith.constant 0 : index
    %c0_96 = arith.constant 0 : index
    %279 = vector.load %arg1[%c0_95, %c0_96] : memref<128x512xf32, #tpu.memory_space<vmem>>, vector<128x512xf32>
    %cst_97 = arith.constant dense<0.000000e+00> : vector<8x512xf32>
    %280 = tpu.matmul %278, %279, %cst_97 {dimension_numbers = #tpu.dot_dimension_numbers<[1], [0], [0], [1], [0, 0, 1, 1], [], []>} : vector<8x128xf32>, vector<128x512xf32>, vector<8x512xf32> -> vector<8x512xf32>
    %c0_98 = arith.constant 0 : index
    %c0_99 = arith.constant 0 : index
    %281 = vector.load %arg2[%c0_98, %c0_99] : memref<128x512xf32, #tpu.memory_space<vmem>>, vector<128x512xf32>
    %cst_100 = arith.constant dense<0.000000e+00> : vector<8x512xf32>
    %282 = tpu.matmul %271, %281, %cst_100 {dimension_numbers = #tpu.dot_dimension_numbers<[1], [0], [0], [1], [0, 0, 1, 1], [], []>} : vector<8x128xf32>, vector<128x512xf32>, vector<8x512xf32> -> vector<8x512xf32>
    %283 = arith.addf %280, %282 : vector<8x512xf32>
    %284 = vector.broadcast %0 : vector<1x512xf32> to vector<8x512xf32>
    %285 = arith.addf %283, %284 : vector<8x512xf32>
    %286 = vector.extract_strided_slice %285 {offsets = [0, 0], sizes = [8, 128], strides = [1, 1]} : vector<8x512xf32> to vector<8x128xf32>
    %287 = arith.negf %286 : vector<8x128xf32>
    %288 = math.exp %287 : vector<8x128xf32>
    %cst_101 = arith.constant 1.000000e+00 : f32
    %289 = vector.broadcast %cst_101 : f32 to vector<8x128xf32>
    %290 = arith.addf %289, %288 : vector<8x128xf32>
    %291 = arith.divf %289, %290 : vector<8x128xf32>
    %292 = vector.extract_strided_slice %285 {offsets = [0, 128], sizes = [8, 128], strides = [1, 1]} : vector<8x512xf32> to vector<8x128xf32>
    %293 = arith.negf %292 : vector<8x128xf32>
    %294 = math.exp %293 : vector<8x128xf32>
    %cst_102 = arith.constant 1.000000e+00 : f32
    %295 = vector.broadcast %cst_102 : f32 to vector<8x128xf32>
    %296 = arith.addf %295, %294 : vector<8x128xf32>
    %297 = arith.divf %295, %296 : vector<8x128xf32>
    %298 = vector.extract_strided_slice %285 {offsets = [0, 256], sizes = [8, 128], strides = [1, 1]} : vector<8x512xf32> to vector<8x128xf32>
    %299 = math.tanh %298 : vector<8x128xf32>
    %300 = vector.extract_strided_slice %285 {offsets = [0, 384], sizes = [8, 128], strides = [1, 1]} : vector<8x512xf32> to vector<8x128xf32>
    %301 = arith.negf %300 : vector<8x128xf32>
    %302 = math.exp %301 : vector<8x128xf32>
    %cst_103 = arith.constant 1.000000e+00 : f32
    %303 = vector.broadcast %cst_103 : f32 to vector<8x128xf32>
    %304 = arith.addf %303, %302 : vector<8x128xf32>
    %305 = arith.divf %303, %304 : vector<8x128xf32>
    %306 = arith.mulf %297, %269 : vector<8x128xf32>
    %307 = arith.mulf %291, %299 : vector<8x128xf32>
    %308 = arith.addf %306, %307 : vector<8x128xf32>
    %309 = math.tanh %308 : vector<8x128xf32>
    %310 = arith.mulf %305, %309 : vector<8x128xf32>
    %311 = arith.index_cast %c7_i32 : i32 to index
    %c0_104 = arith.constant 0 : index
    %c0_105 = arith.constant 0 : index
    %312 = vector.load %arg4[%311, %c0_104, %c0_105] : memref<8x8x128xf32, #tpu.memory_space<vmem>>, vector<1x8x128xf32>
    %313 = vector.shape_cast %312 : vector<1x8x128xf32> to vector<8x128xf32>
    %314 = vector.shape_cast %310 : vector<8x128xf32> to vector<1x8x128xf32>
    tpu.vector_store %arg4[%311, %c0_104, %c0_105], %314 {strides = array<i32>} : memref<8x8x128xf32, #tpu.memory_space<vmem>>, vector<1x8x128xf32>,
    %c8_i32 = arith.constant 8 : i32
    %c0_106 = arith.constant 0 : index
    %c0_107 = arith.constant 0 : index
    %315 = vector.load %arg5[%c0_106, %c0_107] : memref<8x128xf32, #tpu.memory_space<vmem>>, vector<8x128xf32>
    tpu.vector_store %arg5[%c0_106, %c0_107], %310 {strides = array<i32>} : memref<8x128xf32, #tpu.memory_space<vmem>>, vector<8x128xf32>,
    %c0_108 = arith.constant 0 : index
    %c0_109 = arith.constant 0 : index
    %316 = vector.load %arg6[%c0_108, %c0_109] : memref<8x128xf32, #tpu.memory_space<vmem>>, vector<8x128xf32>
    tpu.vector_store %arg6[%c0_108, %c0_109], %308 {strides = array<i32>} : memref<8x128xf32, #tpu.memory_space<vmem>>, vector<8x128xf32>,
    return
  }
}

module attributes {stable_mosaic.version = 11 : i64} {
  func.func @_decoder_kernel(%arg0: memref<7xi32, #tpu.memory_space<smem>>, %arg1: memref<7x8x1xi32, #tpu.memory_space<vmem>>, %arg2: memref<8x8x128xf32, #tpu.memory_space<vmem>>, %arg3: memref<8x128xf32, #tpu.memory_space<vmem>>, %arg4: memref<8x128xf32, #tpu.memory_space<vmem>>, %arg5: memref<128x128xf32, #tpu.memory_space<vmem>>, %arg6: memref<384x512xf32, #tpu.memory_space<vmem>>, %arg7: memref<1x512xf32, #tpu.memory_space<vmem>>, %arg8: memref<128x128xf32, #tpu.memory_space<vmem>>, %arg9: memref<1x128xf32, #tpu.memory_space<vmem>>, %arg10: memref<7x8x128xf32, #tpu.memory_space<vmem>>) attributes {dimension_semantics = [], scalar_prefetch = 0 : i64, scratch_operands = 0 : i64, tpu.core_type = #tpu.core_type<tc>} {
    %c0 = arith.constant 0 : index
    %c0_0 = arith.constant 0 : index
    %c0_1 = arith.constant 0 : index
    %0 = vector.load %arg2[%c0, %c0_0, %c0_1] : memref<8x8x128xf32, #tpu.memory_space<vmem>>, vector<8x8x128xf32>
    %c0_2 = arith.constant 0 : index
    %c0_3 = arith.constant 0 : index
    %1 = vector.load %arg7[%c0_2, %c0_3] : memref<1x512xf32, #tpu.memory_space<vmem>>, vector<1x512xf32>
    %c0_4 = arith.constant 0 : index
    %c0_5 = arith.constant 0 : index
    %2 = vector.load %arg9[%c0_4, %c0_5] : memref<1x128xf32, #tpu.memory_space<vmem>>, vector<1x128xf32>
    %3 = tpu.iota {dimensions = array<i32: 1>} : vector<8x128xi32>
    %cst = arith.constant 0.000000e+00 : f32
    %4 = vector.broadcast %cst : f32 to vector<8x128xf32>
    %c0_6 = arith.constant 0 : index
    %c0_7 = arith.constant 0 : index
    %5 = vector.load %arg3[%c0_6, %c0_7] : memref<8x128xf32, #tpu.memory_space<vmem>>, vector<8x128xf32>
    %c0_8 = arith.constant 0 : index
    %c0_9 = arith.constant 0 : index
    %6 = vector.load %arg4[%c0_8, %c0_9] : memref<8x128xf32, #tpu.memory_space<vmem>>, vector<8x128xf32>
    %c0_i32 = arith.constant 0 : i32
    %7 = arith.index_cast %c0_i32 : i32 to index
    %c0_10 = arith.constant 0 : index
    %c0_11 = arith.constant 0 : index
    %8 = vector.load %arg1[%7, %c0_10, %c0_11] : memref<7x8x1xi32, #tpu.memory_space<vmem>>, vector<1x8x1xi32>
    %9 = vector.shape_cast %8 : vector<1x8x1xi32> to vector<8x1xi32>
    %10 = vector.broadcast %9 : vector<8x1xi32> to vector<8x128xi32>
    %11 = arith.cmpi eq, %3, %10 : vector<8x128xi32>
    %12 = arith.extui %11 : vector<8x128xi1> to vector<8x128xi32>
    %13 = arith.sitofp %12 : vector<8x128xi32> to vector<8x128xf32>
    %14 = arith.index_cast %c0_i32 : i32 to index
    %15 = memref.load %arg0[%14] : memref<7xi32, #tpu.memory_space<smem>>
    %c0_i32_12 = arith.constant 0 : i32
    %16 = arith.cmpi ne, %15, %c0_i32_12 : i32
    %17 = arith.extui %16 : i1 to i32
    %18 = arith.sitofp %17 : i32 to f32
    %19 = vector.broadcast %18 : f32 to vector<8x128xf32>
    %20 = arith.mulf %19, %13 : vector<8x128xf32>
    %cst_13 = arith.constant 1.000000e+00 : f32
    %21 = arith.subf %cst_13, %18 : f32
    %22 = vector.broadcast %21 : f32 to vector<8x128xf32>
    %23 = arith.mulf %22, %4 : vector<8x128xf32>
    %24 = arith.addf %20, %23 : vector<8x128xf32>
    %c0_14 = arith.constant 0 : index
    %c0_15 = arith.constant 0 : index
    %25 = vector.load %arg5[%c0_14, %c0_15] : memref<128x128xf32, #tpu.memory_space<vmem>>, vector<128x128xf32>
    %cst_16 = arith.constant dense<0.000000e+00> : vector<8x128xf32>
    %26 = tpu.matmul %24, %25, %cst_16 {dimension_numbers = #tpu.dot_dimension_numbers<[1], [0], [0], [1], [0, 0, 1, 1], [], []>} : vector<8x128xf32>, vector<128x128xf32>, vector<8x128xf32> -> vector<8x128xf32>
    %27 = vector.shape_cast %5 : vector<8x128xf32> to vector<1x8x128xf32>
    %28 = vector.broadcast %27 : vector<1x8x128xf32> to vector<8x8x128xf32>
    %29 = arith.mulf %0, %28 : vector<8x8x128xf32>
    %cst_17 = arith.constant dense<0.000000e+00> : vector<8x8xf32>
    %30 = vector.multi_reduction <add>, %29, %cst_17 [2] : vector<8x8x128xf32> to vector<8x8xf32>
    %31 = vector.shape_cast %30 : vector<8x8xf32> to vector<8x8x1xf32>
    %cst_18 = arith.constant dense<0xFF800000> : vector<8x1xf32>
    %32 = vector.multi_reduction <maximumf>, %31, %cst_18 [0] : vector<8x8x1xf32> to vector<8x1xf32>
    %33 = vector.shape_cast %32 : vector<8x1xf32> to vector<1x8x1xf32>
    %34 = vector.broadcast %33 : vector<1x8x1xf32> to vector<8x8x1xf32>
    %35 = arith.subf %31, %34 : vector<8x8x1xf32>
    %36 = math.exp %35 : vector<8x8x1xf32>
    %cst_19 = arith.constant dense<0.000000e+00> : vector<8x1xf32>
    %37 = vector.multi_reduction <add>, %36, %cst_19 [0] : vector<8x8x1xf32> to vector<8x1xf32>
    %38 = vector.shape_cast %37 : vector<8x1xf32> to vector<1x8x1xf32>
    %39 = vector.broadcast %38 : vector<1x8x1xf32> to vector<8x8x1xf32>
    %40 = arith.divf %36, %39 : vector<8x8x1xf32>
    %41 = vector.broadcast %40 : vector<8x8x1xf32> to vector<8x8x128xf32>
    %42 = arith.mulf %41, %0 : vector<8x8x128xf32>
    %cst_20 = arith.constant dense<0.000000e+00> : vector<8x128xf32>
    %43 = vector.multi_reduction <add>, %42, %cst_20 [0] : vector<8x8x128xf32> to vector<8x128xf32>
    %44 = tpu.concatenate %26, %43, %5 in 1 : vector<8x128xf32>, vector<8x128xf32>, vector<8x128xf32> -> vector<8x384xf32>
    %c0_21 = arith.constant 0 : index
    %c0_22 = arith.constant 0 : index
    %45 = vector.load %arg6[%c0_21, %c0_22] : memref<384x512xf32, #tpu.memory_space<vmem>>, vector<384x512xf32>
    %cst_23 = arith.constant dense<0.000000e+00> : vector<8x512xf32>
    %46 = tpu.matmul %44, %45, %cst_23 {dimension_numbers = #tpu.dot_dimension_numbers<[1], [0], [0], [1], [0, 0, 1, 1], [], []>} : vector<8x384xf32>, vector<384x512xf32>, vector<8x512xf32> -> vector<8x512xf32>
    %47 = vector.broadcast %1 : vector<1x512xf32> to vector<8x512xf32>
    %48 = arith.addf %46, %47 : vector<8x512xf32>
    %49 = vector.extract_strided_slice %48 {offsets = [0, 0], sizes = [8, 128], strides = [1, 1]} : vector<8x512xf32> to vector<8x128xf32>
    %50 = arith.negf %49 : vector<8x128xf32>
    %51 = math.exp %50 : vector<8x128xf32>
    %cst_24 = arith.constant 1.000000e+00 : f32
    %52 = vector.broadcast %cst_24 : f32 to vector<8x128xf32>
    %53 = arith.addf %52, %51 : vector<8x128xf32>
    %54 = arith.divf %52, %53 : vector<8x128xf32>
    %55 = vector.extract_strided_slice %48 {offsets = [0, 128], sizes = [8, 128], strides = [1, 1]} : vector<8x512xf32> to vector<8x128xf32>
    %56 = arith.negf %55 : vector<8x128xf32>
    %57 = math.exp %56 : vector<8x128xf32>
    %cst_25 = arith.constant 1.000000e+00 : f32
    %58 = vector.broadcast %cst_25 : f32 to vector<8x128xf32>
    %59 = arith.addf %58, %57 : vector<8x128xf32>
    %60 = arith.divf %58, %59 : vector<8x128xf32>
    %61 = vector.extract_strided_slice %48 {offsets = [0, 256], sizes = [8, 128], strides = [1, 1]} : vector<8x512xf32> to vector<8x128xf32>
    %62 = math.tanh %61 : vector<8x128xf32>
    %63 = vector.extract_strided_slice %48 {offsets = [0, 384], sizes = [8, 128], strides = [1, 1]} : vector<8x512xf32> to vector<8x128xf32>
    %64 = arith.negf %63 : vector<8x128xf32>
    %65 = math.exp %64 : vector<8x128xf32>
    %cst_26 = arith.constant 1.000000e+00 : f32
    %66 = vector.broadcast %cst_26 : f32 to vector<8x128xf32>
    %67 = arith.addf %66, %65 : vector<8x128xf32>
    %68 = arith.divf %66, %67 : vector<8x128xf32>
    %69 = arith.mulf %60, %6 : vector<8x128xf32>
    %70 = arith.mulf %54, %62 : vector<8x128xf32>
    %71 = arith.addf %69, %70 : vector<8x128xf32>
    %72 = math.tanh %71 : vector<8x128xf32>
    %73 = arith.mulf %68, %72 : vector<8x128xf32>
    %c0_27 = arith.constant 0 : index
    %c0_28 = arith.constant 0 : index
    %74 = vector.load %arg8[%c0_27, %c0_28] : memref<128x128xf32, #tpu.memory_space<vmem>>, vector<128x128xf32>
    %cst_29 = arith.constant dense<0.000000e+00> : vector<8x128xf32>
    %75 = tpu.matmul %73, %74, %cst_29 {dimension_numbers = #tpu.dot_dimension_numbers<[1], [0], [0], [1], [0, 0, 1, 1], [], []>} : vector<8x128xf32>, vector<128x128xf32>, vector<8x128xf32> -> vector<8x128xf32>
    %76 = vector.broadcast %2 : vector<1x128xf32> to vector<8x128xf32>
    %77 = arith.addf %75, %76 : vector<8x128xf32>
    %78 = arith.index_cast %c0_i32 : i32 to index
    %c0_30 = arith.constant 0 : index
    %c0_31 = arith.constant 0 : index
    %79 = vector.load %arg10[%78, %c0_30, %c0_31] : memref<7x8x128xf32, #tpu.memory_space<vmem>>, vector<1x8x128xf32>
    %80 = vector.shape_cast %79 : vector<1x8x128xf32> to vector<8x128xf32>
    %81 = vector.shape_cast %77 : vector<8x128xf32> to vector<1x8x128xf32>
    tpu.vector_store %arg10[%78, %c0_30, %c0_31], %81 {strides = array<i32>} : memref<7x8x128xf32, #tpu.memory_space<vmem>>, vector<1x8x128xf32>,
    %cst_32 = arith.constant dense<0xFF800000> : vector<8xf32>
    %82 = vector.multi_reduction <maximumf>, %77, %cst_32 [1] : vector<8x128xf32> to vector<8xf32>
    %83 = vector.shape_cast %82 : vector<8xf32> to vector<8x1xf32>
    %84 = vector.broadcast %83 : vector<8x1xf32> to vector<8x128xf32>
    %85 = arith.cmpf oeq, %77, %84 : vector<8x128xf32>
    %c128_i32 = arith.constant 128 : i32
    %86 = vector.broadcast %c128_i32 : i32 to vector<8x128xi32>
    %87 = arith.select %85, %3, %86 : vector<8x128xi1>, vector<8x128xi32>
    %cst_33 = arith.constant dense<2147483647> : vector<8xi32>
    %88 = vector.multi_reduction <minsi>, %87, %cst_33 [1] : vector<8x128xi32> to vector<8xi32>
    %89 = vector.shape_cast %88 : vector<8xi32> to vector<8x1xi32>
    %90 = vector.broadcast %89 : vector<8x1xi32> to vector<8x128xi32>
    %91 = arith.cmpi eq, %3, %90 : vector<8x128xi32>
    %92 = arith.extui %91 : vector<8x128xi1> to vector<8x128xi32>
    %93 = arith.sitofp %92 : vector<8x128xi32> to vector<8x128xf32>
    %c1_i32 = arith.constant 1 : i32
    %94 = arith.index_cast %c1_i32 : i32 to index
    %c0_34 = arith.constant 0 : index
    %c0_35 = arith.constant 0 : index
    %95 = vector.load %arg1[%94, %c0_34, %c0_35] : memref<7x8x1xi32, #tpu.memory_space<vmem>>, vector<1x8x1xi32>
    %96 = vector.shape_cast %95 : vector<1x8x1xi32> to vector<8x1xi32>
    %97 = vector.broadcast %96 : vector<8x1xi32> to vector<8x128xi32>
    %98 = arith.cmpi eq, %3, %97 : vector<8x128xi32>
    %99 = arith.extui %98 : vector<8x128xi1> to vector<8x128xi32>
    %100 = arith.sitofp %99 : vector<8x128xi32> to vector<8x128xf32>
    %101 = arith.index_cast %c1_i32 : i32 to index
    %102 = memref.load %arg0[%101] : memref<7xi32, #tpu.memory_space<smem>>
    %c0_i32_36 = arith.constant 0 : i32
    %103 = arith.cmpi ne, %102, %c0_i32_36 : i32
    %104 = arith.extui %103 : i1 to i32
    %105 = arith.sitofp %104 : i32 to f32
    %106 = vector.broadcast %105 : f32 to vector<8x128xf32>
    %107 = arith.mulf %106, %100 : vector<8x128xf32>
    %cst_37 = arith.constant 1.000000e+00 : f32
    %108 = arith.subf %cst_37, %105 : f32
    %109 = vector.broadcast %108 : f32 to vector<8x128xf32>
    %110 = arith.mulf %109, %93 : vector<8x128xf32>
    %111 = arith.addf %107, %110 : vector<8x128xf32>
    %c0_38 = arith.constant 0 : index
    %c0_39 = arith.constant 0 : index
    %112 = vector.load %arg5[%c0_38, %c0_39] : memref<128x128xf32, #tpu.memory_space<vmem>>, vector<128x128xf32>
    %cst_40 = arith.constant dense<0.000000e+00> : vector<8x128xf32>
    %113 = tpu.matmul %111, %112, %cst_40 {dimension_numbers = #tpu.dot_dimension_numbers<[1], [0], [0], [1], [0, 0, 1, 1], [], []>} : vector<8x128xf32>, vector<128x128xf32>, vector<8x128xf32> -> vector<8x128xf32>
    %114 = vector.shape_cast %73 : vector<8x128xf32> to vector<1x8x128xf32>
    %115 = vector.broadcast %114 : vector<1x8x128xf32> to vector<8x8x128xf32>
    %116 = arith.mulf %0, %115 : vector<8x8x128xf32>
    %cst_41 = arith.constant dense<0.000000e+00> : vector<8x8xf32>
    %117 = vector.multi_reduction <add>, %116, %cst_41 [2] : vector<8x8x128xf32> to vector<8x8xf32>
    %118 = vector.shape_cast %117 : vector<8x8xf32> to vector<8x8x1xf32>
    %cst_42 = arith.constant dense<0xFF800000> : vector<8x1xf32>
    %119 = vector.multi_reduction <maximumf>, %118, %cst_42 [0] : vector<8x8x1xf32> to vector<8x1xf32>
    %120 = vector.shape_cast %119 : vector<8x1xf32> to vector<1x8x1xf32>
    %121 = vector.broadcast %120 : vector<1x8x1xf32> to vector<8x8x1xf32>
    %122 = arith.subf %118, %121 : vector<8x8x1xf32>
    %123 = math.exp %122 : vector<8x8x1xf32>
    %cst_43 = arith.constant dense<0.000000e+00> : vector<8x1xf32>
    %124 = vector.multi_reduction <add>, %123, %cst_43 [0] : vector<8x8x1xf32> to vector<8x1xf32>
    %125 = vector.shape_cast %124 : vector<8x1xf32> to vector<1x8x1xf32>
    %126 = vector.broadcast %125 : vector<1x8x1xf32> to vector<8x8x1xf32>
    %127 = arith.divf %123, %126 : vector<8x8x1xf32>
    %128 = vector.broadcast %127 : vector<8x8x1xf32> to vector<8x8x128xf32>
    %129 = arith.mulf %128, %0 : vector<8x8x128xf32>
    %cst_44 = arith.constant dense<0.000000e+00> : vector<8x128xf32>
    %130 = vector.multi_reduction <add>, %129, %cst_44 [0] : vector<8x8x128xf32> to vector<8x128xf32>
    %131 = tpu.concatenate %113, %130, %73 in 1 : vector<8x128xf32>, vector<8x128xf32>, vector<8x128xf32> -> vector<8x384xf32>
    %c0_45 = arith.constant 0 : index
    %c0_46 = arith.constant 0 : index
    %132 = vector.load %arg6[%c0_45, %c0_46] : memref<384x512xf32, #tpu.memory_space<vmem>>, vector<384x512xf32>
    %cst_47 = arith.constant dense<0.000000e+00> : vector<8x512xf32>
    %133 = tpu.matmul %131, %132, %cst_47 {dimension_numbers = #tpu.dot_dimension_numbers<[1], [0], [0], [1], [0, 0, 1, 1], [], []>} : vector<8x384xf32>, vector<384x512xf32>, vector<8x512xf32> -> vector<8x512xf32>
    %134 = vector.broadcast %1 : vector<1x512xf32> to vector<8x512xf32>
    %135 = arith.addf %133, %134 : vector<8x512xf32>
    %136 = vector.extract_strided_slice %135 {offsets = [0, 0], sizes = [8, 128], strides = [1, 1]} : vector<8x512xf32> to vector<8x128xf32>
    %137 = arith.negf %136 : vector<8x128xf32>
    %138 = math.exp %137 : vector<8x128xf32>
    %cst_48 = arith.constant 1.000000e+00 : f32
    %139 = vector.broadcast %cst_48 : f32 to vector<8x128xf32>
    %140 = arith.addf %139, %138 : vector<8x128xf32>
    %141 = arith.divf %139, %140 : vector<8x128xf32>
    %142 = vector.extract_strided_slice %135 {offsets = [0, 128], sizes = [8, 128], strides = [1, 1]} : vector<8x512xf32> to vector<8x128xf32>
    %143 = arith.negf %142 : vector<8x128xf32>
    %144 = math.exp %143 : vector<8x128xf32>
    %cst_49 = arith.constant 1.000000e+00 : f32
    %145 = vector.broadcast %cst_49 : f32 to vector<8x128xf32>
    %146 = arith.addf %145, %144 : vector<8x128xf32>
    %147 = arith.divf %145, %146 : vector<8x128xf32>
    %148 = vector.extract_strided_slice %135 {offsets = [0, 256], sizes = [8, 128], strides = [1, 1]} : vector<8x512xf32> to vector<8x128xf32>
    %149 = math.tanh %148 : vector<8x128xf32>
    %150 = vector.extract_strided_slice %135 {offsets = [0, 384], sizes = [8, 128], strides = [1, 1]} : vector<8x512xf32> to vector<8x128xf32>
    %151 = arith.negf %150 : vector<8x128xf32>
    %152 = math.exp %151 : vector<8x128xf32>
    %cst_50 = arith.constant 1.000000e+00 : f32
    %153 = vector.broadcast %cst_50 : f32 to vector<8x128xf32>
    %154 = arith.addf %153, %152 : vector<8x128xf32>
    %155 = arith.divf %153, %154 : vector<8x128xf32>
    %156 = arith.mulf %147, %71 : vector<8x128xf32>
    %157 = arith.mulf %141, %149 : vector<8x128xf32>
    %158 = arith.addf %156, %157 : vector<8x128xf32>
    %159 = math.tanh %158 : vector<8x128xf32>
    %160 = arith.mulf %155, %159 : vector<8x128xf32>
    %c0_51 = arith.constant 0 : index
    %c0_52 = arith.constant 0 : index
    %161 = vector.load %arg8[%c0_51, %c0_52] : memref<128x128xf32, #tpu.memory_space<vmem>>, vector<128x128xf32>
    %cst_53 = arith.constant dense<0.000000e+00> : vector<8x128xf32>
    %162 = tpu.matmul %160, %161, %cst_53 {dimension_numbers = #tpu.dot_dimension_numbers<[1], [0], [0], [1], [0, 0, 1, 1], [], []>} : vector<8x128xf32>, vector<128x128xf32>, vector<8x128xf32> -> vector<8x128xf32>
    %163 = vector.broadcast %2 : vector<1x128xf32> to vector<8x128xf32>
    %164 = arith.addf %162, %163 : vector<8x128xf32>
    %165 = arith.index_cast %c1_i32 : i32 to index
    %c0_54 = arith.constant 0 : index
    %c0_55 = arith.constant 0 : index
    %166 = vector.load %arg10[%165, %c0_54, %c0_55] : memref<7x8x128xf32, #tpu.memory_space<vmem>>, vector<1x8x128xf32>
    %167 = vector.shape_cast %166 : vector<1x8x128xf32> to vector<8x128xf32>
    %168 = vector.shape_cast %164 : vector<8x128xf32> to vector<1x8x128xf32>
    tpu.vector_store %arg10[%165, %c0_54, %c0_55], %168 {strides = array<i32>} : memref<7x8x128xf32, #tpu.memory_space<vmem>>, vector<1x8x128xf32>,
    %cst_56 = arith.constant dense<0xFF800000> : vector<8xf32>
    %169 = vector.multi_reduction <maximumf>, %164, %cst_56 [1] : vector<8x128xf32> to vector<8xf32>
    %170 = vector.shape_cast %169 : vector<8xf32> to vector<8x1xf32>
    %171 = vector.broadcast %170 : vector<8x1xf32> to vector<8x128xf32>
    %172 = arith.cmpf oeq, %164, %171 : vector<8x128xf32>
    %c128_i32_57 = arith.constant 128 : i32
    %173 = vector.broadcast %c128_i32_57 : i32 to vector<8x128xi32>
    %174 = arith.select %172, %3, %173 : vector<8x128xi1>, vector<8x128xi32>
    %cst_58 = arith.constant dense<2147483647> : vector<8xi32>
    %175 = vector.multi_reduction <minsi>, %174, %cst_58 [1] : vector<8x128xi32> to vector<8xi32>
    %176 = vector.shape_cast %175 : vector<8xi32> to vector<8x1xi32>
    %177 = vector.broadcast %176 : vector<8x1xi32> to vector<8x128xi32>
    %178 = arith.cmpi eq, %3, %177 : vector<8x128xi32>
    %179 = arith.extui %178 : vector<8x128xi1> to vector<8x128xi32>
    %180 = arith.sitofp %179 : vector<8x128xi32> to vector<8x128xf32>
    %c2_i32 = arith.constant 2 : i32
    %181 = arith.index_cast %c2_i32 : i32 to index
    %c0_59 = arith.constant 0 : index
    %c0_60 = arith.constant 0 : index
    %182 = vector.load %arg1[%181, %c0_59, %c0_60] : memref<7x8x1xi32, #tpu.memory_space<vmem>>, vector<1x8x1xi32>
    %183 = vector.shape_cast %182 : vector<1x8x1xi32> to vector<8x1xi32>
    %184 = vector.broadcast %183 : vector<8x1xi32> to vector<8x128xi32>
    %185 = arith.cmpi eq, %3, %184 : vector<8x128xi32>
    %186 = arith.extui %185 : vector<8x128xi1> to vector<8x128xi32>
    %187 = arith.sitofp %186 : vector<8x128xi32> to vector<8x128xf32>
    %188 = arith.index_cast %c2_i32 : i32 to index
    %189 = memref.load %arg0[%188] : memref<7xi32, #tpu.memory_space<smem>>
    %c0_i32_61 = arith.constant 0 : i32
    %190 = arith.cmpi ne, %189, %c0_i32_61 : i32
    %191 = arith.extui %190 : i1 to i32
    %192 = arith.sitofp %191 : i32 to f32
    %193 = vector.broadcast %192 : f32 to vector<8x128xf32>
    %194 = arith.mulf %193, %187 : vector<8x128xf32>
    %cst_62 = arith.constant 1.000000e+00 : f32
    %195 = arith.subf %cst_62, %192 : f32
    %196 = vector.broadcast %195 : f32 to vector<8x128xf32>
    %197 = arith.mulf %196, %180 : vector<8x128xf32>
    %198 = arith.addf %194, %197 : vector<8x128xf32>
    %c0_63 = arith.constant 0 : index
    %c0_64 = arith.constant 0 : index
    %199 = vector.load %arg5[%c0_63, %c0_64] : memref<128x128xf32, #tpu.memory_space<vmem>>, vector<128x128xf32>
    %cst_65 = arith.constant dense<0.000000e+00> : vector<8x128xf32>
    %200 = tpu.matmul %198, %199, %cst_65 {dimension_numbers = #tpu.dot_dimension_numbers<[1], [0], [0], [1], [0, 0, 1, 1], [], []>} : vector<8x128xf32>, vector<128x128xf32>, vector<8x128xf32> -> vector<8x128xf32>
    %201 = vector.shape_cast %160 : vector<8x128xf32> to vector<1x8x128xf32>
    %202 = vector.broadcast %201 : vector<1x8x128xf32> to vector<8x8x128xf32>
    %203 = arith.mulf %0, %202 : vector<8x8x128xf32>
    %cst_66 = arith.constant dense<0.000000e+00> : vector<8x8xf32>
    %204 = vector.multi_reduction <add>, %203, %cst_66 [2] : vector<8x8x128xf32> to vector<8x8xf32>
    %205 = vector.shape_cast %204 : vector<8x8xf32> to vector<8x8x1xf32>
    %cst_67 = arith.constant dense<0xFF800000> : vector<8x1xf32>
    %206 = vector.multi_reduction <maximumf>, %205, %cst_67 [0] : vector<8x8x1xf32> to vector<8x1xf32>
    %207 = vector.shape_cast %206 : vector<8x1xf32> to vector<1x8x1xf32>
    %208 = vector.broadcast %207 : vector<1x8x1xf32> to vector<8x8x1xf32>
    %209 = arith.subf %205, %208 : vector<8x8x1xf32>
    %210 = math.exp %209 : vector<8x8x1xf32>
    %cst_68 = arith.constant dense<0.000000e+00> : vector<8x1xf32>
    %211 = vector.multi_reduction <add>, %210, %cst_68 [0] : vector<8x8x1xf32> to vector<8x1xf32>
    %212 = vector.shape_cast %211 : vector<8x1xf32> to vector<1x8x1xf32>
    %213 = vector.broadcast %212 : vector<1x8x1xf32> to vector<8x8x1xf32>
    %214 = arith.divf %210, %213 : vector<8x8x1xf32>
    %215 = vector.broadcast %214 : vector<8x8x1xf32> to vector<8x8x128xf32>
    %216 = arith.mulf %215, %0 : vector<8x8x128xf32>
    %cst_69 = arith.constant dense<0.000000e+00> : vector<8x128xf32>
    %217 = vector.multi_reduction <add>, %216, %cst_69 [0] : vector<8x8x128xf32> to vector<8x128xf32>
    %218 = tpu.concatenate %200, %217, %160 in 1 : vector<8x128xf32>, vector<8x128xf32>, vector<8x128xf32> -> vector<8x384xf32>
    %c0_70 = arith.constant 0 : index
    %c0_71 = arith.constant 0 : index
    %219 = vector.load %arg6[%c0_70, %c0_71] : memref<384x512xf32, #tpu.memory_space<vmem>>, vector<384x512xf32>
    %cst_72 = arith.constant dense<0.000000e+00> : vector<8x512xf32>
    %220 = tpu.matmul %218, %219, %cst_72 {dimension_numbers = #tpu.dot_dimension_numbers<[1], [0], [0], [1], [0, 0, 1, 1], [], []>} : vector<8x384xf32>, vector<384x512xf32>, vector<8x512xf32> -> vector<8x512xf32>
    %221 = vector.broadcast %1 : vector<1x512xf32> to vector<8x512xf32>
    %222 = arith.addf %220, %221 : vector<8x512xf32>
    %223 = vector.extract_strided_slice %222 {offsets = [0, 0], sizes = [8, 128], strides = [1, 1]} : vector<8x512xf32> to vector<8x128xf32>
    %224 = arith.negf %223 : vector<8x128xf32>
    %225 = math.exp %224 : vector<8x128xf32>
    %cst_73 = arith.constant 1.000000e+00 : f32
    %226 = vector.broadcast %cst_73 : f32 to vector<8x128xf32>
    %227 = arith.addf %226, %225 : vector<8x128xf32>
    %228 = arith.divf %226, %227 : vector<8x128xf32>
    %229 = vector.extract_strided_slice %222 {offsets = [0, 128], sizes = [8, 128], strides = [1, 1]} : vector<8x512xf32> to vector<8x128xf32>
    %230 = arith.negf %229 : vector<8x128xf32>
    %231 = math.exp %230 : vector<8x128xf32>
    %cst_74 = arith.constant 1.000000e+00 : f32
    %232 = vector.broadcast %cst_74 : f32 to vector<8x128xf32>
    %233 = arith.addf %232, %231 : vector<8x128xf32>
    %234 = arith.divf %232, %233 : vector<8x128xf32>
    %235 = vector.extract_strided_slice %222 {offsets = [0, 256], sizes = [8, 128], strides = [1, 1]} : vector<8x512xf32> to vector<8x128xf32>
    %236 = math.tanh %235 : vector<8x128xf32>
    %237 = vector.extract_strided_slice %222 {offsets = [0, 384], sizes = [8, 128], strides = [1, 1]} : vector<8x512xf32> to vector<8x128xf32>
    %238 = arith.negf %237 : vector<8x128xf32>
    %239 = math.exp %238 : vector<8x128xf32>
    %cst_75 = arith.constant 1.000000e+00 : f32
    %240 = vector.broadcast %cst_75 : f32 to vector<8x128xf32>
    %241 = arith.addf %240, %239 : vector<8x128xf32>
    %242 = arith.divf %240, %241 : vector<8x128xf32>
    %243 = arith.mulf %234, %158 : vector<8x128xf32>
    %244 = arith.mulf %228, %236 : vector<8x128xf32>
    %245 = arith.addf %243, %244 : vector<8x128xf32>
    %246 = math.tanh %245 : vector<8x128xf32>
    %247 = arith.mulf %242, %246 : vector<8x128xf32>
    %c0_76 = arith.constant 0 : index
    %c0_77 = arith.constant 0 : index
    %248 = vector.load %arg8[%c0_76, %c0_77] : memref<128x128xf32, #tpu.memory_space<vmem>>, vector<128x128xf32>
    %cst_78 = arith.constant dense<0.000000e+00> : vector<8x128xf32>
    %249 = tpu.matmul %247, %248, %cst_78 {dimension_numbers = #tpu.dot_dimension_numbers<[1], [0], [0], [1], [0, 0, 1, 1], [], []>} : vector<8x128xf32>, vector<128x128xf32>, vector<8x128xf32> -> vector<8x128xf32>
    %250 = vector.broadcast %2 : vector<1x128xf32> to vector<8x128xf32>
    %251 = arith.addf %249, %250 : vector<8x128xf32>
    %252 = arith.index_cast %c2_i32 : i32 to index
    %c0_79 = arith.constant 0 : index
    %c0_80 = arith.constant 0 : index
    %253 = vector.load %arg10[%252, %c0_79, %c0_80] : memref<7x8x128xf32, #tpu.memory_space<vmem>>, vector<1x8x128xf32>
    %254 = vector.shape_cast %253 : vector<1x8x128xf32> to vector<8x128xf32>
    %255 = vector.shape_cast %251 : vector<8x128xf32> to vector<1x8x128xf32>
    tpu.vector_store %arg10[%252, %c0_79, %c0_80], %255 {strides = array<i32>} : memref<7x8x128xf32, #tpu.memory_space<vmem>>, vector<1x8x128xf32>,
    %cst_81 = arith.constant dense<0xFF800000> : vector<8xf32>
    %256 = vector.multi_reduction <maximumf>, %251, %cst_81 [1] : vector<8x128xf32> to vector<8xf32>
    %257 = vector.shape_cast %256 : vector<8xf32> to vector<8x1xf32>
    %258 = vector.broadcast %257 : vector<8x1xf32> to vector<8x128xf32>
    %259 = arith.cmpf oeq, %251, %258 : vector<8x128xf32>
    %c128_i32_82 = arith.constant 128 : i32
    %260 = vector.broadcast %c128_i32_82 : i32 to vector<8x128xi32>
    %261 = arith.select %259, %3, %260 : vector<8x128xi1>, vector<8x128xi32>
    %cst_83 = arith.constant dense<2147483647> : vector<8xi32>
    %262 = vector.multi_reduction <minsi>, %261, %cst_83 [1] : vector<8x128xi32> to vector<8xi32>
    %263 = vector.shape_cast %262 : vector<8xi32> to vector<8x1xi32>
    %264 = vector.broadcast %263 : vector<8x1xi32> to vector<8x128xi32>
    %265 = arith.cmpi eq, %3, %264 : vector<8x128xi32>
    %266 = arith.extui %265 : vector<8x128xi1> to vector<8x128xi32>
    %267 = arith.sitofp %266 : vector<8x128xi32> to vector<8x128xf32>
    %c3_i32 = arith.constant 3 : i32
    %268 = arith.index_cast %c3_i32 : i32 to index
    %c0_84 = arith.constant 0 : index
    %c0_85 = arith.constant 0 : index
    %269 = vector.load %arg1[%268, %c0_84, %c0_85] : memref<7x8x1xi32, #tpu.memory_space<vmem>>, vector<1x8x1xi32>
    %270 = vector.shape_cast %269 : vector<1x8x1xi32> to vector<8x1xi32>
    %271 = vector.broadcast %270 : vector<8x1xi32> to vector<8x128xi32>
    %272 = arith.cmpi eq, %3, %271 : vector<8x128xi32>
    %273 = arith.extui %272 : vector<8x128xi1> to vector<8x128xi32>
    %274 = arith.sitofp %273 : vector<8x128xi32> to vector<8x128xf32>
    %275 = arith.index_cast %c3_i32 : i32 to index
    %276 = memref.load %arg0[%275] : memref<7xi32, #tpu.memory_space<smem>>
    %c0_i32_86 = arith.constant 0 : i32
    %277 = arith.cmpi ne, %276, %c0_i32_86 : i32
    %278 = arith.extui %277 : i1 to i32
    %279 = arith.sitofp %278 : i32 to f32
    %280 = vector.broadcast %279 : f32 to vector<8x128xf32>
    %281 = arith.mulf %280, %274 : vector<8x128xf32>
    %cst_87 = arith.constant 1.000000e+00 : f32
    %282 = arith.subf %cst_87, %279 : f32
    %283 = vector.broadcast %282 : f32 to vector<8x128xf32>
    %284 = arith.mulf %283, %267 : vector<8x128xf32>
    %285 = arith.addf %281, %284 : vector<8x128xf32>
    %c0_88 = arith.constant 0 : index
    %c0_89 = arith.constant 0 : index
    %286 = vector.load %arg5[%c0_88, %c0_89] : memref<128x128xf32, #tpu.memory_space<vmem>>, vector<128x128xf32>
    %cst_90 = arith.constant dense<0.000000e+00> : vector<8x128xf32>
    %287 = tpu.matmul %285, %286, %cst_90 {dimension_numbers = #tpu.dot_dimension_numbers<[1], [0], [0], [1], [0, 0, 1, 1], [], []>} : vector<8x128xf32>, vector<128x128xf32>, vector<8x128xf32> -> vector<8x128xf32>
    %288 = vector.shape_cast %247 : vector<8x128xf32> to vector<1x8x128xf32>
    %289 = vector.broadcast %288 : vector<1x8x128xf32> to vector<8x8x128xf32>
    %290 = arith.mulf %0, %289 : vector<8x8x128xf32>
    %cst_91 = arith.constant dense<0.000000e+00> : vector<8x8xf32>
    %291 = vector.multi_reduction <add>, %290, %cst_91 [2] : vector<8x8x128xf32> to vector<8x8xf32>
    %292 = vector.shape_cast %291 : vector<8x8xf32> to vector<8x8x1xf32>
    %cst_92 = arith.constant dense<0xFF800000> : vector<8x1xf32>
    %293 = vector.multi_reduction <maximumf>, %292, %cst_92 [0] : vector<8x8x1xf32> to vector<8x1xf32>
    %294 = vector.shape_cast %293 : vector<8x1xf32> to vector<1x8x1xf32>
    %295 = vector.broadcast %294 : vector<1x8x1xf32> to vector<8x8x1xf32>
    %296 = arith.subf %292, %295 : vector<8x8x1xf32>
    %297 = math.exp %296 : vector<8x8x1xf32>
    %cst_93 = arith.constant dense<0.000000e+00> : vector<8x1xf32>
    %298 = vector.multi_reduction <add>, %297, %cst_93 [0] : vector<8x8x1xf32> to vector<8x1xf32>
    %299 = vector.shape_cast %298 : vector<8x1xf32> to vector<1x8x1xf32>
    %300 = vector.broadcast %299 : vector<1x8x1xf32> to vector<8x8x1xf32>
    %301 = arith.divf %297, %300 : vector<8x8x1xf32>
    %302 = vector.broadcast %301 : vector<8x8x1xf32> to vector<8x8x128xf32>
    %303 = arith.mulf %302, %0 : vector<8x8x128xf32>
    %cst_94 = arith.constant dense<0.000000e+00> : vector<8x128xf32>
    %304 = vector.multi_reduction <add>, %303, %cst_94 [0] : vector<8x8x128xf32> to vector<8x128xf32>
    %305 = tpu.concatenate %287, %304, %247 in 1 : vector<8x128xf32>, vector<8x128xf32>, vector<8x128xf32> -> vector<8x384xf32>
    %c0_95 = arith.constant 0 : index
    %c0_96 = arith.constant 0 : index
    %306 = vector.load %arg6[%c0_95, %c0_96] : memref<384x512xf32, #tpu.memory_space<vmem>>, vector<384x512xf32>
    %cst_97 = arith.constant dense<0.000000e+00> : vector<8x512xf32>
    %307 = tpu.matmul %305, %306, %cst_97 {dimension_numbers = #tpu.dot_dimension_numbers<[1], [0], [0], [1], [0, 0, 1, 1], [], []>} : vector<8x384xf32>, vector<384x512xf32>, vector<8x512xf32> -> vector<8x512xf32>
    %308 = vector.broadcast %1 : vector<1x512xf32> to vector<8x512xf32>
    %309 = arith.addf %307, %308 : vector<8x512xf32>
    %310 = vector.extract_strided_slice %309 {offsets = [0, 0], sizes = [8, 128], strides = [1, 1]} : vector<8x512xf32> to vector<8x128xf32>
    %311 = arith.negf %310 : vector<8x128xf32>
    %312 = math.exp %311 : vector<8x128xf32>
    %cst_98 = arith.constant 1.000000e+00 : f32
    %313 = vector.broadcast %cst_98 : f32 to vector<8x128xf32>
    %314 = arith.addf %313, %312 : vector<8x128xf32>
    %315 = arith.divf %313, %314 : vector<8x128xf32>
    %316 = vector.extract_strided_slice %309 {offsets = [0, 128], sizes = [8, 128], strides = [1, 1]} : vector<8x512xf32> to vector<8x128xf32>
    %317 = arith.negf %316 : vector<8x128xf32>
    %318 = math.exp %317 : vector<8x128xf32>
    %cst_99 = arith.constant 1.000000e+00 : f32
    %319 = vector.broadcast %cst_99 : f32 to vector<8x128xf32>
    %320 = arith.addf %319, %318 : vector<8x128xf32>
    %321 = arith.divf %319, %320 : vector<8x128xf32>
    %322 = vector.extract_strided_slice %309 {offsets = [0, 256], sizes = [8, 128], strides = [1, 1]} : vector<8x512xf32> to vector<8x128xf32>
    %323 = math.tanh %322 : vector<8x128xf32>
    %324 = vector.extract_strided_slice %309 {offsets = [0, 384], sizes = [8, 128], strides = [1, 1]} : vector<8x512xf32> to vector<8x128xf32>
    %325 = arith.negf %324 : vector<8x128xf32>
    %326 = math.exp %325 : vector<8x128xf32>
    %cst_100 = arith.constant 1.000000e+00 : f32
    %327 = vector.broadcast %cst_100 : f32 to vector<8x128xf32>
    %328 = arith.addf %327, %326 : vector<8x128xf32>
    %329 = arith.divf %327, %328 : vector<8x128xf32>
    %330 = arith.mulf %321, %245 : vector<8x128xf32>
    %331 = arith.mulf %315, %323 : vector<8x128xf32>
    %332 = arith.addf %330, %331 : vector<8x128xf32>
    %333 = math.tanh %332 : vector<8x128xf32>
    %334 = arith.mulf %329, %333 : vector<8x128xf32>
    %c0_101 = arith.constant 0 : index
    %c0_102 = arith.constant 0 : index
    %335 = vector.load %arg8[%c0_101, %c0_102] : memref<128x128xf32, #tpu.memory_space<vmem>>, vector<128x128xf32>
    %cst_103 = arith.constant dense<0.000000e+00> : vector<8x128xf32>
    %336 = tpu.matmul %334, %335, %cst_103 {dimension_numbers = #tpu.dot_dimension_numbers<[1], [0], [0], [1], [0, 0, 1, 1], [], []>} : vector<8x128xf32>, vector<128x128xf32>, vector<8x128xf32> -> vector<8x128xf32>
    %337 = vector.broadcast %2 : vector<1x128xf32> to vector<8x128xf32>
    %338 = arith.addf %336, %337 : vector<8x128xf32>
    %339 = arith.index_cast %c3_i32 : i32 to index
    %c0_104 = arith.constant 0 : index
    %c0_105 = arith.constant 0 : index
    %340 = vector.load %arg10[%339, %c0_104, %c0_105] : memref<7x8x128xf32, #tpu.memory_space<vmem>>, vector<1x8x128xf32>
    %341 = vector.shape_cast %340 : vector<1x8x128xf32> to vector<8x128xf32>
    %342 = vector.shape_cast %338 : vector<8x128xf32> to vector<1x8x128xf32>
    tpu.vector_store %arg10[%339, %c0_104, %c0_105], %342 {strides = array<i32>} : memref<7x8x128xf32, #tpu.memory_space<vmem>>, vector<1x8x128xf32>,
    %cst_106 = arith.constant dense<0xFF800000> : vector<8xf32>
    %343 = vector.multi_reduction <maximumf>, %338, %cst_106 [1] : vector<8x128xf32> to vector<8xf32>
    %344 = vector.shape_cast %343 : vector<8xf32> to vector<8x1xf32>
    %345 = vector.broadcast %344 : vector<8x1xf32> to vector<8x128xf32>
    %346 = arith.cmpf oeq, %338, %345 : vector<8x128xf32>
    %c128_i32_107 = arith.constant 128 : i32
    %347 = vector.broadcast %c128_i32_107 : i32 to vector<8x128xi32>
    %348 = arith.select %346, %3, %347 : vector<8x128xi1>, vector<8x128xi32>
    %cst_108 = arith.constant dense<2147483647> : vector<8xi32>
    %349 = vector.multi_reduction <minsi>, %348, %cst_108 [1] : vector<8x128xi32> to vector<8xi32>
    %350 = vector.shape_cast %349 : vector<8xi32> to vector<8x1xi32>
    %351 = vector.broadcast %350 : vector<8x1xi32> to vector<8x128xi32>
    %352 = arith.cmpi eq, %3, %351 : vector<8x128xi32>
    %353 = arith.extui %352 : vector<8x128xi1> to vector<8x128xi32>
    %354 = arith.sitofp %353 : vector<8x128xi32> to vector<8x128xf32>
    %c4_i32 = arith.constant 4 : i32
    %355 = arith.index_cast %c4_i32 : i32 to index
    %c0_109 = arith.constant 0 : index
    %c0_110 = arith.constant 0 : index
    %356 = vector.load %arg1[%355, %c0_109, %c0_110] : memref<7x8x1xi32, #tpu.memory_space<vmem>>, vector<1x8x1xi32>
    %357 = vector.shape_cast %356 : vector<1x8x1xi32> to vector<8x1xi32>
    %358 = vector.broadcast %357 : vector<8x1xi32> to vector<8x128xi32>
    %359 = arith.cmpi eq, %3, %358 : vector<8x128xi32>
    %360 = arith.extui %359 : vector<8x128xi1> to vector<8x128xi32>
    %361 = arith.sitofp %360 : vector<8x128xi32> to vector<8x128xf32>
    %362 = arith.index_cast %c4_i32 : i32 to index
    %363 = memref.load %arg0[%362] : memref<7xi32, #tpu.memory_space<smem>>
    %c0_i32_111 = arith.constant 0 : i32
    %364 = arith.cmpi ne, %363, %c0_i32_111 : i32
    %365 = arith.extui %364 : i1 to i32
    %366 = arith.sitofp %365 : i32 to f32
    %367 = vector.broadcast %366 : f32 to vector<8x128xf32>
    %368 = arith.mulf %367, %361 : vector<8x128xf32>
    %cst_112 = arith.constant 1.000000e+00 : f32
    %369 = arith.subf %cst_112, %366 : f32
    %370 = vector.broadcast %369 : f32 to vector<8x128xf32>
    %371 = arith.mulf %370, %354 : vector<8x128xf32>
    %372 = arith.addf %368, %371 : vector<8x128xf32>
    %c0_113 = arith.constant 0 : index
    %c0_114 = arith.constant 0 : index
    %373 = vector.load %arg5[%c0_113, %c0_114] : memref<128x128xf32, #tpu.memory_space<vmem>>, vector<128x128xf32>
    %cst_115 = arith.constant dense<0.000000e+00> : vector<8x128xf32>
    %374 = tpu.matmul %372, %373, %cst_115 {dimension_numbers = #tpu.dot_dimension_numbers<[1], [0], [0], [1], [0, 0, 1, 1], [], []>} : vector<8x128xf32>, vector<128x128xf32>, vector<8x128xf32> -> vector<8x128xf32>
    %375 = vector.shape_cast %334 : vector<8x128xf32> to vector<1x8x128xf32>
    %376 = vector.broadcast %375 : vector<1x8x128xf32> to vector<8x8x128xf32>
    %377 = arith.mulf %0, %376 : vector<8x8x128xf32>
    %cst_116 = arith.constant dense<0.000000e+00> : vector<8x8xf32>
    %378 = vector.multi_reduction <add>, %377, %cst_116 [2] : vector<8x8x128xf32> to vector<8x8xf32>
    %379 = vector.shape_cast %378 : vector<8x8xf32> to vector<8x8x1xf32>
    %cst_117 = arith.constant dense<0xFF800000> : vector<8x1xf32>
    %380 = vector.multi_reduction <maximumf>, %379, %cst_117 [0] : vector<8x8x1xf32> to vector<8x1xf32>
    %381 = vector.shape_cast %380 : vector<8x1xf32> to vector<1x8x1xf32>
    %382 = vector.broadcast %381 : vector<1x8x1xf32> to vector<8x8x1xf32>
    %383 = arith.subf %379, %382 : vector<8x8x1xf32>
    %384 = math.exp %383 : vector<8x8x1xf32>
    %cst_118 = arith.constant dense<0.000000e+00> : vector<8x1xf32>
    %385 = vector.multi_reduction <add>, %384, %cst_118 [0] : vector<8x8x1xf32> to vector<8x1xf32>
    %386 = vector.shape_cast %385 : vector<8x1xf32> to vector<1x8x1xf32>
    %387 = vector.broadcast %386 : vector<1x8x1xf32> to vector<8x8x1xf32>
    %388 = arith.divf %384, %387 : vector<8x8x1xf32>
    %389 = vector.broadcast %388 : vector<8x8x1xf32> to vector<8x8x128xf32>
    %390 = arith.mulf %389, %0 : vector<8x8x128xf32>
    %cst_119 = arith.constant dense<0.000000e+00> : vector<8x128xf32>
    %391 = vector.multi_reduction <add>, %390, %cst_119 [0] : vector<8x8x128xf32> to vector<8x128xf32>
    %392 = tpu.concatenate %374, %391, %334 in 1 : vector<8x128xf32>, vector<8x128xf32>, vector<8x128xf32> -> vector<8x384xf32>
    %c0_120 = arith.constant 0 : index
    %c0_121 = arith.constant 0 : index
    %393 = vector.load %arg6[%c0_120, %c0_121] : memref<384x512xf32, #tpu.memory_space<vmem>>, vector<384x512xf32>
    %cst_122 = arith.constant dense<0.000000e+00> : vector<8x512xf32>
    %394 = tpu.matmul %392, %393, %cst_122 {dimension_numbers = #tpu.dot_dimension_numbers<[1], [0], [0], [1], [0, 0, 1, 1], [], []>} : vector<8x384xf32>, vector<384x512xf32>, vector<8x512xf32> -> vector<8x512xf32>
    %395 = vector.broadcast %1 : vector<1x512xf32> to vector<8x512xf32>
    %396 = arith.addf %394, %395 : vector<8x512xf32>
    %397 = vector.extract_strided_slice %396 {offsets = [0, 0], sizes = [8, 128], strides = [1, 1]} : vector<8x512xf32> to vector<8x128xf32>
    %398 = arith.negf %397 : vector<8x128xf32>
    %399 = math.exp %398 : vector<8x128xf32>
    %cst_123 = arith.constant 1.000000e+00 : f32
    %400 = vector.broadcast %cst_123 : f32 to vector<8x128xf32>
    %401 = arith.addf %400, %399 : vector<8x128xf32>
    %402 = arith.divf %400, %401 : vector<8x128xf32>
    %403 = vector.extract_strided_slice %396 {offsets = [0, 128], sizes = [8, 128], strides = [1, 1]} : vector<8x512xf32> to vector<8x128xf32>
    %404 = arith.negf %403 : vector<8x128xf32>
    %405 = math.exp %404 : vector<8x128xf32>
    %cst_124 = arith.constant 1.000000e+00 : f32
    %406 = vector.broadcast %cst_124 : f32 to vector<8x128xf32>
    %407 = arith.addf %406, %405 : vector<8x128xf32>
    %408 = arith.divf %406, %407 : vector<8x128xf32>
    %409 = vector.extract_strided_slice %396 {offsets = [0, 256], sizes = [8, 128], strides = [1, 1]} : vector<8x512xf32> to vector<8x128xf32>
    %410 = math.tanh %409 : vector<8x128xf32>
    %411 = vector.extract_strided_slice %396 {offsets = [0, 384], sizes = [8, 128], strides = [1, 1]} : vector<8x512xf32> to vector<8x128xf32>
    %412 = arith.negf %411 : vector<8x128xf32>
    %413 = math.exp %412 : vector<8x128xf32>
    %cst_125 = arith.constant 1.000000e+00 : f32
    %414 = vector.broadcast %cst_125 : f32 to vector<8x128xf32>
    %415 = arith.addf %414, %413 : vector<8x128xf32>
    %416 = arith.divf %414, %415 : vector<8x128xf32>
    %417 = arith.mulf %408, %332 : vector<8x128xf32>
    %418 = arith.mulf %402, %410 : vector<8x128xf32>
    %419 = arith.addf %417, %418 : vector<8x128xf32>
    %420 = math.tanh %419 : vector<8x128xf32>
    %421 = arith.mulf %416, %420 : vector<8x128xf32>
    %c0_126 = arith.constant 0 : index
    %c0_127 = arith.constant 0 : index
    %422 = vector.load %arg8[%c0_126, %c0_127] : memref<128x128xf32, #tpu.memory_space<vmem>>, vector<128x128xf32>
    %cst_128 = arith.constant dense<0.000000e+00> : vector<8x128xf32>
    %423 = tpu.matmul %421, %422, %cst_128 {dimension_numbers = #tpu.dot_dimension_numbers<[1], [0], [0], [1], [0, 0, 1, 1], [], []>} : vector<8x128xf32>, vector<128x128xf32>, vector<8x128xf32> -> vector<8x128xf32>
    %424 = vector.broadcast %2 : vector<1x128xf32> to vector<8x128xf32>
    %425 = arith.addf %423, %424 : vector<8x128xf32>
    %426 = arith.index_cast %c4_i32 : i32 to index
    %c0_129 = arith.constant 0 : index
    %c0_130 = arith.constant 0 : index
    %427 = vector.load %arg10[%426, %c0_129, %c0_130] : memref<7x8x128xf32, #tpu.memory_space<vmem>>, vector<1x8x128xf32>
    %428 = vector.shape_cast %427 : vector<1x8x128xf32> to vector<8x128xf32>
    %429 = vector.shape_cast %425 : vector<8x128xf32> to vector<1x8x128xf32>
    tpu.vector_store %arg10[%426, %c0_129, %c0_130], %429 {strides = array<i32>} : memref<7x8x128xf32, #tpu.memory_space<vmem>>, vector<1x8x128xf32>,
    %cst_131 = arith.constant dense<0xFF800000> : vector<8xf32>
    %430 = vector.multi_reduction <maximumf>, %425, %cst_131 [1] : vector<8x128xf32> to vector<8xf32>
    %431 = vector.shape_cast %430 : vector<8xf32> to vector<8x1xf32>
    %432 = vector.broadcast %431 : vector<8x1xf32> to vector<8x128xf32>
    %433 = arith.cmpf oeq, %425, %432 : vector<8x128xf32>
    %c128_i32_132 = arith.constant 128 : i32
    %434 = vector.broadcast %c128_i32_132 : i32 to vector<8x128xi32>
    %435 = arith.select %433, %3, %434 : vector<8x128xi1>, vector<8x128xi32>
    %cst_133 = arith.constant dense<2147483647> : vector<8xi32>
    %436 = vector.multi_reduction <minsi>, %435, %cst_133 [1] : vector<8x128xi32> to vector<8xi32>
    %437 = vector.shape_cast %436 : vector<8xi32> to vector<8x1xi32>
    %438 = vector.broadcast %437 : vector<8x1xi32> to vector<8x128xi32>
    %439 = arith.cmpi eq, %3, %438 : vector<8x128xi32>
    %440 = arith.extui %439 : vector<8x128xi1> to vector<8x128xi32>
    %441 = arith.sitofp %440 : vector<8x128xi32> to vector<8x128xf32>
    %c5_i32 = arith.constant 5 : i32
    %442 = arith.index_cast %c5_i32 : i32 to index
    %c0_134 = arith.constant 0 : index
    %c0_135 = arith.constant 0 : index
    %443 = vector.load %arg1[%442, %c0_134, %c0_135] : memref<7x8x1xi32, #tpu.memory_space<vmem>>, vector<1x8x1xi32>
    %444 = vector.shape_cast %443 : vector<1x8x1xi32> to vector<8x1xi32>
    %445 = vector.broadcast %444 : vector<8x1xi32> to vector<8x128xi32>
    %446 = arith.cmpi eq, %3, %445 : vector<8x128xi32>
    %447 = arith.extui %446 : vector<8x128xi1> to vector<8x128xi32>
    %448 = arith.sitofp %447 : vector<8x128xi32> to vector<8x128xf32>
    %449 = arith.index_cast %c5_i32 : i32 to index
    %450 = memref.load %arg0[%449] : memref<7xi32, #tpu.memory_space<smem>>
    %c0_i32_136 = arith.constant 0 : i32
    %451 = arith.cmpi ne, %450, %c0_i32_136 : i32
    %452 = arith.extui %451 : i1 to i32
    %453 = arith.sitofp %452 : i32 to f32
    %454 = vector.broadcast %453 : f32 to vector<8x128xf32>
    %455 = arith.mulf %454, %448 : vector<8x128xf32>
    %cst_137 = arith.constant 1.000000e+00 : f32
    %456 = arith.subf %cst_137, %453 : f32
    %457 = vector.broadcast %456 : f32 to vector<8x128xf32>
    %458 = arith.mulf %457, %441 : vector<8x128xf32>
    %459 = arith.addf %455, %458 : vector<8x128xf32>
    %c0_138 = arith.constant 0 : index
    %c0_139 = arith.constant 0 : index
    %460 = vector.load %arg5[%c0_138, %c0_139] : memref<128x128xf32, #tpu.memory_space<vmem>>, vector<128x128xf32>
    %cst_140 = arith.constant dense<0.000000e+00> : vector<8x128xf32>
    %461 = tpu.matmul %459, %460, %cst_140 {dimension_numbers = #tpu.dot_dimension_numbers<[1], [0], [0], [1], [0, 0, 1, 1], [], []>} : vector<8x128xf32>, vector<128x128xf32>, vector<8x128xf32> -> vector<8x128xf32>
    %462 = vector.shape_cast %421 : vector<8x128xf32> to vector<1x8x128xf32>
    %463 = vector.broadcast %462 : vector<1x8x128xf32> to vector<8x8x128xf32>
    %464 = arith.mulf %0, %463 : vector<8x8x128xf32>
    %cst_141 = arith.constant dense<0.000000e+00> : vector<8x8xf32>
    %465 = vector.multi_reduction <add>, %464, %cst_141 [2] : vector<8x8x128xf32> to vector<8x8xf32>
    %466 = vector.shape_cast %465 : vector<8x8xf32> to vector<8x8x1xf32>
    %cst_142 = arith.constant dense<0xFF800000> : vector<8x1xf32>
    %467 = vector.multi_reduction <maximumf>, %466, %cst_142 [0] : vector<8x8x1xf32> to vector<8x1xf32>
    %468 = vector.shape_cast %467 : vector<8x1xf32> to vector<1x8x1xf32>
    %469 = vector.broadcast %468 : vector<1x8x1xf32> to vector<8x8x1xf32>
    %470 = arith.subf %466, %469 : vector<8x8x1xf32>
    %471 = math.exp %470 : vector<8x8x1xf32>
    %cst_143 = arith.constant dense<0.000000e+00> : vector<8x1xf32>
    %472 = vector.multi_reduction <add>, %471, %cst_143 [0] : vector<8x8x1xf32> to vector<8x1xf32>
    %473 = vector.shape_cast %472 : vector<8x1xf32> to vector<1x8x1xf32>
    %474 = vector.broadcast %473 : vector<1x8x1xf32> to vector<8x8x1xf32>
    %475 = arith.divf %471, %474 : vector<8x8x1xf32>
    %476 = vector.broadcast %475 : vector<8x8x1xf32> to vector<8x8x128xf32>
    %477 = arith.mulf %476, %0 : vector<8x8x128xf32>
    %cst_144 = arith.constant dense<0.000000e+00> : vector<8x128xf32>
    %478 = vector.multi_reduction <add>, %477, %cst_144 [0] : vector<8x8x128xf32> to vector<8x128xf32>
    %479 = tpu.concatenate %461, %478, %421 in 1 : vector<8x128xf32>, vector<8x128xf32>, vector<8x128xf32> -> vector<8x384xf32>
    %c0_145 = arith.constant 0 : index
    %c0_146 = arith.constant 0 : index
    %480 = vector.load %arg6[%c0_145, %c0_146] : memref<384x512xf32, #tpu.memory_space<vmem>>, vector<384x512xf32>
    %cst_147 = arith.constant dense<0.000000e+00> : vector<8x512xf32>
    %481 = tpu.matmul %479, %480, %cst_147 {dimension_numbers = #tpu.dot_dimension_numbers<[1], [0], [0], [1], [0, 0, 1, 1], [], []>} : vector<8x384xf32>, vector<384x512xf32>, vector<8x512xf32> -> vector<8x512xf32>
    %482 = vector.broadcast %1 : vector<1x512xf32> to vector<8x512xf32>
    %483 = arith.addf %481, %482 : vector<8x512xf32>
    %484 = vector.extract_strided_slice %483 {offsets = [0, 0], sizes = [8, 128], strides = [1, 1]} : vector<8x512xf32> to vector<8x128xf32>
    %485 = arith.negf %484 : vector<8x128xf32>
    %486 = math.exp %485 : vector<8x128xf32>
    %cst_148 = arith.constant 1.000000e+00 : f32
    %487 = vector.broadcast %cst_148 : f32 to vector<8x128xf32>
    %488 = arith.addf %487, %486 : vector<8x128xf32>
    %489 = arith.divf %487, %488 : vector<8x128xf32>
    %490 = vector.extract_strided_slice %483 {offsets = [0, 128], sizes = [8, 128], strides = [1, 1]} : vector<8x512xf32> to vector<8x128xf32>
    %491 = arith.negf %490 : vector<8x128xf32>
    %492 = math.exp %491 : vector<8x128xf32>
    %cst_149 = arith.constant 1.000000e+00 : f32
    %493 = vector.broadcast %cst_149 : f32 to vector<8x128xf32>
    %494 = arith.addf %493, %492 : vector<8x128xf32>
    %495 = arith.divf %493, %494 : vector<8x128xf32>
    %496 = vector.extract_strided_slice %483 {offsets = [0, 256], sizes = [8, 128], strides = [1, 1]} : vector<8x512xf32> to vector<8x128xf32>
    %497 = math.tanh %496 : vector<8x128xf32>
    %498 = vector.extract_strided_slice %483 {offsets = [0, 384], sizes = [8, 128], strides = [1, 1]} : vector<8x512xf32> to vector<8x128xf32>
    %499 = arith.negf %498 : vector<8x128xf32>
    %500 = math.exp %499 : vector<8x128xf32>
    %cst_150 = arith.constant 1.000000e+00 : f32
    %501 = vector.broadcast %cst_150 : f32 to vector<8x128xf32>
    %502 = arith.addf %501, %500 : vector<8x128xf32>
    %503 = arith.divf %501, %502 : vector<8x128xf32>
    %504 = arith.mulf %495, %419 : vector<8x128xf32>
    %505 = arith.mulf %489, %497 : vector<8x128xf32>
    %506 = arith.addf %504, %505 : vector<8x128xf32>
    %507 = math.tanh %506 : vector<8x128xf32>
    %508 = arith.mulf %503, %507 : vector<8x128xf32>
    %c0_151 = arith.constant 0 : index
    %c0_152 = arith.constant 0 : index
    %509 = vector.load %arg8[%c0_151, %c0_152] : memref<128x128xf32, #tpu.memory_space<vmem>>, vector<128x128xf32>
    %cst_153 = arith.constant dense<0.000000e+00> : vector<8x128xf32>
    %510 = tpu.matmul %508, %509, %cst_153 {dimension_numbers = #tpu.dot_dimension_numbers<[1], [0], [0], [1], [0, 0, 1, 1], [], []>} : vector<8x128xf32>, vector<128x128xf32>, vector<8x128xf32> -> vector<8x128xf32>
    %511 = vector.broadcast %2 : vector<1x128xf32> to vector<8x128xf32>
    %512 = arith.addf %510, %511 : vector<8x128xf32>
    %513 = arith.index_cast %c5_i32 : i32 to index
    %c0_154 = arith.constant 0 : index
    %c0_155 = arith.constant 0 : index
    %514 = vector.load %arg10[%513, %c0_154, %c0_155] : memref<7x8x128xf32, #tpu.memory_space<vmem>>, vector<1x8x128xf32>
    %515 = vector.shape_cast %514 : vector<1x8x128xf32> to vector<8x128xf32>
    %516 = vector.shape_cast %512 : vector<8x128xf32> to vector<1x8x128xf32>
    tpu.vector_store %arg10[%513, %c0_154, %c0_155], %516 {strides = array<i32>} : memref<7x8x128xf32, #tpu.memory_space<vmem>>, vector<1x8x128xf32>,
    %cst_156 = arith.constant dense<0xFF800000> : vector<8xf32>
    %517 = vector.multi_reduction <maximumf>, %512, %cst_156 [1] : vector<8x128xf32> to vector<8xf32>
    %518 = vector.shape_cast %517 : vector<8xf32> to vector<8x1xf32>
    %519 = vector.broadcast %518 : vector<8x1xf32> to vector<8x128xf32>
    %520 = arith.cmpf oeq, %512, %519 : vector<8x128xf32>
    %c128_i32_157 = arith.constant 128 : i32
    %521 = vector.broadcast %c128_i32_157 : i32 to vector<8x128xi32>
    %522 = arith.select %520, %3, %521 : vector<8x128xi1>, vector<8x128xi32>
    %cst_158 = arith.constant dense<2147483647> : vector<8xi32>
    %523 = vector.multi_reduction <minsi>, %522, %cst_158 [1] : vector<8x128xi32> to vector<8xi32>
    %524 = vector.shape_cast %523 : vector<8xi32> to vector<8x1xi32>
    %525 = vector.broadcast %524 : vector<8x1xi32> to vector<8x128xi32>
    %526 = arith.cmpi eq, %3, %525 : vector<8x128xi32>
    %527 = arith.extui %526 : vector<8x128xi1> to vector<8x128xi32>
    %528 = arith.sitofp %527 : vector<8x128xi32> to vector<8x128xf32>
    %c6_i32 = arith.constant 6 : i32
    %529 = arith.index_cast %c6_i32 : i32 to index
    %c0_159 = arith.constant 0 : index
    %c0_160 = arith.constant 0 : index
    %530 = vector.load %arg1[%529, %c0_159, %c0_160] : memref<7x8x1xi32, #tpu.memory_space<vmem>>, vector<1x8x1xi32>
    %531 = vector.shape_cast %530 : vector<1x8x1xi32> to vector<8x1xi32>
    %532 = vector.broadcast %531 : vector<8x1xi32> to vector<8x128xi32>
    %533 = arith.cmpi eq, %3, %532 : vector<8x128xi32>
    %534 = arith.extui %533 : vector<8x128xi1> to vector<8x128xi32>
    %535 = arith.sitofp %534 : vector<8x128xi32> to vector<8x128xf32>
    %536 = arith.index_cast %c6_i32 : i32 to index
    %537 = memref.load %arg0[%536] : memref<7xi32, #tpu.memory_space<smem>>
    %c0_i32_161 = arith.constant 0 : i32
    %538 = arith.cmpi ne, %537, %c0_i32_161 : i32
    %539 = arith.extui %538 : i1 to i32
    %540 = arith.sitofp %539 : i32 to f32
    %541 = vector.broadcast %540 : f32 to vector<8x128xf32>
    %542 = arith.mulf %541, %535 : vector<8x128xf32>
    %cst_162 = arith.constant 1.000000e+00 : f32
    %543 = arith.subf %cst_162, %540 : f32
    %544 = vector.broadcast %543 : f32 to vector<8x128xf32>
    %545 = arith.mulf %544, %528 : vector<8x128xf32>
    %546 = arith.addf %542, %545 : vector<8x128xf32>
    %c0_163 = arith.constant 0 : index
    %c0_164 = arith.constant 0 : index
    %547 = vector.load %arg5[%c0_163, %c0_164] : memref<128x128xf32, #tpu.memory_space<vmem>>, vector<128x128xf32>
    %cst_165 = arith.constant dense<0.000000e+00> : vector<8x128xf32>
    %548 = tpu.matmul %546, %547, %cst_165 {dimension_numbers = #tpu.dot_dimension_numbers<[1], [0], [0], [1], [0, 0, 1, 1], [], []>} : vector<8x128xf32>, vector<128x128xf32>, vector<8x128xf32> -> vector<8x128xf32>
    %549 = vector.shape_cast %508 : vector<8x128xf32> to vector<1x8x128xf32>
    %550 = vector.broadcast %549 : vector<1x8x128xf32> to vector<8x8x128xf32>
    %551 = arith.mulf %0, %550 : vector<8x8x128xf32>
    %cst_166 = arith.constant dense<0.000000e+00> : vector<8x8xf32>
    %552 = vector.multi_reduction <add>, %551, %cst_166 [2] : vector<8x8x128xf32> to vector<8x8xf32>
    %553 = vector.shape_cast %552 : vector<8x8xf32> to vector<8x8x1xf32>
    %cst_167 = arith.constant dense<0xFF800000> : vector<8x1xf32>
    %554 = vector.multi_reduction <maximumf>, %553, %cst_167 [0] : vector<8x8x1xf32> to vector<8x1xf32>
    %555 = vector.shape_cast %554 : vector<8x1xf32> to vector<1x8x1xf32>
    %556 = vector.broadcast %555 : vector<1x8x1xf32> to vector<8x8x1xf32>
    %557 = arith.subf %553, %556 : vector<8x8x1xf32>
    %558 = math.exp %557 : vector<8x8x1xf32>
    %cst_168 = arith.constant dense<0.000000e+00> : vector<8x1xf32>
    %559 = vector.multi_reduction <add>, %558, %cst_168 [0] : vector<8x8x1xf32> to vector<8x1xf32>
    %560 = vector.shape_cast %559 : vector<8x1xf32> to vector<1x8x1xf32>
    %561 = vector.broadcast %560 : vector<1x8x1xf32> to vector<8x8x1xf32>
    %562 = arith.divf %558, %561 : vector<8x8x1xf32>
    %563 = vector.broadcast %562 : vector<8x8x1xf32> to vector<8x8x128xf32>
    %564 = arith.mulf %563, %0 : vector<8x8x128xf32>
    %cst_169 = arith.constant dense<0.000000e+00> : vector<8x128xf32>
    %565 = vector.multi_reduction <add>, %564, %cst_169 [0] : vector<8x8x128xf32> to vector<8x128xf32>
    %566 = tpu.concatenate %548, %565, %508 in 1 : vector<8x128xf32>, vector<8x128xf32>, vector<8x128xf32> -> vector<8x384xf32>
    %c0_170 = arith.constant 0 : index
    %c0_171 = arith.constant 0 : index
    %567 = vector.load %arg6[%c0_170, %c0_171] : memref<384x512xf32, #tpu.memory_space<vmem>>, vector<384x512xf32>
    %cst_172 = arith.constant dense<0.000000e+00> : vector<8x512xf32>
    %568 = tpu.matmul %566, %567, %cst_172 {dimension_numbers = #tpu.dot_dimension_numbers<[1], [0], [0], [1], [0, 0, 1, 1], [], []>} : vector<8x384xf32>, vector<384x512xf32>, vector<8x512xf32> -> vector<8x512xf32>
    %569 = vector.broadcast %1 : vector<1x512xf32> to vector<8x512xf32>
    %570 = arith.addf %568, %569 : vector<8x512xf32>
    %571 = vector.extract_strided_slice %570 {offsets = [0, 0], sizes = [8, 128], strides = [1, 1]} : vector<8x512xf32> to vector<8x128xf32>
    %572 = arith.negf %571 : vector<8x128xf32>
    %573 = math.exp %572 : vector<8x128xf32>
    %cst_173 = arith.constant 1.000000e+00 : f32
    %574 = vector.broadcast %cst_173 : f32 to vector<8x128xf32>
    %575 = arith.addf %574, %573 : vector<8x128xf32>
    %576 = arith.divf %574, %575 : vector<8x128xf32>
    %577 = vector.extract_strided_slice %570 {offsets = [0, 128], sizes = [8, 128], strides = [1, 1]} : vector<8x512xf32> to vector<8x128xf32>
    %578 = arith.negf %577 : vector<8x128xf32>
    %579 = math.exp %578 : vector<8x128xf32>
    %cst_174 = arith.constant 1.000000e+00 : f32
    %580 = vector.broadcast %cst_174 : f32 to vector<8x128xf32>
    %581 = arith.addf %580, %579 : vector<8x128xf32>
    %582 = arith.divf %580, %581 : vector<8x128xf32>
    %583 = vector.extract_strided_slice %570 {offsets = [0, 256], sizes = [8, 128], strides = [1, 1]} : vector<8x512xf32> to vector<8x128xf32>
    %584 = math.tanh %583 : vector<8x128xf32>
    %585 = vector.extract_strided_slice %570 {offsets = [0, 384], sizes = [8, 128], strides = [1, 1]} : vector<8x512xf32> to vector<8x128xf32>
    %586 = arith.negf %585 : vector<8x128xf32>
    %587 = math.exp %586 : vector<8x128xf32>
    %cst_175 = arith.constant 1.000000e+00 : f32
    %588 = vector.broadcast %cst_175 : f32 to vector<8x128xf32>
    %589 = arith.addf %588, %587 : vector<8x128xf32>
    %590 = arith.divf %588, %589 : vector<8x128xf32>
    %591 = arith.mulf %582, %506 : vector<8x128xf32>
    %592 = arith.mulf %576, %584 : vector<8x128xf32>
    %593 = arith.addf %591, %592 : vector<8x128xf32>
    %594 = math.tanh %593 : vector<8x128xf32>
    %595 = arith.mulf %590, %594 : vector<8x128xf32>
    %c0_176 = arith.constant 0 : index
    %c0_177 = arith.constant 0 : index
    %596 = vector.load %arg8[%c0_176, %c0_177] : memref<128x128xf32, #tpu.memory_space<vmem>>, vector<128x128xf32>
    %cst_178 = arith.constant dense<0.000000e+00> : vector<8x128xf32>
    %597 = tpu.matmul %595, %596, %cst_178 {dimension_numbers = #tpu.dot_dimension_numbers<[1], [0], [0], [1], [0, 0, 1, 1], [], []>} : vector<8x128xf32>, vector<128x128xf32>, vector<8x128xf32> -> vector<8x128xf32>
    %598 = vector.broadcast %2 : vector<1x128xf32> to vector<8x128xf32>
    %599 = arith.addf %597, %598 : vector<8x128xf32>
    %600 = arith.index_cast %c6_i32 : i32 to index
    %c0_179 = arith.constant 0 : index
    %c0_180 = arith.constant 0 : index
    %601 = vector.load %arg10[%600, %c0_179, %c0_180] : memref<7x8x128xf32, #tpu.memory_space<vmem>>, vector<1x8x128xf32>
    %602 = vector.shape_cast %601 : vector<1x8x128xf32> to vector<8x128xf32>
    %603 = vector.shape_cast %599 : vector<8x128xf32> to vector<1x8x128xf32>
    tpu.vector_store %arg10[%600, %c0_179, %c0_180], %603 {strides = array<i32>} : memref<7x8x128xf32, #tpu.memory_space<vmem>>, vector<1x8x128xf32>,
    %cst_181 = arith.constant dense<0xFF800000> : vector<8xf32>
    %604 = vector.multi_reduction <maximumf>, %599, %cst_181 [1] : vector<8x128xf32> to vector<8xf32>
    %605 = vector.shape_cast %604 : vector<8xf32> to vector<8x1xf32>
    %606 = vector.broadcast %605 : vector<8x1xf32> to vector<8x128xf32>
    %607 = arith.cmpf oeq, %599, %606 : vector<8x128xf32>
    %c128_i32_182 = arith.constant 128 : i32
    %608 = vector.broadcast %c128_i32_182 : i32 to vector<8x128xi32>
    %609 = arith.select %607, %3, %608 : vector<8x128xi1>, vector<8x128xi32>
    %cst_183 = arith.constant dense<2147483647> : vector<8xi32>
    %610 = vector.multi_reduction <minsi>, %609, %cst_183 [1] : vector<8x128xi32> to vector<8xi32>
    %611 = vector.shape_cast %610 : vector<8xi32> to vector<8x1xi32>
    %612 = vector.broadcast %611 : vector<8x1xi32> to vector<8x128xi32>
    %613 = arith.cmpi eq, %3, %612 : vector<8x128xi32>
    %614 = arith.extui %613 : vector<8x128xi1> to vector<8x128xi32>
    %615 = arith.sitofp %614 : vector<8x128xi32> to vector<8x128xf32>
    %c7_i32 = arith.constant 7 : i32
    return
  }
}

</mosaic_0001>

<llo_original>
// kernel: _forward_impl.2
$region0: #{_forward_impl.2}
  #allocation0 [shape = 'u32[]', space=smem, size = 0x4, offset = 0x4, fixed_abs, tag = 'smem constant byte address 0x4 - core index']
  #allocation1 [shape = 'u32[144,128]{1,0:T(1,128)}', space=vmem, size = 0x12000, scoped, tag = 'internal scratch']
  %s0 = inlined_call_operand.vmem [shape: f32[8,8,128], index: 0, kind: input, shape index: {}]
  %s1 = inlined_call_operand.vmem [shape: f32[128,512], index: 1, kind: input, shape index: {}]
  %s2 = inlined_call_operand.hbm [shape: f32[128,512], index: 2, kind: input, shape index: {}]
  %s3 = inlined_call_operand.hbm [shape: f32[1,512], index: 3, kind: input, shape index: {}]
  %s4 = inlined_call_operand.vmem [shape: f32[8,8,128], index: 4, kind: output, shape index: {0}]
  %s5 = inlined_call_operand.vmem [shape: f32[8,128], index: 5, kind: output, shape index: {1}]
  %s6 = inlined_call_operand.vmem [shape: f32[8,128], index: 6, kind: output, shape index: {2}]
  %7 = xla_tuple %s4, %s5, %s6
  %s8 = sld [smem:[#allocation0]]
  $region50: #{_forward_impl.2} parent=0
    _
  %s10 = ssub.s32 1, %s8
  %s11 = scalar_select 0, %s10, %s8
  $region1: #{_forward_impl.2} parent=0
    #allocation2 [shape = 'u8[262144]{0}', space=vmem, size = 0x40000, scoped, tag = 'input window, operand 2, single buffered']
    #allocation3 [shape = 's32[1]{0}', space=sflag, size = 0x4, scoped, tag = 'scoped memory for _forward_impl.2']
    #allocation4 [shape = 'u8[2048]{0}', space=vmem, size = 0x800, scoped, tag = 'input window, operand 3, single buffered']
    #allocation5 [shape = 's32[1]{0}', space=sflag, size = 0x4, scoped, tag = 'scoped memory for _forward_impl.2']
    %12 = vsyncpa [#allocation3], 0
    %13 = vsyncpa [#allocation5], 0
    // Predicated region
    $region2: #{_forward_impl.2} parent=1 // pred_check
      _
    $region3: #{_forward_impl.2} parent=1 // pred_check_branch
      %15 = sbr.rel (0) target = $region5
    $region4: #{_forward_impl.2} parent=1 // pred_region
      _
    $region5: #{_forward_impl.2} parent=1 // pred_fallthru
      _
    // Predicated region
    $region6: #{_forward_impl.2} parent=1 // pred_check
      _
    $region7: #{_forward_impl.2} parent=1 // pred_check_branch
      %17 = sbr.rel (0) target = $region9
    $region8: #{_forward_impl.2} parent=1 // pred_region
      _
    $region9: #{_forward_impl.2} parent=1 // pred_fallthru
      _
    // Predicated region
    $region10: #{_forward_impl.2} parent=1 // pred_check
      _
    $region11: #{_forward_impl.2} parent=1 // pred_check_branch
      %19 = sbr.rel (0) target = $region13
    $region12: #{_forward_impl.2} parent=1 // pred_region
      %s21 = ssub.s32 8192, 8192
      %22 = vsyncadd [#allocation3], %s21
      %s23 = sshll.u32 [#allocation2], 4
      %s24 = int_to_ptr.vmem [resolvable:$true] %s23
      %29 = dma.hbm_to_vmem [thread:$0]  %s2, 8192, %s24, [#allocation3], 512, 512, 32
    $region13: #{_forward_impl.2} parent=1 // pred_fallthru
      _
    // Predicated region
    $region14: #{_forward_impl.2} parent=1 // pred_check
      _
    $region15: #{_forward_impl.2} parent=1 // pred_check_branch
      %31 = sbr.rel (0) target = $region17
    $region16: #{_forward_impl.2} parent=1 // pred_region
      %s33 = ssub.s32 64, 64
      %34 = vsyncadd [#allocation5], %s33
      %s36 = sshll.u32 [#allocation4], 4
      %s37 = int_to_ptr.vmem [resolvable:$true] %s36
      %39 = dma.hbm_to_vmem [thread:$0]  %s3, 64, %s37, [#allocation5]
    $region17: #{_forward_impl.2} parent=1 // pred_fallthru
      _
    // Predicated region
    $region18: #{_forward_impl.2} parent=1 // pred_check
      _
    $region19: #{_forward_impl.2} parent=1 // pred_check_branch
      %41 = sbr.rel (0) target = $region21
    $region20: #{_forward_impl.2} parent=1 // pred_region
      %42 = dma.done [#allocation3], 8192
    $region21: #{_forward_impl.2} parent=1 // pred_fallthru
      _
    // Predicated region
    $region22: #{_forward_impl.2} parent=1 // pred_check
      _
    $region23: #{_forward_impl.2} parent=1 // pred_check_branch
      %44 = sbr.rel (0) target = $region25
    $region24: #{_forward_impl.2} parent=1 // pred_region
      %45 = dma.done [#allocation5], 64
    $region25: #{_forward_impl.2} parent=1 // pred_fallthru
      _
    %v46 = vld [vmem:[#allocation4] sm:$0xf]
    %v47 = vld [vmem:[%s0] sm:$0xff]
    %v48 = vld [vmem:[%s1] sm:$0xff]
    %v49 = vld [vmem:[%s1 + $0x8] sm:$0xff]
    %v50 = vld [vmem:[%s1 + $0x10] sm:$0xff]
    %v51 = vld [vmem:[%s1 + $0x18] sm:$0xff]
    %v52 = vld [vmem:[%s1 + $0x20] sm:$0xff]
    %v53 = vld [vmem:[%s1 + $0x28] sm:$0xff]
    %v54 = vld [vmem:[%s1 + $0x30] sm:$0xff]
    %v55 = vld [vmem:[%s1 + $0x38] sm:$0xff]
    %v56 = vld [vmem:[%s1 + $0x40] sm:$0xff]
    %v57 = vld [vmem:[%s1 + $0x48] sm:$0xff]
    %v58 = vld [vmem:[%s1 + $0x50] sm:$0xff]
    %v59 = vld [vmem:[%s1 + $0x58] sm:$0xff]
    %v60 = vld [vmem:[%s1 + $0x60] sm:$0xff]
    %v61 = vld [vmem:[%s1 + $0x68] sm:$0xff]
    %v62 = vld [vmem:[%s1 + $0x70] sm:$0xff]
    %v63 = vld [vmem:[%s1 + $0x78] sm:$0xff]
    %v64 = vld [vmem:[%s1 + $0x80] sm:$0xff]
    %v65 = vld [vmem:[%s1 + $0x88] sm:$0xff]
    %v66 = vld [vmem:[%s1 + $0x90] sm:$0xff]
    %v67 = vld [vmem:[%s1 + $0x98] sm:$0xff]
    %v68 = vld [vmem:[%s1 + $0xa0] sm:$0xff]
    %v69 = vld [vmem:[%s1 + $0xa8] sm:$0xff]
    %v70 = vld [vmem:[%s1 + $0xb0] sm:$0xff]
    %v71 = vld [vmem:[%s1 + $0xb8] sm:$0xff]
    %v72 = vld [vmem:[%s1 + $0xc0] sm:$0xff]
    %v73 = vld [vmem:[%s1 + $0xc8] sm:$0xff]
    %v74 = vld [vmem:[%s1 + $0xd0] sm:$0xff]
    %v75 = vld [vmem:[%s1 + $0xd8] sm:$0xff]
    %v76 = vld [vmem:[%s1 + $0xe0] sm:$0xff]
    %v77 = vld [vmem:[%s1 + $0xe8] sm:$0xff]
    %v78 = vld [vmem:[%s1 + $0xf0] sm:$0xff]
    %v79 = vld [vmem:[%s1 + $0xf8] sm:$0xff]
    %v80 = vld [vmem:[%s1 + $0x100] sm:$0xff]
    %v81 = vld [vmem:[%s1 + $0x108] sm:$0xff]
    %v82 = vld [vmem:[%s1 + $0x110] sm:$0xff]
    %v83 = vld [vmem:[%s1 + $0x118] sm:$0xff]
    %v84 = vld [vmem:[%s1 + $0x120] sm:$0xff]
    %v85 = vld [vmem:[%s1 + $0x128] sm:$0xff]
    %v86 = vld [vmem:[%s1 + $0x130] sm:$0xff]
    %v87 = vld [vmem:[%s1 + $0x138] sm:$0xff]
    %v88 = vld [vmem:[%s1 + $0x140] sm:$0xff]
    %v89 = vld [vmem:[%s1 + $0x148] sm:$0xff]
    %v90 = vld [vmem:[%s1 + $0x150] sm:$0xff]
    %v91 = vld [vmem:[%s1 + $0x158] sm:$0xff]
    %v92 = vld [vmem:[%s1 + $0x160] sm:$0xff]
    %v93 = vld [vmem:[%s1 + $0x168] sm:$0xff]
    %v94 = vld [vmem:[%s1 + $0x170] sm:$0xff]
    %v95 = vld [vmem:[%s1 + $0x178] sm:$0xff]
    %v96 = vld [vmem:[%s1 + $0x180] sm:$0xff]
    %v97 = vld [vmem:[%s1 + $0x188] sm:$0xff]
    %v98 = vld [vmem:[%s1 + $0x190] sm:$0xff]
    %v99 = vld [vmem:[%s1 + $0x198] sm:$0xff]
    %v100 = vld [vmem:[%s1 + $0x1a0] sm:$0xff]
    %v101 = vld [vmem:[%s1 + $0x1a8] sm:$0xff]
    %v102 = vld [vmem:[%s1 + $0x1b0] sm:$0xff]
    %v103 = vld [vmem:[%s1 + $0x1b8] sm:$0xff]
    %v104 = vld [vmem:[%s1 + $0x1c0] sm:$0xff]
    %v105 = vld [vmem:[%s1 + $0x1c8] sm:$0xff]
    %v106 = vld [vmem:[%s1 + $0x1d0] sm:$0xff]
    %v107 = vld [vmem:[%s1 + $0x1d8] sm:$0xff]
    %v108 = vld [vmem:[%s1 + $0x1e0] sm:$0xff]
    %v109 = vld [vmem:[%s1 + $0x1e8] sm:$0xff]
    %v110 = vld [vmem:[%s1 + $0x1f0] sm:$0xff]
    %v111 = vld [vmem:[%s1 + $0x1f8] sm:$0xff]
    %v112 = vld [vmem:[#allocation2] sm:$0xff]
    %v113 = vld [vmem:[#allocation2 + $0x8] sm:$0xff]
    %v114 = vld [vmem:[#allocation2 + $0x10] sm:$0xff]
    %v115 = vld [vmem:[#allocation2 + $0x18] sm:$0xff]
    %v116 = vld [vmem:[#allocation2 + $0x20] sm:$0xff]
    %v117 = vld [vmem:[#allocation2 + $0x28] sm:$0xff]
    %v118 = vld [vmem:[#allocation2 + $0x30] sm:$0xff]
    %v119 = vld [vmem:[#allocation2 + $0x38] sm:$0xff]
    %v120 = vld [vmem:[#allocation2 + $0x40] sm:$0xff]
    %v121 = vld [vmem:[#allocation2 + $0x48] sm:$0xff]
    %v122 = vld [vmem:[#allocation2 + $0x50] sm:$0xff]
    %v123 = vld [vmem:[#allocation2 + $0x58] sm:$0xff]
    %v124 = vld [vmem:[#allocation2 + $0x60] sm:$0xff]
    %v125 = vld [vmem:[#allocation2 + $0x68] sm:$0xff]
    %v126 = vld [vmem:[#allocation2 + $0x70] sm:$0xff]
    %v127 = vld [vmem:[#allocation2 + $0x78] sm:$0xff]
    %v128 = vld [vmem:[#allocation2 + $0x80] sm:$0xff]
    %v129 = vld [vmem:[#allocation2 + $0x88] sm:$0xff]
    %v130 = vld [vmem:[#allocation2 + $0x90] sm:$0xff]
    %v131 = vld [vmem:[#allocation2 + $0x98] sm:$0xff]
    %v132 = vld [vmem:[#allocation2 + $0xa0] sm:$0xff]
    %v133 = vld [vmem:[#allocation2 + $0xa8] sm:$0xff]
    %v134 = vld [vmem:[#allocation2 + $0xb0] sm:$0xff]
    %v135 = vld [vmem:[#allocation2 + $0xb8] sm:$0xff]
    %v136 = vld [vmem:[#allocation2 + $0xc0] sm:$0xff]
    %v137 = vld [vmem:[#allocation2 + $0xc8] sm:$0xff]
    %v138 = vld [vmem:[#allocation2 + $0xd0] sm:$0xff]
    %v139 = vld [vmem:[#allocation2 + $0xd8] sm:$0xff]
    %v140 = vld [vmem:[#allocation2 + $0xe0] sm:$0xff]
    %v141 = vld [vmem:[#allocation2 + $0xe8] sm:$0xff]
    %v142 = vld [vmem:[#allocation2 + $0xf0] sm:$0xff]
    %v143 = vld [vmem:[#allocation2 + $0xf8] sm:$0xff]
    %v144 = vld [vmem:[#allocation2 + $0x100] sm:$0xff]
    %v145 = vld [vmem:[#allocation2 + $0x108] sm:$0xff]
    %v146 = vld [vmem:[#allocation2 + $0x110] sm:$0xff]
    %v147 = vld [vmem:[#allocation2 + $0x118] sm:$0xff]
    %v148 = vld [vmem:[#allocation2 + $0x120] sm:$0xff]
    %v149 = vld [vmem:[#allocation2 + $0x128] sm:$0xff]
    %v150 = vld [vmem:[#allocation2 + $0x130] sm:$0xff]
    %v151 = vld [vmem:[#allocation2 + $0x138] sm:$0xff]
    %v152 = vld [vmem:[#allocation2 + $0x140] sm:$0xff]
    %v153 = vld [vmem:[#allocation2 + $0x148] sm:$0xff]
    %v154 = vld [vmem:[#allocation2 + $0x150] sm:$0xff]
    %v155 = vld [vmem:[#allocation2 + $0x158] sm:$0xff]
    %v156 = vld [vmem:[#allocation2 + $0x160] sm:$0xff]
    %v157 = vld [vmem:[#allocation2 + $0x168] sm:$0xff]
    %v158 = vld [vmem:[#allocation2 + $0x170] sm:$0xff]
    %v159 = vld [vmem:[#allocation2 + $0x178] sm:$0xff]
    %v160 = vld [vmem:[#allocation2 + $0x180] sm:$0xff]
    %v161 = vld [vmem:[#allocation2 + $0x188] sm:$0xff]
    %v162 = vld [vmem:[#allocation2 + $0x190] sm:$0xff]
    %v163 = vld [vmem:[#allocation2 + $0x198] sm:$0xff]
    %v164 = vld [vmem:[#allocation2 + $0x1a0] sm:$0xff]
    %v165 = vld [vmem:[#allocation2 + $0x1a8] sm:$0xff]
    %v166 = vld [vmem:[#allocation2 + $0x1b0] sm:$0xff]
    %v167 = vld [vmem:[#allocation2 + $0x1b8] sm:$0xff]
    %v168 = vld [vmem:[#allocation2 + $0x1c0] sm:$0xff]
    %v169 = vld [vmem:[#allocation2 + $0x1c8] sm:$0xff]
    %v170 = vld [vmem:[#allocation2 + $0x1d0] sm:$0xff]
    %v171 = vld [vmem:[#allocation2 + $0x1d8] sm:$0xff]
    %v172 = vld [vmem:[#allocation2 + $0x1e0] sm:$0xff]
    %v173 = vld [vmem:[#allocation2 + $0x1e8] sm:$0xff]
    %v174 = vld [vmem:[#allocation2 + $0x1f0] sm:$0xff]
    %v175 = vld [vmem:[#allocation2 + $0x1f8] sm:$0xff]
    %176 = vmatprep.subr.mxu0 %v113
    %177 = vmatpush1.msra.mxu0 %v112
    %178 = vmatprep.subr.mxu0 %v117
    %179 = vmatpush1.msra.mxu0 %v116
    %180 = vmatprep.subr.mxu0 %v121
    %181 = vmatpush1.msra.mxu0 %v120
    %182 = vmatprep.subr.mxu0 %v125
    %183 = vmatpush1.msra.mxu0 %v124
    %184 = vmatprep.subr.mxu0 %v129
    %185 = vmatpush1.msra.mxu0 %v128
    %186 = vmatprep.subr.mxu0 %v133
    %187 = vmatpush1.msra.mxu0 %v132
    %188 = vmatprep.subr.mxu0 %v137
    %189 = vmatpush1.msra.mxu0 %v136
    %190 = vmatprep.subr.mxu0 %v141
    %191 = vmatpush1.msra.mxu0 %v140
    %192 = vmatprep.subr.mxu0 %v145
    %193 = vmatpush1.msra.mxu0 %v144
    %194 = vmatprep.subr.mxu0 %v149
    %195 = vmatpush1.msra.mxu0 %v148
    %196 = vmatprep.subr.mxu0 %v153
    %197 = vmatpush1.msra.mxu0 %v152
    %198 = vmatprep.subr.mxu0 %v157
    %199 = vmatpush1.msra.mxu0 %v156
    %200 = vmatprep.subr.mxu0 %v161
    %201 = vmatpush1.msra.mxu0 %v160
    %202 = vmatprep.subr.mxu0 %v165
    %203 = vmatpush1.msra.mxu0 %v164
    %204 = vmatprep.subr.mxu0 %v169
    %205 = vmatpush1.msra.mxu0 %v168
    %206 = vmatprep.subr.mxu0 %v173
    %207 = vmatpush1.msra.mxu0 %v172
    %208 = vmatprep.subr.mxu0 0.0
    %209 = vmatpush1.msra.mxu0 0.0
    %210 = vmatprep.subr.mxu0 0.0
    %211 = vmatpush1.msra.mxu0 0.0
    %212 = vmatprep.subr.mxu0 0.0
    %213 = vmatpush1.msra.mxu0 0.0
    %214 = vmatprep.subr.mxu0 0.0
    %215 = vmatpush1.msra.mxu0 0.0
    %216 = vmatprep.subr.mxu0 0.0
    %217 = vmatpush1.msra.mxu0 0.0
    %218 = vmatprep.subr.mxu0 0.0
    %219 = vmatpush1.msra.mxu0 0.0
    %220 = vmatprep.subr.mxu0 0.0
    %221 = vmatpush1.msra.mxu0 0.0
    %222 = vmatprep.subr.mxu0 0.0
    %223 = vmatpush1.msra.mxu0 0.0
    %224 = vmatprep.subr.mxu0 0.0
    %225 = vmatpush1.msra.mxu0 0.0
    %226 = vmatprep.subr.mxu0 0.0
    %227 = vmatpush1.msra.mxu0 0.0
    %228 = vmatprep.subr.mxu0 0.0
    %229 = vmatpush1.msra.mxu0 0.0
    %230 = vmatprep.subr.mxu0 0.0
    %231 = vmatpush1.msra.mxu0 0.0
    %232 = vmatprep.subr.mxu0 0.0
    %233 = vmatpush1.msra.mxu0 0.0
    %234 = vmatprep.subr.mxu0 0.0
    %235 = vmatpush1.msra.mxu0 0.0
    %236 = vmatprep.subr.mxu0 0.0
    %237 = vmatpush1.msra.mxu0 0.0
    %238 = vmatprep.subr.mxu0 0.0
    %239 = vmatpush1.msra.mxu0 0.0
    %240 = vmatprep.mubr.f32.mxu0 0.0
    %241 = vmatmul.mubr.f32.gmra.mrb[0].mxu0 0.0
    %v242 = vpop.f32.mrb[0].mxu0
    %v243 = vadd.f32 0.0, %v242
    %v244 = vpop.f32.mrb[0].mxu0
    %v245 = vadd.f32 0.0, %v244
    %246 = vdwg.mxu0
    %247 = vmatprep.subr.mxu0 %v115
    %248 = vmatpush1.msra.mxu0 %v114
    %249 = vmatprep.subr.mxu0 %v119
    %250 = vmatpush1.msra.mxu0 %v118
    %251 = vmatprep.subr.mxu0 %v123
    %252 = vmatpush1.msra.mxu0 %v122
    %253 = vmatprep.subr.mxu0 %v127
    %254 = vmatpush1.msra.mxu0 %v126
    %255 = vmatprep.subr.mxu0 %v131
    %256 = vmatpush1.msra.mxu0 %v130
    %257 = vmatprep.subr.mxu0 %v135
    %258 = vmatpush1.msra.mxu0 %v134
    %259 = vmatprep.subr.mxu0 %v139
    %260 = vmatpush1.msra.mxu0 %v138
    %261 = vmatprep.subr.mxu0 %v143
    %262 = vmatpush1.msra.mxu0 %v142
    %263 = vmatprep.subr.mxu0 %v147
    %264 = vmatpush1.msra.mxu0 %v146
    %265 = vmatprep.subr.mxu0 %v151
    %266 = vmatpush1.msra.mxu0 %v150
    %267 = vmatprep.subr.mxu0 %v155
    %268 = vmatpush1.msra.mxu0 %v154
    %269 = vmatprep.subr.mxu0 %v159
    %270 = vmatpush1.msra.mxu0 %v158
    %271 = vmatprep.subr.mxu0 %v163
    %272 = vmatpush1.msra.mxu0 %v162
    %273 = vmatprep.subr.mxu0 %v167
    %274 = vmatpush1.msra.mxu0 %v166
    %275 = vmatprep.subr.mxu0 %v171
    %276 = vmatpush1.msra.mxu0 %v170
    %277 = vmatprep.subr.mxu0 %v175
    %278 = vmatpush1.msra.mxu0 %v174
    %279 = vmatprep.subr.mxu0 0.0
    %280 = vmatpush1.msra.mxu0 0.0
    %281 = vmatprep.subr.mxu0 0.0
    %282 = vmatpush1.msra.mxu0 0.0
    %283 = vmatprep.subr.mxu0 0.0
    %284 = vmatpush1.msra.mxu0 0.0
    %285 = vmatprep.subr.mxu0 0.0
    %286 = vmatpush1.msra.mxu0 0.0
    %287 = vmatprep.subr.mxu0 0.0
    %288 = vmatpush1.msra.mxu0 0.0
    %289 = vmatprep.subr.mxu0 0.0
    %290 = vmatpush1.msra.mxu0 0.0
    %291 = vmatprep.subr.mxu0 0.0
    %292 = vmatpush1.msra.mxu0 0.0
    %293 = vmatprep.subr.mxu0 0.0
    %294 = vmatpush1.msra.mxu0 0.0
    %295 = vmatprep.subr.mxu0 0.0
    %296 = vmatpush1.msra.mxu0 0.0
    %297 = vmatprep.subr.mxu0 0.0
    %298 = vmatpush1.msra.mxu0 0.0
    %299 = vmatprep.subr.mxu0 0.0
    %300 = vmatpush1.msra.mxu0 0.0
    %301 = vmatprep.subr.mxu0 0.0
    %302 = vmatpush1.msra.mxu0 0.0
    %303 = vmatprep.subr.mxu0 0.0
    %304 = vmatpush1.msra.mxu0 0.0
    %305 = vmatprep.subr.mxu0 0.0
    %306 = vmatpush1.msra.mxu0 0.0
    %307 = vmatprep.subr.mxu0 0.0
    %308 = vmatpush1.msra.mxu0 0.0
    %309 = vmatprep.subr.mxu0 0.0
    %310 = vmatpush1.msra.mxu0 0.0
    %311 = vmatprep.mubr.f32.mxu0 0.0
    %312 = vmatmul.mubr.f32.gmra.mrb[0].mxu0 0.0
    %v313 = vpop.f32.mrb[0].mxu0
    %v314 = vadd.f32 0.0, %v313
    %v315 = vpop.f32.mrb[0].mxu0
    %v316 = vadd.f32 0.0, %v315
    %317 = vdwg.mxu0
    %318 = vmatprep.subr.mxu0 %v49
    %319 = vmatpush1.msra.mxu0 %v48
    %320 = vmatprep.subr.mxu0 %v53
    %321 = vmatpush1.msra.mxu0 %v52
    %322 = vmatprep.subr.mxu0 %v57
    %323 = vmatpush1.msra.mxu0 %v56
    %324 = vmatprep.subr.mxu0 %v61
    %325 = vmatpush1.msra.mxu0 %v60
    %326 = vmatprep.subr.mxu0 %v65
    %327 = vmatpush1.msra.mxu0 %v64
    %328 = vmatprep.subr.mxu0 %v69
    %329 = vmatpush1.msra.mxu0 %v68
    %330 = vmatprep.subr.mxu0 %v73
    %331 = vmatpush1.msra.mxu0 %v72
    %332 = vmatprep.subr.mxu0 %v77
    %333 = vmatpush1.msra.mxu0 %v76
    %334 = vmatprep.subr.mxu0 %v81
    %335 = vmatpush1.msra.mxu0 %v80
    %336 = vmatprep.subr.mxu0 %v85
    %337 = vmatpush1.msra.mxu0 %v84
    %338 = vmatprep.subr.mxu0 %v89
    %339 = vmatpush1.msra.mxu0 %v88
    %340 = vmatprep.subr.mxu0 %v93
    %341 = vmatpush1.msra.mxu0 %v92
    %342 = vmatprep.subr.mxu0 %v97
    %343 = vmatpush1.msra.mxu0 %v96
    %344 = vmatprep.subr.mxu0 %v101
    %345 = vmatpush1.msra.mxu0 %v100
    %346 = vmatprep.subr.mxu0 %v105
    %347 = vmatpush1.msra.mxu0 %v104
    %348 = vmatprep.subr.mxu0 %v109
    %349 = vmatpush1.msra.mxu0 %v108
    %350 = vmatprep.subr.mxu0 0.0
    %351 = vmatpush1.msra.mxu0 0.0
    %352 = vmatprep.subr.mxu0 0.0
    %353 = vmatpush1.msra.mxu0 0.0
    %354 = vmatprep.subr.mxu0 0.0
    %355 = vmatpush1.msra.mxu0 0.0
    %356 = vmatprep.subr.mxu0 0.0
    %357 = vmatpush1.msra.mxu0 0.0
    %358 = vmatprep.subr.mxu0 0.0
    %359 = vmatpush1.msra.mxu0 0.0
    %360 = vmatprep.subr.mxu0 0.0
    %361 = vmatpush1.msra.mxu0 0.0
    %362 = vmatprep.subr.mxu0 0.0
    %363 = vmatpush1.msra.mxu0 0.0
    %364 = vmatprep.subr.mxu0 0.0
    %365 = vmatpush1.msra.mxu0 0.0
    %366 = vmatprep.subr.mxu0 0.0
    %367 = vmatpush1.msra.mxu0 0.0
    %368 = vmatprep.subr.mxu0 0.0
    %369 = vmatpush1.msra.mxu0 0.0
    %370 = vmatprep.subr.mxu0 0.0
    %371 = vmatpush1.msra.mxu0 0.0
    %372 = vmatprep.subr.mxu0 0.0
    %373 = vmatpush1.msra.mxu0 0.0
    %374 = vmatprep.subr.mxu0 0.0
    %375 = vmatpush1.msra.mxu0 0.0
    %376 = vmatprep.subr.mxu0 0.0
    %377 = vmatpush1.msra.mxu0 0.0
    %378 = vmatprep.subr.mxu0 0.0
    %379 = vmatpush1.msra.mxu0 0.0
    %380 = vmatprep.subr.mxu0 0.0
    %381 = vmatpush1.msra.mxu0 0.0
    %382 = vmatprep.mubr.f32.mxu0 0.0
    %383 = vmatmul.mubr.f32.gmra.mrb[0].mxu0 %v47
    %v384 = vpop.f32.mrb[0].mxu0
    %v385 = vadd.f32 %v243, %v384
    %v386 = vpop.f32.mrb[0].mxu0
    %v387 = vadd.f32 %v245, %v386
    %388 = vdwg.mxu0
    %389 = vmatprep.subr.mxu0 %v51
    %390 = vmatpush1.msra.mxu0 %v50
    %391 = vmatprep.subr.mxu0 %v55
    %392 = vmatpush1.msra.mxu0 %v54
    %393 = vmatprep.subr.mxu0 %v59
    %394 = vmatpush1.msra.mxu0 %v58
    %395 = vmatprep.subr.mxu0 %v63
    %396 = vmatpush1.msra.mxu0 %v62
    %397 = vmatprep.subr.mxu0 %v67
    %398 = vmatpush1.msra.mxu0 %v66
    %399 = vmatprep.subr.mxu0 %v71
    %400 = vmatpush1.msra.mxu0 %v70
    %401 = vmatprep.subr.mxu0 %v75
    %402 = vmatpush1.msra.mxu0 %v74
    %403 = vmatprep.subr.mxu0 %v79
    %404 = vmatpush1.msra.mxu0 %v78
    %405 = vmatprep.subr.mxu0 %v83
    %406 = vmatpush1.msra.mxu0 %v82
    %407 = vmatprep.subr.mxu0 %v87
    %408 = vmatpush1.msra.mxu0 %v86
    %409 = vmatprep.subr.mxu0 %v91
    %410 = vmatpush1.msra.mxu0 %v90
    %411 = vmatprep.subr.mxu0 %v95
    %412 = vmatpush1.msra.mxu0 %v94
    %413 = vmatprep.subr.mxu0 %v99
    %414 = vmatpush1.msra.mxu0 %v98
    %415 = vmatprep.subr.mxu0 %v103
    %416 = vmatpush1.msra.mxu0 %v102
    %417 = vmatprep.subr.mxu0 %v107
    %418 = vmatpush1.msra.mxu0 %v106
    %419 = vmatprep.subr.mxu0 %v111
    %420 = vmatpush1.msra.mxu0 %v110
    %421 = vmatprep.subr.mxu0 0.0
    %422 = vmatpush1.msra.mxu0 0.0
    %423 = vmatprep.subr.mxu0 0.0
    %424 = vmatpush1.msra.mxu0 0.0
    %425 = vmatprep.subr.mxu0 0.0
    %426 = vmatpush1.msra.mxu0 0.0
    %427 = vmatprep.subr.mxu0 0.0
    %428 = vmatpush1.msra.mxu0 0.0
    %429 = vmatprep.subr.mxu0 0.0
    %430 = vmatpush1.msra.mxu0 0.0
    %431 = vmatprep.subr.mxu0 0.0
    %432 = vmatpush1.msra.mxu0 0.0
    %433 = vmatprep.subr.mxu0 0.0
    %434 = vmatpush1.msra.mxu0 0.0
    %435 = vmatprep.subr.mxu0 0.0
    %436 = vmatpush1.msra.mxu0 0.0
    %437 = vmatprep.subr.mxu0 0.0
    %438 = vmatpush1.msra.mxu0 0.0
    %439 = vmatprep.subr.mxu0 0.0
    %440 = vmatpush1.msra.mxu0 0.0
    %441 = vmatprep.subr.mxu0 0.0
    %442 = vmatpush1.msra.mxu0 0.0
    %443 = vmatprep.subr.mxu0 0.0
    %444 = vmatpush1.msra.mxu0 0.0
    %445 = vmatprep.subr.mxu0 0.0
    %446 = vmatpush1.msra.mxu0 0.0
    %447 = vmatprep.subr.mxu0 0.0
    %448 = vmatpush1.msra.mxu0 0.0
    %449 = vmatprep.subr.mxu0 0.0
    %450 = vmatpush1.msra.mxu0 0.0
    %451 = vmatprep.subr.mxu0 0.0
    %452 = vmatpush1.msra.mxu0 0.0
    %453 = vmatprep.mubr.f32.mxu0 0.0
    %454 = vmatmul.mubr.f32.gmra.mrb[0].mxu0 %v47
    %v455 = vpop.f32.mrb[0].mxu0
    %v456 = vadd.f32 %v314, %v455
    %v457 = vpop.f32.mrb[0].mxu0
    %v458 = vadd.f32 %v316, %v457
    %459 = vdwg.mxu0
    %v461 = vlaneseq
    %v462 = vshrl.u32 %v461, 7
    %v463 = vsub.s32 0, %v462
    %v464 = vrot.slane %v46, %v463
    %v465 = vlaneseq
    %v466 = vshrl.u32 %v465, 7
    %v467 = vsub.s32 1, %v466
    %v468 = vrot.slane %v46, %v467
    %v469 = vlaneseq
    %v470 = vshrl.u32 %v469, 7
    %v471 = vsub.s32 2, %v470
    %v472 = vrot.slane %v46, %v471
    %v473 = vlaneseq
    %v474 = vshrl.u32 %v473, 7
    %v475 = vsub.s32 3, %v474
    %v476 = vrot.slane %v46, %v475
    %v481 = vadd.f32 %v385, %v464
    %v482 = vadd.f32 %v387, %v468
    %v483 = vadd.f32 %v456, %v472
    %v484 = vadd.f32 %v458, %v476
    %v485 = vxor.u32 %v481, 2147483648
    %v486 = vmul.f32 %v485, 1.442695
    %v487 = vpow.pop %v486
    %v488 = vadd.f32 %v487, 1.0
    %v489 = vrcp.pop %v488
    %v490 = vmul.f32 1.0, %v489
    %v491 = vxor.u32 %v482, 2147483648
    %v492 = vmul.f32 %v491, 1.442695
    %v493 = vpow.pop %v492
    %v494 = vadd.f32 %v493, 1.0
    %v495 = vrcp.pop %v494
    %v496 = vmul.f32 1.0, %v495
    %v497 = vtanh.pop %v483
    %v498 = vxor.u32 %v484, 2147483648
    %v499 = vmul.f32 %v498, 1.442695
    %v500 = vpow.pop %v499
    %v501 = vadd.f32 %v500, 1.0
    %v502 = vrcp.pop %v501
    %v503 = vmul.f32 1.0, %v502
    %v504 = vmul.f32 %v496, 0.0
    %v505 = vmul.f32 %v490, %v497
    %v506 = vadd.f32 %v504, %v505
    %v507 = vtanh.pop %v506
    %v508 = vmul.f32 %v503, %v507
    %509 = vst [vmem:[%s4] sm:$0xff] %v508
    %s510 = scalar_lea.vmem %s0, 8
    %v511 = vld [vmem:[%s510] sm:$0xff]
    %v512 = vld [vmem:[%s1] sm:$0xff]
    %v513 = vld [vmem:[%s1 + $0x8] sm:$0xff]
    %v514 = vld [vmem:[%s1 + $0x10] sm:$0xff]
    %v515 = vld [vmem:[%s1 + $0x18] sm:$0xff]
    %v516 = vld [vmem:[%s1 + $0x20] sm:$0xff]
    %v517 = vld [vmem:[%s1 + $0x28] sm:$0xff]
    %v518 = vld [vmem:[%s1 + $0x30] sm:$0xff]
    %v519 = vld [vmem:[%s1 + $0x38] sm:$0xff]
    %v520 = vld [vmem:[%s1 + $0x40] sm:$0xff]
    %v521 = vld [vmem:[%s1 + $0x48] sm:$0xff]
    %v522 = vld [vmem:[%s1 + $0x50] sm:$0xff]
    %v523 = vld [vmem:[%s1 + $0x58] sm:$0xff]
    %v524 = vld [vmem:[%s1 + $0x60] sm:$0xff]
    %v525 = vld [vmem:[%s1 + $0x68] sm:$0xff]
    %v526 = vld [vmem:[%s1 + $0x70] sm:$0xff]
    %v527 = vld [vmem:[%s1 + $0x78] sm:$0xff]
    %v528 = vld [vmem:[%s1 + $0x80] sm:$0xff]
    %v529 = vld [vmem:[%s1 + $0x88] sm:$0xff]
    %v530 = vld [vmem:[%s1 + $0x90] sm:$0xff]
    %v531 = vld [vmem:[%s1 + $0x98] sm:$0xff]
    %v532 = vld [vmem:[%s1 + $0xa0] sm:$0xff]
    %v533 = vld [vmem:[%s1 + $0xa8] sm:$0xff]
    %v534 = vld [vmem:[%s1 + $0xb0] sm:$0xff]
    %v535 = vld [vmem:[%s1 + $0xb8] sm:$0xff]
    %v536 = vld [vmem:[%s1 + $0xc0] sm:$0xff]
    %v537 = vld [vmem:[%s1 + $0xc8] sm:$0xff]
    %v538 = vld [vmem:[%s1 + $0xd0] sm:$0xff]
    %v539 = vld [vmem:[%s1 + $0xd8] sm:$0xff]
    %v540 = vld [vmem:[%s1 + $0xe0] sm:$0xff]
    %v541 = vld [vmem:[%s1 + $0xe8] sm:$0xff]
    %v542 = vld [vmem:[%s1 + $0xf0] sm:$0xff]
    %v543 = vld [vmem:[%s1 + $0xf8] sm:$0xff]
    %v544 = vld [vmem:[%s1 + $0x100] sm:$0xff]
    %v545 = vld [vmem:[%s1 + $0x108] sm:$0xff]
    %v546 = vld [vmem:[%s1 + $0x110] sm:$0xff]
    %v547 = vld [vmem:[%s1 + $0x118] sm:$0xff]
    %v548 = vld [vmem:[%s1 + $0x120] sm:$0xff]
    %v549 = vld [vmem:[%s1 + $0x128] sm:$0xff]
    %v550 = vld [vmem:[%s1 + $0x130] sm:$0xff]
    %v551 = vld [vmem:[%s1 + $0x138] sm:$0xff]
    %v552 = vld [vmem:[%s1 + $0x140] sm:$0xff]
    %v553 = vld [vmem:[%s1 + $0x148] sm:$0xff]
    %v554 = vld [vmem:[%s1 + $0x150] sm:$0xff]
    %v555 = vld [vmem:[%s1 + $0x158] sm:$0xff]
    %v556 = vld [vmem:[%s1 + $0x160] sm:$0xff]
    %v557 = vld [vmem:[%s1 + $0x168] sm:$0xff]
    %v558 = vld [vmem:[%s1 + $0x170] sm:$0xff]
    %v559 = vld [vmem:[%s1 + $0x178] sm:$0xff]
    %v560 = vld [vmem:[%s1 + $0x180] sm:$0xff]
    %v561 = vld [vmem:[%s1 + $0x188] sm:$0xff]
    %v562 = vld [vmem:[%s1 + $0x190] sm:$0xff]
    %v563 = vld [vmem:[%s1 + $0x198] sm:$0xff]
    %v564 = vld [vmem:[%s1 + $0x1a0] sm:$0xff]
    %v565 = vld [vmem:[%s1 + $0x1a8] sm:$0xff]
    %v566 = vld [vmem:[%s1 + $0x1b0] sm:$0xff]
    %v567 = vld [vmem:[%s1 + $0x1b8] sm:$0xff]
    %v568 = vld [vmem:[%s1 + $0x1c0] sm:$0xff]
    %v569 = vld [vmem:[%s1 + $0x1c8] sm:$0xff]
    %v570 = vld [vmem:[%s1 + $0x1d0] sm:$0xff]
    %v571 = vld [vmem:[%s1 + $0x1d8] sm:$0xff]
    %v572 = vld [vmem:[%s1 + $0x1e0] sm:$0xff]
    %v573 = vld [vmem:[%s1 + $0x1e8] sm:$0xff]
    %v574 = vld [vmem:[%s1 + $0x1f0] sm:$0xff]
    %v575 = vld [vmem:[%s1 + $0x1f8] sm:$0xff]
    %v576 = vld [vmem:[#allocation2] sm:$0xff]
    %v577 = vld [vmem:[#allocation2 + $0x8] sm:$0xff]
    %v578 = vld [vmem:[#allocation2 + $0x10] sm:$0xff]
    %v579 = vld [vmem:[#allocation2 + $0x18] sm:$0xff]
    %v580 = vld [vmem:[#allocation2 + $0x20] sm:$0xff]
    %v581 = vld [vmem:[#allocation2 + $0x28] sm:$0xff]
    %v582 = vld [vmem:[#allocation2 + $0x30] sm:$0xff]
    %v583 = vld [vmem:[#allocation2 + $0x38] sm:$0xff]
    %v584 = vld [vmem:[#allocation2 + $0x40] sm:$0xff]
    %v585 = vld [vmem:[#allocation2 + $0x48] sm:$0xff]
    %v586 = vld [vmem:[#allocation2 + $0x50] sm:$0xff]
    %v587 = vld [vmem:[#allocation2 + $0x58] sm:$0xff]
    %v588 = vld [vmem:[#allocation2 + $0x60] sm:$0xff]
    %v589 = vld [vmem:[#allocation2 + $0x68] sm:$0xff]
    %v590 = vld [vmem:[#allocation2 + $0x70] sm:$0xff]
    %v591 = vld [vmem:[#allocation2 + $0x78] sm:$0xff]
    %v592 = vld [vmem:[#allocation2 + $0x80] sm:$0xff]
    %v593 = vld [vmem:[#allocation2 + $0x88] sm:$0xff]
    %v594 = vld [vmem:[#allocation2 + $0x90] sm:$0xff]
    %v595 = vld [vmem:[#allocation2 + $0x98] sm:$0xff]
    %v596 = vld [vmem:[#allocation2 + $0xa0] sm:$0xff]
    %v597 = vld [vmem:[#allocation2 + $0xa8] sm:$0xff]
    %v598 = vld [vmem:[#allocation2 + $0xb0] sm:$0xff]
    %v599 = vld [vmem:[#allocation2 + $0xb8] sm:$0xff]
    %v600 = vld [vmem:[#allocation2 + $0xc0] sm:$0xff]
    %v601 = vld [vmem:[#allocation2 + $0xc8] sm:$0xff]
    %v602 = vld [vmem:[#allocation2 + $0xd0] sm:$0xff]
    %v603 = vld [vmem:[#allocation2 + $0xd8] sm:$0xff]
    %v604 = vld [vmem:[#allocation2 + $0xe0] sm:$0xff]
    %v605 = vld [vmem:[#allocation2 + $0xe8] sm:$0xff]
    %v606 = vld [vmem:[#allocation2 + $0xf0] sm:$0xff]
    %v607 = vld [vmem:[#allocation2 + $0xf8] sm:$0xff]
    %v608 = vld [vmem:[#allocation2 + $0x100] sm:$0xff]
    %v609 = vld [vmem:[#allocation2 + $0x108] sm:$0xff]
    %v610 = vld [vmem:[#allocation2 + $0x110] sm:$0xff]
    %v611 = vld [vmem:[#allocation2 + $0x118] sm:$0xff]
    %v612 = vld [vmem:[#allocation2 + $0x120] sm:$0xff]
    %v613 = vld [vmem:[#allocation2 + $0x128] sm:$0xff]
    %v614 = vld [vmem:[#allocation2 + $0x130] sm:$0xff]
    %v615 = vld [vmem:[#allocation2 + $0x138] sm:$0xff]
    %v616 = vld [vmem:[#allocation2 + $0x140] sm:$0xff]
    %v617 = vld [vmem:[#allocation2 + $0x148] sm:$0xff]
    %v618 = vld [vmem:[#allocation2 + $0x150] sm:$0xff]
    %v619 = vld [vmem:[#allocation2 + $0x158] sm:$0xff]
    %v620 = vld [vmem:[#allocation2 + $0x160] sm:$0xff]
    %v621 = vld [vmem:[#allocation2 + $0x168] sm:$0xff]
    %v622 = vld [vmem:[#allocation2 + $0x170] sm:$0xff]
    %v623 = vld [vmem:[#allocation2 + $0x178] sm:$0xff]
    %v624 = vld [vmem:[#allocation2 + $0x180] sm:$0xff]
    %v625 = vld [vmem:[#allocation2 + $0x188] sm:$0xff]
    %v626 = vld [vmem:[#allocation2 + $0x190] sm:$0xff]
    %v627 = vld [vmem:[#allocation2 + $0x198] sm:$0xff]
    %v628 = vld [vmem:[#allocation2 + $0x1a0] sm:$0xff]
    %v629 = vld [vmem:[#allocation2 + $0x1a8] sm:$0xff]
    %v630 = vld [vmem:[#allocation2 + $0x1b0] sm:$0xff]
    %v631 = vld [vmem:[#allocation2 + $0x1b8] sm:$0xff]
    %v632 = vld [vmem:[#allocation2 + $0x1c0] sm:$0xff]
    %v633 = vld [vmem:[#allocation2 + $0x1c8] sm:$0xff]
    %v634 = vld [vmem:[#allocation2 + $0x1d0] sm:$0xff]
    %v635 = vld [vmem:[#allocation2 + $0x1d8] sm:$0xff]
    %v636 = vld [vmem:[#allocation2 + $0x1e0] sm:$0xff]
    %v637 = vld [vmem:[#allocation2 + $0x1e8] sm:$0xff]
    %v638 = vld [vmem:[#allocation2 + $0x1f0] sm:$0xff]
    %v639 = vld [vmem:[#allocation2 + $0x1f8] sm:$0xff]
    %640 = vmatprep.subr.mxu0 %v577
    %641 = vmatpush1.msra.mxu0 %v576
    %642 = vmatprep.subr.mxu0 %v581
    %643 = vmatpush1.msra.mxu0 %v580
    %644 = vmatprep.subr.mxu0 %v585
    %645 = vmatpush1.msra.mxu0 %v584
    %646 = vmatprep.subr.mxu0 %v589
    %647 = vmatpush1.msra.mxu0 %v588
    %648 = vmatprep.subr.mxu0 %v593
    %649 = vmatpush1.msra.mxu0 %v592
    %650 = vmatprep.subr.mxu0 %v597
    %651 = vmatpush1.msra.mxu0 %v596
    %652 = vmatprep.subr.mxu0 %v601
    %653 = vmatpush1.msra.mxu0 %v600
    %654 = vmatprep.subr.mxu0 %v605
    %655 = vmatpush1.msra.mxu0 %v604
    %656 = vmatprep.subr.mxu0 %v609
    %657 = vmatpush1.msra.mxu0 %v608
    %658 = vmatprep.subr.mxu0 %v613
    %659 = vmatpush1.msra.mxu0 %v612
    %660 = vmatprep.subr.mxu0 %v617
    %661 = vmatpush1.msra.mxu0 %v616
    %662 = vmatprep.subr.mxu0 %v621
    %663 = vmatpush1.msra.mxu0 %v620
    %664 = vmatprep.subr.mxu0 %v625
    %665 = vmatpush1.msra.mxu0 %v624
    %666 = vmatprep.subr.mxu0 %v629
    %667 = vmatpush1.msra.mxu0 %v628
    %668 = vmatprep.subr.mxu0 %v633
    %669 = vmatpush1.msra.mxu0 %v632
    %670 = vmatprep.subr.mxu0 %v637
    %671 = vmatpush1.msra.mxu0 %v636
    %672 = vmatprep.subr.mxu0 0.0
    %673 = vmatpush1.msra.mxu0 0.0
    %674 = vmatprep.subr.mxu0 0.0
    %675 = vmatpush1.msra.mxu0 0.0
    %676 = vmatprep.subr.mxu0 0.0
    %677 = vmatpush1.msra.mxu0 0.0
    %678 = vmatprep.subr.mxu0 0.0
    %679 = vmatpush1.msra.mxu0 0.0
    %680 = vmatprep.subr.mxu0 0.0
    %681 = vmatpush1.msra.mxu0 0.0
    %682 = vmatprep.subr.mxu0 0.0
    %683 = vmatpush1.msra.mxu0 0.0
    %684 = vmatprep.subr.mxu0 0.0
    %685 = vmatpush1.msra.mxu0 0.0
    %686 = vmatprep.subr.mxu0 0.0
    %687 = vmatpush1.msra.mxu0 0.0
    %688 = vmatprep.subr.mxu0 0.0
    %689 = vmatpush1.msra.mxu0 0.0
    %690 = vmatprep.subr.mxu0 0.0
    %691 = vmatpush1.msra.mxu0 0.0
    %692 = vmatprep.subr.mxu0 0.0
    %693 = vmatpush1.msra.mxu0 0.0
    %694 = vmatprep.subr.mxu0 0.0
    %695 = vmatpush1.msra.mxu0 0.0
    %696 = vmatprep.subr.mxu0 0.0
    %697 = vmatpush1.msra.mxu0 0.0
    %698 = vmatprep.subr.mxu0 0.0
    %699 = vmatpush1.msra.mxu0 0.0
    %700 = vmatprep.subr.mxu0 0.0
    %701 = vmatpush1.msra.mxu0 0.0
    %702 = vmatprep.subr.mxu0 0.0
    %703 = vmatpush1.msra.mxu0 0.0
    %704 = vmatprep.mubr.f32.mxu0 0.0
    %705 = vmatmul.mubr.f32.gmra.mrb[0].mxu0 %v508
    %v706 = vpop.f32.mrb[0].mxu0
    %v707 = vadd.f32 0.0, %v706
    %v708 = vpop.f32.mrb[0].mxu0
    %v709 = vadd.f32 0.0, %v708
    %710 = vdwg.mxu0
    %711 = vmatprep.subr.mxu0 %v579
    %712 = vmatpush1.msra.mxu0 %v578
    %713 = vmatprep.subr.mxu0 %v583
    %714 = vmatpush1.msra.mxu0 %v582
    %715 = vmatprep.subr.mxu0 %v587
    %716 = vmatpush1.msra.mxu0 %v586
    %717 = vmatprep.subr.mxu0 %v591
    %718 = vmatpush1.msra.mxu0 %v590
    %719 = vmatprep.subr.mxu0 %v595
    %720 = vmatpush1.msra.mxu0 %v594
    %721 = vmatprep.subr.mxu0 %v599
    %722 = vmatpush1.msra.mxu0 %v598
    %723 = vmatprep.subr.mxu0 %v603
    %724 = vmatpush1.msra.mxu0 %v602
    %725 = vmatprep.subr.mxu0 %v607
    %726 = vmatpush1.msra.mxu0 %v606
    %727 = vmatprep.subr.mxu0 %v611
    %728 = vmatpush1.msra.mxu0 %v610
    %729 = vmatprep.subr.mxu0 %v615
    %730 = vmatpush1.msra.mxu0 %v614
    %731 = vmatprep.subr.mxu0 %v619
    %732 = vmatpush1.msra.mxu0 %v618
    %733 = vmatprep.subr.mxu0 %v623
    %734 = vmatpush1.msra.mxu0 %v622
    %735 = vmatprep.subr.mxu0 %v627
    %736 = vmatpush1.msra.mxu0 %v626
    %737 = vmatprep.subr.mxu0 %v631
    %738 = vmatpush1.msra.mxu0 %v630
    %739 = vmatprep.subr.mxu0 %v635
    %740 = vmatpush1.msra.mxu0 %v634
    %741 = vmatprep.subr.mxu0 %v639
    %742 = vmatpush1.msra.mxu0 %v638
    %743 = vmatprep.subr.mxu0 0.0
    %744 = vmatpush1.msra.mxu0 0.0
    %745 = vmatprep.subr.mxu0 0.0
    %746 = vmatpush1.msra.mxu0 0.0
    %747 = vmatprep.subr.mxu0 0.0
    %748 = vmatpush1.msra.mxu0 0.0
    %749 = vmatprep.subr.mxu0 0.0
    %750 = vmatpush1.msra.mxu0 0.0
    %751 = vmatprep.subr.mxu0 0.0
    %752 = vmatpush1.msra.mxu0 0.0
    %753 = vmatprep.subr.mxu0 0.0
    %754 = vmatpush1.msra.mxu0 0.0
    %755 = vmatprep.subr.mxu0 0.0
    %756 = vmatpush1.msra.mxu0 0.0
    %757 = vmatprep.subr.mxu0 0.0
    %758 = vmatpush1.msra.mxu0 0.0
    %759 = vmatprep.subr.mxu0 0.0
    %760 = vmatpush1.msra.mxu0 0.0
    %761 = vmatprep.subr.mxu0 0.0
    %762 = vmatpush1.msra.mxu0 0.0
    %763 = vmatprep.subr.mxu0 0.0
    %764 = vmatpush1.msra.mxu0 0.0
    %765 = vmatprep.subr.mxu0 0.0
    %766 = vmatpush1.msra.mxu0 0.0
    %767 = vmatprep.subr.mxu0 0.0
    %768 = vmatpush1.msra.mxu0 0.0
    %769 = vmatprep.subr.mxu0 0.0
    %770 = vmatpush1.msra.mxu0 0.0
    %771 = vmatprep.subr.mxu0 0.0
    %772 = vmatpush1.msra.mxu0 0.0
    %773 = vmatprep.subr.mxu0 0.0
    %774 = vmatpush1.msra.mxu0 0.0
    %775 = vmatprep.mubr.f32.mxu0 0.0
    %776 = vmatmul.mubr.f32.gmra.mrb[0].mxu0 %v508
    %v777 = vpop.f32.mrb[0].mxu0
    %v778 = vadd.f32 0.0, %v777
    %v779 = vpop.f32.mrb[0].mxu0
    %v780 = vadd.f32 0.0, %v779
    %781 = vdwg.mxu0
    %782 = vmatprep.subr.mxu0 %v513
    %783 = vmatpush1.msra.mxu0 %v512
    %784 = vmatprep.subr.mxu0 %v517
    %785 = vmatpush1.msra.mxu0 %v516
    %786 = vmatprep.subr.mxu0 %v521
    %787 = vmatpush1.msra.mxu0 %v520
    %788 = vmatprep.subr.mxu0 %v525
    %789 = vmatpush1.msra.mxu0 %v524
    %790 = vmatprep.subr.mxu0 %v529
    %791 = vmatpush1.msra.mxu0 %v528
    %792 = vmatprep.subr.mxu0 %v533
    %793 = vmatpush1.msra.mxu0 %v532
    %794 = vmatprep.subr.mxu0 %v537
    %795 = vmatpush1.msra.mxu0 %v536
    %796 = vmatprep.subr.mxu0 %v541
    %797 = vmatpush1.msra.mxu0 %v540
    %798 = vmatprep.subr.mxu0 %v545
    %799 = vmatpush1.msra.mxu0 %v544
    %800 = vmatprep.subr.mxu0 %v549
    %801 = vmatpush1.msra.mxu0 %v548
    %802 = vmatprep.subr.mxu0 %v553
    %803 = vmatpush1.msra.mxu0 %v552
    %804 = vmatprep.subr.mxu0 %v557
    %805 = vmatpush1.msra.mxu0 %v556
    %806 = vmatprep.subr.mxu0 %v561
    %807 = vmatpush1.msra.mxu0 %v560
    %808 = vmatprep.subr.mxu0 %v565
    %809 = vmatpush1.msra.mxu0 %v564
    %810 = vmatprep.subr.mxu0 %v569
    %811 = vmatpush1.msra.mxu0 %v568
    %812 = vmatprep.subr.mxu0 %v573
    %813 = vmatpush1.msra.mxu0 %v572
    %814 = vmatprep.subr.mxu0 0.0
    %815 = vmatpush1.msra.mxu0 0.0
    %816 = vmatprep.subr.mxu0 0.0
    %817 = vmatpush1.msra.mxu0 0.0
    %818 = vmatprep.subr.mxu0 0.0
    %819 = vmatpush1.msra.mxu0 0.0
    %820 = vmatprep.subr.mxu0 0.0
    %821 = vmatpush1.msra.mxu0 0.0
    %822 = vmatprep.subr.mxu0 0.0
    %823 = vmatpush1.msra.mxu0 0.0
    %824 = vmatprep.subr.mxu0 0.0
    %825 = vmatpush1.msra.mxu0 0.0
    %826 = vmatprep.subr.mxu0 0.0
    %827 = vmatpush1.msra.mxu0 0.0
    %828 = vmatprep.subr.mxu0 0.0
    %829 = vmatpush1.msra.mxu0 0.0
    %830 = vmatprep.subr.mxu0 0.0
    %831 = vmatpush1.msra.mxu0 0.0
    %832 = vmatprep.subr.mxu0 0.0
    %833 = vmatpush1.msra.mxu0 0.0
    %834 = vmatprep.subr.mxu0 0.0
    %835 = vmatpush1.msra.mxu0 0.0
    %836 = vmatprep.subr.mxu0 0.0
    %837 = vmatpush1.msra.mxu0 0.0
    %838 = vmatprep.subr.mxu0 0.0
    %839 = vmatpush1.msra.mxu0 0.0
    %840 = vmatprep.subr.mxu0 0.0
    %841 = vmatpush1.msra.mxu0 0.0
    %842 = vmatprep.subr.mxu0 0.0
    %843 = vmatpush1.msra.mxu0 0.0
    %844 = vmatprep.subr.mxu0 0.0
    %845 = vmatpush1.msra.mxu0 0.0
    %846 = vmatprep.mubr.f32.mxu0 0.0
    %847 = vmatmul.mubr.f32.gmra.mrb[0].mxu0 %v511
    %v848 = vpop.f32.mrb[0].mxu0
    %v849 = vadd.f32 %v707, %v848
    %v850 = vpop.f32.mrb[0].mxu0
    %v851 = vadd.f32 %v709, %v850
    %852 = vdwg.mxu0
    %853 = vmatprep.subr.mxu0 %v515
    %854 = vmatpush1.msra.mxu0 %v514
    %855 = vmatprep.subr.mxu0 %v519
    %856 = vmatpush1.msra.mxu0 %v518
    %857 = vmatprep.subr.mxu0 %v523
    %858 = vmatpush1.msra.mxu0 %v522
    %859 = vmatprep.subr.mxu0 %v527
    %860 = vmatpush1.msra.mxu0 %v526
    %861 = vmatprep.subr.mxu0 %v531
    %862 = vmatpush1.msra.mxu0 %v530
    %863 = vmatprep.subr.mxu0 %v535
    %864 = vmatpush1.msra.mxu0 %v534
    %865 = vmatprep.subr.mxu0 %v539
    %866 = vmatpush1.msra.mxu0 %v538
    %867 = vmatprep.subr.mxu0 %v543
    %868 = vmatpush1.msra.mxu0 %v542
    %869 = vmatprep.subr.mxu0 %v547
    %870 = vmatpush1.msra.mxu0 %v546
    %871 = vmatprep.subr.mxu0 %v551
    %872 = vmatpush1.msra.mxu0 %v550
    %873 = vmatprep.subr.mxu0 %v555
    %874 = vmatpush1.msra.mxu0 %v554
    %875 = vmatprep.subr.mxu0 %v559
    %876 = vmatpush1.msra.mxu0 %v558
    %877 = vmatprep.subr.mxu0 %v563
    %878 = vmatpush1.msra.mxu0 %v562
    %879 = vmatprep.subr.mxu0 %v567
    %880 = vmatpush1.msra.mxu0 %v566
    %881 = vmatprep.subr.mxu0 %v571
    %882 = vmatpush1.msra.mxu0 %v570
    %883 = vmatprep.subr.mxu0 %v575
    %884 = vmatpush1.msra.mxu0 %v574
    %885 = vmatprep.subr.mxu0 0.0
    %886 = vmatpush1.msra.mxu0 0.0
    %887 = vmatprep.subr.mxu0 0.0
    %888 = vmatpush1.msra.mxu0 0.0
    %889 = vmatprep.subr.mxu0 0.0
    %890 = vmatpush1.msra.mxu0 0.0
    %891 = vmatprep.subr.mxu0 0.0
    %892 = vmatpush1.msra.mxu0 0.0
    %893 = vmatprep.subr.mxu0 0.0
    %894 = vmatpush1.msra.mxu0 0.0
    %895 = vmatprep.subr.mxu0 0.0
    %896 = vmatpush1.msra.mxu0 0.0
    %897 = vmatprep.subr.mxu0 0.0
    %898 = vmatpush1.msra.mxu0 0.0
    %899 = vmatprep.subr.mxu0 0.0
    %900 = vmatpush1.msra.mxu0 0.0
    %901 = vmatprep.subr.mxu0 0.0
    %902 = vmatpush1.msra.mxu0 0.0
    %903 = vmatprep.subr.mxu0 0.0
    %904 = vmatpush1.msra.mxu0 0.0
    %905 = vmatprep.subr.mxu0 0.0
    %906 = vmatpush1.msra.mxu0 0.0
    %907 = vmatprep.subr.mxu0 0.0
    %908 = vmatpush1.msra.mxu0 0.0
    %909 = vmatprep.subr.mxu0 0.0
    %910 = vmatpush1.msra.mxu0 0.0
    %911 = vmatprep.subr.mxu0 0.0
    %912 = vmatpush1.msra.mxu0 0.0
    %913 = vmatprep.subr.mxu0 0.0
    %914 = vmatpush1.msra.mxu0 0.0
    %915 = vmatprep.subr.mxu0 0.0
    %916 = vmatpush1.msra.mxu0 0.0
    %917 = vmatprep.mubr.f32.mxu0 0.0
    %918 = vmatmul.mubr.f32.gmra.mrb[0].mxu0 %v511
    %v919 = vpop.f32.mrb[0].mxu0
    %v920 = vadd.f32 %v778, %v919
    %v921 = vpop.f32.mrb[0].mxu0
    %v922 = vadd.f32 %v780, %v921
    %923 = vdwg.mxu0
    %v924 = vadd.f32 %v849, %v464
    %v925 = vadd.f32 %v851, %v468
    %v926 = vadd.f32 %v920, %v472
    %v927 = vadd.f32 %v922, %v476
    %v928 = vxor.u32 %v924, 2147483648
    %v929 = vmul.f32 %v928, 1.442695
    %v930 = vpow.pop %v929
    %v931 = vadd.f32 %v930, 1.0
    %v932 = vrcp.pop %v931
    %v933 = vmul.f32 1.0, %v932
    %v934 = vxor.u32 %v925, 2147483648
    %v935 = vmul.f32 %v934, 1.442695
    %v936 = vpow.pop %v935
    %v937 = vadd.f32 %v936, 1.0
    %v938 = vrcp.pop %v937
    %v939 = vmul.f32 1.0, %v938
    %v940 = vtanh.pop %v926
    %v941 = vxor.u32 %v927, 2147483648
    %v942 = vmul.f32 %v941, 1.442695
    %v943 = vpow.pop %v942
    %v944 = vadd.f32 %v943, 1.0
    %v945 = vrcp.pop %v944
    %v946 = vmul.f32 1.0, %v945
    %v947 = vmul.f32 %v939, %v506
    %v948 = vmul.f32 %v933, %v940
    %v949 = vadd.f32 %v947, %v948
    %v950 = vtanh.pop %v949
    %v951 = vmul.f32 %v946, %v950
    %s952 = scalar_lea.vmem %s4, 8
    %953 = vst [vmem:[%s952] sm:$0xff] %v951
    %s954 = scalar_lea.vmem %s0, 16
    %v955 = vld [vmem:[%s954] sm:$0xff]
    %v956 = vld [vmem:[%s1] sm:$0xff]
    %v957 = vld [vmem:[%s1 + $0x8] sm:$0xff]
    %v958 = vld [vmem:[%s1 + $0x10] sm:$0xff]
    %v959 = vld [vmem:[%s1 + $0x18] sm:$0xff]
    %v960 = vld [vmem:[%s1 + $0x20] sm:$0xff]
    %v961 = vld [vmem:[%s1 + $0x28] sm:$0xff]
    %v962 = vld [vmem:[%s1 + $0x30] sm:$0xff]
    %v963 = vld [vmem:[%s1 + $0x38] sm:$0xff]
    %v964 = vld [vmem:[%s1 + $0x40] sm:$0xff]
    %v965 = vld [vmem:[%s1 + $0x48] sm:$0xff]
    %v966 = vld [vmem:[%s1 + $0x50] sm:$0xff]
    %v967 = vld [vmem:[%s1 + $0x58] sm:$0xff]
    %v968 = vld [vmem:[%s1 + $0x60] sm:$0xff]
    %v969 = vld [vmem:[%s1 + $0x68] sm:$0xff]
    %v970 = vld [vmem:[%s1 + $0x70] sm:$0xff]
    %v971 = vld [vmem:[%s1 + $0x78] sm:$0xff]
    %v972 = vld [vmem:[%s1 + $0x80] sm:$0xff]
    %v973 = vld [vmem:[%s1 + $0x88] sm:$0xff]
    %v974 = vld [vmem:[%s1 + $0x90] sm:$0xff]
    %v975 = vld [vmem:[%s1 + $0x98] sm:$0xff]
    %v976 = vld [vmem:[%s1 + $0xa0] sm:$0xff]
    %v977 = vld [vmem:[%s1 + $0xa8] sm:$0xff]
    %v978 = vld [vmem:[%s1 + $0xb0] sm:$0xff]
    %v979 = vld [vmem:[%s1 + $0xb8] sm:$0xff]
    %v980 = vld [vmem:[%s1 + $0xc0] sm:$0xff]
    %v981 = vld [vmem:[%s1 + $0xc8] sm:$0xff]
    %v982 = vld [vmem:[%s1 + $0xd0] sm:$0xff]
    %v983 = vld [vmem:[%s1 + $0xd8] sm:$0xff]
    %v984 = vld [vmem:[%s1 + $0xe0] sm:$0xff]
    %v985 = vld [vmem:[%s1 + $0xe8] sm:$0xff]
    %v986 = vld [vmem:[%s1 + $0xf0] sm:$0xff]
    %v987 = vld [vmem:[%s1 + $0xf8] sm:$0xff]
    %v988 = vld [vmem:[%s1 + $0x100] sm:$0xff]
    %v989 = vld [vmem:[%s1 + $0x108] sm:$0xff]
    %v990 = vld [vmem:[%s1 + $0x110] sm:$0xff]
    %v991 = vld [vmem:[%s1 + $0x118] sm:$0xff]
    %v992 = vld [vmem:[%s1 + $0x120] sm:$0xff]
    %v993 = vld [vmem:[%s1 + $0x128] sm:$0xff]
    %v994 = vld [vmem:[%s1 + $0x130] sm:$0xff]
    %v995 = vld [vmem:[%s1 + $0x138] sm:$0xff]
    %v996 = vld [vmem:[%s1 + $0x140] sm:$0xff]
    %v997 = vld [vmem:[%s1 + $0x148] sm:$0xff]
    %v998 = vld [vmem:[%s1 + $0x150] sm:$0xff]
    %v999 = vld [vmem:[%s1 + $0x158] sm:$0xff]
    %v1000 = vld [vmem:[%s1 + $0x160] sm:$0xff]
    %v1001 = vld [vmem:[%s1 + $0x168] sm:$0xff]
    %v1002 = vld [vmem:[%s1 + $0x170] sm:$0xff]
    %v1003 = vld [vmem:[%s1 + $0x178] sm:$0xff]
    %v1004 = vld [vmem:[%s1 + $0x180] sm:$0xff]
    %v1005 = vld [vmem:[%s1 + $0x188] sm:$0xff]
    %v1006 = vld [vmem:[%s1 + $0x190] sm:$0xff]
    %v1007 = vld [vmem:[%s1 + $0x198] sm:$0xff]
    %v1008 = vld [vmem:[%s1 + $0x1a0] sm:$0xff]
    %v1009 = vld [vmem:[%s1 + $0x1a8] sm:$0xff]
    %v1010 = vld [vmem:[%s1 + $0x1b0] sm:$0xff]
    %v1011 = vld [vmem:[%s1 + $0x1b8] sm:$0xff]
    %v1012 = vld [vmem:[%s1 + $0x1c0] sm:$0xff]
    %v1013 = vld [vmem:[%s1 + $0x1c8] sm:$0xff]
    %v1014 = vld [vmem:[%s1 + $0x1d0] sm:$0xff]
    %v1015 = vld [vmem:[%s1 + $0x1d8] sm:$0xff]
    %v1016 = vld [vmem:[%s1 + $0x1e0] sm:$0xff]
    %v1017 = vld [vmem:[%s1 + $0x1e8] sm:$0xff]
    %v1018 = vld [vmem:[%s1 + $0x1f0] sm:$0xff]
    %v1019 = vld [vmem:[%s1 + $0x1f8] sm:$0xff]
    %v1020 = vld [vmem:[#allocation2] sm:$0xff]
    %v1021 = vld [vmem:[#allocation2 + $0x8] sm:$0xff]
    %v1022 = vld [vmem:[#allocation2 + $0x10] sm:$0xff]
    %v1023 = vld [vmem:[#allocation2 + $0x18] sm:$0xff]
    %v1024 = vld [vmem:[#allocation2 + $0x20] sm:$0xff]
    %v1025 = vld [vmem:[#allocation2 + $0x28] sm:$0xff]
    %v1026 = vld [vmem:[#allocation2 + $0x30] sm:$0xff]
    %v1027 = vld [vmem:[#allocation2 + $0x38] sm:$0xff]
    %v1028 = vld [vmem:[#allocation2 + $0x40] sm:$0xff]
    %v1029 = vld [vmem:[#allocation2 + $0x48] sm:$0xff]
    %v1030 = vld [vmem:[#allocation2 + $0x50] sm:$0xff]
    %v1031 = vld [vmem:[#allocation2 + $0x58] sm:$0xff]
    %v1032 = vld [vmem:[#allocation2 + $0x60] sm:$0xff]
    %v1033 = vld [vmem:[#allocation2 + $0x68] sm:$0xff]
    %v1034 = vld [vmem:[#allocation2 + $0x70] sm:$0xff]
    %v1035 = vld [vmem:[#allocation2 + $0x78] sm:$0xff]
    %v1036 = vld [vmem:[#allocation2 + $0x80] sm:$0xff]
    %v1037 = vld [vmem:[#allocation2 + $0x88] sm:$0xff]
    %v1038 = vld [vmem:[#allocation2 + $0x90] sm:$0xff]
    %v1039 = vld [vmem:[#allocation2 + $0x98] sm:$0xff]
    %v1040 = vld [vmem:[#allocation2 + $0xa0] sm:$0xff]
    %v1041 = vld [vmem:[#allocation2 + $0xa8] sm:$0xff]
    %v1042 = vld [vmem:[#allocation2 + $0xb0] sm:$0xff]
    %v1043 = vld [vmem:[#allocation2 + $0xb8] sm:$0xff]
    %v1044 = vld [vmem:[#allocation2 + $0xc0] sm:$0xff]
    %v1045 = vld [vmem:[#allocation2 + $0xc8] sm:$0xff]
    %v1046 = vld [vmem:[#allocation2 + $0xd0] sm:$0xff]
    %v1047 = vld [vmem:[#allocation2 + $0xd8] sm:$0xff]
    %v1048 = vld [vmem:[#allocation2 + $0xe0] sm:$0xff]
    %v1049 = vld [vmem:[#allocation2 + $0xe8] sm:$0xff]
    %v1050 = vld [vmem:[#allocation2 + $0xf0] sm:$0xff]
    %v1051 = vld [vmem:[#allocation2 + $0xf8] sm:$0xff]
    %v1052 = vld [vmem:[#allocation2 + $0x100] sm:$0xff]
    %v1053 = vld [vmem:[#allocation2 + $0x108] sm:$0xff]
    %v1054 = vld [vmem:[#allocation2 + $0x110] sm:$0xff]
    %v1055 = vld [vmem:[#allocation2 + $0x118] sm:$0xff]
    %v1056 = vld [vmem:[#allocation2 + $0x120] sm:$0xff]
    %v1057 = vld [vmem:[#allocation2 + $0x128] sm:$0xff]
    %v1058 = vld [vmem:[#allocation2 + $0x130] sm:$0xff]
    %v1059 = vld [vmem:[#allocation2 + $0x138] sm:$0xff]
    %v1060 = vld [vmem:[#allocation2 + $0x140] sm:$0xff]
    %v1061 = vld [vmem:[#allocation2 + $0x148] sm:$0xff]
    %v1062 = vld [vmem:[#allocation2 + $0x150] sm:$0xff]
    %v1063 = vld [vmem:[#allocation2 + $0x158] sm:$0xff]
    %v1064 = vld [vmem:[#allocation2 + $0x160] sm:$0xff]
    %v1065 = vld [vmem:[#allocation2 + $0x168] sm:$0xff]
    %v1066 = vld [vmem:[#allocation2 + $0x170] sm:$0xff]
    %v1067 = vld [vmem:[#allocation2 + $0x178] sm:$0xff]
    %v1068 = vld [vmem:[#allocation2 + $0x180] sm:$0xff]
    %v1069 = vld [vmem:[#allocation2 + $0x188] sm:$0xff]
    %v1070 = vld [vmem:[#allocation2 + $0x190] sm:$0xff]
    %v1071 = vld [vmem:[#allocation2 + $0x198] sm:$0xff]
    %v1072 = vld [vmem:[#allocation2 + $0x1a0] sm:$0xff]
    %v1073 = vld [vmem:[#allocation2 + $0x1a8] sm:$0xff]
    %v1074 = vld [vmem:[#allocation2 + $0x1b0] sm:$0xff]
    %v1075 = vld [vmem:[#allocation2 + $0x1b8] sm:$0xff]
    %v1076 = vld [vmem:[#allocation2 + $0x1c0] sm:$0xff]
    %v1077 = vld [vmem:[#allocation2 + $0x1c8] sm:$0xff]
    %v1078 = vld [vmem:[#allocation2 + $0x1d0] sm:$0xff]
    %v1079 = vld [vmem:[#allocation2 + $0x1d8] sm:$0xff]
    %v1080 = vld [vmem:[#allocation2 + $0x1e0] sm:$0xff]
    %v1081 = vld [vmem:[#allocation2 + $0x1e8] sm:$0xff]
    %v1082 = vld [vmem:[#allocation2 + $0x1f0] sm:$0xff]
    %v1083 = vld [vmem:[#allocation2 + $0x1f8] sm:$0xff]
    %1084 = vmatprep.subr.mxu0 %v1021
    %1085 = vmatpush1.msra.mxu0 %v1020
    %1086 = vmatprep.subr.mxu0 %v1025
    %1087 = vmatpush1.msra.mxu0 %v1024
    %1088 = vmatprep.subr.mxu0 %v1029
    %1089 = vmatpush1.msra.mxu0 %v1028
    %1090 = vmatprep.subr.mxu0 %v1033
    %1091 = vmatpush1.msra.mxu0 %v1032
    %1092 = vmatprep.subr.mxu0 %v1037
    %1093 = vmatpush1.msra.mxu0 %v1036
    %1094 = vmatprep.subr.mxu0 %v1041
    %1095 = vmatpush1.msra.mxu0 %v1040
    %1096 = vmatprep.subr.mxu0 %v1045
    %1097 = vmatpush1.msra.mxu0 %v1044
    %1098 = vmatprep.subr.mxu0 %v1049
    %1099 = vmatpush1.msra.mxu0 %v1048
    %1100 = vmatprep.subr.mxu0 %v1053
    %1101 = vmatpush1.msra.mxu0 %v1052
    %1102 = vmatprep.subr.mxu0 %v1057
    %1103 = vmatpush1.msra.mxu0 %v1056
    %1104 = vmatprep.subr.mxu0 %v1061
    %1105 = vmatpush1.msra.mxu0 %v1060
    %1106 = vmatprep.subr.mxu0 %v1065
    %1107 = vmatpush1.msra.mxu0 %v1064
    %1108 = vmatprep.subr.mxu0 %v1069
    %1109 = vmatpush1.msra.mxu0 %v1068
    %1110 = vmatprep.subr.mxu0 %v1073
    %1111 = vmatpush1.msra.mxu0 %v1072
    %1112 = vmatprep.subr.mxu0 %v1077
    %1113 = vmatpush1.msra.mxu0 %v1076
    %1114 = vmatprep.subr.mxu0 %v1081
    %1115 = vmatpush1.msra.mxu0 %v1080
    %1116 = vmatprep.subr.mxu0 0.0
    %1117 = vmatpush1.msra.mxu0 0.0
    %1118 = vmatprep.subr.mxu0 0.0
    %1119 = vmatpush1.msra.mxu0 0.0
    %1120 = vmatprep.subr.mxu0 0.0
    %1121 = vmatpush1.msra.mxu0 0.0
    %1122 = vmatprep.subr.mxu0 0.0
    %1123 = vmatpush1.msra.mxu0 0.0
    %1124 = vmatprep.subr.mxu0 0.0
    %1125 = vmatpush1.msra.mxu0 0.0
    %1126 = vmatprep.subr.mxu0 0.0
    %1127 = vmatpush1.msra.mxu0 0.0
    %1128 = vmatprep.subr.mxu0 0.0
    %1129 = vmatpush1.msra.mxu0 0.0
    %1130 = vmatprep.subr.mxu0 0.0
    %1131 = vmatpush1.msra.mxu0 0.0
    %1132 = vmatprep.subr.mxu0 0.0
    %1133 = vmatpush1.msra.mxu0 0.0
    %1134 = vmatprep.subr.mxu0 0.0
    %1135 = vmatpush1.msra.mxu0 0.0
    %1136 = vmatprep.subr.mxu0 0.0
    %1137 = vmatpush1.msra.mxu0 0.0
    %1138 = vmatprep.subr.mxu0 0.0
    %1139 = vmatpush1.msra.mxu0 0.0
    %1140 = vmatprep.subr.mxu0 0.0
    %1141 = vmatpush1.msra.mxu0 0.0
    %1142 = vmatprep.subr.mxu0 0.0
    %1143 = vmatpush1.msra.mxu0 0.0
    %1144 = vmatprep.subr.mxu0 0.0
    %1145 = vmatpush1.msra.mxu0 0.0
    %1146 = vmatprep.subr.mxu0 0.0
    %1147 = vmatpush1.msra.mxu0 0.0
    %1148 = vmatprep.mubr.f32.mxu0 0.0
    %1149 = vmatmul.mubr.f32.gmra.mrb[0].mxu0 %v951
    %v1150 = vpop.f32.mrb[0].mxu0
    %v1151 = vadd.f32 0.0, %v1150
    %v1152 = vpop.f32.mrb[0].mxu0
    %v1153 = vadd.f32 0.0, %v1152
    %1154 = vdwg.mxu0
    %1155 = vmatprep.subr.mxu0 %v1023
    %1156 = vmatpush1.msra.mxu0 %v1022
    %1157 = vmatprep.subr.mxu0 %v1027
    %1158 = vmatpush1.msra.mxu0 %v1026
    %1159 = vmatprep.subr.mxu0 %v1031
    %1160 = vmatpush1.msra.mxu0 %v1030
    %1161 = vmatprep.subr.mxu0 %v1035
    %1162 = vmatpush1.msra.mxu0 %v1034
    %1163 = vmatprep.subr.mxu0 %v1039
    %1164 = vmatpush1.msra.mxu0 %v1038
    %1165 = vmatprep.subr.mxu0 %v1043
    %1166 = vmatpush1.msra.mxu0 %v1042
    %1167 = vmatprep.subr.mxu0 %v1047
    %1168 = vmatpush1.msra.mxu0 %v1046
    %1169 = vmatprep.subr.mxu0 %v1051
    %1170 = vmatpush1.msra.mxu0 %v1050
    %1171 = vmatprep.subr.mxu0 %v1055
    %1172 = vmatpush1.msra.mxu0 %v1054
    %1173 = vmatprep.subr.mxu0 %v1059
    %1174 = vmatpush1.msra.mxu0 %v1058
    %1175 = vmatprep.subr.mxu0 %v1063
    %1176 = vmatpush1.msra.mxu0 %v1062
    %1177 = vmatprep.subr.mxu0 %v1067
    %1178 = vmatpush1.msra.mxu0 %v1066
    %1179 = vmatprep.subr.mxu0 %v1071
    %1180 = vmatpush1.msra.mxu0 %v1070
    %1181 = vmatprep.subr.mxu0 %v1075
    %1182 = vmatpush1.msra.mxu0 %v1074
    %1183 = vmatprep.subr.mxu0 %v1079
    %1184 = vmatpush1.msra.mxu0 %v1078
    %1185 = vmatprep.subr.mxu0 %v1083
    %1186 = vmatpush1.msra.mxu0 %v1082
    %1187 = vmatprep.subr.mxu0 0.0
    %1188 = vmatpush1.msra.mxu0 0.0
    %1189 = vmatprep.subr.mxu0 0.0
    %1190 = vmatpush1.msra.mxu0 0.0
    %1191 = vmatprep.subr.mxu0 0.0
    %1192 = vmatpush1.msra.mxu0 0.0
    %1193 = vmatprep.subr.mxu0 0.0
    %1194 = vmatpush1.msra.mxu0 0.0
    %1195 = vmatprep.subr.mxu0 0.0
    %1196 = vmatpush1.msra.mxu0 0.0
    %1197 = vmatprep.subr.mxu0 0.0
    %1198 = vmatpush1.msra.mxu0 0.0
    %1199 = vmatprep.subr.mxu0 0.0
    %1200 = vmatpush1.msra.mxu0 0.0
    %1201 = vmatprep.subr.mxu0 0.0
    %1202 = vmatpush1.msra.mxu0 0.0
    %1203 = vmatprep.subr.mxu0 0.0
    %1204 = vmatpush1.msra.mxu0 0.0
    %1205 = vmatprep.subr.mxu0 0.0
    %1206 = vmatpush1.msra.mxu0 0.0
    %1207 = vmatprep.subr.mxu0 0.0
    %1208 = vmatpush1.msra.mxu0 0.0
    %1209 = vmatprep.subr.mxu0 0.0
    %1210 = vmatpush1.msra.mxu0 0.0
    %1211 = vmatprep.subr.mxu0 0.0
    %1212 = vmatpush1.msra.mxu0 0.0
    %1213 = vmatprep.subr.mxu0 0.0
    %1214 = vmatpush1.msra.mxu0 0.0
    %1215 = vmatprep.subr.mxu0 0.0
    %1216 = vmatpush1.msra.mxu0 0.0
    %1217 = vmatprep.subr.mxu0 0.0
    %1218 = vmatpush1.msra.mxu0 0.0
    %1219 = vmatprep.mubr.f32.mxu0 0.0
    %1220 = vmatmul.mubr.f32.gmra.mrb[0].mxu0 %v951
    %v1221 = vpop.f32.mrb[0].mxu0
    %v1222 = vadd.f32 0.0, %v1221
    %v1223 = vpop.f32.mrb[0].mxu0
    %v1224 = vadd.f32 0.0, %v1223
    %1225 = vdwg.mxu0
    %1226 = vmatprep.subr.mxu0 %v957
    %1227 = vmatpush1.msra.mxu0 %v956
    %1228 = vmatprep.subr.mxu0 %v961
    %1229 = vmatpush1.msra.mxu0 %v960
    %1230 = vmatprep.subr.mxu0 %v965
    %1231 = vmatpush1.msra.mxu0 %v964
    %1232 = vmatprep.subr.mxu0 %v969
    %1233 = vmatpush1.msra.mxu0 %v968
    %1234 = vmatprep.subr.mxu0 %v973
    %1235 = vmatpush1.msra.mxu0 %v972
    %1236 = vmatprep.subr.mxu0 %v977
    %1237 = vmatpush1.msra.mxu0 %v976
    %1238 = vmatprep.subr.mxu0 %v981
    %1239 = vmatpush1.msra.mxu0 %v980
    %1240 = vmatprep.subr.mxu0 %v985
    %1241 = vmatpush1.msra.mxu0 %v984
    %1242 = vmatprep.subr.mxu0 %v989
    %1243 = vmatpush1.msra.mxu0 %v988
    %1244 = vmatprep.subr.mxu0 %v993
    %1245 = vmatpush1.msra.mxu0 %v992
    %1246 = vmatprep.subr.mxu0 %v997
    %1247 = vmatpush1.msra.mxu0 %v996
    %1248 = vmatprep.subr.mxu0 %v1001
    %1249 = vmatpush1.msra.mxu0 %v1000
    %1250 = vmatprep.subr.mxu0 %v1005
    %1251 = vmatpush1.msra.mxu0 %v1004
    %1252 = vmatprep.subr.mxu0 %v1009
    %1253 = vmatpush1.msra.mxu0 %v1008
    %1254 = vmatprep.subr.mxu0 %v1013
    %1255 = vmatpush1.msra.mxu0 %v1012
    %1256 = vmatprep.subr.mxu0 %v1017
    %1257 = vmatpush1.msra.mxu0 %v1016
    %1258 = vmatprep.subr.mxu0 0.0
    %1259 = vmatpush1.msra.mxu0 0.0
    %1260 = vmatprep.subr.mxu0 0.0
    %1261 = vmatpush1.msra.mxu0 0.0
    %1262 = vmatprep.subr.mxu0 0.0
    %1263 = vmatpush1.msra.mxu0 0.0
    %1264 = vmatprep.subr.mxu0 0.0
    %1265 = vmatpush1.msra.mxu0 0.0
    %1266 = vmatprep.subr.mxu0 0.0
    %1267 = vmatpush1.msra.mxu0 0.0
    %1268 = vmatprep.subr.mxu0 0.0
    %1269 = vmatpush1.msra.mxu0 0.0
    %1270 = vmatprep.subr.mxu0 0.0
    %1271 = vmatpush1.msra.mxu0 0.0
    %1272 = vmatprep.subr.mxu0 0.0
    %1273 = vmatpush1.msra.mxu0 0.0
    %1274 = vmatprep.subr.mxu0 0.0
    %1275 = vmatpush1.msra.mxu0 0.0
    %1276 = vmatprep.subr.mxu0 0.0
    %1277 = vmatpush1.msra.mxu0 0.0
    %1278 = vmatprep.subr.mxu0 0.0
    %1279 = vmatpush1.msra.mxu0 0.0
    %1280 = vmatprep.subr.mxu0 0.0
    %1281 = vmatpush1.msra.mxu0 0.0
    %1282 = vmatprep.subr.mxu0 0.0
    %1283 = vmatpush1.msra.mxu0 0.0
    %1284 = vmatprep.subr.mxu0 0.0
    %1285 = vmatpush1.msra.mxu0 0.0
    %1286 = vmatprep.subr.mxu0 0.0
    %1287 = vmatpush1.msra.mxu0 0.0
    %1288 = vmatprep.subr.mxu0 0.0
    %1289 = vmatpush1.msra.mxu0 0.0
    %1290 = vmatprep.mubr.f32.mxu0 0.0
    %1291 = vmatmul.mubr.f32.gmra.mrb[0].mxu0 %v955
    %v1292 = vpop.f32.mrb[0].mxu0
    %v1293 = vadd.f32 %v1151, %v1292
    %v1294 = vpop.f32.mrb[0].mxu0
    %v1295 = vadd.f32 %v1153, %v1294
    %1296 = vdwg.mxu0
    %1297 = vmatprep.subr.mxu0 %v959
    %1298 = vmatpush1.msra.mxu0 %v958
    %1299 = vmatprep.subr.mxu0 %v963
    %1300 = vmatpush1.msra.mxu0 %v962
    %1301 = vmatprep.subr.mxu0 %v967
    %1302 = vmatpush1.msra.mxu0 %v966
    %1303 = vmatprep.subr.mxu0 %v971
    %1304 = vmatpush1.msra.mxu0 %v970
    %1305 = vmatprep.subr.mxu0 %v975
    %1306 = vmatpush1.msra.mxu0 %v974
    %1307 = vmatprep.subr.mxu0 %v979
    %1308 = vmatpush1.msra.mxu0 %v978
    %1309 = vmatprep.subr.mxu0 %v983
    %1310 = vmatpush1.msra.mxu0 %v982
    %1311 = vmatprep.subr.mxu0 %v987
    %1312 = vmatpush1.msra.mxu0 %v986
    %1313 = vmatprep.subr.mxu0 %v991
    %1314 = vmatpush1.msra.mxu0 %v990
    %1315 = vmatprep.subr.mxu0 %v995
    %1316 = vmatpush1.msra.mxu0 %v994
    %1317 = vmatprep.subr.mxu0 %v999
    %1318 = vmatpush1.msra.mxu0 %v998
    %1319 = vmatprep.subr.mxu0 %v1003
    %1320 = vmatpush1.msra.mxu0 %v1002
    %1321 = vmatprep.subr.mxu0 %v1007
    %1322 = vmatpush1.msra.mxu0 %v1006
    %1323 = vmatprep.subr.mxu0 %v1011
    %1324 = vmatpush1.msra.mxu0 %v1010
    %1325 = vmatprep.subr.mxu0 %v1015
    %1326 = vmatpush1.msra.mxu0 %v1014
    %1327 = vmatprep.subr.mxu0 %v1019
    %1328 = vmatpush1.msra.mxu0 %v1018
    %1329 = vmatprep.subr.mxu0 0.0
    %1330 = vmatpush1.msra.mxu0 0.0
    %1331 = vmatprep.subr.mxu0 0.0
    %1332 = vmatpush1.msra.mxu0 0.0
    %1333 = vmatprep.subr.mxu0 0.0
    %1334 = vmatpush1.msra.mxu0 0.0
    %1335 = vmatprep.subr.mxu0 0.0
    %1336 = vmatpush1.msra.mxu0 0.0
    %1337 = vmatprep.subr.mxu0 0.0
    %1338 = vmatpush1.msra.mxu0 0.0
    %1339 = vmatprep.subr.mxu0 0.0
    %1340 = vmatpush1.msra.mxu0 0.0
    %1341 = vmatprep.subr.mxu0 0.0
    %1342 = vmatpush1.msra.mxu0 0.0
    %1343 = vmatprep.subr.mxu0 0.0
    %1344 = vmatpush1.msra.mxu0 0.0
    %1345 = vmatprep.subr.mxu0 0.0
    %1346 = vmatpush1.msra.mxu0 0.0
    %1347 = vmatprep.subr.mxu0 0.0
    %1348 = vmatpush1.msra.mxu0 0.0
    %1349 = vmatprep.subr.mxu0 0.0
    %1350 = vmatpush1.msra.mxu0 0.0
    %1351 = vmatprep.subr.mxu0 0.0
    %1352 = vmatpush1.msra.mxu0 0.0
    %1353 = vmatprep.subr.mxu0 0.0
    %1354 = vmatpush1.msra.mxu0 0.0
    %1355 = vmatprep.subr.mxu0 0.0
    %1356 = vmatpush1.msra.mxu0 0.0
    %1357 = vmatprep.subr.mxu0 0.0
    %1358 = vmatpush1.msra.mxu0 0.0
    %1359 = vmatprep.subr.mxu0 0.0
    %1360 = vmatpush1.msra.mxu0 0.0
    %1361 = vmatprep.mubr.f32.mxu0 0.0
    %1362 = vmatmul.mubr.f32.gmra.mrb[0].mxu0 %v955
    %v1363 = vpop.f32.mrb[0].mxu0
    %v1364 = vadd.f32 %v1222, %v1363
    %v1365 = vpop.f32.mrb[0].mxu0
    %v1366 = vadd.f32 %v1224, %v1365
    %1367 = vdwg.mxu0
    %v1368 = vadd.f32 %v1293, %v464
    %v1369 = vadd.f32 %v1295, %v468
    %v1370 = vadd.f32 %v1364, %v472
    %v1371 = vadd.f32 %v1366, %v476
    %v1372 = vxor.u32 %v1368, 2147483648
    %v1373 = vmul.f32 %v1372, 1.442695
    %v1374 = vpow.pop %v1373
    %v1375 = vadd.f32 %v1374, 1.0
    %v1376 = vrcp.pop %v1375
    %v1377 = vmul.f32 1.0, %v1376
    %v1378 = vxor.u32 %v1369, 2147483648
    %v1379 = vmul.f32 %v1378, 1.442695
    %v1380 = vpow.pop %v1379
    %v1381 = vadd.f32 %v1380, 1.0
    %v1382 = vrcp.pop %v1381
    %v1383 = vmul.f32 1.0, %v1382
    %v1384 = vtanh.pop %v1370
    %v1385 = vxor.u32 %v1371, 2147483648
    %v1386 = vmul.f32 %v1385, 1.442695
    %v1387 = vpow.pop %v1386
    %v1388 = vadd.f32 %v1387, 1.0
    %v1389 = vrcp.pop %v1388
    %v1390 = vmul.f32 1.0, %v1389
    %v1391 = vmul.f32 %v1383, %v949
    %v1392 = vmul.f32 %v1377, %v1384
    %v1393 = vadd.f32 %v1391, %v1392
    %v1394 = vtanh.pop %v1393
    %v1395 = vmul.f32 %v1390, %v1394
    %s1396 = scalar_lea.vmem %s4, 16
    %1397 = vst [vmem:[%s1396] sm:$0xff] %v1395
    %s1398 = scalar_lea.vmem %s0, 24
    %v1399 = vld [vmem:[%s1398] sm:$0xff]
    %v1400 = vld [vmem:[%s1] sm:$0xff]
    %v1401 = vld [vmem:[%s1 + $0x8] sm:$0xff]
    %v1402 = vld [vmem:[%s1 + $0x10] sm:$0xff]
    %v1403 = vld [vmem:[%s1 + $0x18] sm:$0xff]
    %v1404 = vld [vmem:[%s1 + $0x20] sm:$0xff]
    %v1405 = vld [vmem:[%s1 + $0x28] sm:$0xff]
    %v1406 = vld [vmem:[%s1 + $0x30] sm:$0xff]
    %v1407 = vld [vmem:[%s1 + $0x38] sm:$0xff]
    %v1408 = vld [vmem:[%s1 + $0x40] sm:$0xff]
    %v1409 = vld [vmem:[%s1 + $0x48] sm:$0xff]
    %v1410 = vld [vmem:[%s1 + $0x50] sm:$0xff]
    %v1411 = vld [vmem:[%s1 + $0x58] sm:$0xff]
    %v1412 = vld [vmem:[%s1 + $0x60] sm:$0xff]
    %v1413 = vld [vmem:[%s1 + $0x68] sm:$0xff]
    %v1414 = vld [vmem:[%s1 + $0x70] sm:$0xff]
    %v1415 = vld [vmem:[%s1 + $0x78] sm:$0xff]
    %v1416 = vld [vmem:[%s1 + $0x80] sm:$0xff]
    %v1417 = vld [vmem:[%s1 + $0x88] sm:$0xff]
    %v1418 = vld [vmem:[%s1 + $0x90] sm:$0xff]
    %v1419 = vld [vmem:[%s1 + $0x98] sm:$0xff]
    %v1420 = vld [vmem:[%s1 + $0xa0] sm:$0xff]
    %v1421 = vld [vmem:[%s1 + $0xa8] sm:$0xff]
    %v1422 = vld [vmem:[%s1 + $0xb0] sm:$0xff]
    %v1423 = vld [vmem:[%s1 + $0xb8] sm:$0xff]
    %v1424 = vld [vmem:[%s1 + $0xc0] sm:$0xff]
    %v1425 = vld [vmem:[%s1 + $0xc8] sm:$0xff]
    %v1426 = vld [vmem:[%s1 + $0xd0] sm:$0xff]
    %v1427 = vld [vmem:[%s1 + $0xd8] sm:$0xff]
    %v1428 = vld [vmem:[%s1 + $0xe0] sm:$0xff]
    %v1429 = vld [vmem:[%s1 + $0xe8] sm:$0xff]
    %v1430 = vld [vmem:[%s1 + $0xf0] sm:$0xff]
    %v1431 = vld [vmem:[%s1 + $0xf8] sm:$0xff]
    %v1432 = vld [vmem:[%s1 + $0x100] sm:$0xff]
    %v1433 = vld [vmem:[%s1 + $0x108] sm:$0xff]
    %v1434 = vld [vmem:[%s1 + $0x110] sm:$0xff]
    %v1435 = vld [vmem:[%s1 + $0x118] sm:$0xff]
    %v1436 = vld [vmem:[%s1 + $0x120] sm:$0xff]
    %v1437 = vld [vmem:[%s1 + $0x128] sm:$0xff]
    %v1438 = vld [vmem:[%s1 + $0x130] sm:$0xff]
    %v1439 = vld [vmem:[%s1 + $0x138] sm:$0xff]
    %v1440 = vld [vmem:[%s1 + $0x140] sm:$0xff]
    %v1441 = vld [vmem:[%s1 + $0x148] sm:$0xff]
    %v1442 = vld [vmem:[%s1 + $0x150] sm:$0xff]
    %v1443 = vld [vmem:[%s1 + $0x158] sm:$0xff]
    %v1444 = vld [vmem:[%s1 + $0x160] sm:$0xff]
    %v1445 = vld [vmem:[%s1 + $0x168] sm:$0xff]
    %v1446 = vld [vmem:[%s1 + $0x170] sm:$0xff]
    %v1447 = vld [vmem:[%s1 + $0x178] sm:$0xff]
    %v1448 = vld [vmem:[%s1 + $0x180] sm:$0xff]
    %v1449 = vld [vmem:[%s1 + $0x188] sm:$0xff]
    %v1450 = vld [vmem:[%s1 + $0x190] sm:$0xff]
    %v1451 = vld [vmem:[%s1 + $0x198] sm:$0xff]
    %v1452 = vld [vmem:[%s1 + $0x1a0] sm:$0xff]
    %v1453 = vld [vmem:[%s1 + $0x1a8] sm:$0xff]
    %v1454 = vld [vmem:[%s1 + $0x1b0] sm:$0xff]
    %v1455 = vld [vmem:[%s1 + $0x1b8] sm:$0xff]
    %v1456 = vld [vmem:[%s1 + $0x1c0] sm:$0xff]
    %v1457 = vld [vmem:[%s1 + $0x1c8] sm:$0xff]
    %v1458 = vld [vmem:[%s1 + $0x1d0] sm:$0xff]
    %v1459 = vld [vmem:[%s1 + $0x1d8] sm:$0xff]
    %v1460 = vld [vmem:[%s1 + $0x1e0] sm:$0xff]
    %v1461 = vld [vmem:[%s1 + $0x1e8] sm:$0xff]
    %v1462 = vld [vmem:[%s1 + $0x1f0] sm:$0xff]
    %v1463 = vld [vmem:[%s1 + $0x1f8] sm:$0xff]
    %v1464 = vld [vmem:[#allocation2] sm:$0xff]
    %v1465 = vld [vmem:[#allocation2 + $0x8] sm:$0xff]
    %v1466 = vld [vmem:[#allocation2 + $0x10] sm:$0xff]
    %v1467 = vld [vmem:[#allocation2 + $0x18] sm:$0xff]
    %v1468 = vld [vmem:[#allocation2 + $0x20] sm:$0xff]
    %v1469 = vld [vmem:[#allocation2 + $0x28] sm:$0xff]
    %v1470 = vld [vmem:[#allocation2 + $0x30] sm:$0xff]
    %v1471 = vld [vmem:[#allocation2 + $0x38] sm:$0xff]
    %v1472 = vld [vmem:[#allocation2 + $0x40] sm:$0xff]
    %v1473 = vld [vmem:[#allocation2 + $0x48] sm:$0xff]
    %v1474 = vld [vmem:[#allocation2 + $0x50] sm:$0xff]
    %v1475 = vld [vmem:[#allocation2 + $0x58] sm:$0xff]
    %v1476 = vld [vmem:[#allocation2 + $0x60] sm:$0xff]
    %v1477 = vld [vmem:[#allocation2 + $0x68] sm:$0xff]
    %v1478 = vld [vmem:[#allocation2 + $0x70] sm:$0xff]
    %v1479 = vld [vmem:[#allocation2 + $0x78] sm:$0xff]
    %v1480 = vld [vmem:[#allocation2 + $0x80] sm:$0xff]
    %v1481 = vld [vmem:[#allocation2 + $0x88] sm:$0xff]
    %v1482 = vld [vmem:[#allocation2 + $0x90] sm:$0xff]
    %v1483 = vld [vmem:[#allocation2 + $0x98] sm:$0xff]
    %v1484 = vld [vmem:[#allocation2 + $0xa0] sm:$0xff]
    %v1485 = vld [vmem:[#allocation2 + $0xa8] sm:$0xff]
    %v1486 = vld [vmem:[#allocation2 + $0xb0] sm:$0xff]
    %v1487 = vld [vmem:[#allocation2 + $0xb8] sm:$0xff]
    %v1488 = vld [vmem:[#allocation2 + $0xc0] sm:$0xff]
    %v1489 = vld [vmem:[#allocation2 + $0xc8] sm:$0xff]
    %v1490 = vld [vmem:[#allocation2 + $0xd0] sm:$0xff]
    %v1491 = vld [vmem:[#allocation2 + $0xd8] sm:$0xff]
    %v1492 = vld [vmem:[#allocation2 + $0xe0] sm:$0xff]
    %v1493 = vld [vmem:[#allocation2 + $0xe8] sm:$0xff]
    %v1494 = vld [vmem:[#allocation2 + $0xf0] sm:$0xff]
    %v1495 = vld [vmem:[#allocation2 + $0xf8] sm:$0xff]
    %v1496 = vld [vmem:[#allocation2 + $0x100] sm:$0xff]
    %v1497 = vld [vmem:[#allocation2 + $0x108] sm:$0xff]
    %v1498 = vld [vmem:[#allocation2 + $0x110] sm:$0xff]
    %v1499 = vld [vmem:[#allocation2 + $0x118] sm:$0xff]
    %v1500 = vld [vmem:[#allocation2 + $0x120] sm:$0xff]
    %v1501 = vld [vmem:[#allocation2 + $0x128] sm:$0xff]
    %v1502 = vld [vmem:[#allocation2 + $0x130] sm:$0xff]
    %v1503 = vld [vmem:[#allocation2 + $0x138] sm:$0xff]
    %v1504 = vld [vmem:[#allocation2 + $0x140] sm:$0xff]
    %v1505 = vld [vmem:[#allocation2 + $0x148] sm:$0xff]
    %v1506 = vld [vmem:[#allocation2 + $0x150] sm:$0xff]
    %v1507 = vld [vmem:[#allocation2 + $0x158] sm:$0xff]
    %v1508 = vld [vmem:[#allocation2 + $0x160] sm:$0xff]
    %v1509 = vld [vmem:[#allocation2 + $0x168] sm:$0xff]
    %v1510 = vld [vmem:[#allocation2 + $0x170] sm:$0xff]
    %v1511 = vld [vmem:[#allocation2 + $0x178] sm:$0xff]
    %v1512 = vld [vmem:[#allocation2 + $0x180] sm:$0xff]
    %v1513 = vld [vmem:[#allocation2 + $0x188] sm:$0xff]
    %v1514 = vld [vmem:[#allocation2 + $0x190] sm:$0xff]
    %v1515 = vld [vmem:[#allocation2 + $0x198] sm:$0xff]
    %v1516 = vld [vmem:[#allocation2 + $0x1a0] sm:$0xff]
    %v1517 = vld [vmem:[#allocation2 + $0x1a8] sm:$0xff]
    %v1518 = vld [vmem:[#allocation2 + $0x1b0] sm:$0xff]
    %v1519 = vld [vmem:[#allocation2 + $0x1b8] sm:$0xff]
    %v1520 = vld [vmem:[#allocation2 + $0x1c0] sm:$0xff]
    %v1521 = vld [vmem:[#allocation2 + $0x1c8] sm:$0xff]
    %v1522 = vld [vmem:[#allocation2 + $0x1d0] sm:$0xff]
    %v1523 = vld [vmem:[#allocation2 + $0x1d8] sm:$0xff]
    %v1524 = vld [vmem:[#allocation2 + $0x1e0] sm:$0xff]
    %v1525 = vld [vmem:[#allocation2 + $0x1e8] sm:$0xff]
    %v1526 = vld [vmem:[#allocation2 + $0x1f0] sm:$0xff]
    %v1527 = vld [vmem:[#allocation2 + $0x1f8] sm:$0xff]
    %1528 = vmatprep.subr.mxu0 %v1465
    %1529 = vmatpush1.msra.mxu0 %v1464
    %1530 = vmatprep.subr.mxu0 %v1469
    %1531 = vmatpush1.msra.mxu0 %v1468
    %1532 = vmatprep.subr.mxu0 %v1473
    %1533 = vmatpush1.msra.mxu0 %v1472
    %1534 = vmatprep.subr.mxu0 %v1477
    %1535 = vmatpush1.msra.mxu0 %v1476
    %1536 = vmatprep.subr.mxu0 %v1481
    %1537 = vmatpush1.msra.mxu0 %v1480
    %1538 = vmatprep.subr.mxu0 %v1485
    %1539 = vmatpush1.msra.mxu0 %v1484
    %1540 = vmatprep.subr.mxu0 %v1489
    %1541 = vmatpush1.msra.mxu0 %v1488
    %1542 = vmatprep.subr.mxu0 %v1493
    %1543 = vmatpush1.msra.mxu0 %v1492
    %1544 = vmatprep.subr.mxu0 %v1497
    %1545 = vmatpush1.msra.mxu0 %v1496
    %1546 = vmatprep.subr.mxu0 %v1501
    %1547 = vmatpush1.msra.mxu0 %v1500
    %1548 = vmatprep.subr.mxu0 %v1505
    %1549 = vmatpush1.msra.mxu0 %v1504
    %1550 = vmatprep.subr.mxu0 %v1509
    %1551 = vmatpush1.msra.mxu0 %v1508
    %1552 = vmatprep.subr.mxu0 %v1513
    %1553 = vmatpush1.msra.mxu0 %v1512
    %1554 = vmatprep.subr.mxu0 %v1517
    %1555 = vmatpush1.msra.mxu0 %v1516
    %1556 = vmatprep.subr.mxu0 %v1521
    %1557 = vmatpush1.msra.mxu0 %v1520
    %1558 = vmatprep.subr.mxu0 %v1525
    %1559 = vmatpush1.msra.mxu0 %v1524
    %1560 = vmatprep.subr.mxu0 0.0
    %1561 = vmatpush1.msra.mxu0 0.0
    %1562 = vmatprep.subr.mxu0 0.0
    %1563 = vmatpush1.msra.mxu0 0.0
    %1564 = vmatprep.subr.mxu0 0.0
    %1565 = vmatpush1.msra.mxu0 0.0
    %1566 = vmatprep.subr.mxu0 0.0
    %1567 = vmatpush1.msra.mxu0 0.0
    %1568 = vmatprep.subr.mxu0 0.0
    %1569 = vmatpush1.msra.mxu0 0.0
    %1570 = vmatprep.subr.mxu0 0.0
    %1571 = vmatpush1.msra.mxu0 0.0
    %1572 = vmatprep.subr.mxu0 0.0
    %1573 = vmatpush1.msra.mxu0 0.0
    %1574 = vmatprep.subr.mxu0 0.0
    %1575 = vmatpush1.msra.mxu0 0.0
    %1576 = vmatprep.subr.mxu0 0.0
    %1577 = vmatpush1.msra.mxu0 0.0
    %1578 = vmatprep.subr.mxu0 0.0
    %1579 = vmatpush1.msra.mxu0 0.0
    %1580 = vmatprep.subr.mxu0 0.0
    %1581 = vmatpush1.msra.mxu0 0.0
    %1582 = vmatprep.subr.mxu0 0.0
    %1583 = vmatpush1.msra.mxu0 0.0
    %1584 = vmatprep.subr.mxu0 0.0
    %1585 = vmatpush1.msra.mxu0 0.0
    %1586 = vmatprep.subr.mxu0 0.0
    %1587 = vmatpush1.msra.mxu0 0.0
    %1588 = vmatprep.subr.mxu0 0.0
    %1589 = vmatpush1.msra.mxu0 0.0
    %1590 = vmatprep.subr.mxu0 0.0
    %1591 = vmatpush1.msra.mxu0 0.0
    %1592 = vmatprep.mubr.f32.mxu0 0.0
    %1593 = vmatmul.mubr.f32.gmra.mrb[0].mxu0 %v1395
    %v1594 = vpop.f32.mrb[0].mxu0
    %v1595 = vadd.f32 0.0, %v1594
    %v1596 = vpop.f32.mrb[0].mxu0
    %v1597 = vadd.f32 0.0, %v1596
    %1598 = vdwg.mxu0
    %1599 = vmatprep.subr.mxu0 %v1467
    %1600 = vmatpush1.msra.mxu0 %v1466
    %1601 = vmatprep.subr.mxu0 %v1471
    %1602 = vmatpush1.msra.mxu0 %v1470
    %1603 = vmatprep.subr.mxu0 %v1475
    %1604 = vmatpush1.msra.mxu0 %v1474
    %1605 = vmatprep.subr.mxu0 %v1479
    %1606 = vmatpush1.msra.mxu0 %v1478
    %1607 = vmatprep.subr.mxu0 %v1483
    %1608 = vmatpush1.msra.mxu0 %v1482
    %1609 = vmatprep.subr.mxu0 %v1487
    %1610 = vmatpush1.msra.mxu0 %v1486
    %1611 = vmatprep.subr.mxu0 %v1491
    %1612 = vmatpush1.msra.mxu0 %v1490
    %1613 = vmatprep.subr.mxu0 %v1495
    %1614 = vmatpush1.msra.mxu0 %v1494
    %1615 = vmatprep.subr.mxu0 %v1499
    %1616 = vmatpush1.msra.mxu0 %v1498
    %1617 = vmatprep.subr.mxu0 %v1503
    %1618 = vmatpush1.msra.mxu0 %v1502
    %1619 = vmatprep.subr.mxu0 %v1507
    %1620 = vmatpush1.msra.mxu0 %v1506
    %1621 = vmatprep.subr.mxu0 %v1511
    %1622 = vmatpush1.msra.mxu0 %v1510
    %1623 = vmatprep.subr.mxu0 %v1515
    %1624 = vmatpush1.msra.mxu0 %v1514
    %1625 = vmatprep.subr.mxu0 %v1519
    %1626 = vmatpush1.msra.mxu0 %v1518
    %1627 = vmatprep.subr.mxu0 %v1523
    %1628 = vmatpush1.msra.mxu0 %v1522
    %1629 = vmatprep.subr.mxu0 %v1527
    %1630 = vmatpush1.msra.mxu0 %v1526
    %1631 = vmatprep.subr.mxu0 0.0
    %1632 = vmatpush1.msra.mxu0 0.0
    %1633 = vmatprep.subr.mxu0 0.0
    %1634 = vmatpush1.msra.mxu0 0.0
    %1635 = vmatprep.subr.mxu0 0.0
    %1636 = vmatpush1.msra.mxu0 0.0
    %1637 = vmatprep.subr.mxu0 0.0
    %1638 = vmatpush1.msra.mxu0 0.0
    %1639 = vmatprep.subr.mxu0 0.0
    %1640 = vmatpush1.msra.mxu0 0.0
    %1641 = vmatprep.subr.mxu0 0.0
    %1642 = vmatpush1.msra.mxu0 0.0
    %1643 = vmatprep.subr.mxu0 0.0
    %1644 = vmatpush1.msra.mxu0 0.0
    %1645 = vmatprep.subr.mxu0 0.0
    %1646 = vmatpush1.msra.mxu0 0.0
    %1647 = vmatprep.subr.mxu0 0.0
    %1648 = vmatpush1.msra.mxu0 0.0
    %1649 = vmatprep.subr.mxu0 0.0
    %1650 = vmatpush1.msra.mxu0 0.0
    %1651 = vmatprep.subr.mxu0 0.0
    %1652 = vmatpush1.msra.mxu0 0.0
    %1653 = vmatprep.subr.mxu0 0.0
    %1654 = vmatpush1.msra.mxu0 0.0
    %1655 = vmatprep.subr.mxu0 0.0
    %1656 = vmatpush1.msra.mxu0 0.0
    %1657 = vmatprep.subr.mxu0 0.0
    %1658 = vmatpush1.msra.mxu0 0.0
    %1659 = vmatprep.subr.mxu0 0.0
    %1660 = vmatpush1.msra.mxu0 0.0
    %1661 = vmatprep.subr.mxu0 0.0
    %1662 = vmatpush1.msra.mxu0 0.0
    %1663 = vmatprep.mubr.f32.mxu0 0.0
    %1664 = vmatmul.mubr.f32.gmra.mrb[0].mxu0 %v1395
    %v1665 = vpop.f32.mrb[0].mxu0
    %v1666 = vadd.f32 0.0, %v1665
    %v1667 = vpop.f32.mrb[0].mxu0
    %v1668 = vadd.f32 0.0, %v1667
    %1669 = vdwg.mxu0
    %1670 = vmatprep.subr.mxu0 %v1401
    %1671 = vmatpush1.msra.mxu0 %v1400
    %1672 = vmatprep.subr.mxu0 %v1405
    %1673 = vmatpush1.msra.mxu0 %v1404
    %1674 = vmatprep.subr.mxu0 %v1409
    %1675 = vmatpush1.msra.mxu0 %v1408
    %1676 = vmatprep.subr.mxu0 %v1413
    %1677 = vmatpush1.msra.mxu0 %v1412
    %1678 = vmatprep.subr.mxu0 %v1417
    %1679 = vmatpush1.msra.mxu0 %v1416
    %1680 = vmatprep.subr.mxu0 %v1421
    %1681 = vmatpush1.msra.mxu0 %v1420
    %1682 = vmatprep.subr.mxu0 %v1425
    %1683 = vmatpush1.msra.mxu0 %v1424
    %1684 = vmatprep.subr.mxu0 %v1429
    %1685 = vmatpush1.msra.mxu0 %v1428
    %1686 = vmatprep.subr.mxu0 %v1433
    %1687 = vmatpush1.msra.mxu0 %v1432
    %1688 = vmatprep.subr.mxu0 %v1437
    %1689 = vmatpush1.msra.mxu0 %v1436
    %1690 = vmatprep.subr.mxu0 %v1441
    %1691 = vmatpush1.msra.mxu0 %v1440
    %1692 = vmatprep.subr.mxu0 %v1445
    %1693 = vmatpush1.msra.mxu0 %v1444
    %1694 = vmatprep.subr.mxu0 %v1449
    %1695 = vmatpush1.msra.mxu0 %v1448
    %1696 = vmatprep.subr.mxu0 %v1453
    %1697 = vmatpush1.msra.mxu0 %v1452
    %1698 = vmatprep.subr.mxu0 %v1457
    %1699 = vmatpush1.msra.mxu0 %v1456
    %1700 = vmatprep.subr.mxu0 %v1461
    %1701 = vmatpush1.msra.mxu0 %v1460
    %1702 = vmatprep.subr.mxu0 0.0
    %1703 = vmatpush1.msra.mxu0 0.0
    %1704 = vmatprep.subr.mxu0 0.0
    %1705 = vmatpush1.msra.mxu0 0.0
    %1706 = vmatprep.subr.mxu0 0.0
    %1707 = vmatpush1.msra.mxu0 0.0
    %1708 = vmatprep.subr.mxu0 0.0
    %1709 = vmatpush1.msra.mxu0 0.0
    %1710 = vmatprep.subr.mxu0 0.0
    %1711 = vmatpush1.msra.mxu0 0.0
    %1712 = vmatprep.subr.mxu0 0.0
    %1713 = vmatpush1.msra.mxu0 0.0
    %1714 = vmatprep.subr.mxu0 0.0
    %1715 = vmatpush1.msra.mxu0 0.0
    %1716 = vmatprep.subr.mxu0 0.0
    %1717 = vmatpush1.msra.mxu0 0.0
    %1718 = vmatprep.subr.mxu0 0.0
    %1719 = vmatpush1.msra.mxu0 0.0
    %1720 = vmatprep.subr.mxu0 0.0
    %1721 = vmatpush1.msra.mxu0 0.0
    %1722 = vmatprep.subr.mxu0 0.0
    %1723 = vmatpush1.msra.mxu0 0.0
    %1724 = vmatprep.subr.mxu0 0.0
    %1725 = vmatpush1.msra.mxu0 0.0
    %1726 = vmatprep.subr.mxu0 0.0
    %1727 = vmatpush1.msra.mxu0 0.0
    %1728 = vmatprep.subr.mxu0 0.0
    %1729 = vmatpush1.msra.mxu0 0.0
    %1730 = vmatprep.subr.mxu0 0.0
    %1731 = vmatpush1.msra.mxu0 0.0
    %1732 = vmatprep.subr.mxu0 0.0
    %1733 = vmatpush1.msra.mxu0 0.0
    %1734 = vmatprep.mubr.f32.mxu0 0.0
    %1735 = vmatmul.mubr.f32.gmra.mrb[0].mxu0 %v1399
    %v1736 = vpop.f32.mrb[0].mxu0
    %v1737 = vadd.f32 %v1595, %v1736
    %v1738 = vpop.f32.mrb[0].mxu0
    %v1739 = vadd.f32 %v1597, %v1738
    %1740 = vdwg.mxu0
    %1741 = vmatprep.subr.mxu0 %v1403
    %1742 = vmatpush1.msra.mxu0 %v1402
    %1743 = vmatprep.subr.mxu0 %v1407
    %1744 = vmatpush1.msra.mxu0 %v1406
    %1745 = vmatprep.subr.mxu0 %v1411
    %1746 = vmatpush1.msra.mxu0 %v1410
    %1747 = vmatprep.subr.mxu0 %v1415
    %1748 = vmatpush1.msra.mxu0 %v1414
    %1749 = vmatprep.subr.mxu0 %v1419
    %1750 = vmatpush1.msra.mxu0 %v1418
    %1751 = vmatprep.subr.mxu0 %v1423
    %1752 = vmatpush1.msra.mxu0 %v1422
    %1753 = vmatprep.subr.mxu0 %v1427
    %1754 = vmatpush1.msra.mxu0 %v1426
    %1755 = vmatprep.subr.mxu0 %v1431
    %1756 = vmatpush1.msra.mxu0 %v1430
    %1757 = vmatprep.subr.mxu0 %v1435
    %1758 = vmatpush1.msra.mxu0 %v1434
    %1759 = vmatprep.subr.mxu0 %v1439
    %1760 = vmatpush1.msra.mxu0 %v1438
    %1761 = vmatprep.subr.mxu0 %v1443
    %1762 = vmatpush1.msra.mxu0 %v1442
    %1763 = vmatprep.subr.mxu0 %v1447
    %1764 = vmatpush1.msra.mxu0 %v1446
    %1765 = vmatprep.subr.mxu0 %v1451
    %1766 = vmatpush1.msra.mxu0 %v1450
    %1767 = vmatprep.subr.mxu0 %v1455
    %1768 = vmatpush1.msra.mxu0 %v1454
    %1769 = vmatprep.subr.mxu0 %v1459
    %1770 = vmatpush1.msra.mxu0 %v1458
    %1771 = vmatprep.subr.mxu0 %v1463
    %1772 = vmatpush1.msra.mxu0 %v1462
    %1773 = vmatprep.subr.mxu0 0.0
    %1774 = vmatpush1.msra.mxu0 0.0
    %1775 = vmatprep.subr.mxu0 0.0
    %1776 = vmatpush1.msra.mxu0 0.0
    %1777 = vmatprep.subr.mxu0 0.0
    %1778 = vmatpush1.msra.mxu0 0.0
    %1779 = vmatprep.subr.mxu0 0.0
    %1780 = vmatpush1.msra.mxu0 0.0
    %1781 = vmatprep.subr.mxu0 0.0
    %1782 = vmatpush1.msra.mxu0 0.0
    %1783 = vmatprep.subr.mxu0 0.0
    %1784 = vmatpush1.msra.mxu0 0.0
    %1785 = vmatprep.subr.mxu0 0.0
    %1786 = vmatpush1.msra.mxu0 0.0
    %1787 = vmatprep.subr.mxu0 0.0
    %1788 = vmatpush1.msra.mxu0 0.0
    %1789 = vmatprep.subr.mxu0 0.0
    %1790 = vmatpush1.msra.mxu0 0.0
    %1791 = vmatprep.subr.mxu0 0.0
    %1792 = vmatpush1.msra.mxu0 0.0
    %1793 = vmatprep.subr.mxu0 0.0
    %1794 = vmatpush1.msra.mxu0 0.0
    %1795 = vmatprep.subr.mxu0 0.0
    %1796 = vmatpush1.msra.mxu0 0.0
    %1797 = vmatprep.subr.mxu0 0.0
    %1798 = vmatpush1.msra.mxu0 0.0
    %1799 = vmatprep.subr.mxu0 0.0
    %1800 = vmatpush1.msra.mxu0 0.0
    %1801 = vmatprep.subr.mxu0 0.0
    %1802 = vmatpush1.msra.mxu0 0.0
    %1803 = vmatprep.subr.mxu0 0.0
    %1804 = vmatpush1.msra.mxu0 0.0
    %1805 = vmatprep.mubr.f32.mxu0 0.0
    %1806 = vmatmul.mubr.f32.gmra.mrb[0].mxu0 %v1399
    %v1807 = vpop.f32.mrb[0].mxu0
    %v1808 = vadd.f32 %v1666, %v1807
    %v1809 = vpop.f32.mrb[0].mxu0
    %v1810 = vadd.f32 %v1668, %v1809
    %1811 = vdwg.mxu0
    %v1812 = vadd.f32 %v1737, %v464
    %v1813 = vadd.f32 %v1739, %v468
    %v1814 = vadd.f32 %v1808, %v472
    %v1815 = vadd.f32 %v1810, %v476
    %v1816 = vxor.u32 %v1812, 2147483648
    %v1817 = vmul.f32 %v1816, 1.442695
    %v1818 = vpow.pop %v1817
    %v1819 = vadd.f32 %v1818, 1.0
    %v1820 = vrcp.pop %v1819
    %v1821 = vmul.f32 1.0, %v1820
    %v1822 = vxor.u32 %v1813, 2147483648
    %v1823 = vmul.f32 %v1822, 1.442695
    %v1824 = vpow.pop %v1823
    %v1825 = vadd.f32 %v1824, 1.0
    %v1826 = vrcp.pop %v1825
    %v1827 = vmul.f32 1.0, %v1826
    %v1828 = vtanh.pop %v1814
    %v1829 = vxor.u32 %v1815, 2147483648
    %v1830 = vmul.f32 %v1829, 1.442695
    %v1831 = vpow.pop %v1830
    %v1832 = vadd.f32 %v1831, 1.0
    %v1833 = vrcp.pop %v1832
    %v1834 = vmul.f32 1.0, %v1833
    %v1835 = vmul.f32 %v1827, %v1393
    %v1836 = vmul.f32 %v1821, %v1828
    %v1837 = vadd.f32 %v1835, %v1836
    %v1838 = vtanh.pop %v1837
    %v1839 = vmul.f32 %v1834, %v1838
    %s1840 = scalar_lea.vmem %s4, 24
    %1841 = vst [vmem:[%s1840] sm:$0xff] %v1839
    %s1842 = scalar_lea.vmem %s0, 32
    %v1843 = vld [vmem:[%s1842] sm:$0xff]
    %v1844 = vld [vmem:[%s1] sm:$0xff]
    %v1845 = vld [vmem:[%s1 + $0x8] sm:$0xff]
    %v1846 = vld [vmem:[%s1 + $0x10] sm:$0xff]
    %v1847 = vld [vmem:[%s1 + $0x18] sm:$0xff]
    %v1848 = vld [vmem:[%s1 + $0x20] sm:$0xff]
    %v1849 = vld [vmem:[%s1 + $0x28] sm:$0xff]
    %v1850 = vld [vmem:[%s1 + $0x30] sm:$0xff]
    %v1851 = vld [vmem:[%s1 + $0x38] sm:$0xff]
    %v1852 = vld [vmem:[%s1 + $0x40] sm:$0xff]
    %v1853 = vld [vmem:[%s1 + $0x48] sm:$0xff]
    %v1854 = vld [vmem:[%s1 + $0x50] sm:$0xff]
    %v1855 = vld [vmem:[%s1 + $0x58] sm:$0xff]
    %v1856 = vld [vmem:[%s1 + $0x60] sm:$0xff]
    %v1857 = vld [vmem:[%s1 + $0x68] sm:$0xff]
    %v1858 = vld [vmem:[%s1 + $0x70] sm:$0xff]
    %v1859 = vld [vmem:[%s1 + $0x78] sm:$0xff]
    %v1860 = vld [vmem:[%s1 + $0x80] sm:$0xff]
    %v1861 = vld [vmem:[%s1 + $0x88] sm:$0xff]
    %v1862 = vld [vmem:[%s1 + $0x90] sm:$0xff]
    %v1863 = vld [vmem:[%s1 + $0x98] sm:$0xff]
    %v1864 = vld [vmem:[%s1 + $0xa0] sm:$0xff]
    %v1865 = vld [vmem:[%s1 + $0xa8] sm:$0xff]
    %v1866 = vld [vmem:[%s1 + $0xb0] sm:$0xff]
    %v1867 = vld [vmem:[%s1 + $0xb8] sm:$0xff]
    %v1868 = vld [vmem:[%s1 + $0xc0] sm:$0xff]
    %v1869 = vld [vmem:[%s1 + $0xc8] sm:$0xff]
    %v1870 = vld [vmem:[%s1 + $0xd0] sm:$0xff]
    %v1871 = vld [vmem:[%s1 + $0xd8] sm:$0xff]
    %v1872 = vld [vmem:[%s1 + $0xe0] sm:$0xff]
    %v1873 = vld [vmem:[%s1 + $0xe8] sm:$0xff]
    %v1874 = vld [vmem:[%s1 + $0xf0] sm:$0xff]
    %v1875 = vld [vmem:[%s1 + $0xf8] sm:$0xff]
    %v1876 = vld [vmem:[%s1 + $0x100] sm:$0xff]
    %v1877 = vld [vmem:[%s1 + $0x108] sm:$0xff]
    %v1878 = vld [vmem:[%s1 + $0x110] sm:$0xff]
    %v1879 = vld [vmem:[%s1 + $0x118] sm:$0xff]
    %v1880 = vld [vmem:[%s1 + $0x120] sm:$0xff]
    %v1881 = vld [vmem:[%s1 + $0x128] sm:$0xff]
    %v1882 = vld [vmem:[%s1 + $0x130] sm:$0xff]
    %v1883 = vld [vmem:[%s1 + $0x138] sm:$0xff]
    %v1884 = vld [vmem:[%s1 + $0x140] sm:$0xff]
    %v1885 = vld [vmem:[%s1 + $0x148] sm:$0xff]
    %v1886 = vld [vmem:[%s1 + $0x150] sm:$0xff]
    %v1887 = vld [vmem:[%s1 + $0x158] sm:$0xff]
    %v1888 = vld [vmem:[%s1 + $0x160] sm:$0xff]
    %v1889 = vld [vmem:[%s1 + $0x168] sm:$0xff]
    %v1890 = vld [vmem:[%s1 + $0x170] sm:$0xff]
    %v1891 = vld [vmem:[%s1 + $0x178] sm:$0xff]
    %v1892 = vld [vmem:[%s1 + $0x180] sm:$0xff]
    %v1893 = vld [vmem:[%s1 + $0x188] sm:$0xff]
    %v1894 = vld [vmem:[%s1 + $0x190] sm:$0xff]
    %v1895 = vld [vmem:[%s1 + $0x198] sm:$0xff]
    %v1896 = vld [vmem:[%s1 + $0x1a0] sm:$0xff]
    %v1897 = vld [vmem:[%s1 + $0x1a8] sm:$0xff]
    %v1898 = vld [vmem:[%s1 + $0x1b0] sm:$0xff]
    %v1899 = vld [vmem:[%s1 + $0x1b8] sm:$0xff]
    %v1900 = vld [vmem:[%s1 + $0x1c0] sm:$0xff]
    %v1901 = vld [vmem:[%s1 + $0x1c8] sm:$0xff]
    %v1902 = vld [vmem:[%s1 + $0x1d0] sm:$0xff]
    %v1903 = vld [vmem:[%s1 + $0x1d8] sm:$0xff]
    %v1904 = vld [vmem:[%s1 + $0x1e0] sm:$0xff]
    %v1905 = vld [vmem:[%s1 + $0x1e8] sm:$0xff]
    %v1906 = vld [vmem:[%s1 + $0x1f0] sm:$0xff]
    %v1907 = vld [vmem:[%s1 + $0x1f8] sm:$0xff]
    %v1908 = vld [vmem:[#allocation2] sm:$0xff]
    %v1909 = vld [vmem:[#allocation2 + $0x8] sm:$0xff]
    %v1910 = vld [vmem:[#allocation2 + $0x10] sm:$0xff]
    %v1911 = vld [vmem:[#allocation2 + $0x18] sm:$0xff]
    %v1912 = vld [vmem:[#allocation2 + $0x20] sm:$0xff]
    %v1913 = vld [vmem:[#allocation2 + $0x28] sm:$0xff]
    %v1914 = vld [vmem:[#allocation2 + $0x30] sm:$0xff]
    %v1915 = vld [vmem:[#allocation2 + $0x38] sm:$0xff]
    %v1916 = vld [vmem:[#allocation2 + $0x40] sm:$0xff]
    %v1917 = vld [vmem:[#allocation2 + $0x48] sm:$0xff]
    %v1918 = vld [vmem:[#allocation2 + $0x50] sm:$0xff]
    %v1919 = vld [vmem:[#allocation2 + $0x58] sm:$0xff]
    %v1920 = vld [vmem:[#allocation2 + $0x60] sm:$0xff]
    %v1921 = vld [vmem:[#allocation2 + $0x68] sm:$0xff]
    %v1922 = vld [vmem:[#allocation2 + $0x70] sm:$0xff]
    %v1923 = vld [vmem:[#allocation2 + $0x78] sm:$0xff]
    %v1924 = vld [vmem:[#allocation2 + $0x80] sm:$0xff]
    %v1925 = vld [vmem:[#allocation2 + $0x88] sm:$0xff]
    %v1926 = vld [vmem:[#allocation2 + $0x90] sm:$0xff]
    %v1927 = vld [vmem:[#allocation2 + $0x98] sm:$0xff]
    %v1928 = vld [vmem:[#allocation2 + $0xa0] sm:$0xff]
    %v1929 = vld [vmem:[#allocation2 + $0xa8] sm:$0xff]
    %v1930 = vld [vmem:[#allocation2 + $0xb0] sm:$0xff]
    %v1931 = vld [vmem:[#allocation2 + $0xb8] sm:$0xff]
    %v1932 = vld [vmem:[#allocation2 + $0xc0] sm:$0xff]
    %v1933 = vld [vmem:[#allocation2 + $0xc8] sm:$0xff]
    %v1934 = vld [vmem:[#allocation2 + $0xd0] sm:$0xff]
    %v1935 = vld [vmem:[#allocation2 + $0xd8] sm:$0xff]
    %v1936 = vld [vmem:[#allocation2 + $0xe0] sm:$0xff]
    %v1937 = vld [vmem:[#allocation2 + $0xe8] sm:$0xff]
    %v1938 = vld [vmem:[#allocation2 + $0xf0] sm:$0xff]
    %v1939 = vld [vmem:[#allocation2 + $0xf8] sm:$0xff]
    %v1940 = vld [vmem:[#allocation2 + $0x100] sm:$0xff]
    %v1941 = vld [vmem:[#allocation2 + $0x108] sm:$0xff]
    %v1942 = vld [vmem:[#allocation2 + $0x110] sm:$0xff]
    %v1943 = vld [vmem:[#allocation2 + $0x118] sm:$0xff]
    %v1944 = vld [vmem:[#allocation2 + $0x120] sm:$0xff]
    %v1945 = vld [vmem:[#allocation2 + $0x128] sm:$0xff]
    %v1946 = vld [vmem:[#allocation2 + $0x130] sm:$0xff]
    %v1947 = vld [vmem:[#allocation2 + $0x138] sm:$0xff]
    %v1948 = vld [vmem:[#allocation2 + $0x140] sm:$0xff]
    %v1949 = vld [vmem:[#allocation2 + $0x148] sm:$0xff]
    %v1950 = vld [vmem:[#allocation2 + $0x150] sm:$0xff]
    %v1951 = vld [vmem:[#allocation2 + $0x158] sm:$0xff]
    %v1952 = vld [vmem:[#allocation2 + $0x160] sm:$0xff]
    %v1953 = vld [vmem:[#allocation2 + $0x168] sm:$0xff]
    %v1954 = vld [vmem:[#allocation2 + $0x170] sm:$0xff]
    %v1955 = vld [vmem:[#allocation2 + $0x178] sm:$0xff]
    %v1956 = vld [vmem:[#allocation2 + $0x180] sm:$0xff]
    %v1957 = vld [vmem:[#allocation2 + $0x188] sm:$0xff]
    %v1958 = vld [vmem:[#allocation2 + $0x190] sm:$0xff]
    %v1959 = vld [vmem:[#allocation2 + $0x198] sm:$0xff]
    %v1960 = vld [vmem:[#allocation2 + $0x1a0] sm:$0xff]
    %v1961 = vld [vmem:[#allocation2 + $0x1a8] sm:$0xff]
    %v1962 = vld [vmem:[#allocation2 + $0x1b0] sm:$0xff]
    %v1963 = vld [vmem:[#allocation2 + $0x1b8] sm:$0xff]
    %v1964 = vld [vmem:[#allocation2 + $0x1c0] sm:$0xff]
    %v1965 = vld [vmem:[#allocation2 + $0x1c8] sm:$0xff]
    %v1966 = vld [vmem:[#allocation2 + $0x1d0] sm:$0xff]
    %v1967 = vld [vmem:[#allocation2 + $0x1d8] sm:$0xff]
    %v1968 = vld [vmem:[#allocation2 + $0x1e0] sm:$0xff]
    %v1969 = vld [vmem:[#allocation2 + $0x1e8] sm:$0xff]
    %v1970 = vld [vmem:[#allocation2 + $0x1f0] sm:$0xff]
    %v1971 = vld [vmem:[#allocation2 + $0x1f8] sm:$0xff]
    %1972 = vmatprep.subr.mxu0 %v1909
    %1973 = vmatpush1.msra.mxu0 %v1908
    %1974 = vmatprep.subr.mxu0 %v1913
    %1975 = vmatpush1.msra.mxu0 %v1912
    %1976 = vmatprep.subr.mxu0 %v1917
    %1977 = vmatpush1.msra.mxu0 %v1916
    %1978 = vmatprep.subr.mxu0 %v1921
    %1979 = vmatpush1.msra.mxu0 %v1920
    %1980 = vmatprep.subr.mxu0 %v1925
    %1981 = vmatpush1.msra.mxu0 %v1924
    %1982 = vmatprep.subr.mxu0 %v1929
    %1983 = vmatpush1.msra.mxu0 %v1928
    %1984 = vmatprep.subr.mxu0 %v1933
    %1985 = vmatpush1.msra.mxu0 %v1932
    %1986 = vmatprep.subr.mxu0 %v1937
    %1987 = vmatpush1.msra.mxu0 %v1936
    %1988 = vmatprep.subr.mxu0 %v1941
    %1989 = vmatpush1.msra.mxu0 %v1940
    %1990 = vmatprep.subr.mxu0 %v1945
    %1991 = vmatpush1.msra.mxu0 %v1944
    %1992 = vmatprep.subr.mxu0 %v1949
    %1993 = vmatpush1.msra.mxu0 %v1948
    %1994 = vmatprep.subr.mxu0 %v1953
    %1995 = vmatpush1.msra.mxu0 %v1952
    %1996 = vmatprep.subr.mxu0 %v1957
    %1997 = vmatpush1.msra.mxu0 %v1956
    %1998 = vmatprep.subr.mxu0 %v1961
    %1999 = vmatpush1.msra.mxu0 %v1960
    %2000 = vmatprep.subr.mxu0 %v1965
    %2001 = vmatpush1.msra.mxu0 %v1964
    %2002 = vmatprep.subr.mxu0 %v1969
    %2003 = vmatpush1.msra.mxu0 %v1968
    %2004 = vmatprep.subr.mxu0 0.0
    %2005 = vmatpush1.msra.mxu0 0.0
    %2006 = vmatprep.subr.mxu0 0.0
    %2007 = vmatpush1.msra.mxu0 0.0
    %2008 = vmatprep.subr.mxu0 0.0
    %2009 = vmatpush1.msra.mxu0 0.0
    %2010 = vmatprep.subr.mxu0 0.0
    %2011 = vmatpush1.msra.mxu0 0.0
    %2012 = vmatprep.subr.mxu0 0.0
    %2013 = vmatpush1.msra.mxu0 0.0
    %2014 = vmatprep.subr.mxu0 0.0
    %2015 = vmatpush1.msra.mxu0 0.0
    %2016 = vmatprep.subr.mxu0 0.0
    %2017 = vmatpush1.msra.mxu0 0.0
    %2018 = vmatprep.subr.mxu0 0.0
    %2019 = vmatpush1.msra.mxu0 0.0
    %2020 = vmatprep.subr.mxu0 0.0
    %2021 = vmatpush1.msra.mxu0 0.0
    %2022 = vmatprep.subr.mxu0 0.0
    %2023 = vmatpush1.msra.mxu0 0.0
    %2024 = vmatprep.subr.mxu0 0.0
    %2025 = vmatpush1.msra.mxu0 0.0
    %2026 = vmatprep.subr.mxu0 0.0
    %2027 = vmatpush1.msra.mxu0 0.0
    %2028 = vmatprep.subr.mxu0 0.0
    %2029 = vmatpush1.msra.mxu0 0.0
    %2030 = vmatprep.subr.mxu0 0.0
    %2031 = vmatpush1.msra.mxu0 0.0
    %2032 = vmatprep.subr.mxu0 0.0
    %2033 = vmatpush1.msra.mxu0 0.0
    %2034 = vmatprep.subr.mxu0 0.0
    %2035 = vmatpush1.msra.mxu0 0.0
    %2036 = vmatprep.mubr.f32.mxu0 0.0
    %2037 = vmatmul.mubr.f32.gmra.mrb[0].mxu0 %v1839
    %v2038 = vpop.f32.mrb[0].mxu0
    %v2039 = vadd.f32 0.0, %v2038
    %v2040 = vpop.f32.mrb[0].mxu0
    %v2041 = vadd.f32 0.0, %v2040
    %2042 = vdwg.mxu0
    %2043 = vmatprep.subr.mxu0 %v1911
    %2044 = vmatpush1.msra.mxu0 %v1910
    %2045 = vmatprep.subr.mxu0 %v1915
    %2046 = vmatpush1.msra.mxu0 %v1914
    %2047 = vmatprep.subr.mxu0 %v1919
    %2048 = vmatpush1.msra.mxu0 %v1918
    %2049 = vmatprep.subr.mxu0 %v1923
    %2050 = vmatpush1.msra.mxu0 %v1922
    %2051 = vmatprep.subr.mxu0 %v1927
    %2052 = vmatpush1.msra.mxu0 %v1926
    %2053 = vmatprep.subr.mxu0 %v1931
    %2054 = vmatpush1.msra.mxu0 %v1930
    %2055 = vmatprep.subr.mxu0 %v1935
    %2056 = vmatpush1.msra.mxu0 %v1934
    %2057 = vmatprep.subr.mxu0 %v1939
    %2058 = vmatpush1.msra.mxu0 %v1938
    %2059 = vmatprep.subr.mxu0 %v1943
    %2060 = vmatpush1.msra.mxu0 %v1942
    %2061 = vmatprep.subr.mxu0 %v1947
    %2062 = vmatpush1.msra.mxu0 %v1946
    %2063 = vmatprep.subr.mxu0 %v1951
    %2064 = vmatpush1.msra.mxu0 %v1950
    %2065 = vmatprep.subr.mxu0 %v1955
    %2066 = vmatpush1.msra.mxu0 %v1954
    %2067 = vmatprep.subr.mxu0 %v1959
    %2068 = vmatpush1.msra.mxu0 %v1958
    %2069 = vmatprep.subr.mxu0 %v1963
    %2070 = vmatpush1.msra.mxu0 %v1962
    %2071 = vmatprep.subr.mxu0 %v1967
    %2072 = vmatpush1.msra.mxu0 %v1966
    %2073 = vmatprep.subr.mxu0 %v1971
    %2074 = vmatpush1.msra.mxu0 %v1970
    %2075 = vmatprep.subr.mxu0 0.0
    %2076 = vmatpush1.msra.mxu0 0.0
    %2077 = vmatprep.subr.mxu0 0.0
    %2078 = vmatpush1.msra.mxu0 0.0
    %2079 = vmatprep.subr.mxu0 0.0
    %2080 = vmatpush1.msra.mxu0 0.0
    %2081 = vmatprep.subr.mxu0 0.0
    %2082 = vmatpush1.msra.mxu0 0.0
    %2083 = vmatprep.subr.mxu0 0.0
    %2084 = vmatpush1.msra.mxu0 0.0
    %2085 = vmatprep.subr.mxu0 0.0
    %2086 = vmatpush1.msra.mxu0 0.0
    %2087 = vmatprep.subr.mxu0 0.0
    %2088 = vmatpush1.msra.mxu0 0.0
    %2089 = vmatprep.subr.mxu0 0.0
    %2090 = vmatpush1.msra.mxu0 0.0
    %2091 = vmatprep.subr.mxu0 0.0
    %2092 = vmatpush1.msra.mxu0 0.0
    %2093 = vmatprep.subr.mxu0 0.0
    %2094 = vmatpush1.msra.mxu0 0.0
    %2095 = vmatprep.subr.mxu0 0.0
    %2096 = vmatpush1.msra.mxu0 0.0
    %2097 = vmatprep.subr.mxu0 0.0
    %2098 = vmatpush1.msra.mxu0 0.0
    %2099 = vmatprep.subr.mxu0 0.0
    %2100 = vmatpush1.msra.mxu0 0.0
    %2101 = vmatprep.subr.mxu0 0.0
    %2102 = vmatpush1.msra.mxu0 0.0
    %2103 = vmatprep.subr.mxu0 0.0
    %2104 = vmatpush1.msra.mxu0 0.0
    %2105 = vmatprep.subr.mxu0 0.0
    %2106 = vmatpush1.msra.mxu0 0.0
    %2107 = vmatprep.mubr.f32.mxu0 0.0
    %2108 = vmatmul.mubr.f32.gmra.mrb[0].mxu0 %v1839
    %v2109 = vpop.f32.mrb[0].mxu0
    %v2110 = vadd.f32 0.0, %v2109
    %v2111 = vpop.f32.mrb[0].mxu0
    %v2112 = vadd.f32 0.0, %v2111
    %2113 = vdwg.mxu0
    %2114 = vmatprep.subr.mxu0 %v1845
    %2115 = vmatpush1.msra.mxu0 %v1844
    %2116 = vmatprep.subr.mxu0 %v1849
    %2117 = vmatpush1.msra.mxu0 %v1848
    %2118 = vmatprep.subr.mxu0 %v1853
    %2119 = vmatpush1.msra.mxu0 %v1852
    %2120 = vmatprep.subr.mxu0 %v1857
    %2121 = vmatpush1.msra.mxu0 %v1856
    %2122 = vmatprep.subr.mxu0 %v1861
    %2123 = vmatpush1.msra.mxu0 %v1860
    %2124 = vmatprep.subr.mxu0 %v1865
    %2125 = vmatpush1.msra.mxu0 %v1864
    %2126 = vmatprep.subr.mxu0 %v1869
    %2127 = vmatpush1.msra.mxu0 %v1868
    %2128 = vmatprep.subr.mxu0 %v1873
    %2129 = vmatpush1.msra.mxu0 %v1872
    %2130 = vmatprep.subr.mxu0 %v1877
    %2131 = vmatpush1.msra.mxu0 %v1876
    %2132 = vmatprep.subr.mxu0 %v1881
    %2133 = vmatpush1.msra.mxu0 %v1880
    %2134 = vmatprep.subr.mxu0 %v1885
    %2135 = vmatpush1.msra.mxu0 %v1884
    %2136 = vmatprep.subr.mxu0 %v1889
    %2137 = vmatpush1.msra.mxu0 %v1888
    %2138 = vmatprep.subr.mxu0 %v1893
    %2139 = vmatpush1.msra.mxu0 %v1892
    %2140 = vmatprep.subr.mxu0 %v1897
    %2141 = vmatpush1.msra.mxu0 %v1896
    %2142 = vmatprep.subr.mxu0 %v1901
    %2143 = vmatpush1.msra.mxu0 %v1900
    %2144 = vmatprep.subr.mxu0 %v1905
    %2145 = vmatpush1.msra.mxu0 %v1904
    %2146 = vmatprep.subr.mxu0 0.0
    %2147 = vmatpush1.msra.mxu0 0.0
    %2148 = vmatprep.subr.mxu0 0.0
    %2149 = vmatpush1.msra.mxu0 0.0
    %2150 = vmatprep.subr.mxu0 0.0
    %2151 = vmatpush1.msra.mxu0 0.0
    %2152 = vmatprep.subr.mxu0 0.0
    %2153 = vmatpush1.msra.mxu0 0.0
    %2154 = vmatprep.subr.mxu0 0.0
    %2155 = vmatpush1.msra.mxu0 0.0
    %2156 = vmatprep.subr.mxu0 0.0
    %2157 = vmatpush1.msra.mxu0 0.0
    %2158 = vmatprep.subr.mxu0 0.0
    %2159 = vmatpush1.msra.mxu0 0.0
    %2160 = vmatprep.subr.mxu0 0.0
    %2161 = vmatpush1.msra.mxu0 0.0
    %2162 = vmatprep.subr.mxu0 0.0
    %2163 = vmatpush1.msra.mxu0 0.0
    %2164 = vmatprep.subr.mxu0 0.0
    %2165 = vmatpush1.msra.mxu0 0.0
    %2166 = vmatprep.subr.mxu0 0.0
    %2167 = vmatpush1.msra.mxu0 0.0
    %2168 = vmatprep.subr.mxu0 0.0
    %2169 = vmatpush1.msra.mxu0 0.0
    %2170 = vmatprep.subr.mxu0 0.0
    %2171 = vmatpush1.msra.mxu0 0.0
    %2172 = vmatprep.subr.mxu0 0.0
    %2173 = vmatpush1.msra.mxu0 0.0
    %2174 = vmatprep.subr.mxu0 0.0
    %2175 = vmatpush1.msra.mxu0 0.0
    %2176 = vmatprep.subr.mxu0 0.0
    %2177 = vmatpush1.msra.mxu0 0.0
    %2178 = vmatprep.mubr.f32.mxu0 0.0
    %2179 = vmatmul.mubr.f32.gmra.mrb[0].mxu0 %v1843
    %v2180 = vpop.f32.mrb[0].mxu0
    %v2181 = vadd.f32 %v2039, %v2180
    %v2182 = vpop.f32.mrb[0].mxu0
    %v2183 = vadd.f32 %v2041, %v2182
    %2184 = vdwg.mxu0
    %2185 = vmatprep.subr.mxu0 %v1847
    %2186 = vmatpush1.msra.mxu0 %v1846
    %2187 = vmatprep.subr.mxu0 %v1851
    %2188 = vmatpush1.msra.mxu0 %v1850
    %2189 = vmatprep.subr.mxu0 %v1855
    %2190 = vmatpush1.msra.mxu0 %v1854
    %2191 = vmatprep.subr.mxu0 %v1859
    %2192 = vmatpush1.msra.mxu0 %v1858
    %2193 = vmatprep.subr.mxu0 %v1863
    %2194 = vmatpush1.msra.mxu0 %v1862
    %2195 = vmatprep.subr.mxu0 %v1867
    %2196 = vmatpush1.msra.mxu0 %v1866
    %2197 = vmatprep.subr.mxu0 %v1871
    %2198 = vmatpush1.msra.mxu0 %v1870
    %2199 = vmatprep.subr.mxu0 %v1875
    %2200 = vmatpush1.msra.mxu0 %v1874
    %2201 = vmatprep.subr.mxu0 %v1879
    %2202 = vmatpush1.msra.mxu0 %v1878
    %2203 = vmatprep.subr.mxu0 %v1883
    %2204 = vmatpush1.msra.mxu0 %v1882
    %2205 = vmatprep.subr.mxu0 %v1887
    %2206 = vmatpush1.msra.mxu0 %v1886
    %2207 = vmatprep.subr.mxu0 %v1891
    %2208 = vmatpush1.msra.mxu0 %v1890
    %2209 = vmatprep.subr.mxu0 %v1895
    %2210 = vmatpush1.msra.mxu0 %v1894
    %2211 = vmatprep.subr.mxu0 %v1899
    %2212 = vmatpush1.msra.mxu0 %v1898
    %2213 = vmatprep.subr.mxu0 %v1903
    %2214 = vmatpush1.msra.mxu0 %v1902
    %2215 = vmatprep.subr.mxu0 %v1907
    %2216 = vmatpush1.msra.mxu0 %v1906
    %2217 = vmatprep.subr.mxu0 0.0
    %2218 = vmatpush1.msra.mxu0 0.0
    %2219 = vmatprep.subr.mxu0 0.0
    %2220 = vmatpush1.msra.mxu0 0.0
    %2221 = vmatprep.subr.mxu0 0.0
    %2222 = vmatpush1.msra.mxu0 0.0
    %2223 = vmatprep.subr.mxu0 0.0
    %2224 = vmatpush1.msra.mxu0 0.0
    %2225 = vmatprep.subr.mxu0 0.0
    %2226 = vmatpush1.msra.mxu0 0.0
    %2227 = vmatprep.subr.mxu0 0.0
    %2228 = vmatpush1.msra.mxu0 0.0
    %2229 = vmatprep.subr.mxu0 0.0
    %2230 = vmatpush1.msra.mxu0 0.0
    %2231 = vmatprep.subr.mxu0 0.0
    %2232 = vmatpush1.msra.mxu0 0.0
    %2233 = vmatprep.subr.mxu0 0.0
    %2234 = vmatpush1.msra.mxu0 0.0
    %2235 = vmatprep.subr.mxu0 0.0
    %2236 = vmatpush1.msra.mxu0 0.0
    %2237 = vmatprep.subr.mxu0 0.0
    %2238 = vmatpush1.msra.mxu0 0.0
    %2239 = vmatprep.subr.mxu0 0.0
    %2240 = vmatpush1.msra.mxu0 0.0
    %2241 = vmatprep.subr.mxu0 0.0
    %2242 = vmatpush1.msra.mxu0 0.0
    %2243 = vmatprep.subr.mxu0 0.0
    %2244 = vmatpush1.msra.mxu0 0.0
    %2245 = vmatprep.subr.mxu0 0.0
    %2246 = vmatpush1.msra.mxu0 0.0
    %2247 = vmatprep.subr.mxu0 0.0
    %2248 = vmatpush1.msra.mxu0 0.0
    %2249 = vmatprep.mubr.f32.mxu0 0.0
    %2250 = vmatmul.mubr.f32.gmra.mrb[0].mxu0 %v1843
    %v2251 = vpop.f32.mrb[0].mxu0
    %v2252 = vadd.f32 %v2110, %v2251
    %v2253 = vpop.f32.mrb[0].mxu0
    %v2254 = vadd.f32 %v2112, %v2253
    %2255 = vdwg.mxu0
    %v2256 = vadd.f32 %v2181, %v464
    %v2257 = vadd.f32 %v2183, %v468
    %v2258 = vadd.f32 %v2252, %v472
    %v2259 = vadd.f32 %v2254, %v476
    %v2260 = vxor.u32 %v2256, 2147483648
    %v2261 = vmul.f32 %v2260, 1.442695
    %v2262 = vpow.pop %v2261
    %v2263 = vadd.f32 %v2262, 1.0
    %v2264 = vrcp.pop %v2263
    %v2265 = vmul.f32 1.0, %v2264
    %v2266 = vxor.u32 %v2257, 2147483648
    %v2267 = vmul.f32 %v2266, 1.442695
    %v2268 = vpow.pop %v2267
    %v2269 = vadd.f32 %v2268, 1.0
    %v2270 = vrcp.pop %v2269
    %v2271 = vmul.f32 1.0, %v2270
    %v2272 = vtanh.pop %v2258
    %v2273 = vxor.u32 %v2259, 2147483648
    %v2274 = vmul.f32 %v2273, 1.442695
    %v2275 = vpow.pop %v2274
    %v2276 = vadd.f32 %v2275, 1.0
    %v2277 = vrcp.pop %v2276
    %v2278 = vmul.f32 1.0, %v2277
    %v2279 = vmul.f32 %v2271, %v1837
    %v2280 = vmul.f32 %v2265, %v2272
    %v2281 = vadd.f32 %v2279, %v2280
    %v2282 = vtanh.pop %v2281
    %v2283 = vmul.f32 %v2278, %v2282
    %s2284 = scalar_lea.vmem %s4, 32
    %2285 = vst [vmem:[%s2284] sm:$0xff] %v2283
    %s2286 = scalar_lea.vmem %s0, 40
    %v2287 = vld [vmem:[%s2286] sm:$0xff]
    %v2288 = vld [vmem:[%s1] sm:$0xff]
    %v2289 = vld [vmem:[%s1 + $0x8] sm:$0xff]
    %v2290 = vld [vmem:[%s1 + $0x10] sm:$0xff]
    %v2291 = vld [vmem:[%s1 + $0x18] sm:$0xff]
    %v2292 = vld [vmem:[%s1 + $0x20] sm:$0xff]
    %v2293 = vld [vmem:[%s1 + $0x28] sm:$0xff]
    %v2294 = vld [vmem:[%s1 + $0x30] sm:$0xff]
    %v2295 = vld [vmem:[%s1 + $0x38] sm:$0xff]
    %v2296 = vld [vmem:[%s1 + $0x40] sm:$0xff]
    %v2297 = vld [vmem:[%s1 + $0x48] sm:$0xff]
    %v2298 = vld [vmem:[%s1 + $0x50] sm:$0xff]
    %v2299 = vld [vmem:[%s1 + $0x58] sm:$0xff]
    %v2300 = vld [vmem:[%s1 + $0x60] sm:$0xff]
    %v2301 = vld [vmem:[%s1 + $0x68] sm:$0xff]
    %v2302 = vld [vmem:[%s1 + $0x70] sm:$0xff]
    %v2303 = vld [vmem:[%s1 + $0x78] sm:$0xff]
    %v2304 = vld [vmem:[%s1 + $0x80] sm:$0xff]
    %v2305 = vld [vmem:[%s1 + $0x88] sm:$0xff]
    %v2306 = vld [vmem:[%s1 + $0x90] sm:$0xff]
    %v2307 = vld [vmem:[%s1 + $0x98] sm:$0xff]
    %v2308 = vld [vmem:[%s1 + $0xa0] sm:$0xff]
    %v2309 = vld [vmem:[%s1 + $0xa8] sm:$0xff]
    %v2310 = vld [vmem:[%s1 + $0xb0] sm:$0xff]
    %v2311 = vld [vmem:[%s1 + $0xb8] sm:$0xff]
    %v2312 = vld [vmem:[%s1 + $0xc0] sm:$0xff]
    %v2313 = vld [vmem:[%s1 + $0xc8] sm:$0xff]
    %v2314 = vld [vmem:[%s1 + $0xd0] sm:$0xff]
    %v2315 = vld [vmem:[%s1 + $0xd8] sm:$0xff]
    %v2316 = vld [vmem:[%s1 + $0xe0] sm:$0xff]
    %v2317 = vld [vmem:[%s1 + $0xe8] sm:$0xff]
    %v2318 = vld [vmem:[%s1 + $0xf0] sm:$0xff]
    %v2319 = vld [vmem:[%s1 + $0xf8] sm:$0xff]
    %v2320 = vld [vmem:[%s1 + $0x100] sm:$0xff]
    %v2321 = vld [vmem:[%s1 + $0x108] sm:$0xff]
    %v2322 = vld [vmem:[%s1 + $0x110] sm:$0xff]
    %v2323 = vld [vmem:[%s1 + $0x118] sm:$0xff]
    %v2324 = vld [vmem:[%s1 + $0x120] sm:$0xff]
    %v2325 = vld [vmem:[%s1 + $0x128] sm:$0xff]
    %v2326 = vld [vmem:[%s1 + $0x130] sm:$0xff]
    %v2327 = vld [vmem:[%s1 + $0x138] sm:$0xff]
    %v2328 = vld [vmem:[%s1 + $0x140] sm:$0xff]
    %v2329 = vld [vmem:[%s1 + $0x148] sm:$0xff]
    %v2330 = vld [vmem:[%s1 + $0x150] sm:$0xff]
    %v2331 = vld [vmem:[%s1 + $0x158] sm:$0xff]
    %v2332 = vld [vmem:[%s1 + $0x160] sm:$0xff]
    %v2333 = vld [vmem:[%s1 + $0x168] sm:$0xff]
    %v2334 = vld [vmem:[%s1 + $0x170] sm:$0xff]
    %v2335 = vld [vmem:[%s1 + $0x178] sm:$0xff]
    %v2336 = vld [vmem:[%s1 + $0x180] sm:$0xff]
    %v2337 = vld [vmem:[%s1 + $0x188] sm:$0xff]
    %v2338 = vld [vmem:[%s1 + $0x190] sm:$0xff]
    %v2339 = vld [vmem:[%s1 + $0x198] sm:$0xff]
    %v2340 = vld [vmem:[%s1 + $0x1a0] sm:$0xff]
    %v2341 = vld [vmem:[%s1 + $0x1a8] sm:$0xff]
    %v2342 = vld [vmem:[%s1 + $0x1b0] sm:$0xff]
    %v2343 = vld [vmem:[%s1 + $0x1b8] sm:$0xff]
    %v2344 = vld [vmem:[%s1 + $0x1c0] sm:$0xff]
    %v2345 = vld [vmem:[%s1 + $0x1c8] sm:$0xff]
    %v2346 = vld [vmem:[%s1 + $0x1d0] sm:$0xff]
    %v2347 = vld [vmem:[%s1 + $0x1d8] sm:$0xff]
    %v2348 = vld [vmem:[%s1 + $0x1e0] sm:$0xff]
    %v2349 = vld [vmem:[%s1 + $0x1e8] sm:$0xff]
    %v2350 = vld [vmem:[%s1 + $0x1f0] sm:$0xff]
    %v2351 = vld [vmem:[%s1 + $0x1f8] sm:$0xff]
    %v2352 = vld [vmem:[#allocation2] sm:$0xff]
    %v2353 = vld [vmem:[#allocation2 + $0x8] sm:$0xff]
    %v2354 = vld [vmem:[#allocation2 + $0x10] sm:$0xff]
    %v2355 = vld [vmem:[#allocation2 + $0x18] sm:$0xff]
    %v2356 = vld [vmem:[#allocation2 + $0x20] sm:$0xff]
    %v2357 = vld [vmem:[#allocation2 + $0x28] sm:$0xff]
    %v2358 = vld [vmem:[#allocation2 + $0x30] sm:$0xff]
    %v2359 = vld [vmem:[#allocation2 + $0x38] sm:$0xff]
    %v2360 = vld [vmem:[#allocation2 + $0x40] sm:$0xff]
    %v2361 = vld [vmem:[#allocation2 + $0x48] sm:$0xff]
    %v2362 = vld [vmem:[#allocation2 + $0x50] sm:$0xff]
    %v2363 = vld [vmem:[#allocation2 + $0x58] sm:$0xff]
    %v2364 = vld [vmem:[#allocation2 + $0x60] sm:$0xff]
    %v2365 = vld [vmem:[#allocation2 + $0x68] sm:$0xff]
    %v2366 = vld [vmem:[#allocation2 + $0x70] sm:$0xff]
    %v2367 = vld [vmem:[#allocation2 + $0x78] sm:$0xff]
    %v2368 = vld [vmem:[#allocation2 + $0x80] sm:$0xff]
    %v2369 = vld [vmem:[#allocation2 + $0x88] sm:$0xff]
    %v2370 = vld [vmem:[#allocation2 + $0x90] sm:$0xff]
    %v2371 = vld [vmem:[#allocation2 + $0x98] sm:$0xff]
    %v2372 = vld [vmem:[#allocation2 + $0xa0] sm:$0xff]
    %v2373 = vld [vmem:[#allocation2 + $0xa8] sm:$0xff]
    %v2374 = vld [vmem:[#allocation2 + $0xb0] sm:$0xff]
    %v2375 = vld [vmem:[#allocation2 + $0xb8] sm:$0xff]
    %v2376 = vld [vmem:[#allocation2 + $0xc0] sm:$0xff]
    %v2377 = vld [vmem:[#allocation2 + $0xc8] sm:$0xff]
    %v2378 = vld [vmem:[#allocation2 + $0xd0] sm:$0xff]
    %v2379 = vld [vmem:[#allocation2 + $0xd8] sm:$0xff]
    %v2380 = vld [vmem:[#allocation2 + $0xe0] sm:$0xff]
    %v2381 = vld [vmem:[#allocation2 + $0xe8] sm:$0xff]
    %v2382 = vld [vmem:[#allocation2 + $0xf0] sm:$0xff]
    %v2383 = vld [vmem:[#allocation2 + $0xf8] sm:$0xff]
    %v2384 = vld [vmem:[#allocation2 + $0x100] sm:$0xff]
    %v2385 = vld [vmem:[#allocation2 + $0x108] sm:$0xff]
    %v2386 = vld [vmem:[#allocation2 + $0x110] sm:$0xff]
    %v2387 = vld [vmem:[#allocation2 + $0x118] sm:$0xff]
    %v2388 = vld [vmem:[#allocation2 + $0x120] sm:$0xff]
    %v2389 = vld [vmem:[#allocation2 + $0x128] sm:$0xff]
    %v2390 = vld [vmem:[#allocation2 + $0x130] sm:$0xff]
    %v2391 = vld [vmem:[#allocation2 + $0x138] sm:$0xff]
    %v2392 = vld [vmem:[#allocation2 + $0x140] sm:$0xff]
    %v2393 = vld [vmem:[#allocation2 + $0x148] sm:$0xff]
    %v2394 = vld [vmem:[#allocation2 + $0x150] sm:$0xff]
    %v2395 = vld [vmem:[#allocation2 + $0x158] sm:$0xff]
    %v2396 = vld [vmem:[#allocation2 + $0x160] sm:$0xff]
    %v2397 = vld [vmem:[#allocation2 + $0x168] sm:$0xff]
    %v2398 = vld [vmem:[#allocation2 + $0x170] sm:$0xff]
    %v2399 = vld [vmem:[#allocation2 + $0x178] sm:$0xff]
    %v2400 = vld [vmem:[#allocation2 + $0x180] sm:$0xff]
    %v2401 = vld [vmem:[#allocation2 + $0x188] sm:$0xff]
    %v2402 = vld [vmem:[#allocation2 + $0x190] sm:$0xff]
    %v2403 = vld [vmem:[#allocation2 + $0x198] sm:$0xff]
    %v2404 = vld [vmem:[#allocation2 + $0x1a0] sm:$0xff]
    %v2405 = vld [vmem:[#allocation2 + $0x1a8] sm:$0xff]
    %v2406 = vld [vmem:[#allocation2 + $0x1b0] sm:$0xff]
    %v2407 = vld [vmem:[#allocation2 + $0x1b8] sm:$0xff]
    %v2408 = vld [vmem:[#allocation2 + $0x1c0] sm:$0xff]
    %v2409 = vld [vmem:[#allocation2 + $0x1c8] sm:$0xff]
    %v2410 = vld [vmem:[#allocation2 + $0x1d0] sm:$0xff]
    %v2411 = vld [vmem:[#allocation2 + $0x1d8] sm:$0xff]
    %v2412 = vld [vmem:[#allocation2 + $0x1e0] sm:$0xff]
    %v2413 = vld [vmem:[#allocation2 + $0x1e8] sm:$0xff]
    %v2414 = vld [vmem:[#allocation2 + $0x1f0] sm:$0xff]
    %v2415 = vld [vmem:[#allocation2 + $0x1f8] sm:$0xff]
    %2416 = vmatprep.subr.mxu0 %v2353
    %2417 = vmatpush1.msra.mxu0 %v2352
    %2418 = vmatprep.subr.mxu0 %v2357
    %2419 = vmatpush1.msra.mxu0 %v2356
    %2420 = vmatprep.subr.mxu0 %v2361
    %2421 = vmatpush1.msra.mxu0 %v2360
    %2422 = vmatprep.subr.mxu0 %v2365
    %2423 = vmatpush1.msra.mxu0 %v2364
    %2424 = vmatprep.subr.mxu0 %v2369
    %2425 = vmatpush1.msra.mxu0 %v2368
    %2426 = vmatprep.subr.mxu0 %v2373
    %2427 = vmatpush1.msra.mxu0 %v2372
    %2428 = vmatprep.subr.mxu0 %v2377
    %2429 = vmatpush1.msra.mxu0 %v2376
    %2430 = vmatprep.subr.mxu0 %v2381
    %2431 = vmatpush1.msra.mxu0 %v2380
    %2432 = vmatprep.subr.mxu0 %v2385
    %2433 = vmatpush1.msra.mxu0 %v2384
    %2434 = vmatprep.subr.mxu0 %v2389
    %2435 = vmatpush1.msra.mxu0 %v2388
    %2436 = vmatprep.subr.mxu0 %v2393
    %2437 = vmatpush1.msra.mxu0 %v2392
    %2438 = vmatprep.subr.mxu0 %v2397
    %2439 = vmatpush1.msra.mxu0 %v2396
    %2440 = vmatprep.subr.mxu0 %v2401
    %2441 = vmatpush1.msra.mxu0 %v2400
    %2442 = vmatprep.subr.mxu0 %v2405
    %2443 = vmatpush1.msra.mxu0 %v2404
    %2444 = vmatprep.subr.mxu0 %v2409
    %2445 = vmatpush1.msra.mxu0 %v2408
    %2446 = vmatprep.subr.mxu0 %v2413
    %2447 = vmatpush1.msra.mxu0 %v2412
    %2448 = vmatprep.subr.mxu0 0.0
    %2449 = vmatpush1.msra.mxu0 0.0
    %2450 = vmatprep.subr.mxu0 0.0
    %2451 = vmatpush1.msra.mxu0 0.0
    %2452 = vmatprep.subr.mxu0 0.0
    %2453 = vmatpush1.msra.mxu0 0.0
    %2454 = vmatprep.subr.mxu0 0.0
    %2455 = vmatpush1.msra.mxu0 0.0
    %2456 = vmatprep.subr.mxu0 0.0
    %2457 = vmatpush1.msra.mxu0 0.0
    %2458 = vmatprep.subr.mxu0 0.0
    %2459 = vmatpush1.msra.mxu0 0.0
    %2460 = vmatprep.subr.mxu0 0.0
    %2461 = vmatpush1.msra.mxu0 0.0
    %2462 = vmatprep.subr.mxu0 0.0
    %2463 = vmatpush1.msra.mxu0 0.0
    %2464 = vmatprep.subr.mxu0 0.0
    %2465 = vmatpush1.msra.mxu0 0.0
    %2466 = vmatprep.subr.mxu0 0.0
    %2467 = vmatpush1.msra.mxu0 0.0
    %2468 = vmatprep.subr.mxu0 0.0
    %2469 = vmatpush1.msra.mxu0 0.0
    %2470 = vmatprep.subr.mxu0 0.0
    %2471 = vmatpush1.msra.mxu0 0.0
    %2472 = vmatprep.subr.mxu0 0.0
    %2473 = vmatpush1.msra.mxu0 0.0
    %2474 = vmatprep.subr.mxu0 0.0
    %2475 = vmatpush1.msra.mxu0 0.0
    %2476 = vmatprep.subr.mxu0 0.0
    %2477 = vmatpush1.msra.mxu0 0.0
    %2478 = vmatprep.subr.mxu0 0.0
    %2479 = vmatpush1.msra.mxu0 0.0
    %2480 = vmatprep.mubr.f32.mxu0 0.0
    %2481 = vmatmul.mubr.f32.gmra.mrb[0].mxu0 %v2283
    %v2482 = vpop.f32.mrb[0].mxu0
    %v2483 = vadd.f32 0.0, %v2482
    %v2484 = vpop.f32.mrb[0].mxu0
    %v2485 = vadd.f32 0.0, %v2484
    %2486 = vdwg.mxu0
    %2487 = vmatprep.subr.mxu0 %v2355
    %2488 = vmatpush1.msra.mxu0 %v2354
    %2489 = vmatprep.subr.mxu0 %v2359
    %2490 = vmatpush1.msra.mxu0 %v2358
    %2491 = vmatprep.subr.mxu0 %v2363
    %2492 = vmatpush1.msra.mxu0 %v2362
    %2493 = vmatprep.subr.mxu0 %v2367
    %2494 = vmatpush1.msra.mxu0 %v2366
    %2495 = vmatprep.subr.mxu0 %v2371
    %2496 = vmatpush1.msra.mxu0 %v2370
    %2497 = vmatprep.subr.mxu0 %v2375
    %2498 = vmatpush1.msra.mxu0 %v2374
    %2499 = vmatprep.subr.mxu0 %v2379
    %2500 = vmatpush1.msra.mxu0 %v2378
    %2501 = vmatprep.subr.mxu0 %v2383
    %2502 = vmatpush1.msra.mxu0 %v2382
    %2503 = vmatprep.subr.mxu0 %v2387
    %2504 = vmatpush1.msra.mxu0 %v2386
    %2505 = vmatprep.subr.mxu0 %v2391
    %2506 = vmatpush1.msra.mxu0 %v2390
    %2507 = vmatprep.subr.mxu0 %v2395
    %2508 = vmatpush1.msra.mxu0 %v2394
    %2509 = vmatprep.subr.mxu0 %v2399
    %2510 = vmatpush1.msra.mxu0 %v2398
    %2511 = vmatprep.subr.mxu0 %v2403
    %2512 = vmatpush1.msra.mxu0 %v2402
    %2513 = vmatprep.subr.mxu0 %v2407
    %2514 = vmatpush1.msra.mxu0 %v2406
    %2515 = vmatprep.subr.mxu0 %v2411
    %2516 = vmatpush1.msra.mxu0 %v2410
    %2517 = vmatprep.subr.mxu0 %v2415
    %2518 = vmatpush1.msra.mxu0 %v2414
    %2519 = vmatprep.subr.mxu0 0.0
    %2520 = vmatpush1.msra.mxu0 0.0
    %2521 = vmatprep.subr.mxu0 0.0
    %2522 = vmatpush1.msra.mxu0 0.0
    %2523 = vmatprep.subr.mxu0 0.0
    %2524 = vmatpush1.msra.mxu0 0.0
    %2525 = vmatprep.subr.mxu0 0.0
    %2526 = vmatpush1.msra.mxu0 0.0
    %2527 = vmatprep.subr.mxu0 0.0
    %2528 = vmatpush1.msra.mxu0 0.0
    %2529 = vmatprep.subr.mxu0 0.0
    %2530 = vmatpush1.msra.mxu0 0.0
    %2531 = vmatprep.subr.mxu0 0.0
    %2532 = vmatpush1.msra.mxu0 0.0
    %2533 = vmatprep.subr.mxu0 0.0
    %2534 = vmatpush1.msra.mxu0 0.0
    %2535 = vmatprep.subr.mxu0 0.0
    %2536 = vmatpush1.msra.mxu0 0.0
    %2537 = vmatprep.subr.mxu0 0.0
    %2538 = vmatpush1.msra.mxu0 0.0
    %2539 = vmatprep.subr.mxu0 0.0
    %2540 = vmatpush1.msra.mxu0 0.0
    %2541 = vmatprep.subr.mxu0 0.0
    %2542 = vmatpush1.msra.mxu0 0.0
    %2543 = vmatprep.subr.mxu0 0.0
    %2544 = vmatpush1.msra.mxu0 0.0
    %2545 = vmatprep.subr.mxu0 0.0
    %2546 = vmatpush1.msra.mxu0 0.0
    %2547 = vmatprep.subr.mxu0 0.0
    %2548 = vmatpush1.msra.mxu0 0.0
    %2549 = vmatprep.subr.mxu0 0.0
    %2550 = vmatpush1.msra.mxu0 0.0
    %2551 = vmatprep.mubr.f32.mxu0 0.0
    %2552 = vmatmul.mubr.f32.gmra.mrb[0].mxu0 %v2283
    %v2553 = vpop.f32.mrb[0].mxu0
    %v2554 = vadd.f32 0.0, %v2553
    %v2555 = vpop.f32.mrb[0].mxu0
    %v2556 = vadd.f32 0.0, %v2555
    %2557 = vdwg.mxu0
    %2558 = vmatprep.subr.mxu0 %v2289
    %2559 = vmatpush1.msra.mxu0 %v2288
    %2560 = vmatprep.subr.mxu0 %v2293
    %2561 = vmatpush1.msra.mxu0 %v2292
    %2562 = vmatprep.subr.mxu0 %v2297
    %2563 = vmatpush1.msra.mxu0 %v2296
    %2564 = vmatprep.subr.mxu0 %v2301
    %2565 = vmatpush1.msra.mxu0 %v2300
    %2566 = vmatprep.subr.mxu0 %v2305
    %2567 = vmatpush1.msra.mxu0 %v2304
    %2568 = vmatprep.subr.mxu0 %v2309
    %2569 = vmatpush1.msra.mxu0 %v2308
    %2570 = vmatprep.subr.mxu0 %v2313
    %2571 = vmatpush1.msra.mxu0 %v2312
    %2572 = vmatprep.subr.mxu0 %v2317
    %2573 = vmatpush1.msra.mxu0 %v2316
    %2574 = vmatprep.subr.mxu0 %v2321
    %2575 = vmatpush1.msra.mxu0 %v2320
    %2576 = vmatprep.subr.mxu0 %v2325
    %2577 = vmatpush1.msra.mxu0 %v2324
    %2578 = vmatprep.subr.mxu0 %v2329
    %2579 = vmatpush1.msra.mxu0 %v2328
    %2580 = vmatprep.subr.mxu0 %v2333
    %2581 = vmatpush1.msra.mxu0 %v2332
    %2582 = vmatprep.subr.mxu0 %v2337
    %2583 = vmatpush1.msra.mxu0 %v2336
    %2584 = vmatprep.subr.mxu0 %v2341
    %2585 = vmatpush1.msra.mxu0 %v2340
    %2586 = vmatprep.subr.mxu0 %v2345
    %2587 = vmatpush1.msra.mxu0 %v2344
    %2588 = vmatprep.subr.mxu0 %v2349
    %2589 = vmatpush1.msra.mxu0 %v2348
    %2590 = vmatprep.subr.mxu0 0.0
    %2591 = vmatpush1.msra.mxu0 0.0
    %2592 = vmatprep.subr.mxu0 0.0
    %2593 = vmatpush1.msra.mxu0 0.0
    %2594 = vmatprep.subr.mxu0 0.0
    %2595 = vmatpush1.msra.mxu0 0.0
    %2596 = vmatprep.subr.mxu0 0.0
    %2597 = vmatpush1.msra.mxu0 0.0
    %2598 = vmatprep.subr.mxu0 0.0
    %2599 = vmatpush1.msra.mxu0 0.0
    %2600 = vmatprep.subr.mxu0 0.0
    %2601 = vmatpush1.msra.mxu0 0.0
    %2602 = vmatprep.subr.mxu0 0.0
    %2603 = vmatpush1.msra.mxu0 0.0
    %2604 = vmatprep.subr.mxu0 0.0
    %2605 = vmatpush1.msra.mxu0 0.0
    %2606 = vmatprep.subr.mxu0 0.0
    %2607 = vmatpush1.msra.mxu0 0.0
    %2608 = vmatprep.subr.mxu0 0.0
    %2609 = vmatpush1.msra.mxu0 0.0
    %2610 = vmatprep.subr.mxu0 0.0
    %2611 = vmatpush1.msra.mxu0 0.0
    %2612 = vmatprep.subr.mxu0 0.0
    %2613 = vmatpush1.msra.mxu0 0.0
    %2614 = vmatprep.subr.mxu0 0.0
    %2615 = vmatpush1.msra.mxu0 0.0
    %2616 = vmatprep.subr.mxu0 0.0
    %2617 = vmatpush1.msra.mxu0 0.0
    %2618 = vmatprep.subr.mxu0 0.0
    %2619 = vmatpush1.msra.mxu0 0.0
    %2620 = vmatprep.subr.mxu0 0.0
    %2621 = vmatpush1.msra.mxu0 0.0
    %2622 = vmatprep.mubr.f32.mxu0 0.0
    %2623 = vmatmul.mubr.f32.gmra.mrb[0].mxu0 %v2287
    %v2624 = vpop.f32.mrb[0].mxu0
    %v2625 = vadd.f32 %v2483, %v2624
    %v2626 = vpop.f32.mrb[0].mxu0
    %v2627 = vadd.f32 %v2485, %v2626
    %2628 = vdwg.mxu0
    %2629 = vmatprep.subr.mxu0 %v2291
    %2630 = vmatpush1.msra.mxu0 %v2290
    %2631 = vmatprep.subr.mxu0 %v2295
    %2632 = vmatpush1.msra.mxu0 %v2294
    %2633 = vmatprep.subr.mxu0 %v2299
    %2634 = vmatpush1.msra.mxu0 %v2298
    %2635 = vmatprep.subr.mxu0 %v2303
    %2636 = vmatpush1.msra.mxu0 %v2302
    %2637 = vmatprep.subr.mxu0 %v2307
    %2638 = vmatpush1.msra.mxu0 %v2306
    %2639 = vmatprep.subr.mxu0 %v2311
    %2640 = vmatpush1.msra.mxu0 %v2310
    %2641 = vmatprep.subr.mxu0 %v2315
    %2642 = vmatpush1.msra.mxu0 %v2314
    %2643 = vmatprep.subr.mxu0 %v2319
    %2644 = vmatpush1.msra.mxu0 %v2318
    %2645 = vmatprep.subr.mxu0 %v2323
    %2646 = vmatpush1.msra.mxu0 %v2322
    %2647 = vmatprep.subr.mxu0 %v2327
    %2648 = vmatpush1.msra.mxu0 %v2326
    %2649 = vmatprep.subr.mxu0 %v2331
    %2650 = vmatpush1.msra.mxu0 %v2330
    %2651 = vmatprep.subr.mxu0 %v2335
    %2652 = vmatpush1.msra.mxu0 %v2334
    %2653 = vmatprep.subr.mxu0 %v2339
    %2654 = vmatpush1.msra.mxu0 %v2338
    %2655 = vmatprep.subr.mxu0 %v2343
    %2656 = vmatpush1.msra.mxu0 %v2342
    %2657 = vmatprep.subr.mxu0 %v2347
    %2658 = vmatpush1.msra.mxu0 %v2346
    %2659 = vmatprep.subr.mxu0 %v2351
    %2660 = vmatpush1.msra.mxu0 %v2350
    %2661 = vmatprep.subr.mxu0 0.0
    %2662 = vmatpush1.msra.mxu0 0.0
    %2663 = vmatprep.subr.mxu0 0.0
    %2664 = vmatpush1.msra.mxu0 0.0
    %2665 = vmatprep.subr.mxu0 0.0
    %2666 = vmatpush1.msra.mxu0 0.0
    %2667 = vmatprep.subr.mxu0 0.0
    %2668 = vmatpush1.msra.mxu0 0.0
    %2669 = vmatprep.subr.mxu0 0.0
    %2670 = vmatpush1.msra.mxu0 0.0
    %2671 = vmatprep.subr.mxu0 0.0
    %2672 = vmatpush1.msra.mxu0 0.0
    %2673 = vmatprep.subr.mxu0 0.0
    %2674 = vmatpush1.msra.mxu0 0.0
    %2675 = vmatprep.subr.mxu0 0.0
    %2676 = vmatpush1.msra.mxu0 0.0
    %2677 = vmatprep.subr.mxu0 0.0
    %2678 = vmatpush1.msra.mxu0 0.0
    %2679 = vmatprep.subr.mxu0 0.0
    %2680 = vmatpush1.msra.mxu0 0.0
    %2681 = vmatprep.subr.mxu0 0.0
    %2682 = vmatpush1.msra.mxu0 0.0
    %2683 = vmatprep.subr.mxu0 0.0
    %2684 = vmatpush1.msra.mxu0 0.0
    %2685 = vmatprep.subr.mxu0 0.0
    %2686 = vmatpush1.msra.mxu0 0.0
    %2687 = vmatprep.subr.mxu0 0.0
    %2688 = vmatpush1.msra.mxu0 0.0
    %2689 = vmatprep.subr.mxu0 0.0
    %2690 = vmatpush1.msra.mxu0 0.0
    %2691 = vmatprep.subr.mxu0 0.0
    %2692 = vmatpush1.msra.mxu0 0.0
    %2693 = vmatprep.mubr.f32.mxu0 0.0
    %2694 = vmatmul.mubr.f32.gmra.mrb[0].mxu0 %v2287
    %v2695 = vpop.f32.mrb[0].mxu0
    %v2696 = vadd.f32 %v2554, %v2695
    %v2697 = vpop.f32.mrb[0].mxu0
    %v2698 = vadd.f32 %v2556, %v2697
    %2699 = vdwg.mxu0
    %v2700 = vadd.f32 %v2625, %v464
    %v2701 = vadd.f32 %v2627, %v468
    %v2702 = vadd.f32 %v2696, %v472
    %v2703 = vadd.f32 %v2698, %v476
    %v2704 = vxor.u32 %v2700, 2147483648
    %v2705 = vmul.f32 %v2704, 1.442695
    %v2706 = vpow.pop %v2705
    %v2707 = vadd.f32 %v2706, 1.0
    %v2708 = vrcp.pop %v2707
    %v2709 = vmul.f32 1.0, %v2708
    %v2710 = vxor.u32 %v2701, 2147483648
    %v2711 = vmul.f32 %v2710, 1.442695
    %v2712 = vpow.pop %v2711
    %v2713 = vadd.f32 %v2712, 1.0
    %v2714 = vrcp.pop %v2713
    %v2715 = vmul.f32 1.0, %v2714
    %v2716 = vtanh.pop %v2702
    %v2717 = vxor.u32 %v2703, 2147483648
    %v2718 = vmul.f32 %v2717, 1.442695
    %v2719 = vpow.pop %v2718
    %v2720 = vadd.f32 %v2719, 1.0
    %v2721 = vrcp.pop %v2720
    %v2722 = vmul.f32 1.0, %v2721
    %v2723 = vmul.f32 %v2715, %v2281
    %v2724 = vmul.f32 %v2709, %v2716
    %v2725 = vadd.f32 %v2723, %v2724
    %v2726 = vtanh.pop %v2725
    %v2727 = vmul.f32 %v2722, %v2726
    %s2728 = scalar_lea.vmem %s4, 40
    %2729 = vst [vmem:[%s2728] sm:$0xff] %v2727
    %s2730 = scalar_lea.vmem %s0, 48
    %v2731 = vld [vmem:[%s2730] sm:$0xff]
    %v2732 = vld [vmem:[%s1] sm:$0xff]
    %v2733 = vld [vmem:[%s1 + $0x8] sm:$0xff]
    %v2734 = vld [vmem:[%s1 + $0x10] sm:$0xff]
    %v2735 = vld [vmem:[%s1 + $0x18] sm:$0xff]
    %v2736 = vld [vmem:[%s1 + $0x20] sm:$0xff]
    %v2737 = vld [vmem:[%s1 + $0x28] sm:$0xff]
    %v2738 = vld [vmem:[%s1 + $0x30] sm:$0xff]
    %v2739 = vld [vmem:[%s1 + $0x38] sm:$0xff]
    %v2740 = vld [vmem:[%s1 + $0x40] sm:$0xff]
    %v2741 = vld [vmem:[%s1 + $0x48] sm:$0xff]
    %v2742 = vld [vmem:[%s1 + $0x50] sm:$0xff]
    %v2743 = vld [vmem:[%s1 + $0x58] sm:$0xff]
    %v2744 = vld [vmem:[%s1 + $0x60] sm:$0xff]
    %v2745 = vld [vmem:[%s1 + $0x68] sm:$0xff]
    %v2746 = vld [vmem:[%s1 + $0x70] sm:$0xff]
    %v2747 = vld [vmem:[%s1 + $0x78] sm:$0xff]
    %v2748 = vld [vmem:[%s1 + $0x80] sm:$0xff]
    %v2749 = vld [vmem:[%s1 + $0x88] sm:$0xff]
    %v2750 = vld [vmem:[%s1 + $0x90] sm:$0xff]
    %v2751 = vld [vmem:[%s1 + $0x98] sm:$0xff]
    %v2752 = vld [vmem:[%s1 + $0xa0] sm:$0xff]
    %v2753 = vld [vmem:[%s1 + $0xa8] sm:$0xff]
    %v2754 = vld [vmem:[%s1 + $0xb0] sm:$0xff]
    %v2755 = vld [vmem:[%s1 + $0xb8] sm:$0xff]
    %v2756 = vld [vmem:[%s1 + $0xc0] sm:$0xff]
    %v2757 = vld [vmem:[%s1 + $0xc8] sm:$0xff]
    %v2758 = vld [vmem:[%s1 + $0xd0] sm:$0xff]
    %v2759 = vld [vmem:[%s1 + $0xd8] sm:$0xff]
    %v2760 = vld [vmem:[%s1 + $0xe0] sm:$0xff]
    %v2761 = vld [vmem:[%s1 + $0xe8] sm:$0xff]
    %v2762 = vld [vmem:[%s1 + $0xf0] sm:$0xff]
    %v2763 = vld [vmem:[%s1 + $0xf8] sm:$0xff]
    %v2764 = vld [vmem:[%s1 + $0x100] sm:$0xff]
    %v2765 = vld [vmem:[%s1 + $0x108] sm:$0xff]
    %v2766 = vld [vmem:[%s1 + $0x110] sm:$0xff]
    %v2767 = vld [vmem:[%s1 + $0x118] sm:$0xff]
    %v2768 = vld [vmem:[%s1 + $0x120] sm:$0xff]
    %v2769 = vld [vmem:[%s1 + $0x128] sm:$0xff]
    %v2770 = vld [vmem:[%s1 + $0x130] sm:$0xff]
    %v2771 = vld [vmem:[%s1 + $0x138] sm:$0xff]
    %v2772 = vld [vmem:[%s1 + $0x140] sm:$0xff]
    %v2773 = vld [vmem:[%s1 + $0x148] sm:$0xff]
    %v2774 = vld [vmem:[%s1 + $0x150] sm:$0xff]
    %v2775 = vld [vmem:[%s1 + $0x158] sm:$0xff]
    %v2776 = vld [vmem:[%s1 + $0x160] sm:$0xff]
    %v2777 = vld [vmem:[%s1 + $0x168] sm:$0xff]
    %v2778 = vld [vmem:[%s1 + $0x170] sm:$0xff]
    %v2779 = vld [vmem:[%s1 + $0x178] sm:$0xff]
    %v2780 = vld [vmem:[%s1 + $0x180] sm:$0xff]
    %v2781 = vld [vmem:[%s1 + $0x188] sm:$0xff]
    %v2782 = vld [vmem:[%s1 + $0x190] sm:$0xff]
    %v2783 = vld [vmem:[%s1 + $0x198] sm:$0xff]
    %v2784 = vld [vmem:[%s1 + $0x1a0] sm:$0xff]
    %v2785 = vld [vmem:[%s1 + $0x1a8] sm:$0xff]
    %v2786 = vld [vmem:[%s1 + $0x1b0] sm:$0xff]
    %v2787 = vld [vmem:[%s1 + $0x1b8] sm:$0xff]
    %v2788 = vld [vmem:[%s1 + $0x1c0] sm:$0xff]
    %v2789 = vld [vmem:[%s1 + $0x1c8] sm:$0xff]
    %v2790 = vld [vmem:[%s1 + $0x1d0] sm:$0xff]
    %v2791 = vld [vmem:[%s1 + $0x1d8] sm:$0xff]
    %v2792 = vld [vmem:[%s1 + $0x1e0] sm:$0xff]
    %v2793 = vld [vmem:[%s1 + $0x1e8] sm:$0xff]
    %v2794 = vld [vmem:[%s1 + $0x1f0] sm:$0xff]
    %v2795 = vld [vmem:[%s1 + $0x1f8] sm:$0xff]
    %v2796 = vld [vmem:[#allocation2] sm:$0xff]
    %v2797 = vld [vmem:[#allocation2 + $0x8] sm:$0xff]
    %v2798 = vld [vmem:[#allocation2 + $0x10] sm:$0xff]
    %v2799 = vld [vmem:[#allocation2 + $0x18] sm:$0xff]
    %v2800 = vld [vmem:[#allocation2 + $0x20] sm:$0xff]
    %v2801 = vld [vmem:[#allocation2 + $0x28] sm:$0xff]
    %v2802 = vld [vmem:[#allocation2 + $0x30] sm:$0xff]
    %v2803 = vld [vmem:[#allocation2 + $0x38] sm:$0xff]
    %v2804 = vld [vmem:[#allocation2 + $0x40] sm:$0xff]
    %v2805 = vld [vmem:[#allocation2 + $0x48] sm:$0xff]
    %v2806 = vld [vmem:[#allocation2 + $0x50] sm:$0xff]
    %v2807 = vld [vmem:[#allocation2 + $0x58] sm:$0xff]
    %v2808 = vld [vmem:[#allocation2 + $0x60] sm:$0xff]
    %v2809 = vld [vmem:[#allocation2 + $0x68] sm:$0xff]
    %v2810 = vld [vmem:[#allocation2 + $0x70] sm:$0xff]
    %v2811 = vld [vmem:[#allocation2 + $0x78] sm:$0xff]
    %v2812 = vld [vmem:[#allocation2 + $0x80] sm:$0xff]
    %v2813 = vld [vmem:[#allocation2 + $0x88] sm:$0xff]
    %v2814 = vld [vmem:[#allocation2 + $0x90] sm:$0xff]
    %v2815 = vld [vmem:[#allocation2 + $0x98] sm:$0xff]
    %v2816 = vld [vmem:[#allocation2 + $0xa0] sm:$0xff]
    %v2817 = vld [vmem:[#allocation2 + $0xa8] sm:$0xff]
    %v2818 = vld [vmem:[#allocation2 + $0xb0] sm:$0xff]
    %v2819 = vld [vmem:[#allocation2 + $0xb8] sm:$0xff]
    %v2820 = vld [vmem:[#allocation2 + $0xc0] sm:$0xff]
    %v2821 = vld [vmem:[#allocation2 + $0xc8] sm:$0xff]
    %v2822 = vld [vmem:[#allocation2 + $0xd0] sm:$0xff]
    %v2823 = vld [vmem:[#allocation2 + $0xd8] sm:$0xff]
    %v2824 = vld [vmem:[#allocation2 + $0xe0] sm:$0xff]
    %v2825 = vld [vmem:[#allocation2 + $0xe8] sm:$0xff]
    %v2826 = vld [vmem:[#allocation2 + $0xf0] sm:$0xff]
    %v2827 = vld [vmem:[#allocation2 + $0xf8] sm:$0xff]
    %v2828 = vld [vmem:[#allocation2 + $0x100] sm:$0xff]
    %v2829 = vld [vmem:[#allocation2 + $0x108] sm:$0xff]
    %v2830 = vld [vmem:[#allocation2 + $0x110] sm:$0xff]
    %v2831 = vld [vmem:[#allocation2 + $0x118] sm:$0xff]
    %v2832 = vld [vmem:[#allocation2 + $0x120] sm:$0xff]
    %v2833 = vld [vmem:[#allocation2 + $0x128] sm:$0xff]
    %v2834 = vld [vmem:[#allocation2 + $0x130] sm:$0xff]
    %v2835 = vld [vmem:[#allocation2 + $0x138] sm:$0xff]
    %v2836 = vld [vmem:[#allocation2 + $0x140] sm:$0xff]
    %v2837 = vld [vmem:[#allocation2 + $0x148] sm:$0xff]
    %v2838 = vld [vmem:[#allocation2 + $0x150] sm:$0xff]
    %v2839 = vld [vmem:[#allocation2 + $0x158] sm:$0xff]
    %v2840 = vld [vmem:[#allocation2 + $0x160] sm:$0xff]
    %v2841 = vld [vmem:[#allocation2 + $0x168] sm:$0xff]
    %v2842 = vld [vmem:[#allocation2 + $0x170] sm:$0xff]
    %v2843 = vld [vmem:[#allocation2 + $0x178] sm:$0xff]
    %v2844 = vld [vmem:[#allocation2 + $0x180] sm:$0xff]
    %v2845 = vld [vmem:[#allocation2 + $0x188] sm:$0xff]
    %v2846 = vld [vmem:[#allocation2 + $0x190] sm:$0xff]
    %v2847 = vld [vmem:[#allocation2 + $0x198] sm:$0xff]
    %v2848 = vld [vmem:[#allocation2 + $0x1a0] sm:$0xff]
    %v2849 = vld [vmem:[#allocation2 + $0x1a8] sm:$0xff]
    %v2850 = vld [vmem:[#allocation2 + $0x1b0] sm:$0xff]
    %v2851 = vld [vmem:[#allocation2 + $0x1b8] sm:$0xff]
    %v2852 = vld [vmem:[#allocation2 + $0x1c0] sm:$0xff]
    %v2853 = vld [vmem:[#allocation2 + $0x1c8] sm:$0xff]
    %v2854 = vld [vmem:[#allocation2 + $0x1d0] sm:$0xff]
    %v2855 = vld [vmem:[#allocation2 + $0x1d8] sm:$0xff]
    %v2856 = vld [vmem:[#allocation2 + $0x1e0] sm:$0xff]
    %v2857 = vld [vmem:[#allocation2 + $0x1e8] sm:$0xff]
    %v2858 = vld [vmem:[#allocation2 + $0x1f0] sm:$0xff]
    %v2859 = vld [vmem:[#allocation2 + $0x1f8] sm:$0xff]
    %2860 = vmatprep.subr.mxu0 %v2797
    %2861 = vmatpush1.msra.mxu0 %v2796
    %2862 = vmatprep.subr.mxu0 %v2801
    %2863 = vmatpush1.msra.mxu0 %v2800
    %2864 = vmatprep.subr.mxu0 %v2805
    %2865 = vmatpush1.msra.mxu0 %v2804
    %2866 = vmatprep.subr.mxu0 %v2809
    %2867 = vmatpush1.msra.mxu0 %v2808
    %2868 = vmatprep.subr.mxu0 %v2813
    %2869 = vmatpush1.msra.mxu0 %v2812
    %2870 = vmatprep.subr.mxu0 %v2817
    %2871 = vmatpush1.msra.mxu0 %v2816
    %2872 = vmatprep.subr.mxu0 %v2821
    %2873 = vmatpush1.msra.mxu0 %v2820
    %2874 = vmatprep.subr.mxu0 %v2825
    %2875 = vmatpush1.msra.mxu0 %v2824
    %2876 = vmatprep.subr.mxu0 %v2829
    %2877 = vmatpush1.msra.mxu0 %v2828
    %2878 = vmatprep.subr.mxu0 %v2833
    %2879 = vmatpush1.msra.mxu0 %v2832
    %2880 = vmatprep.subr.mxu0 %v2837
    %2881 = vmatpush1.msra.mxu0 %v2836
    %2882 = vmatprep.subr.mxu0 %v2841
    %2883 = vmatpush1.msra.mxu0 %v2840
    %2884 = vmatprep.subr.mxu0 %v2845
    %2885 = vmatpush1.msra.mxu0 %v2844
    %2886 = vmatprep.subr.mxu0 %v2849
    %2887 = vmatpush1.msra.mxu0 %v2848
    %2888 = vmatprep.subr.mxu0 %v2853
    %2889 = vmatpush1.msra.mxu0 %v2852
    %2890 = vmatprep.subr.mxu0 %v2857
    %2891 = vmatpush1.msra.mxu0 %v2856
    %2892 = vmatprep.subr.mxu0 0.0
    %2893 = vmatpush1.msra.mxu0 0.0
    %2894 = vmatprep.subr.mxu0 0.0
    %2895 = vmatpush1.msra.mxu0 0.0
    %2896 = vmatprep.subr.mxu0 0.0
    %2897 = vmatpush1.msra.mxu0 0.0
    %2898 = vmatprep.subr.mxu0 0.0
    %2899 = vmatpush1.msra.mxu0 0.0
    %2900 = vmatprep.subr.mxu0 0.0
    %2901 = vmatpush1.msra.mxu0 0.0
    %2902 = vmatprep.subr.mxu0 0.0
    %2903 = vmatpush1.msra.mxu0 0.0
    %2904 = vmatprep.subr.mxu0 0.0
    %2905 = vmatpush1.msra.mxu0 0.0
    %2906 = vmatprep.subr.mxu0 0.0
    %2907 = vmatpush1.msra.mxu0 0.0
    %2908 = vmatprep.subr.mxu0 0.0
    %2909 = vmatpush1.msra.mxu0 0.0
    %2910 = vmatprep.subr.mxu0 0.0
    %2911 = vmatpush1.msra.mxu0 0.0
    %2912 = vmatprep.subr.mxu0 0.0
    %2913 = vmatpush1.msra.mxu0 0.0
    %2914 = vmatprep.subr.mxu0 0.0
    %2915 = vmatpush1.msra.mxu0 0.0
    %2916 = vmatprep.subr.mxu0 0.0
    %2917 = vmatpush1.msra.mxu0 0.0
    %2918 = vmatprep.subr.mxu0 0.0
    %2919 = vmatpush1.msra.mxu0 0.0
    %2920 = vmatprep.subr.mxu0 0.0
    %2921 = vmatpush1.msra.mxu0 0.0
    %2922 = vmatprep.subr.mxu0 0.0
    %2923 = vmatpush1.msra.mxu0 0.0
    %2924 = vmatprep.mubr.f32.mxu0 0.0
    %2925 = vmatmul.mubr.f32.gmra.mrb[0].mxu0 %v2727
    %v2926 = vpop.f32.mrb[0].mxu0
    %v2927 = vadd.f32 0.0, %v2926
    %v2928 = vpop.f32.mrb[0].mxu0
    %v2929 = vadd.f32 0.0, %v2928
    %2930 = vdwg.mxu0
    %2931 = vmatprep.subr.mxu0 %v2799
    %2932 = vmatpush1.msra.mxu0 %v2798
    %2933 = vmatprep.subr.mxu0 %v2803
    %2934 = vmatpush1.msra.mxu0 %v2802
    %2935 = vmatprep.subr.mxu0 %v2807
    %2936 = vmatpush1.msra.mxu0 %v2806
    %2937 = vmatprep.subr.mxu0 %v2811
    %2938 = vmatpush1.msra.mxu0 %v2810
    %2939 = vmatprep.subr.mxu0 %v2815
    %2940 = vmatpush1.msra.mxu0 %v2814
    %2941 = vmatprep.subr.mxu0 %v2819
    %2942 = vmatpush1.msra.mxu0 %v2818
    %2943 = vmatprep.subr.mxu0 %v2823
    %2944 = vmatpush1.msra.mxu0 %v2822
    %2945 = vmatprep.subr.mxu0 %v2827
    %2946 = vmatpush1.msra.mxu0 %v2826
    %2947 = vmatprep.subr.mxu0 %v2831
    %2948 = vmatpush1.msra.mxu0 %v2830
    %2949 = vmatprep.subr.mxu0 %v2835
    %2950 = vmatpush1.msra.mxu0 %v2834
    %2951 = vmatprep.subr.mxu0 %v2839
    %2952 = vmatpush1.msra.mxu0 %v2838
    %2953 = vmatprep.subr.mxu0 %v2843
    %2954 = vmatpush1.msra.mxu0 %v2842
    %2955 = vmatprep.subr.mxu0 %v2847
    %2956 = vmatpush1.msra.mxu0 %v2846
    %2957 = vmatprep.subr.mxu0 %v2851
    %2958 = vmatpush1.msra.mxu0 %v2850
    %2959 = vmatprep.subr.mxu0 %v2855
    %2960 = vmatpush1.msra.mxu0 %v2854
    %2961 = vmatprep.subr.mxu0 %v2859
    %2962 = vmatpush1.msra.mxu0 %v2858
    %2963 = vmatprep.subr.mxu0 0.0
    %2964 = vmatpush1.msra.mxu0 0.0
    %2965 = vmatprep.subr.mxu0 0.0
    %2966 = vmatpush1.msra.mxu0 0.0
    %2967 = vmatprep.subr.mxu0 0.0
    %2968 = vmatpush1.msra.mxu0 0.0
    %2969 = vmatprep.subr.mxu0 0.0
    %2970 = vmatpush1.msra.mxu0 0.0
    %2971 = vmatprep.subr.mxu0 0.0
    %2972 = vmatpush1.msra.mxu0 0.0
    %2973 = vmatprep.subr.mxu0 0.0
    %2974 = vmatpush1.msra.mxu0 0.0
    %2975 = vmatprep.subr.mxu0 0.0
    %2976 = vmatpush1.msra.mxu0 0.0
    %2977 = vmatprep.subr.mxu0 0.0
    %2978 = vmatpush1.msra.mxu0 0.0
    %2979 = vmatprep.subr.mxu0 0.0
    %2980 = vmatpush1.msra.mxu0 0.0
    %2981 = vmatprep.subr.mxu0 0.0
    %2982 = vmatpush1.msra.mxu0 0.0
    %2983 = vmatprep.subr.mxu0 0.0
    %2984 = vmatpush1.msra.mxu0 0.0
    %2985 = vmatprep.subr.mxu0 0.0
    %2986 = vmatpush1.msra.mxu0 0.0
    %2987 = vmatprep.subr.mxu0 0.0
    %2988 = vmatpush1.msra.mxu0 0.0
    %2989 = vmatprep.subr.mxu0 0.0
    %2990 = vmatpush1.msra.mxu0 0.0
    %2991 = vmatprep.subr.mxu0 0.0
    %2992 = vmatpush1.msra.mxu0 0.0
    %2993 = vmatprep.subr.mxu0 0.0
    %2994 = vmatpush1.msra.mxu0 0.0
    %2995 = vmatprep.mubr.f32.mxu0 0.0
    %2996 = vmatmul.mubr.f32.gmra.mrb[0].mxu0 %v2727
    %v2997 = vpop.f32.mrb[0].mxu0
    %v2998 = vadd.f32 0.0, %v2997
    %v2999 = vpop.f32.mrb[0].mxu0
    %v3000 = vadd.f32 0.0, %v2999
    %3001 = vdwg.mxu0
    %3002 = vmatprep.subr.mxu0 %v2733
    %3003 = vmatpush1.msra.mxu0 %v2732
    %3004 = vmatprep.subr.mxu0 %v2737
    %3005 = vmatpush1.msra.mxu0 %v2736
    %3006 = vmatprep.subr.mxu0 %v2741
    %3007 = vmatpush1.msra.mxu0 %v2740
    %3008 = vmatprep.subr.mxu0 %v2745
    %3009 = vmatpush1.msra.mxu0 %v2744
    %3010 = vmatprep.subr.mxu0 %v2749
    %3011 = vmatpush1.msra.mxu0 %v2748
    %3012 = vmatprep.subr.mxu0 %v2753
    %3013 = vmatpush1.msra.mxu0 %v2752
    %3014 = vmatprep.subr.mxu0 %v2757
    %3015 = vmatpush1.msra.mxu0 %v2756
    %3016 = vmatprep.subr.mxu0 %v2761
    %3017 = vmatpush1.msra.mxu0 %v2760
    %3018 = vmatprep.subr.mxu0 %v2765
    %3019 = vmatpush1.msra.mxu0 %v2764
    %3020 = vmatprep.subr.mxu0 %v2769
    %3021 = vmatpush1.msra.mxu0 %v2768
    %3022 = vmatprep.subr.mxu0 %v2773
    %3023 = vmatpush1.msra.mxu0 %v2772
    %3024 = vmatprep.subr.mxu0 %v2777
    %3025 = vmatpush1.msra.mxu0 %v2776
    %3026 = vmatprep.subr.mxu0 %v2781
    %3027 = vmatpush1.msra.mxu0 %v2780
    %3028 = vmatprep.subr.mxu0 %v2785
    %3029 = vmatpush1.msra.mxu0 %v2784
    %3030 = vmatprep.subr.mxu0 %v2789
    %3031 = vmatpush1.msra.mxu0 %v2788
    %3032 = vmatprep.subr.mxu0 %v2793
    %3033 = vmatpush1.msra.mxu0 %v2792
    %3034 = vmatprep.subr.mxu0 0.0
    %3035 = vmatpush1.msra.mxu0 0.0
    %3036 = vmatprep.subr.mxu0 0.0
    %3037 = vmatpush1.msra.mxu0 0.0
    %3038 = vmatprep.subr.mxu0 0.0
    %3039 = vmatpush1.msra.mxu0 0.0
    %3040 = vmatprep.subr.mxu0 0.0
    %3041 = vmatpush1.msra.mxu0 0.0
    %3042 = vmatprep.subr.mxu0 0.0
    %3043 = vmatpush1.msra.mxu0 0.0
    %3044 = vmatprep.subr.mxu0 0.0
    %3045 = vmatpush1.msra.mxu0 0.0
    %3046 = vmatprep.subr.mxu0 0.0
    %3047 = vmatpush1.msra.mxu0 0.0
    %3048 = vmatprep.subr.mxu0 0.0
    %3049 = vmatpush1.msra.mxu0 0.0
    %3050 = vmatprep.subr.mxu0 0.0
    %3051 = vmatpush1.msra.mxu0 0.0
    %3052 = vmatprep.subr.mxu0 0.0
    %3053 = vmatpush1.msra.mxu0 0.0
    %3054 = vmatprep.subr.mxu0 0.0
    %3055 = vmatpush1.msra.mxu0 0.0
    %3056 = vmatprep.subr.mxu0 0.0
    %3057 = vmatpush1.msra.mxu0 0.0
    %3058 = vmatprep.subr.mxu0 0.0
    %3059 = vmatpush1.msra.mxu0 0.0
    %3060 = vmatprep.subr.mxu0 0.0
    %3061 = vmatpush1.msra.mxu0 0.0
    %3062 = vmatprep.subr.mxu0 0.0
    %3063 = vmatpush1.msra.mxu0 0.0
    %3064 = vmatprep.subr.mxu0 0.0
    %3065 = vmatpush1.msra.mxu0 0.0
    %3066 = vmatprep.mubr.f32.mxu0 0.0
    %3067 = vmatmul.mubr.f32.gmra.mrb[0].mxu0 %v2731
    %v3068 = vpop.f32.mrb[0].mxu0
    %v3069 = vadd.f32 %v2927, %v3068
    %v3070 = vpop.f32.mrb[0].mxu0
    %v3071 = vadd.f32 %v2929, %v3070
    %3072 = vdwg.mxu0
    %3073 = vmatprep.subr.mxu0 %v2735
    %3074 = vmatpush1.msra.mxu0 %v2734
    %3075 = vmatprep.subr.mxu0 %v2739
    %3076 = vmatpush1.msra.mxu0 %v2738
    %3077 = vmatprep.subr.mxu0 %v2743
    %3078 = vmatpush1.msra.mxu0 %v2742
    %3079 = vmatprep.subr.mxu0 %v2747
    %3080 = vmatpush1.msra.mxu0 %v2746
    %3081 = vmatprep.subr.mxu0 %v2751
    %3082 = vmatpush1.msra.mxu0 %v2750
    %3083 = vmatprep.subr.mxu0 %v2755
    %3084 = vmatpush1.msra.mxu0 %v2754
    %3085 = vmatprep.subr.mxu0 %v2759
    %3086 = vmatpush1.msra.mxu0 %v2758
    %3087 = vmatprep.subr.mxu0 %v2763
    %3088 = vmatpush1.msra.mxu0 %v2762
    %3089 = vmatprep.subr.mxu0 %v2767
    %3090 = vmatpush1.msra.mxu0 %v2766
    %3091 = vmatprep.subr.mxu0 %v2771
    %3092 = vmatpush1.msra.mxu0 %v2770
    %3093 = vmatprep.subr.mxu0 %v2775
    %3094 = vmatpush1.msra.mxu0 %v2774
    %3095 = vmatprep.subr.mxu0 %v2779
    %3096 = vmatpush1.msra.mxu0 %v2778
    %3097 = vmatprep.subr.mxu0 %v2783
    %3098 = vmatpush1.msra.mxu0 %v2782
    %3099 = vmatprep.subr.mxu0 %v2787
    %3100 = vmatpush1.msra.mxu0 %v2786
    %3101 = vmatprep.subr.mxu0 %v2791
    %3102 = vmatpush1.msra.mxu0 %v2790
    %3103 = vmatprep.subr.mxu0 %v2795
    %3104 = vmatpush1.msra.mxu0 %v2794
    %3105 = vmatprep.subr.mxu0 0.0
    %3106 = vmatpush1.msra.mxu0 0.0
    %3107 = vmatprep.subr.mxu0 0.0
    %3108 = vmatpush1.msra.mxu0 0.0
    %3109 = vmatprep.subr.mxu0 0.0
    %3110 = vmatpush1.msra.mxu0 0.0
    %3111 = vmatprep.subr.mxu0 0.0
    %3112 = vmatpush1.msra.mxu0 0.0
    %3113 = vmatprep.subr.mxu0 0.0
    %3114 = vmatpush1.msra.mxu0 0.0
    %3115 = vmatprep.subr.mxu0 0.0
    %3116 = vmatpush1.msra.mxu0 0.0
    %3117 = vmatprep.subr.mxu0 0.0
    %3118 = vmatpush1.msra.mxu0 0.0
    %3119 = vmatprep.subr.mxu0 0.0
    %3120 = vmatpush1.msra.mxu0 0.0
    %3121 = vmatprep.subr.mxu0 0.0
    %3122 = vmatpush1.msra.mxu0 0.0
    %3123 = vmatprep.subr.mxu0 0.0
    %3124 = vmatpush1.msra.mxu0 0.0
    %3125 = vmatprep.subr.mxu0 0.0
    %3126 = vmatpush1.msra.mxu0 0.0
    %3127 = vmatprep.subr.mxu0 0.0
    %3128 = vmatpush1.msra.mxu0 0.0
    %3129 = vmatprep.subr.mxu0 0.0
    %3130 = vmatpush1.msra.mxu0 0.0
    %3131 = vmatprep.subr.mxu0 0.0
    %3132 = vmatpush1.msra.mxu0 0.0
    %3133 = vmatprep.subr.mxu0 0.0
    %3134 = vmatpush1.msra.mxu0 0.0
    %3135 = vmatprep.subr.mxu0 0.0
    %3136 = vmatpush1.msra.mxu0 0.0
    %3137 = vmatprep.mubr.f32.mxu0 0.0
    %3138 = vmatmul.mubr.f32.gmra.mrb[0].mxu0 %v2731
    %v3139 = vpop.f32.mrb[0].mxu0
    %v3140 = vadd.f32 %v2998, %v3139
    %v3141 = vpop.f32.mrb[0].mxu0
    %v3142 = vadd.f32 %v3000, %v3141
    %3143 = vdwg.mxu0
    %v3144 = vadd.f32 %v3069, %v464
    %v3145 = vadd.f32 %v3071, %v468
    %v3146 = vadd.f32 %v3140, %v472
    %v3147 = vadd.f32 %v3142, %v476
    %v3148 = vxor.u32 %v3144, 2147483648
    %v3149 = vmul.f32 %v3148, 1.442695
    %v3150 = vpow.pop %v3149
    %v3151 = vadd.f32 %v3150, 1.0
    %v3152 = vrcp.pop %v3151
    %v3153 = vmul.f32 1.0, %v3152
    %v3154 = vxor.u32 %v3145, 2147483648
    %v3155 = vmul.f32 %v3154, 1.442695
    %v3156 = vpow.pop %v3155
    %v3157 = vadd.f32 %v3156, 1.0
    %v3158 = vrcp.pop %v3157
    %v3159 = vmul.f32 1.0, %v3158
    %v3160 = vtanh.pop %v3146
    %v3161 = vxor.u32 %v3147, 2147483648
    %v3162 = vmul.f32 %v3161, 1.442695
    %v3163 = vpow.pop %v3162
    %v3164 = vadd.f32 %v3163, 1.0
    %v3165 = vrcp.pop %v3164
    %v3166 = vmul.f32 1.0, %v3165
    %v3167 = vmul.f32 %v3159, %v2725
    %v3168 = vmul.f32 %v3153, %v3160
    %v3169 = vadd.f32 %v3167, %v3168
    %v3170 = vtanh.pop %v3169
    %v3171 = vmul.f32 %v3166, %v3170
    %s3172 = scalar_lea.vmem %s4, 48
    %3173 = vst [vmem:[%s3172] sm:$0xff] %v3171
    %s3174 = scalar_lea.vmem %s0, 56
    %v3175 = vld [vmem:[%s3174] sm:$0xff]
    %v3176 = vld [vmem:[%s1] sm:$0xff]
    %v3177 = vld [vmem:[%s1 + $0x8] sm:$0xff]
    %v3178 = vld [vmem:[%s1 + $0x10] sm:$0xff]
    %v3179 = vld [vmem:[%s1 + $0x18] sm:$0xff]
    %v3180 = vld [vmem:[%s1 + $0x20] sm:$0xff]
    %v3181 = vld [vmem:[%s1 + $0x28] sm:$0xff]
    %v3182 = vld [vmem:[%s1 + $0x30] sm:$0xff]
    %v3183 = vld [vmem:[%s1 + $0x38] sm:$0xff]
    %v3184 = vld [vmem:[%s1 + $0x40] sm:$0xff]
    %v3185 = vld [vmem:[%s1 + $0x48] sm:$0xff]
    %v3186 = vld [vmem:[%s1 + $0x50] sm:$0xff]
    %v3187 = vld [vmem:[%s1 + $0x58] sm:$0xff]
    %v3188 = vld [vmem:[%s1 + $0x60] sm:$0xff]
    %v3189 = vld [vmem:[%s1 + $0x68] sm:$0xff]
    %v3190 = vld [vmem:[%s1 + $0x70] sm:$0xff]
    %v3191 = vld [vmem:[%s1 + $0x78] sm:$0xff]
    %v3192 = vld [vmem:[%s1 + $0x80] sm:$0xff]
    %v3193 = vld [vmem:[%s1 + $0x88] sm:$0xff]
    %v3194 = vld [vmem:[%s1 + $0x90] sm:$0xff]
    %v3195 = vld [vmem:[%s1 + $0x98] sm:$0xff]
    %v3196 = vld [vmem:[%s1 + $0xa0] sm:$0xff]
    %v3197 = vld [vmem:[%s1 + $0xa8] sm:$0xff]
    %v3198 = vld [vmem:[%s1 + $0xb0] sm:$0xff]
    %v3199 = vld [vmem:[%s1 + $0xb8] sm:$0xff]
    %v3200 = vld [vmem:[%s1 + $0xc0] sm:$0xff]
    %v3201 = vld [vmem:[%s1 + $0xc8] sm:$0xff]
    %v3202 = vld [vmem:[%s1 + $0xd0] sm:$0xff]
    %v3203 = vld [vmem:[%s1 + $0xd8] sm:$0xff]
    %v3204 = vld [vmem:[%s1 + $0xe0] sm:$0xff]
    %v3205 = vld [vmem:[%s1 + $0xe8] sm:$0xff]
    %v3206 = vld [vmem:[%s1 + $0xf0] sm:$0xff]
    %v3207 = vld [vmem:[%s1 + $0xf8] sm:$0xff]
    %v3208 = vld [vmem:[%s1 + $0x100] sm:$0xff]
    %v3209 = vld [vmem:[%s1 + $0x108] sm:$0xff]
    %v3210 = vld [vmem:[%s1 + $0x110] sm:$0xff]
    %v3211 = vld [vmem:[%s1 + $0x118] sm:$0xff]
    %v3212 = vld [vmem:[%s1 + $0x120] sm:$0xff]
    %v3213 = vld [vmem:[%s1 + $0x128] sm:$0xff]
    %v3214 = vld [vmem:[%s1 + $0x130] sm:$0xff]
    %v3215 = vld [vmem:[%s1 + $0x138] sm:$0xff]
    %v3216 = vld [vmem:[%s1 + $0x140] sm:$0xff]
    %v3217 = vld [vmem:[%s1 + $0x148] sm:$0xff]
    %v3218 = vld [vmem:[%s1 + $0x150] sm:$0xff]
    %v3219 = vld [vmem:[%s1 + $0x158] sm:$0xff]
    %v3220 = vld [vmem:[%s1 + $0x160] sm:$0xff]
    %v3221 = vld [vmem:[%s1 + $0x168] sm:$0xff]
    %v3222 = vld [vmem:[%s1 + $0x170] sm:$0xff]
    %v3223 = vld [vmem:[%s1 + $0x178] sm:$0xff]
    %v3224 = vld [vmem:[%s1 + $0x180] sm:$0xff]
    %v3225 = vld [vmem:[%s1 + $0x188] sm:$0xff]
    %v3226 = vld [vmem:[%s1 + $0x190] sm:$0xff]
    %v3227 = vld [vmem:[%s1 + $0x198] sm:$0xff]
    %v3228 = vld [vmem:[%s1 + $0x1a0] sm:$0xff]
    %v3229 = vld [vmem:[%s1 + $0x1a8] sm:$0xff]
    %v3230 = vld [vmem:[%s1 + $0x1b0] sm:$0xff]
    %v3231 = vld [vmem:[%s1 + $0x1b8] sm:$0xff]
    %v3232 = vld [vmem:[%s1 + $0x1c0] sm:$0xff]
    %v3233 = vld [vmem:[%s1 + $0x1c8] sm:$0xff]
    %v3234 = vld [vmem:[%s1 + $0x1d0] sm:$0xff]
    %v3235 = vld [vmem:[%s1 + $0x1d8] sm:$0xff]
    %v3236 = vld [vmem:[%s1 + $0x1e0] sm:$0xff]
    %v3237 = vld [vmem:[%s1 + $0x1e8] sm:$0xff]
    %v3238 = vld [vmem:[%s1 + $0x1f0] sm:$0xff]
    %v3239 = vld [vmem:[%s1 + $0x1f8] sm:$0xff]
    %v3240 = vld [vmem:[#allocation2] sm:$0xff]
    %v3241 = vld [vmem:[#allocation2 + $0x8] sm:$0xff]
    %v3242 = vld [vmem:[#allocation2 + $0x10] sm:$0xff]
    %v3243 = vld [vmem:[#allocation2 + $0x18] sm:$0xff]
    %v3244 = vld [vmem:[#allocation2 + $0x20] sm:$0xff]
    %v3245 = vld [vmem:[#allocation2 + $0x28] sm:$0xff]
    %v3246 = vld [vmem:[#allocation2 + $0x30] sm:$0xff]
    %v3247 = vld [vmem:[#allocation2 + $0x38] sm:$0xff]
    %v3248 = vld [vmem:[#allocation2 + $0x40] sm:$0xff]
    %v3249 = vld [vmem:[#allocation2 + $0x48] sm:$0xff]
    %v3250 = vld [vmem:[#allocation2 + $0x50] sm:$0xff]
    %v3251 = vld [vmem:[#allocation2 + $0x58] sm:$0xff]
    %v3252 = vld [vmem:[#allocation2 + $0x60] sm:$0xff]
    %v3253 = vld [vmem:[#allocation2 + $0x68] sm:$0xff]
    %v3254 = vld [vmem:[#allocation2 + $0x70] sm:$0xff]
    %v3255 = vld [vmem:[#allocation2 + $0x78] sm:$0xff]
    %v3256 = vld [vmem:[#allocation2 + $0x80] sm:$0xff]
    %v3257 = vld [vmem:[#allocation2 + $0x88] sm:$0xff]
    %v3258 = vld [vmem:[#allocation2 + $0x90] sm:$0xff]
    %v3259 = vld [vmem:[#allocation2 + $0x98] sm:$0xff]
    %v3260 = vld [vmem:[#allocation2 + $0xa0] sm:$0xff]
    %v3261 = vld [vmem:[#allocation2 + $0xa8] sm:$0xff]
    %v3262 = vld [vmem:[#allocation2 + $0xb0] sm:$0xff]
    %v3263 = vld [vmem:[#allocation2 + $0xb8] sm:$0xff]
    %v3264 = vld [vmem:[#allocation2 + $0xc0] sm:$0xff]
    %v3265 = vld [vmem:[#allocation2 + $0xc8] sm:$0xff]
    %v3266 = vld [vmem:[#allocation2 + $0xd0] sm:$0xff]
    %v3267 = vld [vmem:[#allocation2 + $0xd8] sm:$0xff]
    %v3268 = vld [vmem:[#allocation2 + $0xe0] sm:$0xff]
    %v3269 = vld [vmem:[#allocation2 + $0xe8] sm:$0xff]
    %v3270 = vld [vmem:[#allocation2 + $0xf0] sm:$0xff]
    %v3271 = vld [vmem:[#allocation2 + $0xf8] sm:$0xff]
    %v3272 = vld [vmem:[#allocation2 + $0x100] sm:$0xff]
    %v3273 = vld [vmem:[#allocation2 + $0x108] sm:$0xff]
    %v3274 = vld [vmem:[#allocation2 + $0x110] sm:$0xff]
    %v3275 = vld [vmem:[#allocation2 + $0x118] sm:$0xff]
    %v3276 = vld [vmem:[#allocation2 + $0x120] sm:$0xff]
    %v3277 = vld [vmem:[#allocation2 + $0x128] sm:$0xff]
    %v3278 = vld [vmem:[#allocation2 + $0x130] sm:$0xff]
    %v3279 = vld [vmem:[#allocation2 + $0x138] sm:$0xff]
    %v3280 = vld [vmem:[#allocation2 + $0x140] sm:$0xff]
    %v3281 = vld [vmem:[#allocation2 + $0x148] sm:$0xff]
    %v3282 = vld [vmem:[#allocation2 + $0x150] sm:$0xff]
    %v3283 = vld [vmem:[#allocation2 + $0x158] sm:$0xff]
    %v3284 = vld [vmem:[#allocation2 + $0x160] sm:$0xff]
    %v3285 = vld [vmem:[#allocation2 + $0x168] sm:$0xff]
    %v3286 = vld [vmem:[#allocation2 + $0x170] sm:$0xff]
    %v3287 = vld [vmem:[#allocation2 + $0x178] sm:$0xff]
    %v3288 = vld [vmem:[#allocation2 + $0x180] sm:$0xff]
    %v3289 = vld [vmem:[#allocation2 + $0x188] sm:$0xff]
    %v3290 = vld [vmem:[#allocation2 + $0x190] sm:$0xff]
    %v3291 = vld [vmem:[#allocation2 + $0x198] sm:$0xff]
    %v3292 = vld [vmem:[#allocation2 + $0x1a0] sm:$0xff]
    %v3293 = vld [vmem:[#allocation2 + $0x1a8] sm:$0xff]
    %v3294 = vld [vmem:[#allocation2 + $0x1b0] sm:$0xff]
    %v3295 = vld [vmem:[#allocation2 + $0x1b8] sm:$0xff]
    %v3296 = vld [vmem:[#allocation2 + $0x1c0] sm:$0xff]
    %v3297 = vld [vmem:[#allocation2 + $0x1c8] sm:$0xff]
    %v3298 = vld [vmem:[#allocation2 + $0x1d0] sm:$0xff]
    %v3299 = vld [vmem:[#allocation2 + $0x1d8] sm:$0xff]
    %v3300 = vld [vmem:[#allocation2 + $0x1e0] sm:$0xff]
    %v3301 = vld [vmem:[#allocation2 + $0x1e8] sm:$0xff]
    %v3302 = vld [vmem:[#allocation2 + $0x1f0] sm:$0xff]
    %v3303 = vld [vmem:[#allocation2 + $0x1f8] sm:$0xff]
    %3304 = vmatprep.subr.mxu0 %v3241
    %3305 = vmatpush1.msra.mxu0 %v3240
    %3306 = vmatprep.subr.mxu0 %v3245
    %3307 = vmatpush1.msra.mxu0 %v3244
    %3308 = vmatprep.subr.mxu0 %v3249
    %3309 = vmatpush1.msra.mxu0 %v3248
    %3310 = vmatprep.subr.mxu0 %v3253
    %3311 = vmatpush1.msra.mxu0 %v3252
    %3312 = vmatprep.subr.mxu0 %v3257
    %3313 = vmatpush1.msra.mxu0 %v3256
    %3314 = vmatprep.subr.mxu0 %v3261
    %3315 = vmatpush1.msra.mxu0 %v3260
    %3316 = vmatprep.subr.mxu0 %v3265
    %3317 = vmatpush1.msra.mxu0 %v3264
    %3318 = vmatprep.subr.mxu0 %v3269
    %3319 = vmatpush1.msra.mxu0 %v3268
    %3320 = vmatprep.subr.mxu0 %v3273
    %3321 = vmatpush1.msra.mxu0 %v3272
    %3322 = vmatprep.subr.mxu0 %v3277
    %3323 = vmatpush1.msra.mxu0 %v3276
    %3324 = vmatprep.subr.mxu0 %v3281
    %3325 = vmatpush1.msra.mxu0 %v3280
    %3326 = vmatprep.subr.mxu0 %v3285
    %3327 = vmatpush1.msra.mxu0 %v3284
    %3328 = vmatprep.subr.mxu0 %v3289
    %3329 = vmatpush1.msra.mxu0 %v3288
    %3330 = vmatprep.subr.mxu0 %v3293
    %3331 = vmatpush1.msra.mxu0 %v3292
    %3332 = vmatprep.subr.mxu0 %v3297
    %3333 = vmatpush1.msra.mxu0 %v3296
    %3334 = vmatprep.subr.mxu0 %v3301
    %3335 = vmatpush1.msra.mxu0 %v3300
    %3336 = vmatprep.subr.mxu0 0.0
    %3337 = vmatpush1.msra.mxu0 0.0
    %3338 = vmatprep.subr.mxu0 0.0
    %3339 = vmatpush1.msra.mxu0 0.0
    %3340 = vmatprep.subr.mxu0 0.0
    %3341 = vmatpush1.msra.mxu0 0.0
    %3342 = vmatprep.subr.mxu0 0.0
    %3343 = vmatpush1.msra.mxu0 0.0
    %3344 = vmatprep.subr.mxu0 0.0
    %3345 = vmatpush1.msra.mxu0 0.0
    %3346 = vmatprep.subr.mxu0 0.0
    %3347 = vmatpush1.msra.mxu0 0.0
    %3348 = vmatprep.subr.mxu0 0.0
    %3349 = vmatpush1.msra.mxu0 0.0
    %3350 = vmatprep.subr.mxu0 0.0
    %3351 = vmatpush1.msra.mxu0 0.0
    %3352 = vmatprep.subr.mxu0 0.0
    %3353 = vmatpush1.msra.mxu0 0.0
    %3354 = vmatprep.subr.mxu0 0.0
    %3355 = vmatpush1.msra.mxu0 0.0
    %3356 = vmatprep.subr.mxu0 0.0
    %3357 = vmatpush1.msra.mxu0 0.0
    %3358 = vmatprep.subr.mxu0 0.0
    %3359 = vmatpush1.msra.mxu0 0.0
    %3360 = vmatprep.subr.mxu0 0.0
    %3361 = vmatpush1.msra.mxu0 0.0
    %3362 = vmatprep.subr.mxu0 0.0
    %3363 = vmatpush1.msra.mxu0 0.0
    %3364 = vmatprep.subr.mxu0 0.0
    %3365 = vmatpush1.msra.mxu0 0.0
    %3366 = vmatprep.subr.mxu0 0.0
    %3367 = vmatpush1.msra.mxu0 0.0
    %3368 = vmatprep.mubr.f32.mxu0 0.0
    %3369 = vmatmul.mubr.f32.gmra.mrb[0].mxu0 %v3171
    %v3370 = vpop.f32.mrb[0].mxu0
    %v3371 = vadd.f32 0.0, %v3370
    %v3372 = vpop.f32.mrb[0].mxu0
    %v3373 = vadd.f32 0.0, %v3372
    %3374 = vdwg.mxu0
    %3375 = vmatprep.subr.mxu0 %v3243
    %3376 = vmatpush1.msra.mxu0 %v3242
    %3377 = vmatprep.subr.mxu0 %v3247
    %3378 = vmatpush1.msra.mxu0 %v3246
    %3379 = vmatprep.subr.mxu0 %v3251
    %3380 = vmatpush1.msra.mxu0 %v3250
    %3381 = vmatprep.subr.mxu0 %v3255
    %3382 = vmatpush1.msra.mxu0 %v3254
    %3383 = vmatprep.subr.mxu0 %v3259
    %3384 = vmatpush1.msra.mxu0 %v3258
    %3385 = vmatprep.subr.mxu0 %v3263
    %3386 = vmatpush1.msra.mxu0 %v3262
    %3387 = vmatprep.subr.mxu0 %v3267
    %3388 = vmatpush1.msra.mxu0 %v3266
    %3389 = vmatprep.subr.mxu0 %v3271
    %3390 = vmatpush1.msra.mxu0 %v3270
    %3391 = vmatprep.subr.mxu0 %v3275
    %3392 = vmatpush1.msra.mxu0 %v3274
    %3393 = vmatprep.subr.mxu0 %v3279
    %3394 = vmatpush1.msra.mxu0 %v3278
    %3395 = vmatprep.subr.mxu0 %v3283
    %3396 = vmatpush1.msra.mxu0 %v3282
    %3397 = vmatprep.subr.mxu0 %v3287
    %3398 = vmatpush1.msra.mxu0 %v3286
    %3399 = vmatprep.subr.mxu0 %v3291
    %3400 = vmatpush1.msra.mxu0 %v3290
    %3401 = vmatprep.subr.mxu0 %v3295
    %3402 = vmatpush1.msra.mxu0 %v3294
    %3403 = vmatprep.subr.mxu0 %v3299
    %3404 = vmatpush1.msra.mxu0 %v3298
    %3405 = vmatprep.subr.mxu0 %v3303
    %3406 = vmatpush1.msra.mxu0 %v3302
    %3407 = vmatprep.subr.mxu0 0.0
    %3408 = vmatpush1.msra.mxu0 0.0
    %3409 = vmatprep.subr.mxu0 0.0
    %3410 = vmatpush1.msra.mxu0 0.0
    %3411 = vmatprep.subr.mxu0 0.0
    %3412 = vmatpush1.msra.mxu0 0.0
    %3413 = vmatprep.subr.mxu0 0.0
    %3414 = vmatpush1.msra.mxu0 0.0
    %3415 = vmatprep.subr.mxu0 0.0
    %3416 = vmatpush1.msra.mxu0 0.0
    %3417 = vmatprep.subr.mxu0 0.0
    %3418 = vmatpush1.msra.mxu0 0.0
    %3419 = vmatprep.subr.mxu0 0.0
    %3420 = vmatpush1.msra.mxu0 0.0
    %3421 = vmatprep.subr.mxu0 0.0
    %3422 = vmatpush1.msra.mxu0 0.0
    %3423 = vmatprep.subr.mxu0 0.0
    %3424 = vmatpush1.msra.mxu0 0.0
    %3425 = vmatprep.subr.mxu0 0.0
    %3426 = vmatpush1.msra.mxu0 0.0
    %3427 = vmatprep.subr.mxu0 0.0
    %3428 = vmatpush1.msra.mxu0 0.0
    %3429 = vmatprep.subr.mxu0 0.0
    %3430 = vmatpush1.msra.mxu0 0.0
    %3431 = vmatprep.subr.mxu0 0.0
    %3432 = vmatpush1.msra.mxu0 0.0
    %3433 = vmatprep.subr.mxu0 0.0
    %3434 = vmatpush1.msra.mxu0 0.0
    %3435 = vmatprep.subr.mxu0 0.0
    %3436 = vmatpush1.msra.mxu0 0.0
    %3437 = vmatprep.subr.mxu0 0.0
    %3438 = vmatpush1.msra.mxu0 0.0
    %3439 = vmatprep.mubr.f32.mxu0 0.0
    %3440 = vmatmul.mubr.f32.gmra.mrb[0].mxu0 %v3171
    %v3441 = vpop.f32.mrb[0].mxu0
    %v3442 = vadd.f32 0.0, %v3441
    %v3443 = vpop.f32.mrb[0].mxu0
    %v3444 = vadd.f32 0.0, %v3443
    %3445 = vdwg.mxu0
    %3446 = vmatprep.subr.mxu0 %v3177
    %3447 = vmatpush1.msra.mxu0 %v3176
    %3448 = vmatprep.subr.mxu0 %v3181
    %3449 = vmatpush1.msra.mxu0 %v3180
    %3450 = vmatprep.subr.mxu0 %v3185
    %3451 = vmatpush1.msra.mxu0 %v3184
    %3452 = vmatprep.subr.mxu0 %v3189
    %3453 = vmatpush1.msra.mxu0 %v3188
    %3454 = vmatprep.subr.mxu0 %v3193
    %3455 = vmatpush1.msra.mxu0 %v3192
    %3456 = vmatprep.subr.mxu0 %v3197
    %3457 = vmatpush1.msra.mxu0 %v3196
    %3458 = vmatprep.subr.mxu0 %v3201
    %3459 = vmatpush1.msra.mxu0 %v3200
    %3460 = vmatprep.subr.mxu0 %v3205
    %3461 = vmatpush1.msra.mxu0 %v3204
    %3462 = vmatprep.subr.mxu0 %v3209
    %3463 = vmatpush1.msra.mxu0 %v3208
    %3464 = vmatprep.subr.mxu0 %v3213
    %3465 = vmatpush1.msra.mxu0 %v3212
    %3466 = vmatprep.subr.mxu0 %v3217
    %3467 = vmatpush1.msra.mxu0 %v3216
    %3468 = vmatprep.subr.mxu0 %v3221
    %3469 = vmatpush1.msra.mxu0 %v3220
    %3470 = vmatprep.subr.mxu0 %v3225
    %3471 = vmatpush1.msra.mxu0 %v3224
    %3472 = vmatprep.subr.mxu0 %v3229
    %3473 = vmatpush1.msra.mxu0 %v3228
    %3474 = vmatprep.subr.mxu0 %v3233
    %3475 = vmatpush1.msra.mxu0 %v3232
    %3476 = vmatprep.subr.mxu0 %v3237
    %3477 = vmatpush1.msra.mxu0 %v3236
    %3478 = vmatprep.subr.mxu0 0.0
    %3479 = vmatpush1.msra.mxu0 0.0
    %3480 = vmatprep.subr.mxu0 0.0
    %3481 = vmatpush1.msra.mxu0 0.0
    %3482 = vmatprep.subr.mxu0 0.0
    %3483 = vmatpush1.msra.mxu0 0.0
    %3484 = vmatprep.subr.mxu0 0.0
    %3485 = vmatpush1.msra.mxu0 0.0
    %3486 = vmatprep.subr.mxu0 0.0
    %3487 = vmatpush1.msra.mxu0 0.0
    %3488 = vmatprep.subr.mxu0 0.0
    %3489 = vmatpush1.msra.mxu0 0.0
    %3490 = vmatprep.subr.mxu0 0.0
    %3491 = vmatpush1.msra.mxu0 0.0
    %3492 = vmatprep.subr.mxu0 0.0
    %3493 = vmatpush1.msra.mxu0 0.0
    %3494 = vmatprep.subr.mxu0 0.0
    %3495 = vmatpush1.msra.mxu0 0.0
    %3496 = vmatprep.subr.mxu0 0.0
    %3497 = vmatpush1.msra.mxu0 0.0
    %3498 = vmatprep.subr.mxu0 0.0
    %3499 = vmatpush1.msra.mxu0 0.0
    %3500 = vmatprep.subr.mxu0 0.0
    %3501 = vmatpush1.msra.mxu0 0.0
    %3502 = vmatprep.subr.mxu0 0.0
    %3503 = vmatpush1.msra.mxu0 0.0
    %3504 = vmatprep.subr.mxu0 0.0
    %3505 = vmatpush1.msra.mxu0 0.0
    %3506 = vmatprep.subr.mxu0 0.0
    %3507 = vmatpush1.msra.mxu0 0.0
    %3508 = vmatprep.subr.mxu0 0.0
    %3509 = vmatpush1.msra.mxu0 0.0
    %3510 = vmatprep.mubr.f32.mxu0 0.0
    %3511 = vmatmul.mubr.f32.gmra.mrb[0].mxu0 %v3175
    %v3512 = vpop.f32.mrb[0].mxu0
    %v3513 = vadd.f32 %v3371, %v3512
    %v3514 = vpop.f32.mrb[0].mxu0
    %v3515 = vadd.f32 %v3373, %v3514
    %3516 = vdwg.mxu0
    %3517 = vmatprep.subr.mxu0 %v3179
    %3518 = vmatpush1.msra.mxu0 %v3178
    %3519 = vmatprep.subr.mxu0 %v3183
    %3520 = vmatpush1.msra.mxu0 %v3182
    %3521 = vmatprep.subr.mxu0 %v3187
    %3522 = vmatpush1.msra.mxu0 %v3186
    %3523 = vmatprep.subr.mxu0 %v3191
    %3524 = vmatpush1.msra.mxu0 %v3190
    %3525 = vmatprep.subr.mxu0 %v3195
    %3526 = vmatpush1.msra.mxu0 %v3194
    %3527 = vmatprep.subr.mxu0 %v3199
    %3528 = vmatpush1.msra.mxu0 %v3198
    %3529 = vmatprep.subr.mxu0 %v3203
    %3530 = vmatpush1.msra.mxu0 %v3202
    %3531 = vmatprep.subr.mxu0 %v3207
    %3532 = vmatpush1.msra.mxu0 %v3206
    %3533 = vmatprep.subr.mxu0 %v3211
    %3534 = vmatpush1.msra.mxu0 %v3210
    %3535 = vmatprep.subr.mxu0 %v3215
    %3536 = vmatpush1.msra.mxu0 %v3214
    %3537 = vmatprep.subr.mxu0 %v3219
    %3538 = vmatpush1.msra.mxu0 %v3218
    %3539 = vmatprep.subr.mxu0 %v3223
    %3540 = vmatpush1.msra.mxu0 %v3222
    %3541 = vmatprep.subr.mxu0 %v3227
    %3542 = vmatpush1.msra.mxu0 %v3226
    %3543 = vmatprep.subr.mxu0 %v3231
    %3544 = vmatpush1.msra.mxu0 %v3230
    %3545 = vmatprep.subr.mxu0 %v3235
    %3546 = vmatpush1.msra.mxu0 %v3234
    %3547 = vmatprep.subr.mxu0 %v3239
    %3548 = vmatpush1.msra.mxu0 %v3238
    %3549 = vmatprep.subr.mxu0 0.0
    %3550 = vmatpush1.msra.mxu0 0.0
    %3551 = vmatprep.subr.mxu0 0.0
    %3552 = vmatpush1.msra.mxu0 0.0
    %3553 = vmatprep.subr.mxu0 0.0
    %3554 = vmatpush1.msra.mxu0 0.0
    %3555 = vmatprep.subr.mxu0 0.0
    %3556 = vmatpush1.msra.mxu0 0.0
    %3557 = vmatprep.subr.mxu0 0.0
    %3558 = vmatpush1.msra.mxu0 0.0
    %3559 = vmatprep.subr.mxu0 0.0
    %3560 = vmatpush1.msra.mxu0 0.0
    %3561 = vmatprep.subr.mxu0 0.0
    %3562 = vmatpush1.msra.mxu0 0.0
    %3563 = vmatprep.subr.mxu0 0.0
    %3564 = vmatpush1.msra.mxu0 0.0
    %3565 = vmatprep.subr.mxu0 0.0
    %3566 = vmatpush1.msra.mxu0 0.0
    %3567 = vmatprep.subr.mxu0 0.0
    %3568 = vmatpush1.msra.mxu0 0.0
    %3569 = vmatprep.subr.mxu0 0.0
    %3570 = vmatpush1.msra.mxu0 0.0
    %3571 = vmatprep.subr.mxu0 0.0
    %3572 = vmatpush1.msra.mxu0 0.0
    %3573 = vmatprep.subr.mxu0 0.0
    %3574 = vmatpush1.msra.mxu0 0.0
    %3575 = vmatprep.subr.mxu0 0.0
    %3576 = vmatpush1.msra.mxu0 0.0
    %3577 = vmatprep.subr.mxu0 0.0
    %3578 = vmatpush1.msra.mxu0 0.0
    %3579 = vmatprep.subr.mxu0 0.0
    %3580 = vmatpush1.msra.mxu0 0.0
    %3581 = vmatprep.mubr.f32.mxu0 0.0
    %3582 = vmatmul.mubr.f32.gmra.mrb[0].mxu0 %v3175
    %v3583 = vpop.f32.mrb[0].mxu0
    %v3584 = vadd.f32 %v3442, %v3583
    %v3585 = vpop.f32.mrb[0].mxu0
    %v3586 = vadd.f32 %v3444, %v3585
    %3587 = vdwg.mxu0
    %v3588 = vadd.f32 %v3513, %v464
    %v3589 = vadd.f32 %v3515, %v468
    %v3590 = vadd.f32 %v3584, %v472
    %v3591 = vadd.f32 %v3586, %v476
    %v3592 = vxor.u32 %v3588, 2147483648
    %v3593 = vmul.f32 %v3592, 1.442695
    %v3594 = vpow.pop %v3593
    %v3595 = vadd.f32 %v3594, 1.0
    %v3596 = vrcp.pop %v3595
    %v3597 = vmul.f32 1.0, %v3596
    %v3598 = vxor.u32 %v3589, 2147483648
    %v3599 = vmul.f32 %v3598, 1.442695
    %v3600 = vpow.pop %v3599
    %v3601 = vadd.f32 %v3600, 1.0
    %v3602 = vrcp.pop %v3601
    %v3603 = vmul.f32 1.0, %v3602
    %v3604 = vtanh.pop %v3590
    %v3605 = vxor.u32 %v3591, 2147483648
    %v3606 = vmul.f32 %v3605, 1.442695
    %v3607 = vpow.pop %v3606
    %v3608 = vadd.f32 %v3607, 1.0
    %v3609 = vrcp.pop %v3608
    %v3610 = vmul.f32 1.0, %v3609
    %v3611 = vmul.f32 %v3603, %v3169
    %v3612 = vmul.f32 %v3597, %v3604
    %v3613 = vadd.f32 %v3611, %v3612
    %v3614 = vtanh.pop %v3613
    %v3615 = vmul.f32 %v3610, %v3614
    %s3616 = scalar_lea.vmem %s4, 56
    %3617 = vst [vmem:[%s3616] sm:$0xff] %v3615
    %3618 = vst [vmem:[%s5] sm:$0xff] %v3615
    %3619 = vst [vmem:[%s6] sm:$0xff] %v3613
    // Predicated region
    $region26: #{_forward_impl.2} parent=1 // pred_check
      _
    $region27: #{_forward_impl.2} parent=1 // pred_check_branch
      %3621 = sbr.rel (0) target = $region29
    $region28: #{_forward_impl.2} parent=1 // pred_region
      _
    $region29: #{_forward_impl.2} parent=1 // pred_fallthru
      _
    // Predicated region
    $region30: #{_forward_impl.2} parent=1 // pred_check
      _
    $region31: #{_forward_impl.2} parent=1 // pred_check_branch
      %3623 = sbr.rel (0) target = $region33
    $region32: #{_forward_impl.2} parent=1 // pred_region
      _
    $region33: #{_forward_impl.2} parent=1 // pred_fallthru
      _
    // Predicated region
    $region34: #{_forward_impl.2} parent=1 // pred_check
      _
    $region35: #{_forward_impl.2} parent=1 // pred_check_branch
      %3625 = sbr.rel (0) target = $region37
    $region36: #{_forward_impl.2} parent=1 // pred_region
      _
    $region37: #{_forward_impl.2} parent=1 // pred_fallthru
      _
    // Predicated region
    $region38: #{_forward_impl.2} parent=1 // pred_check
      _
    $region39: #{_forward_impl.2} parent=1 // pred_check_branch
      %3627 = sbr.rel (0) target = $region41
    $region40: #{_forward_impl.2} parent=1 // pred_region
      _
    $region41: #{_forward_impl.2} parent=1 // pred_fallthru
      _
    // Predicated region
    $region42: #{_forward_impl.2} parent=1 // pred_check
      _
    $region43: #{_forward_impl.2} parent=1 // pred_check_branch
      %3629 = sbr.rel (0) target = $region45
    $region44: #{_forward_impl.2} parent=1 // pred_region
      _
    $region45: #{_forward_impl.2} parent=1 // pred_fallthru
      _
    // Predicated region
    $region46: #{_forward_impl.2} parent=1 // pred_check
      _
    $region47: #{_forward_impl.2} parent=1 // pred_check_branch
      %3631 = sbr.rel (0) target = $region49
    $region48: #{_forward_impl.2} parent=1 // pred_region
      _
    $region49: #{_forward_impl.2} parent=1 // pred_fallthru
      _
    %3632 = vsyncpa [#allocation3], 1
    %3633 = vsyncpa [#allocation5], 1

// kernel: _forward_impl.3
$region0: #{_forward_impl.3}
  #allocation0 [shape = 'u32[]', space=smem, size = 0x4, offset = 0x4, fixed_abs, tag = 'smem constant byte address 0x4 - core index']
  #allocation1 [shape = 'u32[144,128]{1,0:T(1,128)}', space=vmem, size = 0x12000, scoped, tag = 'internal scratch']
  %s0 = inlined_call_operand.vmem [shape: s32[7], index: 0, kind: input, shape index: {}]
  %s1 = inlined_call_operand.vmem [shape: s32[7,8,1], index: 1, kind: input, shape index: {}]
  %s2 = inlined_call_operand.vmem [shape: f32[8,8,128], index: 2, kind: input, shape index: {}]
  %s3 = inlined_call_operand.vmem [shape: f32[8,128], index: 3, kind: input, shape index: {}]
  %s4 = inlined_call_operand.vmem [shape: f32[8,128], index: 4, kind: input, shape index: {}]
  %s5 = inlined_call_operand.vmem [shape: f32[128,128], index: 5, kind: input, shape index: {}]
  %s6 = inlined_call_operand.vmem [shape: f32[384,512], index: 6, kind: input, shape index: {}]
  %s7 = inlined_call_operand.vmem [shape: f32[1,512], index: 7, kind: input, shape index: {}]
  %s8 = inlined_call_operand.vmem [shape: f32[128,128], index: 8, kind: input, shape index: {}]
  %s9 = inlined_call_operand.vmem [shape: f32[1,128], index: 9, kind: input, shape index: {}]
  %s10 = inlined_call_operand.vmem [shape: f32[7,8,128], index: 10, kind: output, shape index: {}]
  %s11 = sld [smem:[#allocation0]]
  $region54: #{_forward_impl.3} parent=0
    _
  %s13 = ssub.s32 1, %s11
  %s14 = scalar_select 0, %s13, %s11
  $region1: #{_forward_impl.3} parent=0
    #allocation2 [shape = 'u8[512]{0}', space=smem, size = 0x200, scoped, tag = 'input window, operand 0, single buffered']
    #allocation3 [shape = 's32[1]{0}', space=sflag, size = 0x4, scoped, tag = 'scoped memory for _forward_impl.3']
    %15 = vsyncpa [#allocation3], 0
    // Predicated region
    $region2: #{_forward_impl.3} parent=1 // pred_check
      _
    $region3: #{_forward_impl.3} parent=1 // pred_check_branch
      %17 = sbr.rel (0) target = $region5
    $region4: #{_forward_impl.3} parent=1 // pred_region
      %s19 = ssub.s32 16, 16
      %20 = vsyncadd [#allocation3], %s19
      %s22 = sshll.u32 %s0, 4
      %s23 = int_to_ptr.vmem [resolvable:$true] %s22
      %25 = dma.vmem_to_smem %s23, 16, [#allocation2], [#allocation3]
    $region5: #{_forward_impl.3} parent=1 // pred_fallthru
      _
    // Predicated region
    $region6: #{_forward_impl.3} parent=1 // pred_check
      _
    $region7: #{_forward_impl.3} parent=1 // pred_check_branch
      %27 = sbr.rel (0) target = $region9
    $region8: #{_forward_impl.3} parent=1 // pred_region
      _
    $region9: #{_forward_impl.3} parent=1 // pred_fallthru
      _
    // Predicated region
    $region10: #{_forward_impl.3} parent=1 // pred_check
      _
    $region11: #{_forward_impl.3} parent=1 // pred_check_branch
      %29 = sbr.rel (0) target = $region13
    $region12: #{_forward_impl.3} parent=1 // pred_region
      _
    $region13: #{_forward_impl.3} parent=1 // pred_fallthru
      _
    // Predicated region
    $region14: #{_forward_impl.3} parent=1 // pred_check
      _
    $region15: #{_forward_impl.3} parent=1 // pred_check_branch
      %31 = sbr.rel (0) target = $region17
    $region16: #{_forward_impl.3} parent=1 // pred_region
      _
    $region17: #{_forward_impl.3} parent=1 // pred_fallthru
      _
    // Predicated region
    $region18: #{_forward_impl.3} parent=1 // pred_check
      _
    $region19: #{_forward_impl.3} parent=1 // pred_check_branch
      %33 = sbr.rel (0) target = $region21
    $region20: #{_forward_impl.3} parent=1 // pred_region
      _
    $region21: #{_forward_impl.3} parent=1 // pred_fallthru
      _
    // Predicated region
    $region22: #{_forward_impl.3} parent=1 // pred_check
      _
    $region23: #{_forward_impl.3} parent=1 // pred_check_branch
      %35 = sbr.rel (0) target = $region25
    $region24: #{_forward_impl.3} parent=1 // pred_region
      _
    $region25: #{_forward_impl.3} parent=1 // pred_fallthru
      _
    // Predicated region
    $region26: #{_forward_impl.3} parent=1 // pred_check
      _
    $region27: #{_forward_impl.3} parent=1 // pred_check_branch
      %37 = sbr.rel (0) target = $region29
    $region28: #{_forward_impl.3} parent=1 // pred_region
      _
    $region29: #{_forward_impl.3} parent=1 // pred_fallthru
      _
    // Predicated region
    $region30: #{_forward_impl.3} parent=1 // pred_check
      _
    $region31: #{_forward_impl.3} parent=1 // pred_check_branch
      %39 = sbr.rel (0) target = $region33
    $region32: #{_forward_impl.3} parent=1 // pred_region
      _
    $region33: #{_forward_impl.3} parent=1 // pred_fallthru
      _
    // Predicated region
    $region34: #{_forward_impl.3} parent=1 // pred_check
      _
    $region35: #{_forward_impl.3} parent=1 // pred_check_branch
      %41 = sbr.rel (0) target = $region37
    $region36: #{_forward_impl.3} parent=1 // pred_region
      _
    $region37: #{_forward_impl.3} parent=1 // pred_fallthru
      _
    // Predicated region
    $region38: #{_forward_impl.3} parent=1 // pred_check
      _
    $region39: #{_forward_impl.3} parent=1 // pred_check_branch
      %43 = sbr.rel (0) target = $region41
    $region40: #{_forward_impl.3} parent=1 // pred_region
      _
    $region41: #{_forward_impl.3} parent=1 // pred_fallthru
      _
    // Predicated region
    $region42: #{_forward_impl.3} parent=1 // pred_check
      _
    $region43: #{_forward_impl.3} parent=1 // pred_check_branch
      %45 = sbr.rel (0) target = $region45
    $region44: #{_forward_impl.3} parent=1 // pred_region
      %46 = dma.done [#allocation3], 16
    $region45: #{_forward_impl.3} parent=1 // pred_fallthru
      _
    %47 = sfence
    %v48 = vld [vmem:[%s2] sm:$0xff]
    %v49 = vld [vmem:[%s2 + $0x8] sm:$0xff]
    %v50 = vld [vmem:[%s2 + $0x10] sm:$0xff]
    %v51 = vld [vmem:[%s2 + $0x18] sm:$0xff]
    %v52 = vld [vmem:[%s2 + $0x20] sm:$0xff]
    %v53 = vld [vmem:[%s2 + $0x28] sm:$0xff]
    %v54 = vld [vmem:[%s2 + $0x30] sm:$0xff]
    %v55 = vld [vmem:[%s2 + $0x38] sm:$0xff]
    %v56 = vld [vmem:[%s7] sm:$0xf]
    %v57 = vld [vmem:[%s9] sm:$0x1]
    %v58 = vlaneseq
    %v59 = vand.u32 %v58, 127
    %v60 = vld [vmem:[%s3] sm:$0xff]
    %v61 = vld [vmem:[%s4] sm:$0xff]
    %v62 = vld [vmem:[%s1] sm:$0xff]
    %63 = vset.pattern.permute.xlu0 0
    %64 = vperm.xlu0 %63, %v62
    %v65 = vpop.permute.xlu0 %64
    %vm66 = vcmp.eq.s32.totalorder %v59, %v65
    %v67 = vsel %vm66, 1, 0
    %v68 = vcvt.s32.f32 %v67
    %s69 = sld [smem:[#allocation2]]
    %p70 = scmp.ne.s32.totalorder %s69, 0
    %s71 = scalar_select %p70, 1, 0
    %s72 = scvt.s32.f32 %s71
    %v73 = vstv %s72
    %v74 = vmul.f32 %v73, %v68
    %s75 = ssub.f32 1.0, %s72
    %v76 = vstv %s75
    %v77 = vmul.f32 %v76, 0.0
    %v78 = vadd.f32 %v74, %v77
    %v79 = vld [vmem:[%s5] sm:$0xff]
    %v80 = vld [vmem:[%s5 + $0x8] sm:$0xff]
    %v81 = vld [vmem:[%s5 + $0x10] sm:$0xff]
    %v82 = vld [vmem:[%s5 + $0x18] sm:$0xff]
    %v83 = vld [vmem:[%s5 + $0x20] sm:$0xff]
    %v84 = vld [vmem:[%s5 + $0x28] sm:$0xff]
    %v85 = vld [vmem:[%s5 + $0x30] sm:$0xff]
    %v86 = vld [vmem:[%s5 + $0x38] sm:$0xff]
    %v87 = vld [vmem:[%s5 + $0x40] sm:$0xff]
    %v88 = vld [vmem:[%s5 + $0x48] sm:$0xff]
    %v89 = vld [vmem:[%s5 + $0x50] sm:$0xff]
    %v90 = vld [vmem:[%s5 + $0x58] sm:$0xff]
    %v91 = vld [vmem:[%s5 + $0x60] sm:$0xff]
    %v92 = vld [vmem:[%s5 + $0x68] sm:$0xff]
    %v93 = vld [vmem:[%s5 + $0x70] sm:$0xff]
    %v94 = vld [vmem:[%s5 + $0x78] sm:$0xff]
    %95 = vmatprep.subr.mxu0 0.0
    %96 = vmatpush1.msra.mxu0 %v79
    %97 = vmatprep.subr.mxu0 0.0
    %98 = vmatpush1.msra.mxu0 %v80
    %99 = vmatprep.subr.mxu0 0.0
    %100 = vmatpush1.msra.mxu0 %v81
    %101 = vmatprep.subr.mxu0 0.0
    %102 = vmatpush1.msra.mxu0 %v82
    %103 = vmatprep.subr.mxu0 0.0
    %104 = vmatpush1.msra.mxu0 %v83
    %105 = vmatprep.subr.mxu0 0.0
    %106 = vmatpush1.msra.mxu0 %v84
    %107 = vmatprep.subr.mxu0 0.0
    %108 = vmatpush1.msra.mxu0 %v85
    %109 = vmatprep.subr.mxu0 0.0
    %110 = vmatpush1.msra.mxu0 %v86
    %111 = vmatprep.subr.mxu0 0.0
    %112 = vmatpush1.msra.mxu0 %v87
    %113 = vmatprep.subr.mxu0 0.0
    %114 = vmatpush1.msra.mxu0 %v88
    %115 = vmatprep.subr.mxu0 0.0
    %116 = vmatpush1.msra.mxu0 %v89
    %117 = vmatprep.subr.mxu0 0.0
    %118 = vmatpush1.msra.mxu0 %v90
    %119 = vmatprep.subr.mxu0 0.0
    %120 = vmatpush1.msra.mxu0 %v91
    %121 = vmatprep.subr.mxu0 0.0
    %122 = vmatpush1.msra.mxu0 %v92
    %123 = vmatprep.subr.mxu0 0.0
    %124 = vmatpush1.msra.mxu0 %v93
    %125 = vmatprep.subr.mxu0 0.0
    %126 = vmatpush1.msra.mxu0 %v94
    %127 = vmatprep.subr.mxu0 0.0
    %128 = vmatpush1.msra.mxu0 0.0
    %129 = vmatprep.subr.mxu0 0.0
    %130 = vmatpush1.msra.mxu0 0.0
    %131 = vmatprep.subr.mxu0 0.0
    %132 = vmatpush1.msra.mxu0 0.0
    %133 = vmatprep.subr.mxu0 0.0
    %134 = vmatpush1.msra.mxu0 0.0
    %135 = vmatprep.subr.mxu0 0.0
    %136 = vmatpush1.msra.mxu0 0.0
    %137 = vmatprep.subr.mxu0 0.0
    %138 = vmatpush1.msra.mxu0 0.0
    %139 = vmatprep.subr.mxu0 0.0
    %140 = vmatpush1.msra.mxu0 0.0
    %141 = vmatprep.subr.mxu0 0.0
    %142 = vmatpush1.msra.mxu0 0.0
    %143 = vmatprep.subr.mxu0 0.0
    %144 = vmatpush1.msra.mxu0 0.0
    %145 = vmatprep.subr.mxu0 0.0
    %146 = vmatpush1.msra.mxu0 0.0
    %147 = vmatprep.subr.mxu0 0.0
    %148 = vmatpush1.msra.mxu0 0.0
    %149 = vmatprep.subr.mxu0 0.0
    %150 = vmatpush1.msra.mxu0 0.0
    %151 = vmatprep.subr.mxu0 0.0
    %152 = vmatpush1.msra.mxu0 0.0
    %153 = vmatprep.subr.mxu0 0.0
    %154 = vmatpush1.msra.mxu0 0.0
    %155 = vmatprep.subr.mxu0 0.0
    %156 = vmatpush1.msra.mxu0 0.0
    %157 = vmatprep.subr.mxu0 0.0
    %158 = vmatpush1.msra.mxu0 0.0
    %159 = vmatprep.mubr.f32.mxu0 0.0
    %160 = vmatmul.mubr.f32.gmra.mrb[0].mxu0 %v78
    %v161 = vpop.f32.mrb[0].mxu0
    %v162 = vadd.f32 0.0, %v161
    %v163 = vpop.f32.mrb[0].mxu0
    %164 = vdwg.mxu0
    %v165 = vmul.f32 %v48, %v60
    %v166 = vmul.f32 %v49, %v60
    %v167 = vmul.f32 %v50, %v60
    %v168 = vmul.f32 %v51, %v60
    %v169 = vmul.f32 %v52, %v60
    %v170 = vmul.f32 %v53, %v60
    %v171 = vmul.f32 %v54, %v60
    %v172 = vmul.f32 %v55, %v60
    %173 = vadd.xlane.f32.xlu0 %v165
    %v174 = vpop.xlane.xlu0 %173
    %175 = vadd.xlane.f32.xlu0 %v166
    %v176 = vpop.xlane.xlu0 %175
    %177 = vadd.xlane.f32.xlu0 %v167
    %v178 = vpop.xlane.xlu0 %177
    %179 = vadd.xlane.f32.xlu0 %v168
    %v180 = vpop.xlane.xlu0 %179
    %181 = vadd.xlane.f32.xlu0 %v169
    %v182 = vpop.xlane.xlu0 %181
    %183 = vadd.xlane.f32.xlu0 %v170
    %v184 = vpop.xlane.xlu0 %183
    %185 = vadd.xlane.f32.xlu0 %v171
    %v186 = vpop.xlane.xlu0 %185
    %187 = vadd.xlane.f32.xlu0 %v172
    %v188 = vpop.xlane.xlu0 %187
    %v189 = vmax.f32 %v174, %v182
    %v190 = vmax.f32 %v176, %v184
    %v191 = vmax.f32 %v178, %v186
    %v192 = vmax.f32 %v180, %v188
    %v193 = vmax.f32 %v189, %v190
    %v194 = vmax.f32 %v191, %v192
    %v195 = vmax.f32 %v193, %v194
    %v196 = vsub.f32 %v174, %v195
    %v197 = vsub.f32 %v176, %v195
    %v198 = vsub.f32 %v178, %v195
    %v199 = vsub.f32 %v180, %v195
    %v200 = vsub.f32 %v182, %v195
    %v201 = vsub.f32 %v184, %v195
    %v202 = vsub.f32 %v186, %v195
    %v203 = vsub.f32 %v188, %v195
    %v204 = vmul.f32 %v196, 1.442695
    %v205 = vpow.pop %v204
    %v206 = vmul.f32 %v197, 1.442695
    %v207 = vpow.pop %v206
    %v208 = vmul.f32 %v198, 1.442695
    %v209 = vpow.pop %v208
    %v210 = vmul.f32 %v199, 1.442695
    %v211 = vpow.pop %v210
    %v212 = vmul.f32 %v200, 1.442695
    %v213 = vpow.pop %v212
    %v214 = vmul.f32 %v201, 1.442695
    %v215 = vpow.pop %v214
    %v216 = vmul.f32 %v202, 1.442695
    %v217 = vpow.pop %v216
    %v218 = vmul.f32 %v203, 1.442695
    %v219 = vpow.pop %v218
    %v220 = vadd.f32 %v205, %v207
    %v221 = vadd.f32 %v220, %v209
    %v222 = vadd.f32 %v221, %v211
    %v223 = vadd.f32 %v222, %v213
    %v224 = vadd.f32 %v223, %v215
    %v225 = vadd.f32 %v224, %v217
    %v226 = vadd.f32 %v225, %v219
    %v227 = vrcp.pop %v226
    %v228 = vmul.f32 %v205, %v227
    %v229 = vmul.f32 %v207, %v227
    %v230 = vmul.f32 %v209, %v227
    %v231 = vmul.f32 %v211, %v227
    %v232 = vmul.f32 %v213, %v227
    %v233 = vmul.f32 %v215, %v227
    %v234 = vmul.f32 %v217, %v227
    %v235 = vmul.f32 %v219, %v227
    %v236 = vmul.f32 %v228, %v48
    %v237 = vmul.f32 %v229, %v49
    %v238 = vmul.f32 %v230, %v50
    %v239 = vmul.f32 %v231, %v51
    %v240 = vmul.f32 %v232, %v52
    %v241 = vmul.f32 %v233, %v53
    %v242 = vmul.f32 %v234, %v54
    %v243 = vmul.f32 %v235, %v55
    %v244 = vadd.f32 %v236, %v237
    %v245 = vadd.f32 %v244, %v238
    %v246 = vadd.f32 %v245, %v239
    %v247 = vadd.f32 %v246, %v240
    %v248 = vadd.f32 %v247, %v241
    %v249 = vadd.f32 %v248, %v242
    %v250 = vadd.f32 %v249, %v243
    %v251 = vld [vmem:[%s6] sm:$0xff]
    %v252 = vld [vmem:[%s6 + $0x8] sm:$0xff]
    %v253 = vld [vmem:[%s6 + $0x10] sm:$0xff]
    %v254 = vld [vmem:[%s6 + $0x18] sm:$0xff]
    %v255 = vld [vmem:[%s6 + $0x20] sm:$0xff]
    %v256 = vld [vmem:[%s6 + $0x28] sm:$0xff]
    %v257 = vld [vmem:[%s6 + $0x30] sm:$0xff]
    %v258 = vld [vmem:[%s6 + $0x38] sm:$0xff]
    %v259 = vld [vmem:[%s6 + $0x40] sm:$0xff]
    %v260 = vld [vmem:[%s6 + $0x48] sm:$0xff]
    %v261 = vld [vmem:[%s6 + $0x50] sm:$0xff]
    %v262 = vld [vmem:[%s6 + $0x58] sm:$0xff]
    %v263 = vld [vmem:[%s6 + $0x60] sm:$0xff]
    %v264 = vld [vmem:[%s6 + $0x68] sm:$0xff]
    %v265 = vld [vmem:[%s6 + $0x70] sm:$0xff]
    %v266 = vld [vmem:[%s6 + $0x78] sm:$0xff]
    %v267 = vld [vmem:[%s6 + $0x80] sm:$0xff]
    %v268 = vld [vmem:[%s6 + $0x88] sm:$0xff]
    %v269 = vld [vmem:[%s6 + $0x90] sm:$0xff]
    %v270 = vld [vmem:[%s6 + $0x98] sm:$0xff]
    %v271 = vld [vmem:[%s6 + $0xa0] sm:$0xff]
    %v272 = vld [vmem:[%s6 + $0xa8] sm:$0xff]
    %v273 = vld [vmem:[%s6 + $0xb0] sm:$0xff]
    %v274 = vld [vmem:[%s6 + $0xb8] sm:$0xff]
    %v275 = vld [vmem:[%s6 + $0xc0] sm:$0xff]
    %v276 = vld [vmem:[%s6 + $0xc8] sm:$0xff]
    %v277 = vld [vmem:[%s6 + $0xd0] sm:$0xff]
    %v278 = vld [vmem:[%s6 + $0xd8] sm:$0xff]
    %v279 = vld [vmem:[%s6 + $0xe0] sm:$0xff]
    %v280 = vld [vmem:[%s6 + $0xe8] sm:$0xff]
    %v281 = vld [vmem:[%s6 + $0xf0] sm:$0xff]
    %v282 = vld [vmem:[%s6 + $0xf8] sm:$0xff]
    %v283 = vld [vmem:[%s6 + $0x100] sm:$0xff]
    %v284 = vld [vmem:[%s6 + $0x108] sm:$0xff]
    %v285 = vld [vmem:[%s6 + $0x110] sm:$0xff]
    %v286 = vld [vmem:[%s6 + $0x118] sm:$0xff]
    %v287 = vld [vmem:[%s6 + $0x120] sm:$0xff]
    %v288 = vld [vmem:[%s6 + $0x128] sm:$0xff]
    %v289 = vld [vmem:[%s6 + $0x130] sm:$0xff]
    %v290 = vld [vmem:[%s6 + $0x138] sm:$0xff]
    %v291 = vld [vmem:[%s6 + $0x140] sm:$0xff]
    %v292 = vld [vmem:[%s6 + $0x148] sm:$0xff]
    %v293 = vld [vmem:[%s6 + $0x150] sm:$0xff]
    %v294 = vld [vmem:[%s6 + $0x158] sm:$0xff]
    %v295 = vld [vmem:[%s6 + $0x160] sm:$0xff]
    %v296 = vld [vmem:[%s6 + $0x168] sm:$0xff]
    %v297 = vld [vmem:[%s6 + $0x170] sm:$0xff]
    %v298 = vld [vmem:[%s6 + $0x178] sm:$0xff]
    %v299 = vld [vmem:[%s6 + $0x180] sm:$0xff]
    %v300 = vld [vmem:[%s6 + $0x188] sm:$0xff]
    %v301 = vld [vmem:[%s6 + $0x190] sm:$0xff]
    %v302 = vld [vmem:[%s6 + $0x198] sm:$0xff]
    %v303 = vld [vmem:[%s6 + $0x1a0] sm:$0xff]
    %v304 = vld [vmem:[%s6 + $0x1a8] sm:$0xff]
    %v305 = vld [vmem:[%s6 + $0x1b0] sm:$0xff]
    %v306 = vld [vmem:[%s6 + $0x1b8] sm:$0xff]
    %v307 = vld [vmem:[%s6 + $0x1c0] sm:$0xff]
    %v308 = vld [vmem:[%s6 + $0x1c8] sm:$0xff]
    %v309 = vld [vmem:[%s6 + $0x1d0] sm:$0xff]
    %v310 = vld [vmem:[%s6 + $0x1d8] sm:$0xff]
    %v311 = vld [vmem:[%s6 + $0x1e0] sm:$0xff]
    %v312 = vld [vmem:[%s6 + $0x1e8] sm:$0xff]
    %v313 = vld [vmem:[%s6 + $0x1f0] sm:$0xff]
    %v314 = vld [vmem:[%s6 + $0x1f8] sm:$0xff]
    %v315 = vld [vmem:[%s6 + $0x200] sm:$0xff]
    %v316 = vld [vmem:[%s6 + $0x208] sm:$0xff]
    %v317 = vld [vmem:[%s6 + $0x210] sm:$0xff]
    %v318 = vld [vmem:[%s6 + $0x218] sm:$0xff]
    %v319 = vld [vmem:[%s6 + $0x220] sm:$0xff]
    %v320 = vld [vmem:[%s6 + $0x228] sm:$0xff]
    %v321 = vld [vmem:[%s6 + $0x230] sm:$0xff]
    %v322 = vld [vmem:[%s6 + $0x238] sm:$0xff]
    %v323 = vld [vmem:[%s6 + $0x240] sm:$0xff]
    %v324 = vld [vmem:[%s6 + $0x248] sm:$0xff]
    %v325 = vld [vmem:[%s6 + $0x250] sm:$0xff]
    %v326 = vld [vmem:[%s6 + $0x258] sm:$0xff]
    %v327 = vld [vmem:[%s6 + $0x260] sm:$0xff]
    %v328 = vld [vmem:[%s6 + $0x268] sm:$0xff]
    %v329 = vld [vmem:[%s6 + $0x270] sm:$0xff]
    %v330 = vld [vmem:[%s6 + $0x278] sm:$0xff]
    %v331 = vld [vmem:[%s6 + $0x280] sm:$0xff]
    %v332 = vld [vmem:[%s6 + $0x288] sm:$0xff]
    %v333 = vld [vmem:[%s6 + $0x290] sm:$0xff]
    %v334 = vld [vmem:[%s6 + $0x298] sm:$0xff]
    %v335 = vld [vmem:[%s6 + $0x2a0] sm:$0xff]
    %v336 = vld [vmem:[%s6 + $0x2a8] sm:$0xff]
    %v337 = vld [vmem:[%s6 + $0x2b0] sm:$0xff]
    %v338 = vld [vmem:[%s6 + $0x2b8] sm:$0xff]
    %v339 = vld [vmem:[%s6 + $0x2c0] sm:$0xff]
    %v340 = vld [vmem:[%s6 + $0x2c8] sm:$0xff]
    %v341 = vld [vmem:[%s6 + $0x2d0] sm:$0xff]
    %v342 = vld [vmem:[%s6 + $0x2d8] sm:$0xff]
    %v343 = vld [vmem:[%s6 + $0x2e0] sm:$0xff]
    %v344 = vld [vmem:[%s6 + $0x2e8] sm:$0xff]
    %v345 = vld [vmem:[%s6 + $0x2f0] sm:$0xff]
    %v346 = vld [vmem:[%s6 + $0x2f8] sm:$0xff]
    %v347 = vld [vmem:[%s6 + $0x300] sm:$0xff]
    %v348 = vld [vmem:[%s6 + $0x308] sm:$0xff]
    %v349 = vld [vmem:[%s6 + $0x310] sm:$0xff]
    %v350 = vld [vmem:[%s6 + $0x318] sm:$0xff]
    %v351 = vld [vmem:[%s6 + $0x320] sm:$0xff]
    %v352 = vld [vmem:[%s6 + $0x328] sm:$0xff]
    %v353 = vld [vmem:[%s6 + $0x330] sm:$0xff]
    %v354 = vld [vmem:[%s6 + $0x338] sm:$0xff]
    %v355 = vld [vmem:[%s6 + $0x340] sm:$0xff]
    %v356 = vld [vmem:[%s6 + $0x348] sm:$0xff]
    %v357 = vld [vmem:[%s6 + $0x350] sm:$0xff]
    %v358 = vld [vmem:[%s6 + $0x358] sm:$0xff]
    %v359 = vld [vmem:[%s6 + $0x360] sm:$0xff]
    %v360 = vld [vmem:[%s6 + $0x368] sm:$0xff]
    %v361 = vld [vmem:[%s6 + $0x370] sm:$0xff]
    %v362 = vld [vmem:[%s6 + $0x378] sm:$0xff]
    %v363 = vld [vmem:[%s6 + $0x380] sm:$0xff]
    %v364 = vld [vmem:[%s6 + $0x388] sm:$0xff]
    %v365 = vld [vmem:[%s6 + $0x390] sm:$0xff]
    %v366 = vld [vmem:[%s6 + $0x398] sm:$0xff]
    %v367 = vld [vmem:[%s6 + $0x3a0] sm:$0xff]
    %v368 = vld [vmem:[%s6 + $0x3a8] sm:$0xff]
    %v369 = vld [vmem:[%s6 + $0x3b0] sm:$0xff]
    %v370 = vld [vmem:[%s6 + $0x3b8] sm:$0xff]
    %v371 = vld [vmem:[%s6 + $0x3c0] sm:$0xff]
    %v372 = vld [vmem:[%s6 + $0x3c8] sm:$0xff]
    %v373 = vld [vmem:[%s6 + $0x3d0] sm:$0xff]
    %v374 = vld [vmem:[%s6 + $0x3d8] sm:$0xff]
    %v375 = vld [vmem:[%s6 + $0x3e0] sm:$0xff]
    %v376 = vld [vmem:[%s6 + $0x3e8] sm:$0xff]
    %v377 = vld [vmem:[%s6 + $0x3f0] sm:$0xff]
    %v378 = vld [vmem:[%s6 + $0x3f8] sm:$0xff]
    %v379 = vld [vmem:[%s6 + $0x400] sm:$0xff]
    %v380 = vld [vmem:[%s6 + $0x408] sm:$0xff]
    %v381 = vld [vmem:[%s6 + $0x410] sm:$0xff]
    %v382 = vld [vmem:[%s6 + $0x418] sm:$0xff]
    %v383 = vld [vmem:[%s6 + $0x420] sm:$0xff]
    %v384 = vld [vmem:[%s6 + $0x428] sm:$0xff]
    %v385 = vld [vmem:[%s6 + $0x430] sm:$0xff]
    %v386 = vld [vmem:[%s6 + $0x438] sm:$0xff]
    %v387 = vld [vmem:[%s6 + $0x440] sm:$0xff]
    %v388 = vld [vmem:[%s6 + $0x448] sm:$0xff]
    %v389 = vld [vmem:[%s6 + $0x450] sm:$0xff]
    %v390 = vld [vmem:[%s6 + $0x458] sm:$0xff]
    %v391 = vld [vmem:[%s6 + $0x460] sm:$0xff]
    %v392 = vld [vmem:[%s6 + $0x468] sm:$0xff]
    %v393 = vld [vmem:[%s6 + $0x470] sm:$0xff]
    %v394 = vld [vmem:[%s6 + $0x478] sm:$0xff]
    %v395 = vld [vmem:[%s6 + $0x480] sm:$0xff]
    %v396 = vld [vmem:[%s6 + $0x488] sm:$0xff]
    %v397 = vld [vmem:[%s6 + $0x490] sm:$0xff]
    %v398 = vld [vmem:[%s6 + $0x498] sm:$0xff]
    %v399 = vld [vmem:[%s6 + $0x4a0] sm:$0xff]
    %v400 = vld [vmem:[%s6 + $0x4a8] sm:$0xff]
    %v401 = vld [vmem:[%s6 + $0x4b0] sm:$0xff]
    %v402 = vld [vmem:[%s6 + $0x4b8] sm:$0xff]
    %v403 = vld [vmem:[%s6 + $0x4c0] sm:$0xff]
    %v404 = vld [vmem:[%s6 + $0x4c8] sm:$0xff]
    %v405 = vld [vmem:[%s6 + $0x4d0] sm:$0xff]
    %v406 = vld [vmem:[%s6 + $0x4d8] sm:$0xff]
    %v407 = vld [vmem:[%s6 + $0x4e0] sm:$0xff]
    %v408 = vld [vmem:[%s6 + $0x4e8] sm:$0xff]
    %v409 = vld [vmem:[%s6 + $0x4f0] sm:$0xff]
    %v410 = vld [vmem:[%s6 + $0x4f8] sm:$0xff]
    %v411 = vld [vmem:[%s6 + $0x500] sm:$0xff]
    %v412 = vld [vmem:[%s6 + $0x508] sm:$0xff]
    %v413 = vld [vmem:[%s6 + $0x510] sm:$0xff]
    %v414 = vld [vmem:[%s6 + $0x518] sm:$0xff]
    %v415 = vld [vmem:[%s6 + $0x520] sm:$0xff]
    %v416 = vld [vmem:[%s6 + $0x528] sm:$0xff]
    %v417 = vld [vmem:[%s6 + $0x530] sm:$0xff]
    %v418 = vld [vmem:[%s6 + $0x538] sm:$0xff]
    %v419 = vld [vmem:[%s6 + $0x540] sm:$0xff]
    %v420 = vld [vmem:[%s6 + $0x548] sm:$0xff]
    %v421 = vld [vmem:[%s6 + $0x550] sm:$0xff]
    %v422 = vld [vmem:[%s6 + $0x558] sm:$0xff]
    %v423 = vld [vmem:[%s6 + $0x560] sm:$0xff]
    %v424 = vld [vmem:[%s6 + $0x568] sm:$0xff]
    %v425 = vld [vmem:[%s6 + $0x570] sm:$0xff]
    %v426 = vld [vmem:[%s6 + $0x578] sm:$0xff]
    %v427 = vld [vmem:[%s6 + $0x580] sm:$0xff]
    %v428 = vld [vmem:[%s6 + $0x588] sm:$0xff]
    %v429 = vld [vmem:[%s6 + $0x590] sm:$0xff]
    %v430 = vld [vmem:[%s6 + $0x598] sm:$0xff]
    %v431 = vld [vmem:[%s6 + $0x5a0] sm:$0xff]
    %v432 = vld [vmem:[%s6 + $0x5a8] sm:$0xff]
    %v433 = vld [vmem:[%s6 + $0x5b0] sm:$0xff]
    %v434 = vld [vmem:[%s6 + $0x5b8] sm:$0xff]
    %v435 = vld [vmem:[%s6 + $0x5c0] sm:$0xff]
    %v436 = vld [vmem:[%s6 + $0x5c8] sm:$0xff]
    %v437 = vld [vmem:[%s6 + $0x5d0] sm:$0xff]
    %v438 = vld [vmem:[%s6 + $0x5d8] sm:$0xff]
    %v439 = vld [vmem:[%s6 + $0x5e0] sm:$0xff]
    %v440 = vld [vmem:[%s6 + $0x5e8] sm:$0xff]
    %v441 = vld [vmem:[%s6 + $0x5f0] sm:$0xff]
    %v442 = vld [vmem:[%s6 + $0x5f8] sm:$0xff]
    %v444 = vlaneseq
    %v445 = vshrl.u32 %v444, 7
    %v446 = vsub.s32 0, %v445
    %v447 = vrot.slane %v56, %v446
    %v448 = vlaneseq
    %v449 = vshrl.u32 %v448, 7
    %v450 = vsub.s32 1, %v449
    %v451 = vrot.slane %v56, %v450
    %v452 = vlaneseq
    %v453 = vshrl.u32 %v452, 7
    %v454 = vsub.s32 2, %v453
    %v455 = vrot.slane %v56, %v454
    %v456 = vlaneseq
    %v457 = vshrl.u32 %v456, 7
    %v458 = vsub.s32 3, %v457
    %v459 = vrot.slane %v56, %v458
    %464 = vmatprep.subr.mxu0 %v252
    %465 = vmatpush1.msra.mxu0 %v251
    %466 = vmatprep.subr.mxu0 %v256
    %467 = vmatpush1.msra.mxu0 %v255
    %468 = vmatprep.subr.mxu0 %v260
    %469 = vmatpush1.msra.mxu0 %v259
    %470 = vmatprep.subr.mxu0 %v264
    %471 = vmatpush1.msra.mxu0 %v263
    %472 = vmatprep.subr.mxu0 %v268
    %473 = vmatpush1.msra.mxu0 %v267
    %474 = vmatprep.subr.mxu0 %v272
    %475 = vmatpush1.msra.mxu0 %v271
    %476 = vmatprep.subr.mxu0 %v276
    %477 = vmatpush1.msra.mxu0 %v275
    %478 = vmatprep.subr.mxu0 %v280
    %479 = vmatpush1.msra.mxu0 %v279
    %480 = vmatprep.subr.mxu0 %v284
    %481 = vmatpush1.msra.mxu0 %v283
    %482 = vmatprep.subr.mxu0 %v288
    %483 = vmatpush1.msra.mxu0 %v287
    %484 = vmatprep.subr.mxu0 %v292
    %485 = vmatpush1.msra.mxu0 %v291
    %486 = vmatprep.subr.mxu0 %v296
    %487 = vmatpush1.msra.mxu0 %v295
    %488 = vmatprep.subr.mxu0 %v300
    %489 = vmatpush1.msra.mxu0 %v299
    %490 = vmatprep.subr.mxu0 %v304
    %491 = vmatpush1.msra.mxu0 %v303
    %492 = vmatprep.subr.mxu0 %v308
    %493 = vmatpush1.msra.mxu0 %v307
    %494 = vmatprep.subr.mxu0 %v312
    %495 = vmatpush1.msra.mxu0 %v311
    %496 = vmatprep.subr.mxu0 %v316
    %497 = vmatpush1.msra.mxu0 %v315
    %498 = vmatprep.subr.mxu0 %v320
    %499 = vmatpush1.msra.mxu0 %v319
    %500 = vmatprep.subr.mxu0 %v324
    %501 = vmatpush1.msra.mxu0 %v323
    %502 = vmatprep.subr.mxu0 %v328
    %503 = vmatpush1.msra.mxu0 %v327
    %504 = vmatprep.subr.mxu0 %v332
    %505 = vmatpush1.msra.mxu0 %v331
    %506 = vmatprep.subr.mxu0 %v336
    %507 = vmatpush1.msra.mxu0 %v335
    %508 = vmatprep.subr.mxu0 %v340
    %509 = vmatpush1.msra.mxu0 %v339
    %510 = vmatprep.subr.mxu0 %v344
    %511 = vmatpush1.msra.mxu0 %v343
    %512 = vmatprep.subr.mxu0 %v348
    %513 = vmatpush1.msra.mxu0 %v347
    %514 = vmatprep.subr.mxu0 %v352
    %515 = vmatpush1.msra.mxu0 %v351
    %516 = vmatprep.subr.mxu0 %v356
    %517 = vmatpush1.msra.mxu0 %v355
    %518 = vmatprep.subr.mxu0 %v360
    %519 = vmatpush1.msra.mxu0 %v359
    %520 = vmatprep.subr.mxu0 %v364
    %521 = vmatpush1.msra.mxu0 %v363
    %522 = vmatprep.subr.mxu0 %v368
    %523 = vmatpush1.msra.mxu0 %v367
    %524 = vmatprep.subr.mxu0 %v372
    %525 = vmatpush1.msra.mxu0 %v371
    %526 = vmatprep.subr.mxu0 %v376
    %527 = vmatpush1.msra.mxu0 %v375
    %528 = vmatprep.mubr.f32.mxu0 %v250
    %529 = vmatmul.mubr.f32.gmra.mrb[0].mxu0 %v162
    %v530 = vpop.f32.mrb[0].mxu0
    %v531 = vadd.f32 %v447, %v530
    %v532 = vpop.f32.mrb[0].mxu0
    %v533 = vadd.f32 %v451, %v532
    %534 = vdwg.mxu0
    %535 = vmatprep.subr.mxu0 %v380
    %536 = vmatpush1.msra.mxu0 %v379
    %537 = vmatprep.subr.mxu0 %v384
    %538 = vmatpush1.msra.mxu0 %v383
    %539 = vmatprep.subr.mxu0 %v388
    %540 = vmatpush1.msra.mxu0 %v387
    %541 = vmatprep.subr.mxu0 %v392
    %542 = vmatpush1.msra.mxu0 %v391
    %543 = vmatprep.subr.mxu0 %v396
    %544 = vmatpush1.msra.mxu0 %v395
    %545 = vmatprep.subr.mxu0 %v400
    %546 = vmatpush1.msra.mxu0 %v399
    %547 = vmatprep.subr.mxu0 %v404
    %548 = vmatpush1.msra.mxu0 %v403
    %549 = vmatprep.subr.mxu0 %v408
    %550 = vmatpush1.msra.mxu0 %v407
    %551 = vmatprep.subr.mxu0 %v412
    %552 = vmatpush1.msra.mxu0 %v411
    %553 = vmatprep.subr.mxu0 %v416
    %554 = vmatpush1.msra.mxu0 %v415
    %555 = vmatprep.subr.mxu0 %v420
    %556 = vmatpush1.msra.mxu0 %v419
    %557 = vmatprep.subr.mxu0 %v424
    %558 = vmatpush1.msra.mxu0 %v423
    %559 = vmatprep.subr.mxu0 %v428
    %560 = vmatpush1.msra.mxu0 %v427
    %561 = vmatprep.subr.mxu0 %v432
    %562 = vmatpush1.msra.mxu0 %v431
    %563 = vmatprep.subr.mxu0 %v436
    %564 = vmatpush1.msra.mxu0 %v435
    %565 = vmatprep.subr.mxu0 %v440
    %566 = vmatpush1.msra.mxu0 %v439
    %567 = vmatprep.subr.mxu0 0.0
    %568 = vmatpush1.msra.mxu0 0.0
    %569 = vmatprep.subr.mxu0 0.0
    %570 = vmatpush1.msra.mxu0 0.0
    %571 = vmatprep.subr.mxu0 0.0
    %572 = vmatpush1.msra.mxu0 0.0
    %573 = vmatprep.subr.mxu0 0.0
    %574 = vmatpush1.msra.mxu0 0.0
    %575 = vmatprep.subr.mxu0 0.0
    %576 = vmatpush1.msra.mxu0 0.0
    %577 = vmatprep.subr.mxu0 0.0
    %578 = vmatpush1.msra.mxu0 0.0
    %579 = vmatprep.subr.mxu0 0.0
    %580 = vmatpush1.msra.mxu0 0.0
    %581 = vmatprep.subr.mxu0 0.0
    %582 = vmatpush1.msra.mxu0 0.0
    %583 = vmatprep.subr.mxu0 0.0
    %584 = vmatpush1.msra.mxu0 0.0
    %585 = vmatprep.subr.mxu0 0.0
    %586 = vmatpush1.msra.mxu0 0.0
    %587 = vmatprep.subr.mxu0 0.0
    %588 = vmatpush1.msra.mxu0 0.0
    %589 = vmatprep.subr.mxu0 0.0
    %590 = vmatpush1.msra.mxu0 0.0
    %591 = vmatprep.subr.mxu0 0.0
    %592 = vmatpush1.msra.mxu0 0.0
    %593 = vmatprep.subr.mxu0 0.0
    %594 = vmatpush1.msra.mxu0 0.0
    %595 = vmatprep.subr.mxu0 0.0
    %596 = vmatpush1.msra.mxu0 0.0
    %597 = vmatprep.subr.mxu0 0.0
    %598 = vmatpush1.msra.mxu0 0.0
    %599 = vmatprep.mubr.f32.mxu0 0.0
    %600 = vmatmul.mubr.f32.gmra.mrb[0].mxu0 %v60
    %v601 = vpop.f32.mrb[0].mxu0
    %v602 = vadd.f32 %v531, %v601
    %v603 = vpop.f32.mrb[0].mxu0
    %v604 = vadd.f32 %v533, %v603
    %605 = vdwg.mxu0
    %606 = vmatprep.subr.mxu0 %v254
    %607 = vmatpush1.msra.mxu0 %v253
    %608 = vmatprep.subr.mxu0 %v258
    %609 = vmatpush1.msra.mxu0 %v257
    %610 = vmatprep.subr.mxu0 %v262
    %611 = vmatpush1.msra.mxu0 %v261
    %612 = vmatprep.subr.mxu0 %v266
    %613 = vmatpush1.msra.mxu0 %v265
    %614 = vmatprep.subr.mxu0 %v270
    %615 = vmatpush1.msra.mxu0 %v269
    %616 = vmatprep.subr.mxu0 %v274
    %617 = vmatpush1.msra.mxu0 %v273
    %618 = vmatprep.subr.mxu0 %v278
    %619 = vmatpush1.msra.mxu0 %v277
    %620 = vmatprep.subr.mxu0 %v282
    %621 = vmatpush1.msra.mxu0 %v281
    %622 = vmatprep.subr.mxu0 %v286
    %623 = vmatpush1.msra.mxu0 %v285
    %624 = vmatprep.subr.mxu0 %v290
    %625 = vmatpush1.msra.mxu0 %v289
    %626 = vmatprep.subr.mxu0 %v294
    %627 = vmatpush1.msra.mxu0 %v293
    %628 = vmatprep.subr.mxu0 %v298
    %629 = vmatpush1.msra.mxu0 %v297
    %630 = vmatprep.subr.mxu0 %v302
    %631 = vmatpush1.msra.mxu0 %v301
    %632 = vmatprep.subr.mxu0 %v306
    %633 = vmatpush1.msra.mxu0 %v305
    %634 = vmatprep.subr.mxu0 %v310
    %635 = vmatpush1.msra.mxu0 %v309
    %636 = vmatprep.subr.mxu0 %v314
    %637 = vmatpush1.msra.mxu0 %v313
    %638 = vmatprep.subr.mxu0 %v318
    %639 = vmatpush1.msra.mxu0 %v317
    %640 = vmatprep.subr.mxu0 %v322
    %641 = vmatpush1.msra.mxu0 %v321
    %642 = vmatprep.subr.mxu0 %v326
    %643 = vmatpush1.msra.mxu0 %v325
    %644 = vmatprep.subr.mxu0 %v330
    %645 = vmatpush1.msra.mxu0 %v329
    %646 = vmatprep.subr.mxu0 %v334
    %647 = vmatpush1.msra.mxu0 %v333
    %648 = vmatprep.subr.mxu0 %v338
    %649 = vmatpush1.msra.mxu0 %v337
    %650 = vmatprep.subr.mxu0 %v342
    %651 = vmatpush1.msra.mxu0 %v341
    %652 = vmatprep.subr.mxu0 %v346
    %653 = vmatpush1.msra.mxu0 %v345
    %654 = vmatprep.subr.mxu0 %v350
    %655 = vmatpush1.msra.mxu0 %v349
    %656 = vmatprep.subr.mxu0 %v354
    %657 = vmatpush1.msra.mxu0 %v353
    %658 = vmatprep.subr.mxu0 %v358
    %659 = vmatpush1.msra.mxu0 %v357
    %660 = vmatprep.subr.mxu0 %v362
    %661 = vmatpush1.msra.mxu0 %v361
    %662 = vmatprep.subr.mxu0 %v366
    %663 = vmatpush1.msra.mxu0 %v365
    %664 = vmatprep.subr.mxu0 %v370
    %665 = vmatpush1.msra.mxu0 %v369
    %666 = vmatprep.subr.mxu0 %v374
    %667 = vmatpush1.msra.mxu0 %v373
    %668 = vmatprep.subr.mxu0 %v378
    %669 = vmatpush1.msra.mxu0 %v377
    %670 = vmatprep.mubr.f32.mxu0 %v250
    %671 = vmatmul.mubr.f32.gmra.mrb[0].mxu0 %v162
    %v672 = vpop.f32.mrb[0].mxu0
    %v673 = vadd.f32 %v455, %v672
    %v674 = vpop.f32.mrb[0].mxu0
    %v675 = vadd.f32 %v459, %v674
    %676 = vdwg.mxu0
    %677 = vmatprep.subr.mxu0 %v382
    %678 = vmatpush1.msra.mxu0 %v381
    %679 = vmatprep.subr.mxu0 %v386
    %680 = vmatpush1.msra.mxu0 %v385
    %681 = vmatprep.subr.mxu0 %v390
    %682 = vmatpush1.msra.mxu0 %v389
    %683 = vmatprep.subr.mxu0 %v394
    %684 = vmatpush1.msra.mxu0 %v393
    %685 = vmatprep.subr.mxu0 %v398
    %686 = vmatpush1.msra.mxu0 %v397
    %687 = vmatprep.subr.mxu0 %v402
    %688 = vmatpush1.msra.mxu0 %v401
    %689 = vmatprep.subr.mxu0 %v406
    %690 = vmatpush1.msra.mxu0 %v405
    %691 = vmatprep.subr.mxu0 %v410
    %692 = vmatpush1.msra.mxu0 %v409
    %693 = vmatprep.subr.mxu0 %v414
    %694 = vmatpush1.msra.mxu0 %v413
    %695 = vmatprep.subr.mxu0 %v418
    %696 = vmatpush1.msra.mxu0 %v417
    %697 = vmatprep.subr.mxu0 %v422
    %698 = vmatpush1.msra.mxu0 %v421
    %699 = vmatprep.subr.mxu0 %v426
    %700 = vmatpush1.msra.mxu0 %v425
    %701 = vmatprep.subr.mxu0 %v430
    %702 = vmatpush1.msra.mxu0 %v429
    %703 = vmatprep.subr.mxu0 %v434
    %704 = vmatpush1.msra.mxu0 %v433
    %705 = vmatprep.subr.mxu0 %v438
    %706 = vmatpush1.msra.mxu0 %v437
    %707 = vmatprep.subr.mxu0 %v442
    %708 = vmatpush1.msra.mxu0 %v441
    %709 = vmatprep.subr.mxu0 0.0
    %710 = vmatpush1.msra.mxu0 0.0
    %711 = vmatprep.subr.mxu0 0.0
    %712 = vmatpush1.msra.mxu0 0.0
    %713 = vmatprep.subr.mxu0 0.0
    %714 = vmatpush1.msra.mxu0 0.0
    %715 = vmatprep.subr.mxu0 0.0
    %716 = vmatpush1.msra.mxu0 0.0
    %717 = vmatprep.subr.mxu0 0.0
    %718 = vmatpush1.msra.mxu0 0.0
    %719 = vmatprep.subr.mxu0 0.0
    %720 = vmatpush1.msra.mxu0 0.0
    %721 = vmatprep.subr.mxu0 0.0
    %722 = vmatpush1.msra.mxu0 0.0
    %723 = vmatprep.subr.mxu0 0.0
    %724 = vmatpush1.msra.mxu0 0.0
    %725 = vmatprep.subr.mxu0 0.0
    %726 = vmatpush1.msra.mxu0 0.0
    %727 = vmatprep.subr.mxu0 0.0
    %728 = vmatpush1.msra.mxu0 0.0
    %729 = vmatprep.subr.mxu0 0.0
    %730 = vmatpush1.msra.mxu0 0.0
    %731 = vmatprep.subr.mxu0 0.0
    %732 = vmatpush1.msra.mxu0 0.0
    %733 = vmatprep.subr.mxu0 0.0
    %734 = vmatpush1.msra.mxu0 0.0
    %735 = vmatprep.subr.mxu0 0.0
    %736 = vmatpush1.msra.mxu0 0.0
    %737 = vmatprep.subr.mxu0 0.0
    %738 = vmatpush1.msra.mxu0 0.0
    %739 = vmatprep.subr.mxu0 0.0
    %740 = vmatpush1.msra.mxu0 0.0
    %741 = vmatprep.mubr.f32.mxu0 0.0
    %742 = vmatmul.mubr.f32.gmra.mrb[0].mxu0 %v60
    %v743 = vpop.f32.mrb[0].mxu0
    %v744 = vadd.f32 %v673, %v743
    %v745 = vpop.f32.mrb[0].mxu0
    %v746 = vadd.f32 %v675, %v745
    %747 = vdwg.mxu0
    %v748 = vxor.u32 %v602, 2147483648
    %v749 = vmul.f32 %v748, 1.442695
    %v750 = vpow.pop %v749
    %v751 = vadd.f32 %v750, 1.0
    %v752 = vrcp.pop %v751
    %v753 = vmul.f32 1.0, %v752
    %v754 = vxor.u32 %v604, 2147483648
    %v755 = vmul.f32 %v754, 1.442695
    %v756 = vpow.pop %v755
    %v757 = vadd.f32 %v756, 1.0
    %v758 = vrcp.pop %v757
    %v759 = vmul.f32 1.0, %v758
    %v760 = vtanh.pop %v744
    %v761 = vxor.u32 %v746, 2147483648
    %v762 = vmul.f32 %v761, 1.442695
    %v763 = vpow.pop %v762
    %v764 = vadd.f32 %v763, 1.0
    %v765 = vrcp.pop %v764
    %v766 = vmul.f32 1.0, %v765
    %v767 = vmul.f32 %v759, %v61
    %v768 = vmul.f32 %v753, %v760
    %v769 = vadd.f32 %v767, %v768
    %v770 = vtanh.pop %v769
    %v771 = vmul.f32 %v766, %v770
    %v772 = vld [vmem:[%s8] sm:$0xff]
    %v773 = vld [vmem:[%s8 + $0x8] sm:$0xff]
    %v774 = vld [vmem:[%s8 + $0x10] sm:$0xff]
    %v775 = vld [vmem:[%s8 + $0x18] sm:$0xff]
    %v776 = vld [vmem:[%s8 + $0x20] sm:$0xff]
    %v777 = vld [vmem:[%s8 + $0x28] sm:$0xff]
    %v778 = vld [vmem:[%s8 + $0x30] sm:$0xff]
    %v779 = vld [vmem:[%s8 + $0x38] sm:$0xff]
    %v780 = vld [vmem:[%s8 + $0x40] sm:$0xff]
    %v781 = vld [vmem:[%s8 + $0x48] sm:$0xff]
    %v782 = vld [vmem:[%s8 + $0x50] sm:$0xff]
    %v783 = vld [vmem:[%s8 + $0x58] sm:$0xff]
    %v784 = vld [vmem:[%s8 + $0x60] sm:$0xff]
    %v785 = vld [vmem:[%s8 + $0x68] sm:$0xff]
    %v786 = vld [vmem:[%s8 + $0x70] sm:$0xff]
    %v787 = vld [vmem:[%s8 + $0x78] sm:$0xff]
    %v789 = vlaneseq
    %v790 = vshrl.u32 %v789, 7
    %v791 = vsub.s32 0, %v790
    %v792 = vrot.slane %v57, %v791
    %794 = vmatprep.subr.mxu0 0.0
    %795 = vmatpush1.msra.mxu0 %v772
    %796 = vmatprep.subr.mxu0 0.0
    %797 = vmatpush1.msra.mxu0 %v773
    %798 = vmatprep.subr.mxu0 0.0
    %799 = vmatpush1.msra.mxu0 %v774
    %800 = vmatprep.subr.mxu0 0.0
    %801 = vmatpush1.msra.mxu0 %v775
    %802 = vmatprep.subr.mxu0 0.0
    %803 = vmatpush1.msra.mxu0 %v776
    %804 = vmatprep.subr.mxu0 0.0
    %805 = vmatpush1.msra.mxu0 %v777
    %806 = vmatprep.subr.mxu0 0.0
    %807 = vmatpush1.msra.mxu0 %v778
    %808 = vmatprep.subr.mxu0 0.0
    %809 = vmatpush1.msra.mxu0 %v779
    %810 = vmatprep.subr.mxu0 0.0
    %811 = vmatpush1.msra.mxu0 %v780
    %812 = vmatprep.subr.mxu0 0.0
    %813 = vmatpush1.msra.mxu0 %v781
    %814 = vmatprep.subr.mxu0 0.0
    %815 = vmatpush1.msra.mxu0 %v782
    %816 = vmatprep.subr.mxu0 0.0
    %817 = vmatpush1.msra.mxu0 %v783
    %818 = vmatprep.subr.mxu0 0.0
    %819 = vmatpush1.msra.mxu0 %v784
    %820 = vmatprep.subr.mxu0 0.0
    %821 = vmatpush1.msra.mxu0 %v785
    %822 = vmatprep.subr.mxu0 0.0
    %823 = vmatpush1.msra.mxu0 %v786
    %824 = vmatprep.subr.mxu0 0.0
    %825 = vmatpush1.msra.mxu0 %v787
    %826 = vmatprep.subr.mxu0 0.0
    %827 = vmatpush1.msra.mxu0 0.0
    %828 = vmatprep.subr.mxu0 0.0
    %829 = vmatpush1.msra.mxu0 0.0
    %830 = vmatprep.subr.mxu0 0.0
    %831 = vmatpush1.msra.mxu0 0.0
    %832 = vmatprep.subr.mxu0 0.0
    %833 = vmatpush1.msra.mxu0 0.0
    %834 = vmatprep.subr.mxu0 0.0
    %835 = vmatpush1.msra.mxu0 0.0
    %836 = vmatprep.subr.mxu0 0.0
    %837 = vmatpush1.msra.mxu0 0.0
    %838 = vmatprep.subr.mxu0 0.0
    %839 = vmatpush1.msra.mxu0 0.0
    %840 = vmatprep.subr.mxu0 0.0
    %841 = vmatpush1.msra.mxu0 0.0
    %842 = vmatprep.subr.mxu0 0.0
    %843 = vmatpush1.msra.mxu0 0.0
    %844 = vmatprep.subr.mxu0 0.0
    %845 = vmatpush1.msra.mxu0 0.0
    %846 = vmatprep.subr.mxu0 0.0
    %847 = vmatpush1.msra.mxu0 0.0
    %848 = vmatprep.subr.mxu0 0.0
    %849 = vmatpush1.msra.mxu0 0.0
    %850 = vmatprep.subr.mxu0 0.0
    %851 = vmatpush1.msra.mxu0 0.0
    %852 = vmatprep.subr.mxu0 0.0
    %853 = vmatpush1.msra.mxu0 0.0
    %854 = vmatprep.subr.mxu0 0.0
    %855 = vmatpush1.msra.mxu0 0.0
    %856 = vmatprep.subr.mxu0 0.0
    %857 = vmatpush1.msra.mxu0 0.0
    %858 = vmatprep.mubr.f32.mxu0 0.0
    %859 = vmatmul.mubr.f32.gmra.mrb[0].mxu0 %v771
    %v860 = vpop.f32.mrb[0].mxu0
    %v861 = vadd.f32 %v792, %v860
    %v862 = vpop.f32.mrb[0].mxu0
    %863 = vdwg.mxu0
    %864 = vst [vmem:[%s10] sm:$0xff] %v861
    %865 = vmax.xlane.f32.xlu0 %v861
    %v866 = vpop.xlane.xlu0 %865
    %vm867 = vcmp.eq.f32.partialorder %v861, %v866
    %v868 = vsel %vm867, %v59, 128
    %v869 = vand.u32 %v868, 65535
    %v870 = vshra.s32 %v868, 16
    %v871 = vcvt.s32.f32 %v869
    %v872 = vcvt.s32.f32 %v870
    %873 = vmin.xlane.f32.xlu0 %v872
    %v874 = vpop.xlane.xlu0 %873
    %vm875 = vcmp.eq.f32.partialorder %v872, %v874
    %v876 = vsel %vm875, %v871, inf
    %877 = vmin.xlane.f32.xlu0 %v876
    %v878 = vpop.xlane.xlu0 %877
    %v879 = vcvt.f32.s32 %v878
    %v880 = vcvt.f32.s32 %v874
    %v881 = vshll.u32 %v880, 16
    %v882 = vadd.s32 %v881, %v879
    %vm883 = vcmp.eq.s32.totalorder %v59, %v882
    %v884 = vsel %vm883, 1, 0
    %v885 = vcvt.s32.f32 %v884
    %s886 = scalar_lea.vmem %s1, 8
    %v887 = vld [vmem:[%s886] sm:$0xff]
    %888 = vset.pattern.permute.xlu0 0
    %889 = vperm.xlu0 %888, %v887
    %v890 = vpop.permute.xlu0 %889
    %vm891 = vcmp.eq.s32.totalorder %v59, %v890
    %v892 = vsel %vm891, 1, 0
    %v893 = vcvt.s32.f32 %v892
    %s894 = sld [smem:[#allocation2 + $0x1]]
    %p895 = scmp.ne.s32.totalorder %s894, 0
    %s896 = scalar_select %p895, 1, 0
    %s897 = scvt.s32.f32 %s896
    %v898 = vstv %s897
    %v899 = vmul.f32 %v898, %v893
    %s900 = ssub.f32 1.0, %s897
    %v901 = vstv %s900
    %v902 = vmul.f32 %v901, %v885
    %v903 = vadd.f32 %v899, %v902
    %v904 = vld [vmem:[%s5] sm:$0xff]
    %v905 = vld [vmem:[%s5 + $0x8] sm:$0xff]
    %v906 = vld [vmem:[%s5 + $0x10] sm:$0xff]
    %v907 = vld [vmem:[%s5 + $0x18] sm:$0xff]
    %v908 = vld [vmem:[%s5 + $0x20] sm:$0xff]
    %v909 = vld [vmem:[%s5 + $0x28] sm:$0xff]
    %v910 = vld [vmem:[%s5 + $0x30] sm:$0xff]
    %v911 = vld [vmem:[%s5 + $0x38] sm:$0xff]
    %v912 = vld [vmem:[%s5 + $0x40] sm:$0xff]
    %v913 = vld [vmem:[%s5 + $0x48] sm:$0xff]
    %v914 = vld [vmem:[%s5 + $0x50] sm:$0xff]
    %v915 = vld [vmem:[%s5 + $0x58] sm:$0xff]
    %v916 = vld [vmem:[%s5 + $0x60] sm:$0xff]
    %v917 = vld [vmem:[%s5 + $0x68] sm:$0xff]
    %v918 = vld [vmem:[%s5 + $0x70] sm:$0xff]
    %v919 = vld [vmem:[%s5 + $0x78] sm:$0xff]
    %920 = vmatprep.subr.mxu0 0.0
    %921 = vmatpush1.msra.mxu0 %v904
    %922 = vmatprep.subr.mxu0 0.0
    %923 = vmatpush1.msra.mxu0 %v905
    %924 = vmatprep.subr.mxu0 0.0
    %925 = vmatpush1.msra.mxu0 %v906
    %926 = vmatprep.subr.mxu0 0.0
    %927 = vmatpush1.msra.mxu0 %v907
    %928 = vmatprep.subr.mxu0 0.0
    %929 = vmatpush1.msra.mxu0 %v908
    %930 = vmatprep.subr.mxu0 0.0
    %931 = vmatpush1.msra.mxu0 %v909
    %932 = vmatprep.subr.mxu0 0.0
    %933 = vmatpush1.msra.mxu0 %v910
    %934 = vmatprep.subr.mxu0 0.0
    %935 = vmatpush1.msra.mxu0 %v911
    %936 = vmatprep.subr.mxu0 0.0
    %937 = vmatpush1.msra.mxu0 %v912
    %938 = vmatprep.subr.mxu0 0.0
    %939 = vmatpush1.msra.mxu0 %v913
    %940 = vmatprep.subr.mxu0 0.0
    %941 = vmatpush1.msra.mxu0 %v914
    %942 = vmatprep.subr.mxu0 0.0
    %943 = vmatpush1.msra.mxu0 %v915
    %944 = vmatprep.subr.mxu0 0.0
    %945 = vmatpush1.msra.mxu0 %v916
    %946 = vmatprep.subr.mxu0 0.0
    %947 = vmatpush1.msra.mxu0 %v917
    %948 = vmatprep.subr.mxu0 0.0
    %949 = vmatpush1.msra.mxu0 %v918
    %950 = vmatprep.subr.mxu0 0.0
    %951 = vmatpush1.msra.mxu0 %v919
    %952 = vmatprep.subr.mxu0 0.0
    %953 = vmatpush1.msra.mxu0 0.0
    %954 = vmatprep.subr.mxu0 0.0
    %955 = vmatpush1.msra.mxu0 0.0
    %956 = vmatprep.subr.mxu0 0.0
    %957 = vmatpush1.msra.mxu0 0.0
    %958 = vmatprep.subr.mxu0 0.0
    %959 = vmatpush1.msra.mxu0 0.0
    %960 = vmatprep.subr.mxu0 0.0
    %961 = vmatpush1.msra.mxu0 0.0
    %962 = vmatprep.subr.mxu0 0.0
    %963 = vmatpush1.msra.mxu0 0.0
    %964 = vmatprep.subr.mxu0 0.0
    %965 = vmatpush1.msra.mxu0 0.0
    %966 = vmatprep.subr.mxu0 0.0
    %967 = vmatpush1.msra.mxu0 0.0
    %968 = vmatprep.subr.mxu0 0.0
    %969 = vmatpush1.msra.mxu0 0.0
    %970 = vmatprep.subr.mxu0 0.0
    %971 = vmatpush1.msra.mxu0 0.0
    %972 = vmatprep.subr.mxu0 0.0
    %973 = vmatpush1.msra.mxu0 0.0
    %974 = vmatprep.subr.mxu0 0.0
    %975 = vmatpush1.msra.mxu0 0.0
    %976 = vmatprep.subr.mxu0 0.0
    %977 = vmatpush1.msra.mxu0 0.0
    %978 = vmatprep.subr.mxu0 0.0
    %979 = vmatpush1.msra.mxu0 0.0
    %980 = vmatprep.subr.mxu0 0.0
    %981 = vmatpush1.msra.mxu0 0.0
    %982 = vmatprep.subr.mxu0 0.0
    %983 = vmatpush1.msra.mxu0 0.0
    %984 = vmatprep.mubr.f32.mxu0 0.0
    %985 = vmatmul.mubr.f32.gmra.mrb[0].mxu0 %v903
    %v986 = vpop.f32.mrb[0].mxu0
    %v987 = vadd.f32 0.0, %v986
    %v988 = vpop.f32.mrb[0].mxu0
    %989 = vdwg.mxu0
    %v990 = vmul.f32 %v48, %v771
    %v991 = vmul.f32 %v49, %v771
    %v992 = vmul.f32 %v50, %v771
    %v993 = vmul.f32 %v51, %v771
    %v994 = vmul.f32 %v52, %v771
    %v995 = vmul.f32 %v53, %v771
    %v996 = vmul.f32 %v54, %v771
    %v997 = vmul.f32 %v55, %v771
    %998 = vadd.xlane.f32.xlu0 %v990
    %v999 = vpop.xlane.xlu0 %998
    %1000 = vadd.xlane.f32.xlu0 %v991
    %v1001 = vpop.xlane.xlu0 %1000
    %1002 = vadd.xlane.f32.xlu0 %v992
    %v1003 = vpop.xlane.xlu0 %1002
    %1004 = vadd.xlane.f32.xlu0 %v993
    %v1005 = vpop.xlane.xlu0 %1004
    %1006 = vadd.xlane.f32.xlu0 %v994
    %v1007 = vpop.xlane.xlu0 %1006
    %1008 = vadd.xlane.f32.xlu0 %v995
    %v1009 = vpop.xlane.xlu0 %1008
    %1010 = vadd.xlane.f32.xlu0 %v996
    %v1011 = vpop.xlane.xlu0 %1010
    %1012 = vadd.xlane.f32.xlu0 %v997
    %v1013 = vpop.xlane.xlu0 %1012
    %v1014 = vmax.f32 %v999, %v1007
    %v1015 = vmax.f32 %v1001, %v1009
    %v1016 = vmax.f32 %v1003, %v1011
    %v1017 = vmax.f32 %v1005, %v1013
    %v1018 = vmax.f32 %v1014, %v1015
    %v1019 = vmax.f32 %v1016, %v1017
    %v1020 = vmax.f32 %v1018, %v1019
    %v1021 = vsub.f32 %v999, %v1020
    %v1022 = vsub.f32 %v1001, %v1020
    %v1023 = vsub.f32 %v1003, %v1020
    %v1024 = vsub.f32 %v1005, %v1020
    %v1025 = vsub.f32 %v1007, %v1020
    %v1026 = vsub.f32 %v1009, %v1020
    %v1027 = vsub.f32 %v1011, %v1020
    %v1028 = vsub.f32 %v1013, %v1020
    %v1029 = vmul.f32 %v1021, 1.442695
    %v1030 = vpow.pop %v1029
    %v1031 = vmul.f32 %v1022, 1.442695
    %v1032 = vpow.pop %v1031
    %v1033 = vmul.f32 %v1023, 1.442695
    %v1034 = vpow.pop %v1033
    %v1035 = vmul.f32 %v1024, 1.442695
    %v1036 = vpow.pop %v1035
    %v1037 = vmul.f32 %v1025, 1.442695
    %v1038 = vpow.pop %v1037
    %v1039 = vmul.f32 %v1026, 1.442695
    %v1040 = vpow.pop %v1039
    %v1041 = vmul.f32 %v1027, 1.442695
    %v1042 = vpow.pop %v1041
    %v1043 = vmul.f32 %v1028, 1.442695
    %v1044 = vpow.pop %v1043
    %v1045 = vadd.f32 %v1030, %v1032
    %v1046 = vadd.f32 %v1045, %v1034
    %v1047 = vadd.f32 %v1046, %v1036
    %v1048 = vadd.f32 %v1047, %v1038
    %v1049 = vadd.f32 %v1048, %v1040
    %v1050 = vadd.f32 %v1049, %v1042
    %v1051 = vadd.f32 %v1050, %v1044
    %v1052 = vrcp.pop %v1051
    %v1053 = vmul.f32 %v1030, %v1052
    %v1054 = vmul.f32 %v1032, %v1052
    %v1055 = vmul.f32 %v1034, %v1052
    %v1056 = vmul.f32 %v1036, %v1052
    %v1057 = vmul.f32 %v1038, %v1052
    %v1058 = vmul.f32 %v1040, %v1052
    %v1059 = vmul.f32 %v1042, %v1052
    %v1060 = vmul.f32 %v1044, %v1052
    %v1061 = vmul.f32 %v1053, %v48
    %v1062 = vmul.f32 %v1054, %v49
    %v1063 = vmul.f32 %v1055, %v50
    %v1064 = vmul.f32 %v1056, %v51
    %v1065 = vmul.f32 %v1057, %v52
    %v1066 = vmul.f32 %v1058, %v53
    %v1067 = vmul.f32 %v1059, %v54
    %v1068 = vmul.f32 %v1060, %v55
    %v1069 = vadd.f32 %v1061, %v1062
    %v1070 = vadd.f32 %v1069, %v1063
    %v1071 = vadd.f32 %v1070, %v1064
    %v1072 = vadd.f32 %v1071, %v1065
    %v1073 = vadd.f32 %v1072, %v1066
    %v1074 = vadd.f32 %v1073, %v1067
    %v1075 = vadd.f32 %v1074, %v1068
    %v1076 = vld [vmem:[%s6] sm:$0xff]
    %v1077 = vld [vmem:[%s6 + $0x8] sm:$0xff]
    %v1078 = vld [vmem:[%s6 + $0x10] sm:$0xff]
    %v1079 = vld [vmem:[%s6 + $0x18] sm:$0xff]
    %v1080 = vld [vmem:[%s6 + $0x20] sm:$0xff]
    %v1081 = vld [vmem:[%s6 + $0x28] sm:$0xff]
    %v1082 = vld [vmem:[%s6 + $0x30] sm:$0xff]
    %v1083 = vld [vmem:[%s6 + $0x38] sm:$0xff]
    %v1084 = vld [vmem:[%s6 + $0x40] sm:$0xff]
    %v1085 = vld [vmem:[%s6 + $0x48] sm:$0xff]
    %v1086 = vld [vmem:[%s6 + $0x50] sm:$0xff]
    %v1087 = vld [vmem:[%s6 + $0x58] sm:$0xff]
    %v1088 = vld [vmem:[%s6 + $0x60] sm:$0xff]
    %v1089 = vld [vmem:[%s6 + $0x68] sm:$0xff]
    %v1090 = vld [vmem:[%s6 + $0x70] sm:$0xff]
    %v1091 = vld [vmem:[%s6 + $0x78] sm:$0xff]
    %v1092 = vld [vmem:[%s6 + $0x80] sm:$0xff]
    %v1093 = vld [vmem:[%s6 + $0x88] sm:$0xff]
    %v1094 = vld [vmem:[%s6 + $0x90] sm:$0xff]
    %v1095 = vld [vmem:[%s6 + $0x98] sm:$0xff]
    %v1096 = vld [vmem:[%s6 + $0xa0] sm:$0xff]
    %v1097 = vld [vmem:[%s6 + $0xa8] sm:$0xff]
    %v1098 = vld [vmem:[%s6 + $0xb0] sm:$0xff]
    %v1099 = vld [vmem:[%s6 + $0xb8] sm:$0xff]
    %v1100 = vld [vmem:[%s6 + $0xc0] sm:$0xff]
    %v1101 = vld [vmem:[%s6 + $0xc8] sm:$0xff]
    %v1102 = vld [vmem:[%s6 + $0xd0] sm:$0xff]
    %v1103 = vld [vmem:[%s6 + $0xd8] sm:$0xff]
    %v1104 = vld [vmem:[%s6 + $0xe0] sm:$0xff]
    %v1105 = vld [vmem:[%s6 + $0xe8] sm:$0xff]
    %v1106 = vld [vmem:[%s6 + $0xf0] sm:$0xff]
    %v1107 = vld [vmem:[%s6 + $0xf8] sm:$0xff]
    %v1108 = vld [vmem:[%s6 + $0x100] sm:$0xff]
    %v1109 = vld [vmem:[%s6 + $0x108] sm:$0xff]
    %v1110 = vld [vmem:[%s6 + $0x110] sm:$0xff]
    %v1111 = vld [vmem:[%s6 + $0x118] sm:$0xff]
    %v1112 = vld [vmem:[%s6 + $0x120] sm:$0xff]
    %v1113 = vld [vmem:[%s6 + $0x128] sm:$0xff]
    %v1114 = vld [vmem:[%s6 + $0x130] sm:$0xff]
    %v1115 = vld [vmem:[%s6 + $0x138] sm:$0xff]
    %v1116 = vld [vmem:[%s6 + $0x140] sm:$0xff]
    %v1117 = vld [vmem:[%s6 + $0x148] sm:$0xff]
    %v1118 = vld [vmem:[%s6 + $0x150] sm:$0xff]
    %v1119 = vld [vmem:[%s6 + $0x158] sm:$0xff]
    %v1120 = vld [vmem:[%s6 + $0x160] sm:$0xff]
    %v1121 = vld [vmem:[%s6 + $0x168] sm:$0xff]
    %v1122 = vld [vmem:[%s6 + $0x170] sm:$0xff]
    %v1123 = vld [vmem:[%s6 + $0x178] sm:$0xff]
    %v1124 = vld [vmem:[%s6 + $0x180] sm:$0xff]
    %v1125 = vld [vmem:[%s6 + $0x188] sm:$0xff]
    %v1126 = vld [vmem:[%s6 + $0x190] sm:$0xff]
    %v1127 = vld [vmem:[%s6 + $0x198] sm:$0xff]
    %v1128 = vld [vmem:[%s6 + $0x1a0] sm:$0xff]
    %v1129 = vld [vmem:[%s6 + $0x1a8] sm:$0xff]
    %v1130 = vld [vmem:[%s6 + $0x1b0] sm:$0xff]
    %v1131 = vld [vmem:[%s6 + $0x1b8] sm:$0xff]
    %v1132 = vld [vmem:[%s6 + $0x1c0] sm:$0xff]
    %v1133 = vld [vmem:[%s6 + $0x1c8] sm:$0xff]
    %v1134 = vld [vmem:[%s6 + $0x1d0] sm:$0xff]
    %v1135 = vld [vmem:[%s6 + $0x1d8] sm:$0xff]
    %v1136 = vld [vmem:[%s6 + $0x1e0] sm:$0xff]
    %v1137 = vld [vmem:[%s6 + $0x1e8] sm:$0xff]
    %v1138 = vld [vmem:[%s6 + $0x1f0] sm:$0xff]
    %v1139 = vld [vmem:[%s6 + $0x1f8] sm:$0xff]
    %v1140 = vld [vmem:[%s6 + $0x200] sm:$0xff]
    %v1141 = vld [vmem:[%s6 + $0x208] sm:$0xff]
    %v1142 = vld [vmem:[%s6 + $0x210] sm:$0xff]
    %v1143 = vld [vmem:[%s6 + $0x218] sm:$0xff]
    %v1144 = vld [vmem:[%s6 + $0x220] sm:$0xff]
    %v1145 = vld [vmem:[%s6 + $0x228] sm:$0xff]
    %v1146 = vld [vmem:[%s6 + $0x230] sm:$0xff]
    %v1147 = vld [vmem:[%s6 + $0x238] sm:$0xff]
    %v1148 = vld [vmem:[%s6 + $0x240] sm:$0xff]
    %v1149 = vld [vmem:[%s6 + $0x248] sm:$0xff]
    %v1150 = vld [vmem:[%s6 + $0x250] sm:$0xff]
    %v1151 = vld [vmem:[%s6 + $0x258] sm:$0xff]
    %v1152 = vld [vmem:[%s6 + $0x260] sm:$0xff]
    %v1153 = vld [vmem:[%s6 + $0x268] sm:$0xff]
    %v1154 = vld [vmem:[%s6 + $0x270] sm:$0xff]
    %v1155 = vld [vmem:[%s6 + $0x278] sm:$0xff]
    %v1156 = vld [vmem:[%s6 + $0x280] sm:$0xff]
    %v1157 = vld [vmem:[%s6 + $0x288] sm:$0xff]
    %v1158 = vld [vmem:[%s6 + $0x290] sm:$0xff]
    %v1159 = vld [vmem:[%s6 + $0x298] sm:$0xff]
    %v1160 = vld [vmem:[%s6 + $0x2a0] sm:$0xff]
    %v1161 = vld [vmem:[%s6 + $0x2a8] sm:$0xff]
    %v1162 = vld [vmem:[%s6 + $0x2b0] sm:$0xff]
    %v1163 = vld [vmem:[%s6 + $0x2b8] sm:$0xff]
    %v1164 = vld [vmem:[%s6 + $0x2c0] sm:$0xff]
    %v1165 = vld [vmem:[%s6 + $0x2c8] sm:$0xff]
    %v1166 = vld [vmem:[%s6 + $0x2d0] sm:$0xff]
    %v1167 = vld [vmem:[%s6 + $0x2d8] sm:$0xff]
    %v1168 = vld [vmem:[%s6 + $0x2e0] sm:$0xff]
    %v1169 = vld [vmem:[%s6 + $0x2e8] sm:$0xff]
    %v1170 = vld [vmem:[%s6 + $0x2f0] sm:$0xff]
    %v1171 = vld [vmem:[%s6 + $0x2f8] sm:$0xff]
    %v1172 = vld [vmem:[%s6 + $0x300] sm:$0xff]
    %v1173 = vld [vmem:[%s6 + $0x308] sm:$0xff]
    %v1174 = vld [vmem:[%s6 + $0x310] sm:$0xff]
    %v1175 = vld [vmem:[%s6 + $0x318] sm:$0xff]
    %v1176 = vld [vmem:[%s6 + $0x320] sm:$0xff]
    %v1177 = vld [vmem:[%s6 + $0x328] sm:$0xff]
    %v1178 = vld [vmem:[%s6 + $0x330] sm:$0xff]
    %v1179 = vld [vmem:[%s6 + $0x338] sm:$0xff]
    %v1180 = vld [vmem:[%s6 + $0x340] sm:$0xff]
    %v1181 = vld [vmem:[%s6 + $0x348] sm:$0xff]
    %v1182 = vld [vmem:[%s6 + $0x350] sm:$0xff]
    %v1183 = vld [vmem:[%s6 + $0x358] sm:$0xff]
    %v1184 = vld [vmem:[%s6 + $0x360] sm:$0xff]
    %v1185 = vld [vmem:[%s6 + $0x368] sm:$0xff]
    %v1186 = vld [vmem:[%s6 + $0x370] sm:$0xff]
    %v1187 = vld [vmem:[%s6 + $0x378] sm:$0xff]
    %v1188 = vld [vmem:[%s6 + $0x380] sm:$0xff]
    %v1189 = vld [vmem:[%s6 + $0x388] sm:$0xff]
    %v1190 = vld [vmem:[%s6 + $0x390] sm:$0xff]
    %v1191 = vld [vmem:[%s6 + $0x398] sm:$0xff]
    %v1192 = vld [vmem:[%s6 + $0x3a0] sm:$0xff]
    %v1193 = vld [vmem:[%s6 + $0x3a8] sm:$0xff]
    %v1194 = vld [vmem:[%s6 + $0x3b0] sm:$0xff]
    %v1195 = vld [vmem:[%s6 + $0x3b8] sm:$0xff]
    %v1196 = vld [vmem:[%s6 + $0x3c0] sm:$0xff]
    %v1197 = vld [vmem:[%s6 + $0x3c8] sm:$0xff]
    %v1198 = vld [vmem:[%s6 + $0x3d0] sm:$0xff]
    %v1199 = vld [vmem:[%s6 + $0x3d8] sm:$0xff]
    %v1200 = vld [vmem:[%s6 + $0x3e0] sm:$0xff]
    %v1201 = vld [vmem:[%s6 + $0x3e8] sm:$0xff]
    %v1202 = vld [vmem:[%s6 + $0x3f0] sm:$0xff]
    %v1203 = vld [vmem:[%s6 + $0x3f8] sm:$0xff]
    %v1204 = vld [vmem:[%s6 + $0x400] sm:$0xff]
    %v1205 = vld [vmem:[%s6 + $0x408] sm:$0xff]
    %v1206 = vld [vmem:[%s6 + $0x410] sm:$0xff]
    %v1207 = vld [vmem:[%s6 + $0x418] sm:$0xff]
    %v1208 = vld [vmem:[%s6 + $0x420] sm:$0xff]
    %v1209 = vld [vmem:[%s6 + $0x428] sm:$0xff]
    %v1210 = vld [vmem:[%s6 + $0x430] sm:$0xff]
    %v1211 = vld [vmem:[%s6 + $0x438] sm:$0xff]
    %v1212 = vld [vmem:[%s6 + $0x440] sm:$0xff]
    %v1213 = vld [vmem:[%s6 + $0x448] sm:$0xff]
    %v1214 = vld [vmem:[%s6 + $0x450] sm:$0xff]
    %v1215 = vld [vmem:[%s6 + $0x458] sm:$0xff]
    %v1216 = vld [vmem:[%s6 + $0x460] sm:$0xff]
    %v1217 = vld [vmem:[%s6 + $0x468] sm:$0xff]
    %v1218 = vld [vmem:[%s6 + $0x470] sm:$0xff]
    %v1219 = vld [vmem:[%s6 + $0x478] sm:$0xff]
    %v1220 = vld [vmem:[%s6 + $0x480] sm:$0xff]
    %v1221 = vld [vmem:[%s6 + $0x488] sm:$0xff]
    %v1222 = vld [vmem:[%s6 + $0x490] sm:$0xff]
    %v1223 = vld [vmem:[%s6 + $0x498] sm:$0xff]
    %v1224 = vld [vmem:[%s6 + $0x4a0] sm:$0xff]
    %v1225 = vld [vmem:[%s6 + $0x4a8] sm:$0xff]
    %v1226 = vld [vmem:[%s6 + $0x4b0] sm:$0xff]
    %v1227 = vld [vmem:[%s6 + $0x4b8] sm:$0xff]
    %v1228 = vld [vmem:[%s6 + $0x4c0] sm:$0xff]
    %v1229 = vld [vmem:[%s6 + $0x4c8] sm:$0xff]
    %v1230 = vld [vmem:[%s6 + $0x4d0] sm:$0xff]
    %v1231 = vld [vmem:[%s6 + $0x4d8] sm:$0xff]
    %v1232 = vld [vmem:[%s6 + $0x4e0] sm:$0xff]
    %v1233 = vld [vmem:[%s6 + $0x4e8] sm:$0xff]
    %v1234 = vld [vmem:[%s6 + $0x4f0] sm:$0xff]
    %v1235 = vld [vmem:[%s6 + $0x4f8] sm:$0xff]
    %v1236 = vld [vmem:[%s6 + $0x500] sm:$0xff]
    %v1237 = vld [vmem:[%s6 + $0x508] sm:$0xff]
    %v1238 = vld [vmem:[%s6 + $0x510] sm:$0xff]
    %v1239 = vld [vmem:[%s6 + $0x518] sm:$0xff]
    %v1240 = vld [vmem:[%s6 + $0x520] sm:$0xff]
    %v1241 = vld [vmem:[%s6 + $0x528] sm:$0xff]
    %v1242 = vld [vmem:[%s6 + $0x530] sm:$0xff]
    %v1243 = vld [vmem:[%s6 + $0x538] sm:$0xff]
    %v1244 = vld [vmem:[%s6 + $0x540] sm:$0xff]
    %v1245 = vld [vmem:[%s6 + $0x548] sm:$0xff]
    %v1246 = vld [vmem:[%s6 + $0x550] sm:$0xff]
    %v1247 = vld [vmem:[%s6 + $0x558] sm:$0xff]
    %v1248 = vld [vmem:[%s6 + $0x560] sm:$0xff]
    %v1249 = vld [vmem:[%s6 + $0x568] sm:$0xff]
    %v1250 = vld [vmem:[%s6 + $0x570] sm:$0xff]
    %v1251 = vld [vmem:[%s6 + $0x578] sm:$0xff]
    %v1252 = vld [vmem:[%s6 + $0x580] sm:$0xff]
    %v1253 = vld [vmem:[%s6 + $0x588] sm:$0xff]
    %v1254 = vld [vmem:[%s6 + $0x590] sm:$0xff]
    %v1255 = vld [vmem:[%s6 + $0x598] sm:$0xff]
    %v1256 = vld [vmem:[%s6 + $0x5a0] sm:$0xff]
    %v1257 = vld [vmem:[%s6 + $0x5a8] sm:$0xff]
    %v1258 = vld [vmem:[%s6 + $0x5b0] sm:$0xff]
    %v1259 = vld [vmem:[%s6 + $0x5b8] sm:$0xff]
    %v1260 = vld [vmem:[%s6 + $0x5c0] sm:$0xff]
    %v1261 = vld [vmem:[%s6 + $0x5c8] sm:$0xff]
    %v1262 = vld [vmem:[%s6 + $0x5d0] sm:$0xff]
    %v1263 = vld [vmem:[%s6 + $0x5d8] sm:$0xff]
    %v1264 = vld [vmem:[%s6 + $0x5e0] sm:$0xff]
    %v1265 = vld [vmem:[%s6 + $0x5e8] sm:$0xff]
    %v1266 = vld [vmem:[%s6 + $0x5f0] sm:$0xff]
    %v1267 = vld [vmem:[%s6 + $0x5f8] sm:$0xff]
    %1268 = vmatprep.subr.mxu0 %v1077
    %1269 = vmatpush1.msra.mxu0 %v1076
    %1270 = vmatprep.subr.mxu0 %v1081
    %1271 = vmatpush1.msra.mxu0 %v1080
    %1272 = vmatprep.subr.mxu0 %v1085
    %1273 = vmatpush1.msra.mxu0 %v1084
    %1274 = vmatprep.subr.mxu0 %v1089
    %1275 = vmatpush1.msra.mxu0 %v1088
    %1276 = vmatprep.subr.mxu0 %v1093
    %1277 = vmatpush1.msra.mxu0 %v1092
    %1278 = vmatprep.subr.mxu0 %v1097
    %1279 = vmatpush1.msra.mxu0 %v1096
    %1280 = vmatprep.subr.mxu0 %v1101
    %1281 = vmatpush1.msra.mxu0 %v1100
    %1282 = vmatprep.subr.mxu0 %v1105
    %1283 = vmatpush1.msra.mxu0 %v1104
    %1284 = vmatprep.subr.mxu0 %v1109
    %1285 = vmatpush1.msra.mxu0 %v1108
    %1286 = vmatprep.subr.mxu0 %v1113
    %1287 = vmatpush1.msra.mxu0 %v1112
    %1288 = vmatprep.subr.mxu0 %v1117
    %1289 = vmatpush1.msra.mxu0 %v1116
    %1290 = vmatprep.subr.mxu0 %v1121
    %1291 = vmatpush1.msra.mxu0 %v1120
    %1292 = vmatprep.subr.mxu0 %v1125
    %1293 = vmatpush1.msra.mxu0 %v1124
    %1294 = vmatprep.subr.mxu0 %v1129
    %1295 = vmatpush1.msra.mxu0 %v1128
    %1296 = vmatprep.subr.mxu0 %v1133
    %1297 = vmatpush1.msra.mxu0 %v1132
    %1298 = vmatprep.subr.mxu0 %v1137
    %1299 = vmatpush1.msra.mxu0 %v1136
    %1300 = vmatprep.subr.mxu0 %v1141
    %1301 = vmatpush1.msra.mxu0 %v1140
    %1302 = vmatprep.subr.mxu0 %v1145
    %1303 = vmatpush1.msra.mxu0 %v1144
    %1304 = vmatprep.subr.mxu0 %v1149
    %1305 = vmatpush1.msra.mxu0 %v1148
    %1306 = vmatprep.subr.mxu0 %v1153
    %1307 = vmatpush1.msra.mxu0 %v1152
    %1308 = vmatprep.subr.mxu0 %v1157
    %1309 = vmatpush1.msra.mxu0 %v1156
    %1310 = vmatprep.subr.mxu0 %v1161
    %1311 = vmatpush1.msra.mxu0 %v1160
    %1312 = vmatprep.subr.mxu0 %v1165
    %1313 = vmatpush1.msra.mxu0 %v1164
    %1314 = vmatprep.subr.mxu0 %v1169
    %1315 = vmatpush1.msra.mxu0 %v1168
    %1316 = vmatprep.subr.mxu0 %v1173
    %1317 = vmatpush1.msra.mxu0 %v1172
    %1318 = vmatprep.subr.mxu0 %v1177
    %1319 = vmatpush1.msra.mxu0 %v1176
    %1320 = vmatprep.subr.mxu0 %v1181
    %1321 = vmatpush1.msra.mxu0 %v1180
    %1322 = vmatprep.subr.mxu0 %v1185
    %1323 = vmatpush1.msra.mxu0 %v1184
    %1324 = vmatprep.subr.mxu0 %v1189
    %1325 = vmatpush1.msra.mxu0 %v1188
    %1326 = vmatprep.subr.mxu0 %v1193
    %1327 = vmatpush1.msra.mxu0 %v1192
    %1328 = vmatprep.subr.mxu0 %v1197
    %1329 = vmatpush1.msra.mxu0 %v1196
    %1330 = vmatprep.subr.mxu0 %v1201
    %1331 = vmatpush1.msra.mxu0 %v1200
    %1332 = vmatprep.mubr.f32.mxu0 %v1075
    %1333 = vmatmul.mubr.f32.gmra.mrb[0].mxu0 %v987
    %v1334 = vpop.f32.mrb[0].mxu0
    %v1335 = vadd.f32 %v447, %v1334
    %v1336 = vpop.f32.mrb[0].mxu0
    %v1337 = vadd.f32 %v451, %v1336
    %1338 = vdwg.mxu0
    %1339 = vmatprep.subr.mxu0 %v1205
    %1340 = vmatpush1.msra.mxu0 %v1204
    %1341 = vmatprep.subr.mxu0 %v1209
    %1342 = vmatpush1.msra.mxu0 %v1208
    %1343 = vmatprep.subr.mxu0 %v1213
    %1344 = vmatpush1.msra.mxu0 %v1212
    %1345 = vmatprep.subr.mxu0 %v1217
    %1346 = vmatpush1.msra.mxu0 %v1216
    %1347 = vmatprep.subr.mxu0 %v1221
    %1348 = vmatpush1.msra.mxu0 %v1220
    %1349 = vmatprep.subr.mxu0 %v1225
    %1350 = vmatpush1.msra.mxu0 %v1224
    %1351 = vmatprep.subr.mxu0 %v1229
    %1352 = vmatpush1.msra.mxu0 %v1228
    %1353 = vmatprep.subr.mxu0 %v1233
    %1354 = vmatpush1.msra.mxu0 %v1232
    %1355 = vmatprep.subr.mxu0 %v1237
    %1356 = vmatpush1.msra.mxu0 %v1236
    %1357 = vmatprep.subr.mxu0 %v1241
    %1358 = vmatpush1.msra.mxu0 %v1240
    %1359 = vmatprep.subr.mxu0 %v1245
    %1360 = vmatpush1.msra.mxu0 %v1244
    %1361 = vmatprep.subr.mxu0 %v1249
    %1362 = vmatpush1.msra.mxu0 %v1248
    %1363 = vmatprep.subr.mxu0 %v1253
    %1364 = vmatpush1.msra.mxu0 %v1252
    %1365 = vmatprep.subr.mxu0 %v1257
    %1366 = vmatpush1.msra.mxu0 %v1256
    %1367 = vmatprep.subr.mxu0 %v1261
    %1368 = vmatpush1.msra.mxu0 %v1260
    %1369 = vmatprep.subr.mxu0 %v1265
    %1370 = vmatpush1.msra.mxu0 %v1264
    %1371 = vmatprep.subr.mxu0 0.0
    %1372 = vmatpush1.msra.mxu0 0.0
    %1373 = vmatprep.subr.mxu0 0.0
    %1374 = vmatpush1.msra.mxu0 0.0
    %1375 = vmatprep.subr.mxu0 0.0
    %1376 = vmatpush1.msra.mxu0 0.0
    %1377 = vmatprep.subr.mxu0 0.0
    %1378 = vmatpush1.msra.mxu0 0.0
    %1379 = vmatprep.subr.mxu0 0.0
    %1380 = vmatpush1.msra.mxu0 0.0
    %1381 = vmatprep.subr.mxu0 0.0
    %1382 = vmatpush1.msra.mxu0 0.0
    %1383 = vmatprep.subr.mxu0 0.0
    %1384 = vmatpush1.msra.mxu0 0.0
    %1385 = vmatprep.subr.mxu0 0.0
    %1386 = vmatpush1.msra.mxu0 0.0
    %1387 = vmatprep.subr.mxu0 0.0
    %1388 = vmatpush1.msra.mxu0 0.0
    %1389 = vmatprep.subr.mxu0 0.0
    %1390 = vmatpush1.msra.mxu0 0.0
    %1391 = vmatprep.subr.mxu0 0.0
    %1392 = vmatpush1.msra.mxu0 0.0
    %1393 = vmatprep.subr.mxu0 0.0
    %1394 = vmatpush1.msra.mxu0 0.0
    %1395 = vmatprep.subr.mxu0 0.0
    %1396 = vmatpush1.msra.mxu0 0.0
    %1397 = vmatprep.subr.mxu0 0.0
    %1398 = vmatpush1.msra.mxu0 0.0
    %1399 = vmatprep.subr.mxu0 0.0
    %1400 = vmatpush1.msra.mxu0 0.0
    %1401 = vmatprep.subr.mxu0 0.0
    %1402 = vmatpush1.msra.mxu0 0.0
    %1403 = vmatprep.mubr.f32.mxu0 0.0
    %1404 = vmatmul.mubr.f32.gmra.mrb[0].mxu0 %v771
    %v1405 = vpop.f32.mrb[0].mxu0
    %v1406 = vadd.f32 %v1335, %v1405
    %v1407 = vpop.f32.mrb[0].mxu0
    %v1408 = vadd.f32 %v1337, %v1407
    %1409 = vdwg.mxu0
    %1410 = vmatprep.subr.mxu0 %v1079
    %1411 = vmatpush1.msra.mxu0 %v1078
    %1412 = vmatprep.subr.mxu0 %v1083
    %1413 = vmatpush1.msra.mxu0 %v1082
    %1414 = vmatprep.subr.mxu0 %v1087
    %1415 = vmatpush1.msra.mxu0 %v1086
    %1416 = vmatprep.subr.mxu0 %v1091
    %1417 = vmatpush1.msra.mxu0 %v1090
    %1418 = vmatprep.subr.mxu0 %v1095
    %1419 = vmatpush1.msra.mxu0 %v1094
    %1420 = vmatprep.subr.mxu0 %v1099
    %1421 = vmatpush1.msra.mxu0 %v1098
    %1422 = vmatprep.subr.mxu0 %v1103
    %1423 = vmatpush1.msra.mxu0 %v1102
    %1424 = vmatprep.subr.mxu0 %v1107
    %1425 = vmatpush1.msra.mxu0 %v1106
    %1426 = vmatprep.subr.mxu0 %v1111
    %1427 = vmatpush1.msra.mxu0 %v1110
    %1428 = vmatprep.subr.mxu0 %v1115
    %1429 = vmatpush1.msra.mxu0 %v1114
    %1430 = vmatprep.subr.mxu0 %v1119
    %1431 = vmatpush1.msra.mxu0 %v1118
    %1432 = vmatprep.subr.mxu0 %v1123
    %1433 = vmatpush1.msra.mxu0 %v1122
    %1434 = vmatprep.subr.mxu0 %v1127
    %1435 = vmatpush1.msra.mxu0 %v1126
    %1436 = vmatprep.subr.mxu0 %v1131
    %1437 = vmatpush1.msra.mxu0 %v1130
    %1438 = vmatprep.subr.mxu0 %v1135
    %1439 = vmatpush1.msra.mxu0 %v1134
    %1440 = vmatprep.subr.mxu0 %v1139
    %1441 = vmatpush1.msra.mxu0 %v1138
    %1442 = vmatprep.subr.mxu0 %v1143
    %1443 = vmatpush1.msra.mxu0 %v1142
    %1444 = vmatprep.subr.mxu0 %v1147
    %1445 = vmatpush1.msra.mxu0 %v1146
    %1446 = vmatprep.subr.mxu0 %v1151
    %1447 = vmatpush1.msra.mxu0 %v1150
    %1448 = vmatprep.subr.mxu0 %v1155
    %1449 = vmatpush1.msra.mxu0 %v1154
    %1450 = vmatprep.subr.mxu0 %v1159
    %1451 = vmatpush1.msra.mxu0 %v1158
    %1452 = vmatprep.subr.mxu0 %v1163
    %1453 = vmatpush1.msra.mxu0 %v1162
    %1454 = vmatprep.subr.mxu0 %v1167
    %1455 = vmatpush1.msra.mxu0 %v1166
    %1456 = vmatprep.subr.mxu0 %v1171
    %1457 = vmatpush1.msra.mxu0 %v1170
    %1458 = vmatprep.subr.mxu0 %v1175
    %1459 = vmatpush1.msra.mxu0 %v1174
    %1460 = vmatprep.subr.mxu0 %v1179
    %1461 = vmatpush1.msra.mxu0 %v1178
    %1462 = vmatprep.subr.mxu0 %v1183
    %1463 = vmatpush1.msra.mxu0 %v1182
    %1464 = vmatprep.subr.mxu0 %v1187
    %1465 = vmatpush1.msra.mxu0 %v1186
    %1466 = vmatprep.subr.mxu0 %v1191
    %1467 = vmatpush1.msra.mxu0 %v1190
    %1468 = vmatprep.subr.mxu0 %v1195
    %1469 = vmatpush1.msra.mxu0 %v1194
    %1470 = vmatprep.subr.mxu0 %v1199
    %1471 = vmatpush1.msra.mxu0 %v1198
    %1472 = vmatprep.subr.mxu0 %v1203
    %1473 = vmatpush1.msra.mxu0 %v1202
    %1474 = vmatprep.mubr.f32.mxu0 %v1075
    %1475 = vmatmul.mubr.f32.gmra.mrb[0].mxu0 %v987
    %v1476 = vpop.f32.mrb[0].mxu0
    %v1477 = vadd.f32 %v455, %v1476
    %v1478 = vpop.f32.mrb[0].mxu0
    %v1479 = vadd.f32 %v459, %v1478
    %1480 = vdwg.mxu0
    %1481 = vmatprep.subr.mxu0 %v1207
    %1482 = vmatpush1.msra.mxu0 %v1206
    %1483 = vmatprep.subr.mxu0 %v1211
    %1484 = vmatpush1.msra.mxu0 %v1210
    %1485 = vmatprep.subr.mxu0 %v1215
    %1486 = vmatpush1.msra.mxu0 %v1214
    %1487 = vmatprep.subr.mxu0 %v1219
    %1488 = vmatpush1.msra.mxu0 %v1218
    %1489 = vmatprep.subr.mxu0 %v1223
    %1490 = vmatpush1.msra.mxu0 %v1222
    %1491 = vmatprep.subr.mxu0 %v1227
    %1492 = vmatpush1.msra.mxu0 %v1226
    %1493 = vmatprep.subr.mxu0 %v1231
    %1494 = vmatpush1.msra.mxu0 %v1230
    %1495 = vmatprep.subr.mxu0 %v1235
    %1496 = vmatpush1.msra.mxu0 %v1234
    %1497 = vmatprep.subr.mxu0 %v1239
    %1498 = vmatpush1.msra.mxu0 %v1238
    %1499 = vmatprep.subr.mxu0 %v1243
    %1500 = vmatpush1.msra.mxu0 %v1242
    %1501 = vmatprep.subr.mxu0 %v1247
    %1502 = vmatpush1.msra.mxu0 %v1246
    %1503 = vmatprep.subr.mxu0 %v1251
    %1504 = vmatpush1.msra.mxu0 %v1250
    %1505 = vmatprep.subr.mxu0 %v1255
    %1506 = vmatpush1.msra.mxu0 %v1254
    %1507 = vmatprep.subr.mxu0 %v1259
    %1508 = vmatpush1.msra.mxu0 %v1258
    %1509 = vmatprep.subr.mxu0 %v1263
    %1510 = vmatpush1.msra.mxu0 %v1262
    %1511 = vmatprep.subr.mxu0 %v1267
    %1512 = vmatpush1.msra.mxu0 %v1266
    %1513 = vmatprep.subr.mxu0 0.0
    %1514 = vmatpush1.msra.mxu0 0.0
    %1515 = vmatprep.subr.mxu0 0.0
    %1516 = vmatpush1.msra.mxu0 0.0
    %1517 = vmatprep.subr.mxu0 0.0
    %1518 = vmatpush1.msra.mxu0 0.0
    %1519 = vmatprep.subr.mxu0 0.0
    %1520 = vmatpush1.msra.mxu0 0.0
    %1521 = vmatprep.subr.mxu0 0.0
    %1522 = vmatpush1.msra.mxu0 0.0
    %1523 = vmatprep.subr.mxu0 0.0
    %1524 = vmatpush1.msra.mxu0 0.0
    %1525 = vmatprep.subr.mxu0 0.0
    %1526 = vmatpush1.msra.mxu0 0.0
    %1527 = vmatprep.subr.mxu0 0.0
    %1528 = vmatpush1.msra.mxu0 0.0
    %1529 = vmatprep.subr.mxu0 0.0
    %1530 = vmatpush1.msra.mxu0 0.0
    %1531 = vmatprep.subr.mxu0 0.0
    %1532 = vmatpush1.msra.mxu0 0.0
    %1533 = vmatprep.subr.mxu0 0.0
    %1534 = vmatpush1.msra.mxu0 0.0
    %1535 = vmatprep.subr.mxu0 0.0
    %1536 = vmatpush1.msra.mxu0 0.0
    %1537 = vmatprep.subr.mxu0 0.0
    %1538 = vmatpush1.msra.mxu0 0.0
    %1539 = vmatprep.subr.mxu0 0.0
    %1540 = vmatpush1.msra.mxu0 0.0
    %1541 = vmatprep.subr.mxu0 0.0
    %1542 = vmatpush1.msra.mxu0 0.0
    %1543 = vmatprep.subr.mxu0 0.0
    %1544 = vmatpush1.msra.mxu0 0.0
    %1545 = vmatprep.mubr.f32.mxu0 0.0
    %1546 = vmatmul.mubr.f32.gmra.mrb[0].mxu0 %v771
    %v1547 = vpop.f32.mrb[0].mxu0
    %v1548 = vadd.f32 %v1477, %v1547
    %v1549 = vpop.f32.mrb[0].mxu0
    %v1550 = vadd.f32 %v1479, %v1549
    %1551 = vdwg.mxu0
    %v1552 = vxor.u32 %v1406, 2147483648
    %v1553 = vmul.f32 %v1552, 1.442695
    %v1554 = vpow.pop %v1553
    %v1555 = vadd.f32 %v1554, 1.0
    %v1556 = vrcp.pop %v1555
    %v1557 = vmul.f32 1.0, %v1556
    %v1558 = vxor.u32 %v1408, 2147483648
    %v1559 = vmul.f32 %v1558, 1.442695
    %v1560 = vpow.pop %v1559
    %v1561 = vadd.f32 %v1560, 1.0
    %v1562 = vrcp.pop %v1561
    %v1563 = vmul.f32 1.0, %v1562
    %v1564 = vtanh.pop %v1548
    %v1565 = vxor.u32 %v1550, 2147483648
    %v1566 = vmul.f32 %v1565, 1.442695
    %v1567 = vpow.pop %v1566
    %v1568 = vadd.f32 %v1567, 1.0
    %v1569 = vrcp.pop %v1568
    %v1570 = vmul.f32 1.0, %v1569
    %v1571 = vmul.f32 %v1563, %v769
    %v1572 = vmul.f32 %v1557, %v1564
    %v1573 = vadd.f32 %v1571, %v1572
    %v1574 = vtanh.pop %v1573
    %v1575 = vmul.f32 %v1570, %v1574
    %v1576 = vld [vmem:[%s8] sm:$0xff]
    %v1577 = vld [vmem:[%s8 + $0x8] sm:$0xff]
    %v1578 = vld [vmem:[%s8 + $0x10] sm:$0xff]
    %v1579 = vld [vmem:[%s8 + $0x18] sm:$0xff]
    %v1580 = vld [vmem:[%s8 + $0x20] sm:$0xff]
    %v1581 = vld [vmem:[%s8 + $0x28] sm:$0xff]
    %v1582 = vld [vmem:[%s8 + $0x30] sm:$0xff]
    %v1583 = vld [vmem:[%s8 + $0x38] sm:$0xff]
    %v1584 = vld [vmem:[%s8 + $0x40] sm:$0xff]
    %v1585 = vld [vmem:[%s8 + $0x48] sm:$0xff]
    %v1586 = vld [vmem:[%s8 + $0x50] sm:$0xff]
    %v1587 = vld [vmem:[%s8 + $0x58] sm:$0xff]
    %v1588 = vld [vmem:[%s8 + $0x60] sm:$0xff]
    %v1589 = vld [vmem:[%s8 + $0x68] sm:$0xff]
    %v1590 = vld [vmem:[%s8 + $0x70] sm:$0xff]
    %v1591 = vld [vmem:[%s8 + $0x78] sm:$0xff]
    %1592 = vmatprep.subr.mxu0 0.0
    %1593 = vmatpush1.msra.mxu0 %v1576
    %1594 = vmatprep.subr.mxu0 0.0
    %1595 = vmatpush1.msra.mxu0 %v1577
    %1596 = vmatprep.subr.mxu0 0.0
    %1597 = vmatpush1.msra.mxu0 %v1578
    %1598 = vmatprep.subr.mxu0 0.0
    %1599 = vmatpush1.msra.mxu0 %v1579
    %1600 = vmatprep.subr.mxu0 0.0
    %1601 = vmatpush1.msra.mxu0 %v1580
    %1602 = vmatprep.subr.mxu0 0.0
    %1603 = vmatpush1.msra.mxu0 %v1581
    %1604 = vmatprep.subr.mxu0 0.0
    %1605 = vmatpush1.msra.mxu0 %v1582
    %1606 = vmatprep.subr.mxu0 0.0
    %1607 = vmatpush1.msra.mxu0 %v1583
    %1608 = vmatprep.subr.mxu0 0.0
    %1609 = vmatpush1.msra.mxu0 %v1584
    %1610 = vmatprep.subr.mxu0 0.0
    %1611 = vmatpush1.msra.mxu0 %v1585
    %1612 = vmatprep.subr.mxu0 0.0
    %1613 = vmatpush1.msra.mxu0 %v1586
    %1614 = vmatprep.subr.mxu0 0.0
    %1615 = vmatpush1.msra.mxu0 %v1587
    %1616 = vmatprep.subr.mxu0 0.0
    %1617 = vmatpush1.msra.mxu0 %v1588
    %1618 = vmatprep.subr.mxu0 0.0
    %1619 = vmatpush1.msra.mxu0 %v1589
    %1620 = vmatprep.subr.mxu0 0.0
    %1621 = vmatpush1.msra.mxu0 %v1590
    %1622 = vmatprep.subr.mxu0 0.0
    %1623 = vmatpush1.msra.mxu0 %v1591
    %1624 = vmatprep.subr.mxu0 0.0
    %1625 = vmatpush1.msra.mxu0 0.0
    %1626 = vmatprep.subr.mxu0 0.0
    %1627 = vmatpush1.msra.mxu0 0.0
    %1628 = vmatprep.subr.mxu0 0.0
    %1629 = vmatpush1.msra.mxu0 0.0
    %1630 = vmatprep.subr.mxu0 0.0
    %1631 = vmatpush1.msra.mxu0 0.0
    %1632 = vmatprep.subr.mxu0 0.0
    %1633 = vmatpush1.msra.mxu0 0.0
    %1634 = vmatprep.subr.mxu0 0.0
    %1635 = vmatpush1.msra.mxu0 0.0
    %1636 = vmatprep.subr.mxu0 0.0
    %1637 = vmatpush1.msra.mxu0 0.0
    %1638 = vmatprep.subr.mxu0 0.0
    %1639 = vmatpush1.msra.mxu0 0.0
    %1640 = vmatprep.subr.mxu0 0.0
    %1641 = vmatpush1.msra.mxu0 0.0
    %1642 = vmatprep.subr.mxu0 0.0
    %1643 = vmatpush1.msra.mxu0 0.0
    %1644 = vmatprep.subr.mxu0 0.0
    %1645 = vmatpush1.msra.mxu0 0.0
    %1646 = vmatprep.subr.mxu0 0.0
    %1647 = vmatpush1.msra.mxu0 0.0
    %1648 = vmatprep.subr.mxu0 0.0
    %1649 = vmatpush1.msra.mxu0 0.0
    %1650 = vmatprep.subr.mxu0 0.0
    %1651 = vmatpush1.msra.mxu0 0.0
    %1652 = vmatprep.subr.mxu0 0.0
    %1653 = vmatpush1.msra.mxu0 0.0
    %1654 = vmatprep.subr.mxu0 0.0
    %1655 = vmatpush1.msra.mxu0 0.0
    %1656 = vmatprep.mubr.f32.mxu0 0.0
    %1657 = vmatmul.mubr.f32.gmra.mrb[0].mxu0 %v1575
    %v1658 = vpop.f32.mrb[0].mxu0
    %v1659 = vadd.f32 %v792, %v1658
    %v1660 = vpop.f32.mrb[0].mxu0
    %1661 = vdwg.mxu0
    %s1662 = scalar_lea.vmem %s10, 8
    %1663 = vst [vmem:[%s1662] sm:$0xff] %v1659
    %1664 = vmax.xlane.f32.xlu0 %v1659
    %v1665 = vpop.xlane.xlu0 %1664
    %vm1666 = vcmp.eq.f32.partialorder %v1659, %v1665
    %v1667 = vsel %vm1666, %v59, 128
    %v1668 = vand.u32 %v1667, 65535
    %v1669 = vshra.s32 %v1667, 16
    %v1670 = vcvt.s32.f32 %v1668
    %v1671 = vcvt.s32.f32 %v1669
    %1672 = vmin.xlane.f32.xlu0 %v1671
    %v1673 = vpop.xlane.xlu0 %1672
    %vm1674 = vcmp.eq.f32.partialorder %v1671, %v1673
    %v1675 = vsel %vm1674, %v1670, inf
    %1676 = vmin.xlane.f32.xlu0 %v1675
    %v1677 = vpop.xlane.xlu0 %1676
    %v1678 = vcvt.f32.s32 %v1677
    %v1679 = vcvt.f32.s32 %v1673
    %v1680 = vshll.u32 %v1679, 16
    %v1681 = vadd.s32 %v1680, %v1678
    %vm1682 = vcmp.eq.s32.totalorder %v59, %v1681
    %v1683 = vsel %vm1682, 1, 0
    %v1684 = vcvt.s32.f32 %v1683
    %s1685 = scalar_lea.vmem %s1, 16
    %v1686 = vld [vmem:[%s1685] sm:$0xff]
    %1687 = vset.pattern.permute.xlu0 0
    %1688 = vperm.xlu0 %1687, %v1686
    %v1689 = vpop.permute.xlu0 %1688
    %vm1690 = vcmp.eq.s32.totalorder %v59, %v1689
    %v1691 = vsel %vm1690, 1, 0
    %v1692 = vcvt.s32.f32 %v1691
    %s1693 = sld [smem:[#allocation2 + $0x2]]
    %p1694 = scmp.ne.s32.totalorder %s1693, 0
    %s1695 = scalar_select %p1694, 1, 0
    %s1696 = scvt.s32.f32 %s1695
    %v1697 = vstv %s1696
    %v1698 = vmul.f32 %v1697, %v1692
    %s1699 = ssub.f32 1.0, %s1696
    %v1700 = vstv %s1699
    %v1701 = vmul.f32 %v1700, %v1684
    %v1702 = vadd.f32 %v1698, %v1701
    %v1703 = vld [vmem:[%s5] sm:$0xff]
    %v1704 = vld [vmem:[%s5 + $0x8] sm:$0xff]
    %v1705 = vld [vmem:[%s5 + $0x10] sm:$0xff]
    %v1706 = vld [vmem:[%s5 + $0x18] sm:$0xff]
    %v1707 = vld [vmem:[%s5 + $0x20] sm:$0xff]
    %v1708 = vld [vmem:[%s5 + $0x28] sm:$0xff]
    %v1709 = vld [vmem:[%s5 + $0x30] sm:$0xff]
    %v1710 = vld [vmem:[%s5 + $0x38] sm:$0xff]
    %v1711 = vld [vmem:[%s5 + $0x40] sm:$0xff]
    %v1712 = vld [vmem:[%s5 + $0x48] sm:$0xff]
    %v1713 = vld [vmem:[%s5 + $0x50] sm:$0xff]
    %v1714 = vld [vmem:[%s5 + $0x58] sm:$0xff]
    %v1715 = vld [vmem:[%s5 + $0x60] sm:$0xff]
    %v1716 = vld [vmem:[%s5 + $0x68] sm:$0xff]
    %v1717 = vld [vmem:[%s5 + $0x70] sm:$0xff]
    %v1718 = vld [vmem:[%s5 + $0x78] sm:$0xff]
    %1719 = vmatprep.subr.mxu0 0.0
    %1720 = vmatpush1.msra.mxu0 %v1703
    %1721 = vmatprep.subr.mxu0 0.0
    %1722 = vmatpush1.msra.mxu0 %v1704
    %1723 = vmatprep.subr.mxu0 0.0
    %1724 = vmatpush1.msra.mxu0 %v1705
    %1725 = vmatprep.subr.mxu0 0.0
    %1726 = vmatpush1.msra.mxu0 %v1706
    %1727 = vmatprep.subr.mxu0 0.0
    %1728 = vmatpush1.msra.mxu0 %v1707
    %1729 = vmatprep.subr.mxu0 0.0
    %1730 = vmatpush1.msra.mxu0 %v1708
    %1731 = vmatprep.subr.mxu0 0.0
    %1732 = vmatpush1.msra.mxu0 %v1709
    %1733 = vmatprep.subr.mxu0 0.0
    %1734 = vmatpush1.msra.mxu0 %v1710
    %1735 = vmatprep.subr.mxu0 0.0
    %1736 = vmatpush1.msra.mxu0 %v1711
    %1737 = vmatprep.subr.mxu0 0.0
    %1738 = vmatpush1.msra.mxu0 %v1712
    %1739 = vmatprep.subr.mxu0 0.0
    %1740 = vmatpush1.msra.mxu0 %v1713
    %1741 = vmatprep.subr.mxu0 0.0
    %1742 = vmatpush1.msra.mxu0 %v1714
    %1743 = vmatprep.subr.mxu0 0.0
    %1744 = vmatpush1.msra.mxu0 %v1715
    %1745 = vmatprep.subr.mxu0 0.0
    %1746 = vmatpush1.msra.mxu0 %v1716
    %1747 = vmatprep.subr.mxu0 0.0
    %1748 = vmatpush1.msra.mxu0 %v1717
    %1749 = vmatprep.subr.mxu0 0.0
    %1750 = vmatpush1.msra.mxu0 %v1718
    %1751 = vmatprep.subr.mxu0 0.0
    %1752 = vmatpush1.msra.mxu0 0.0
    %1753 = vmatprep.subr.mxu0 0.0
    %1754 = vmatpush1.msra.mxu0 0.0
    %1755 = vmatprep.subr.mxu0 0.0
    %1756 = vmatpush1.msra.mxu0 0.0
    %1757 = vmatprep.subr.mxu0 0.0
    %1758 = vmatpush1.msra.mxu0 0.0
    %1759 = vmatprep.subr.mxu0 0.0
    %1760 = vmatpush1.msra.mxu0 0.0
    %1761 = vmatprep.subr.mxu0 0.0
    %1762 = vmatpush1.msra.mxu0 0.0
    %1763 = vmatprep.subr.mxu0 0.0
    %1764 = vmatpush1.msra.mxu0 0.0
    %1765 = vmatprep.subr.mxu0 0.0
    %1766 = vmatpush1.msra.mxu0 0.0
    %1767 = vmatprep.subr.mxu0 0.0
    %1768 = vmatpush1.msra.mxu0 0.0
    %1769 = vmatprep.subr.mxu0 0.0
    %1770 = vmatpush1.msra.mxu0 0.0
    %1771 = vmatprep.subr.mxu0 0.0
    %1772 = vmatpush1.msra.mxu0 0.0
    %1773 = vmatprep.subr.mxu0 0.0
    %1774 = vmatpush1.msra.mxu0 0.0
    %1775 = vmatprep.subr.mxu0 0.0
    %1776 = vmatpush1.msra.mxu0 0.0
    %1777 = vmatprep.subr.mxu0 0.0
    %1778 = vmatpush1.msra.mxu0 0.0
    %1779 = vmatprep.subr.mxu0 0.0
    %1780 = vmatpush1.msra.mxu0 0.0
    %1781 = vmatprep.subr.mxu0 0.0
    %1782 = vmatpush1.msra.mxu0 0.0
    %1783 = vmatprep.mubr.f32.mxu0 0.0
    %1784 = vmatmul.mubr.f32.gmra.mrb[0].mxu0 %v1702
    %v1785 = vpop.f32.mrb[0].mxu0
    %v1786 = vadd.f32 0.0, %v1785
    %v1787 = vpop.f32.mrb[0].mxu0
    %1788 = vdwg.mxu0
    %v1789 = vmul.f32 %v48, %v1575
    %v1790 = vmul.f32 %v49, %v1575
    %v1791 = vmul.f32 %v50, %v1575
    %v1792 = vmul.f32 %v51, %v1575
    %v1793 = vmul.f32 %v52, %v1575
    %v1794 = vmul.f32 %v53, %v1575
    %v1795 = vmul.f32 %v54, %v1575
    %v1796 = vmul.f32 %v55, %v1575
    %1797 = vadd.xlane.f32.xlu0 %v1789
    %v1798 = vpop.xlane.xlu0 %1797
    %1799 = vadd.xlane.f32.xlu0 %v1790
    %v1800 = vpop.xlane.xlu0 %1799
    %1801 = vadd.xlane.f32.xlu0 %v1791
    %v1802 = vpop.xlane.xlu0 %1801
    %1803 = vadd.xlane.f32.xlu0 %v1792
    %v1804 = vpop.xlane.xlu0 %1803
    %1805 = vadd.xlane.f32.xlu0 %v1793
    %v1806 = vpop.xlane.xlu0 %1805
    %1807 = vadd.xlane.f32.xlu0 %v1794
    %v1808 = vpop.xlane.xlu0 %1807
    %1809 = vadd.xlane.f32.xlu0 %v1795
    %v1810 = vpop.xlane.xlu0 %1809
    %1811 = vadd.xlane.f32.xlu0 %v1796
    %v1812 = vpop.xlane.xlu0 %1811
    %v1813 = vmax.f32 %v1798, %v1806
    %v1814 = vmax.f32 %v1800, %v1808
    %v1815 = vmax.f32 %v1802, %v1810
    %v1816 = vmax.f32 %v1804, %v1812
    %v1817 = vmax.f32 %v1813, %v1814
    %v1818 = vmax.f32 %v1815, %v1816
    %v1819 = vmax.f32 %v1817, %v1818
    %v1820 = vsub.f32 %v1798, %v1819
    %v1821 = vsub.f32 %v1800, %v1819
    %v1822 = vsub.f32 %v1802, %v1819
    %v1823 = vsub.f32 %v1804, %v1819
    %v1824 = vsub.f32 %v1806, %v1819
    %v1825 = vsub.f32 %v1808, %v1819
    %v1826 = vsub.f32 %v1810, %v1819
    %v1827 = vsub.f32 %v1812, %v1819
    %v1828 = vmul.f32 %v1820, 1.442695
    %v1829 = vpow.pop %v1828
    %v1830 = vmul.f32 %v1821, 1.442695
    %v1831 = vpow.pop %v1830
    %v1832 = vmul.f32 %v1822, 1.442695
    %v1833 = vpow.pop %v1832
    %v1834 = vmul.f32 %v1823, 1.442695
    %v1835 = vpow.pop %v1834
    %v1836 = vmul.f32 %v1824, 1.442695
    %v1837 = vpow.pop %v1836
    %v1838 = vmul.f32 %v1825, 1.442695
    %v1839 = vpow.pop %v1838
    %v1840 = vmul.f32 %v1826, 1.442695
    %v1841 = vpow.pop %v1840
    %v1842 = vmul.f32 %v1827, 1.442695
    %v1843 = vpow.pop %v1842
    %v1844 = vadd.f32 %v1829, %v1831
    %v1845 = vadd.f32 %v1844, %v1833
    %v1846 = vadd.f32 %v1845, %v1835
    %v1847 = vadd.f32 %v1846, %v1837
    %v1848 = vadd.f32 %v1847, %v1839
    %v1849 = vadd.f32 %v1848, %v1841
    %v1850 = vadd.f32 %v1849, %v1843
    %v1851 = vrcp.pop %v1850
    %v1852 = vmul.f32 %v1829, %v1851
    %v1853 = vmul.f32 %v1831, %v1851
    %v1854 = vmul.f32 %v1833, %v1851
    %v1855 = vmul.f32 %v1835, %v1851
    %v1856 = vmul.f32 %v1837, %v1851
    %v1857 = vmul.f32 %v1839, %v1851
    %v1858 = vmul.f32 %v1841, %v1851
    %v1859 = vmul.f32 %v1843, %v1851
    %v1860 = vmul.f32 %v1852, %v48
    %v1861 = vmul.f32 %v1853, %v49
    %v1862 = vmul.f32 %v1854, %v50
    %v1863 = vmul.f32 %v1855, %v51
    %v1864 = vmul.f32 %v1856, %v52
    %v1865 = vmul.f32 %v1857, %v53
    %v1866 = vmul.f32 %v1858, %v54
    %v1867 = vmul.f32 %v1859, %v55
    %v1868 = vadd.f32 %v1860, %v1861
    %v1869 = vadd.f32 %v1868, %v1862
    %v1870 = vadd.f32 %v1869, %v1863
    %v1871 = vadd.f32 %v1870, %v1864
    %v1872 = vadd.f32 %v1871, %v1865
    %v1873 = vadd.f32 %v1872, %v1866
    %v1874 = vadd.f32 %v1873, %v1867
    %v1875 = vld [vmem:[%s6] sm:$0xff]
    %v1876 = vld [vmem:[%s6 + $0x8] sm:$0xff]
    %v1877 = vld [vmem:[%s6 + $0x10] sm:$0xff]
    %v1878 = vld [vmem:[%s6 + $0x18] sm:$0xff]
    %v1879 = vld [vmem:[%s6 + $0x20] sm:$0xff]
    %v1880 = vld [vmem:[%s6 + $0x28] sm:$0xff]
    %v1881 = vld [vmem:[%s6 + $0x30] sm:$0xff]
    %v1882 = vld [vmem:[%s6 + $0x38] sm:$0xff]
    %v1883 = vld [vmem:[%s6 + $0x40] sm:$0xff]
    %v1884 = vld [vmem:[%s6 + $0x48] sm:$0xff]
    %v1885 = vld [vmem:[%s6 + $0x50] sm:$0xff]
    %v1886 = vld [vmem:[%s6 + $0x58] sm:$0xff]
    %v1887 = vld [vmem:[%s6 + $0x60] sm:$0xff]
    %v1888 = vld [vmem:[%s6 + $0x68] sm:$0xff]
    %v1889 = vld [vmem:[%s6 + $0x70] sm:$0xff]
    %v1890 = vld [vmem:[%s6 + $0x78] sm:$0xff]
    %v1891 = vld [vmem:[%s6 + $0x80] sm:$0xff]
    %v1892 = vld [vmem:[%s6 + $0x88] sm:$0xff]
    %v1893 = vld [vmem:[%s6 + $0x90] sm:$0xff]
    %v1894 = vld [vmem:[%s6 + $0x98] sm:$0xff]
    %v1895 = vld [vmem:[%s6 + $0xa0] sm:$0xff]
    %v1896 = vld [vmem:[%s6 + $0xa8] sm:$0xff]
    %v1897 = vld [vmem:[%s6 + $0xb0] sm:$0xff]
    %v1898 = vld [vmem:[%s6 + $0xb8] sm:$0xff]
    %v1899 = vld [vmem:[%s6 + $0xc0] sm:$0xff]
    %v1900 = vld [vmem:[%s6 + $0xc8] sm:$0xff]
    %v1901 = vld [vmem:[%s6 + $0xd0] sm:$0xff]
    %v1902 = vld [vmem:[%s6 + $0xd8] sm:$0xff]
    %v1903 = vld [vmem:[%s6 + $0xe0] sm:$0xff]
    %v1904 = vld [vmem:[%s6 + $0xe8] sm:$0xff]
    %v1905 = vld [vmem:[%s6 + $0xf0] sm:$0xff]
    %v1906 = vld [vmem:[%s6 + $0xf8] sm:$0xff]
    %v1907 = vld [vmem:[%s6 + $0x100] sm:$0xff]
    %v1908 = vld [vmem:[%s6 + $0x108] sm:$0xff]
    %v1909 = vld [vmem:[%s6 + $0x110] sm:$0xff]
    %v1910 = vld [vmem:[%s6 + $0x118] sm:$0xff]
    %v1911 = vld [vmem:[%s6 + $0x120] sm:$0xff]
    %v1912 = vld [vmem:[%s6 + $0x128] sm:$0xff]
    %v1913 = vld [vmem:[%s6 + $0x130] sm:$0xff]
    %v1914 = vld [vmem:[%s6 + $0x138] sm:$0xff]
    %v1915 = vld [vmem:[%s6 + $0x140] sm:$0xff]
    %v1916 = vld [vmem:[%s6 + $0x148] sm:$0xff]
    %v1917 = vld [vmem:[%s6 + $0x150] sm:$0xff]
    %v1918 = vld [vmem:[%s6 + $0x158] sm:$0xff]
    %v1919 = vld [vmem:[%s6 + $0x160] sm:$0xff]
    %v1920 = vld [vmem:[%s6 + $0x168] sm:$0xff]
    %v1921 = vld [vmem:[%s6 + $0x170] sm:$0xff]
    %v1922 = vld [vmem:[%s6 + $0x178] sm:$0xff]
    %v1923 = vld [vmem:[%s6 + $0x180] sm:$0xff]
    %v1924 = vld [vmem:[%s6 + $0x188] sm:$0xff]
    %v1925 = vld [vmem:[%s6 + $0x190] sm:$0xff]
    %v1926 = vld [vmem:[%s6 + $0x198] sm:$0xff]
    %v1927 = vld [vmem:[%s6 + $0x1a0] sm:$0xff]
    %v1928 = vld [vmem:[%s6 + $0x1a8] sm:$0xff]
    %v1929 = vld [vmem:[%s6 + $0x1b0] sm:$0xff]
    %v1930 = vld [vmem:[%s6 + $0x1b8] sm:$0xff]
    %v1931 = vld [vmem:[%s6 + $0x1c0] sm:$0xff]
    %v1932 = vld [vmem:[%s6 + $0x1c8] sm:$0xff]
    %v1933 = vld [vmem:[%s6 + $0x1d0] sm:$0xff]
    %v1934 = vld [vmem:[%s6 + $0x1d8] sm:$0xff]
    %v1935 = vld [vmem:[%s6 + $0x1e0] sm:$0xff]
    %v1936 = vld [vmem:[%s6 + $0x1e8] sm:$0xff]
    %v1937 = vld [vmem:[%s6 + $0x1f0] sm:$0xff]
    %v1938 = vld [vmem:[%s6 + $0x1f8] sm:$0xff]
    %v1939 = vld [vmem:[%s6 + $0x200] sm:$0xff]
    %v1940 = vld [vmem:[%s6 + $0x208] sm:$0xff]
    %v1941 = vld [vmem:[%s6 + $0x210] sm:$0xff]
    %v1942 = vld [vmem:[%s6 + $0x218] sm:$0xff]
    %v1943 = vld [vmem:[%s6 + $0x220] sm:$0xff]
    %v1944 = vld [vmem:[%s6 + $0x228] sm:$0xff]
    %v1945 = vld [vmem:[%s6 + $0x230] sm:$0xff]
    %v1946 = vld [vmem:[%s6 + $0x238] sm:$0xff]
    %v1947 = vld [vmem:[%s6 + $0x240] sm:$0xff]
    %v1948 = vld [vmem:[%s6 + $0x248] sm:$0xff]
    %v1949 = vld [vmem:[%s6 + $0x250] sm:$0xff]
    %v1950 = vld [vmem:[%s6 + $0x258] sm:$0xff]
    %v1951 = vld [vmem:[%s6 + $0x260] sm:$0xff]
    %v1952 = vld [vmem:[%s6 + $0x268] sm:$0xff]
    %v1953 = vld [vmem:[%s6 + $0x270] sm:$0xff]
    %v1954 = vld [vmem:[%s6 + $0x278] sm:$0xff]
    %v1955 = vld [vmem:[%s6 + $0x280] sm:$0xff]
    %v1956 = vld [vmem:[%s6 + $0x288] sm:$0xff]
    %v1957 = vld [vmem:[%s6 + $0x290] sm:$0xff]
    %v1958 = vld [vmem:[%s6 + $0x298] sm:$0xff]
    %v1959 = vld [vmem:[%s6 + $0x2a0] sm:$0xff]
    %v1960 = vld [vmem:[%s6 + $0x2a8] sm:$0xff]
    %v1961 = vld [vmem:[%s6 + $0x2b0] sm:$0xff]
    %v1962 = vld [vmem:[%s6 + $0x2b8] sm:$0xff]
    %v1963 = vld [vmem:[%s6 + $0x2c0] sm:$0xff]
    %v1964 = vld [vmem:[%s6 + $0x2c8] sm:$0xff]
    %v1965 = vld [vmem:[%s6 + $0x2d0] sm:$0xff]
    %v1966 = vld [vmem:[%s6 + $0x2d8] sm:$0xff]
    %v1967 = vld [vmem:[%s6 + $0x2e0] sm:$0xff]
    %v1968 = vld [vmem:[%s6 + $0x2e8] sm:$0xff]
    %v1969 = vld [vmem:[%s6 + $0x2f0] sm:$0xff]
    %v1970 = vld [vmem:[%s6 + $0x2f8] sm:$0xff]
    %v1971 = vld [vmem:[%s6 + $0x300] sm:$0xff]
    %v1972 = vld [vmem:[%s6 + $0x308] sm:$0xff]
    %v1973 = vld [vmem:[%s6 + $0x310] sm:$0xff]
    %v1974 = vld [vmem:[%s6 + $0x318] sm:$0xff]
    %v1975 = vld [vmem:[%s6 + $0x320] sm:$0xff]
    %v1976 = vld [vmem:[%s6 + $0x328] sm:$0xff]
    %v1977 = vld [vmem:[%s6 + $0x330] sm:$0xff]
    %v1978 = vld [vmem:[%s6 + $0x338] sm:$0xff]
    %v1979 = vld [vmem:[%s6 + $0x340] sm:$0xff]
    %v1980 = vld [vmem:[%s6 + $0x348] sm:$0xff]
    %v1981 = vld [vmem:[%s6 + $0x350] sm:$0xff]
    %v1982 = vld [vmem:[%s6 + $0x358] sm:$0xff]
    %v1983 = vld [vmem:[%s6 + $0x360] sm:$0xff]
    %v1984 = vld [vmem:[%s6 + $0x368] sm:$0xff]
    %v1985 = vld [vmem:[%s6 + $0x370] sm:$0xff]
    %v1986 = vld [vmem:[%s6 + $0x378] sm:$0xff]
    %v1987 = vld [vmem:[%s6 + $0x380] sm:$0xff]
    %v1988 = vld [vmem:[%s6 + $0x388] sm:$0xff]
    %v1989 = vld [vmem:[%s6 + $0x390] sm:$0xff]
    %v1990 = vld [vmem:[%s6 + $0x398] sm:$0xff]
    %v1991 = vld [vmem:[%s6 + $0x3a0] sm:$0xff]
    %v1992 = vld [vmem:[%s6 + $0x3a8] sm:$0xff]
    %v1993 = vld [vmem:[%s6 + $0x3b0] sm:$0xff]
    %v1994 = vld [vmem:[%s6 + $0x3b8] sm:$0xff]
    %v1995 = vld [vmem:[%s6 + $0x3c0] sm:$0xff]
    %v1996 = vld [vmem:[%s6 + $0x3c8] sm:$0xff]
    %v1997 = vld [vmem:[%s6 + $0x3d0] sm:$0xff]
    %v1998 = vld [vmem:[%s6 + $0x3d8] sm:$0xff]
    %v1999 = vld [vmem:[%s6 + $0x3e0] sm:$0xff]
    %v2000 = vld [vmem:[%s6 + $0x3e8] sm:$0xff]
    %v2001 = vld [vmem:[%s6 + $0x3f0] sm:$0xff]
    %v2002 = vld [vmem:[%s6 + $0x3f8] sm:$0xff]
    %v2003 = vld [vmem:[%s6 + $0x400] sm:$0xff]
    %v2004 = vld [vmem:[%s6 + $0x408] sm:$0xff]
    %v2005 = vld [vmem:[%s6 + $0x410] sm:$0xff]
    %v2006 = vld [vmem:[%s6 + $0x418] sm:$0xff]
    %v2007 = vld [vmem:[%s6 + $0x420] sm:$0xff]
    %v2008 = vld [vmem:[%s6 + $0x428] sm:$0xff]
    %v2009 = vld [vmem:[%s6 + $0x430] sm:$0xff]
    %v2010 = vld [vmem:[%s6 + $0x438] sm:$0xff]
    %v2011 = vld [vmem:[%s6 + $0x440] sm:$0xff]
    %v2012 = vld [vmem:[%s6 + $0x448] sm:$0xff]
    %v2013 = vld [vmem:[%s6 + $0x450] sm:$0xff]
    %v2014 = vld [vmem:[%s6 + $0x458] sm:$0xff]
    %v2015 = vld [vmem:[%s6 + $0x460] sm:$0xff]
    %v2016 = vld [vmem:[%s6 + $0x468] sm:$0xff]
    %v2017 = vld [vmem:[%s6 + $0x470] sm:$0xff]
    %v2018 = vld [vmem:[%s6 + $0x478] sm:$0xff]
    %v2019 = vld [vmem:[%s6 + $0x480] sm:$0xff]
    %v2020 = vld [vmem:[%s6 + $0x488] sm:$0xff]
    %v2021 = vld [vmem:[%s6 + $0x490] sm:$0xff]
    %v2022 = vld [vmem:[%s6 + $0x498] sm:$0xff]
    %v2023 = vld [vmem:[%s6 + $0x4a0] sm:$0xff]
    %v2024 = vld [vmem:[%s6 + $0x4a8] sm:$0xff]
    %v2025 = vld [vmem:[%s6 + $0x4b0] sm:$0xff]
    %v2026 = vld [vmem:[%s6 + $0x4b8] sm:$0xff]
    %v2027 = vld [vmem:[%s6 + $0x4c0] sm:$0xff]
    %v2028 = vld [vmem:[%s6 + $0x4c8] sm:$0xff]
    %v2029 = vld [vmem:[%s6 + $0x4d0] sm:$0xff]
    %v2030 = vld [vmem:[%s6 + $0x4d8] sm:$0xff]
    %v2031 = vld [vmem:[%s6 + $0x4e0] sm:$0xff]
    %v2032 = vld [vmem:[%s6 + $0x4e8] sm:$0xff]
    %v2033 = vld [vmem:[%s6 + $0x4f0] sm:$0xff]
    %v2034 = vld [vmem:[%s6 + $0x4f8] sm:$0xff]
    %v2035 = vld [vmem:[%s6 + $0x500] sm:$0xff]
    %v2036 = vld [vmem:[%s6 + $0x508] sm:$0xff]
    %v2037 = vld [vmem:[%s6 + $0x510] sm:$0xff]
    %v2038 = vld [vmem:[%s6 + $0x518] sm:$0xff]
    %v2039 = vld [vmem:[%s6 + $0x520] sm:$0xff]
    %v2040 = vld [vmem:[%s6 + $0x528] sm:$0xff]
    %v2041 = vld [vmem:[%s6 + $0x530] sm:$0xff]
    %v2042 = vld [vmem:[%s6 + $0x538] sm:$0xff]
    %v2043 = vld [vmem:[%s6 + $0x540] sm:$0xff]
    %v2044 = vld [vmem:[%s6 + $0x548] sm:$0xff]
    %v2045 = vld [vmem:[%s6 + $0x550] sm:$0xff]
    %v2046 = vld [vmem:[%s6 + $0x558] sm:$0xff]
    %v2047 = vld [vmem:[%s6 + $0x560] sm:$0xff]
    %v2048 = vld [vmem:[%s6 + $0x568] sm:$0xff]
    %v2049 = vld [vmem:[%s6 + $0x570] sm:$0xff]
    %v2050 = vld [vmem:[%s6 + $0x578] sm:$0xff]
    %v2051 = vld [vmem:[%s6 + $0x580] sm:$0xff]
    %v2052 = vld [vmem:[%s6 + $0x588] sm:$0xff]
    %v2053 = vld [vmem:[%s6 + $0x590] sm:$0xff]
    %v2054 = vld [vmem:[%s6 + $0x598] sm:$0xff]
    %v2055 = vld [vmem:[%s6 + $0x5a0] sm:$0xff]
    %v2056 = vld [vmem:[%s6 + $0x5a8] sm:$0xff]
    %v2057 = vld [vmem:[%s6 + $0x5b0] sm:$0xff]
    %v2058 = vld [vmem:[%s6 + $0x5b8] sm:$0xff]
    %v2059 = vld [vmem:[%s6 + $0x5c0] sm:$0xff]
    %v2060 = vld [vmem:[%s6 + $0x5c8] sm:$0xff]
    %v2061 = vld [vmem:[%s6 + $0x5d0] sm:$0xff]
    %v2062 = vld [vmem:[%s6 + $0x5d8] sm:$0xff]
    %v2063 = vld [vmem:[%s6 + $0x5e0] sm:$0xff]
    %v2064 = vld [vmem:[%s6 + $0x5e8] sm:$0xff]
    %v2065 = vld [vmem:[%s6 + $0x5f0] sm:$0xff]
    %v2066 = vld [vmem:[%s6 + $0x5f8] sm:$0xff]
    %2067 = vmatprep.subr.mxu0 %v1876
    %2068 = vmatpush1.msra.mxu0 %v1875
    %2069 = vmatprep.subr.mxu0 %v1880
    %2070 = vmatpush1.msra.mxu0 %v1879
    %2071 = vmatprep.subr.mxu0 %v1884
    %2072 = vmatpush1.msra.mxu0 %v1883
    %2073 = vmatprep.subr.mxu0 %v1888
    %2074 = vmatpush1.msra.mxu0 %v1887
    %2075 = vmatprep.subr.mxu0 %v1892
    %2076 = vmatpush1.msra.mxu0 %v1891
    %2077 = vmatprep.subr.mxu0 %v1896
    %2078 = vmatpush1.msra.mxu0 %v1895
    %2079 = vmatprep.subr.mxu0 %v1900
    %2080 = vmatpush1.msra.mxu0 %v1899
    %2081 = vmatprep.subr.mxu0 %v1904
    %2082 = vmatpush1.msra.mxu0 %v1903
    %2083 = vmatprep.subr.mxu0 %v1908
    %2084 = vmatpush1.msra.mxu0 %v1907
    %2085 = vmatprep.subr.mxu0 %v1912
    %2086 = vmatpush1.msra.mxu0 %v1911
    %2087 = vmatprep.subr.mxu0 %v1916
    %2088 = vmatpush1.msra.mxu0 %v1915
    %2089 = vmatprep.subr.mxu0 %v1920
    %2090 = vmatpush1.msra.mxu0 %v1919
    %2091 = vmatprep.subr.mxu0 %v1924
    %2092 = vmatpush1.msra.mxu0 %v1923
    %2093 = vmatprep.subr.mxu0 %v1928
    %2094 = vmatpush1.msra.mxu0 %v1927
    %2095 = vmatprep.subr.mxu0 %v1932
    %2096 = vmatpush1.msra.mxu0 %v1931
    %2097 = vmatprep.subr.mxu0 %v1936
    %2098 = vmatpush1.msra.mxu0 %v1935
    %2099 = vmatprep.subr.mxu0 %v1940
    %2100 = vmatpush1.msra.mxu0 %v1939
    %2101 = vmatprep.subr.mxu0 %v1944
    %2102 = vmatpush1.msra.mxu0 %v1943
    %2103 = vmatprep.subr.mxu0 %v1948
    %2104 = vmatpush1.msra.mxu0 %v1947
    %2105 = vmatprep.subr.mxu0 %v1952
    %2106 = vmatpush1.msra.mxu0 %v1951
    %2107 = vmatprep.subr.mxu0 %v1956
    %2108 = vmatpush1.msra.mxu0 %v1955
    %2109 = vmatprep.subr.mxu0 %v1960
    %2110 = vmatpush1.msra.mxu0 %v1959
    %2111 = vmatprep.subr.mxu0 %v1964
    %2112 = vmatpush1.msra.mxu0 %v1963
    %2113 = vmatprep.subr.mxu0 %v1968
    %2114 = vmatpush1.msra.mxu0 %v1967
    %2115 = vmatprep.subr.mxu0 %v1972
    %2116 = vmatpush1.msra.mxu0 %v1971
    %2117 = vmatprep.subr.mxu0 %v1976
    %2118 = vmatpush1.msra.mxu0 %v1975
    %2119 = vmatprep.subr.mxu0 %v1980
    %2120 = vmatpush1.msra.mxu0 %v1979
    %2121 = vmatprep.subr.mxu0 %v1984
    %2122 = vmatpush1.msra.mxu0 %v1983
    %2123 = vmatprep.subr.mxu0 %v1988
    %2124 = vmatpush1.msra.mxu0 %v1987
    %2125 = vmatprep.subr.mxu0 %v1992
    %2126 = vmatpush1.msra.mxu0 %v1991
    %2127 = vmatprep.subr.mxu0 %v1996
    %2128 = vmatpush1.msra.mxu0 %v1995
    %2129 = vmatprep.subr.mxu0 %v2000
    %2130 = vmatpush1.msra.mxu0 %v1999
    %2131 = vmatprep.mubr.f32.mxu0 %v1874
    %2132 = vmatmul.mubr.f32.gmra.mrb[0].mxu0 %v1786
    %v2133 = vpop.f32.mrb[0].mxu0
    %v2134 = vadd.f32 %v447, %v2133
    %v2135 = vpop.f32.mrb[0].mxu0
    %v2136 = vadd.f32 %v451, %v2135
    %2137 = vdwg.mxu0
    %2138 = vmatprep.subr.mxu0 %v2004
    %2139 = vmatpush1.msra.mxu0 %v2003
    %2140 = vmatprep.subr.mxu0 %v2008
    %2141 = vmatpush1.msra.mxu0 %v2007
    %2142 = vmatprep.subr.mxu0 %v2012
    %2143 = vmatpush1.msra.mxu0 %v2011
    %2144 = vmatprep.subr.mxu0 %v2016
    %2145 = vmatpush1.msra.mxu0 %v2015
    %2146 = vmatprep.subr.mxu0 %v2020
    %2147 = vmatpush1.msra.mxu0 %v2019
    %2148 = vmatprep.subr.mxu0 %v2024
    %2149 = vmatpush1.msra.mxu0 %v2023
    %2150 = vmatprep.subr.mxu0 %v2028
    %2151 = vmatpush1.msra.mxu0 %v2027
    %2152 = vmatprep.subr.mxu0 %v2032
    %2153 = vmatpush1.msra.mxu0 %v2031
    %2154 = vmatprep.subr.mxu0 %v2036
    %2155 = vmatpush1.msra.mxu0 %v2035
    %2156 = vmatprep.subr.mxu0 %v2040
    %2157 = vmatpush1.msra.mxu0 %v2039
    %2158 = vmatprep.subr.mxu0 %v2044
    %2159 = vmatpush1.msra.mxu0 %v2043
    %2160 = vmatprep.subr.mxu0 %v2048
    %2161 = vmatpush1.msra.mxu0 %v2047
    %2162 = vmatprep.subr.mxu0 %v2052
    %2163 = vmatpush1.msra.mxu0 %v2051
    %2164 = vmatprep.subr.mxu0 %v2056
    %2165 = vmatpush1.msra.mxu0 %v2055
    %2166 = vmatprep.subr.mxu0 %v2060
    %2167 = vmatpush1.msra.mxu0 %v2059
    %2168 = vmatprep.subr.mxu0 %v2064
    %2169 = vmatpush1.msra.mxu0 %v2063
    %2170 = vmatprep.subr.mxu0 0.0
    %2171 = vmatpush1.msra.mxu0 0.0
    %2172 = vmatprep.subr.mxu0 0.0
    %2173 = vmatpush1.msra.mxu0 0.0
    %2174 = vmatprep.subr.mxu0 0.0
    %2175 = vmatpush1.msra.mxu0 0.0
    %2176 = vmatprep.subr.mxu0 0.0
    %2177 = vmatpush1.msra.mxu0 0.0
    %2178 = vmatprep.subr.mxu0 0.0
    %2179 = vmatpush1.msra.mxu0 0.0
    %2180 = vmatprep.subr.mxu0 0.0
    %2181 = vmatpush1.msra.mxu0 0.0
    %2182 = vmatprep.subr.mxu0 0.0
    %2183 = vmatpush1.msra.mxu0 0.0
    %2184 = vmatprep.subr.mxu0 0.0
    %2185 = vmatpush1.msra.mxu0 0.0
    %2186 = vmatprep.subr.mxu0 0.0
    %2187 = vmatpush1.msra.mxu0 0.0
    %2188 = vmatprep.subr.mxu0 0.0
    %2189 = vmatpush1.msra.mxu0 0.0
    %2190 = vmatprep.subr.mxu0 0.0
    %2191 = vmatpush1.msra.mxu0 0.0
    %2192 = vmatprep.subr.mxu0 0.0
    %2193 = vmatpush1.msra.mxu0 0.0
    %2194 = vmatprep.subr.mxu0 0.0
    %2195 = vmatpush1.msra.mxu0 0.0
    %2196 = vmatprep.subr.mxu0 0.0
    %2197 = vmatpush1.msra.mxu0 0.0
    %2198 = vmatprep.subr.mxu0 0.0
    %2199 = vmatpush1.msra.mxu0 0.0
    %2200 = vmatprep.subr.mxu0 0.0
    %2201 = vmatpush1.msra.mxu0 0.0
    %2202 = vmatprep.mubr.f32.mxu0 0.0
    %2203 = vmatmul.mubr.f32.gmra.mrb[0].mxu0 %v1575
    %v2204 = vpop.f32.mrb[0].mxu0
    %v2205 = vadd.f32 %v2134, %v2204
    %v2206 = vpop.f32.mrb[0].mxu0
    %v2207 = vadd.f32 %v2136, %v2206
    %2208 = vdwg.mxu0
    %2209 = vmatprep.subr.mxu0 %v1878
    %2210 = vmatpush1.msra.mxu0 %v1877
    %2211 = vmatprep.subr.mxu0 %v1882
    %2212 = vmatpush1.msra.mxu0 %v1881
    %2213 = vmatprep.subr.mxu0 %v1886
    %2214 = vmatpush1.msra.mxu0 %v1885
    %2215 = vmatprep.subr.mxu0 %v1890
    %2216 = vmatpush1.msra.mxu0 %v1889
    %2217 = vmatprep.subr.mxu0 %v1894
    %2218 = vmatpush1.msra.mxu0 %v1893
    %2219 = vmatprep.subr.mxu0 %v1898
    %2220 = vmatpush1.msra.mxu0 %v1897
    %2221 = vmatprep.subr.mxu0 %v1902
    %2222 = vmatpush1.msra.mxu0 %v1901
    %2223 = vmatprep.subr.mxu0 %v1906
    %2224 = vmatpush1.msra.mxu0 %v1905
    %2225 = vmatprep.subr.mxu0 %v1910
    %2226 = vmatpush1.msra.mxu0 %v1909
    %2227 = vmatprep.subr.mxu0 %v1914
    %2228 = vmatpush1.msra.mxu0 %v1913
    %2229 = vmatprep.subr.mxu0 %v1918
    %2230 = vmatpush1.msra.mxu0 %v1917
    %2231 = vmatprep.subr.mxu0 %v1922
    %2232 = vmatpush1.msra.mxu0 %v1921
    %2233 = vmatprep.subr.mxu0 %v1926
    %2234 = vmatpush1.msra.mxu0 %v1925
    %2235 = vmatprep.subr.mxu0 %v1930
    %2236 = vmatpush1.msra.mxu0 %v1929
    %2237 = vmatprep.subr.mxu0 %v1934
    %2238 = vmatpush1.msra.mxu0 %v1933
    %2239 = vmatprep.subr.mxu0 %v1938
    %2240 = vmatpush1.msra.mxu0 %v1937
    %2241 = vmatprep.subr.mxu0 %v1942
    %2242 = vmatpush1.msra.mxu0 %v1941
    %2243 = vmatprep.subr.mxu0 %v1946
    %2244 = vmatpush1.msra.mxu0 %v1945
    %2245 = vmatprep.subr.mxu0 %v1950
    %2246 = vmatpush1.msra.mxu0 %v1949
    %2247 = vmatprep.subr.mxu0 %v1954
    %2248 = vmatpush1.msra.mxu0 %v1953
    %2249 = vmatprep.subr.mxu0 %v1958
    %2250 = vmatpush1.msra.mxu0 %v1957
    %2251 = vmatprep.subr.mxu0 %v1962
    %2252 = vmatpush1.msra.mxu0 %v1961
    %2253 = vmatprep.subr.mxu0 %v1966
    %2254 = vmatpush1.msra.mxu0 %v1965
    %2255 = vmatprep.subr.mxu0 %v1970
    %2256 = vmatpush1.msra.mxu0 %v1969
    %2257 = vmatprep.subr.mxu0 %v1974
    %2258 = vmatpush1.msra.mxu0 %v1973
    %2259 = vmatprep.subr.mxu0 %v1978
    %2260 = vmatpush1.msra.mxu0 %v1977
    %2261 = vmatprep.subr.mxu0 %v1982
    %2262 = vmatpush1.msra.mxu0 %v1981
    %2263 = vmatprep.subr.mxu0 %v1986
    %2264 = vmatpush1.msra.mxu0 %v1985
    %2265 = vmatprep.subr.mxu0 %v1990
    %2266 = vmatpush1.msra.mxu0 %v1989
    %2267 = vmatprep.subr.mxu0 %v1994
    %2268 = vmatpush1.msra.mxu0 %v1993
    %2269 = vmatprep.subr.mxu0 %v1998
    %2270 = vmatpush1.msra.mxu0 %v1997
    %2271 = vmatprep.subr.mxu0 %v2002
    %2272 = vmatpush1.msra.mxu0 %v2001
    %2273 = vmatprep.mubr.f32.mxu0 %v1874
    %2274 = vmatmul.mubr.f32.gmra.mrb[0].mxu0 %v1786
    %v2275 = vpop.f32.mrb[0].mxu0
    %v2276 = vadd.f32 %v455, %v2275
    %v2277 = vpop.f32.mrb[0].mxu0
    %v2278 = vadd.f32 %v459, %v2277
    %2279 = vdwg.mxu0
    %2280 = vmatprep.subr.mxu0 %v2006
    %2281 = vmatpush1.msra.mxu0 %v2005
    %2282 = vmatprep.subr.mxu0 %v2010
    %2283 = vmatpush1.msra.mxu0 %v2009
    %2284 = vmatprep.subr.mxu0 %v2014
    %2285 = vmatpush1.msra.mxu0 %v2013
    %2286 = vmatprep.subr.mxu0 %v2018
    %2287 = vmatpush1.msra.mxu0 %v2017
    %2288 = vmatprep.subr.mxu0 %v2022
    %2289 = vmatpush1.msra.mxu0 %v2021
    %2290 = vmatprep.subr.mxu0 %v2026
    %2291 = vmatpush1.msra.mxu0 %v2025
    %2292 = vmatprep.subr.mxu0 %v2030
    %2293 = vmatpush1.msra.mxu0 %v2029
    %2294 = vmatprep.subr.mxu0 %v2034
    %2295 = vmatpush1.msra.mxu0 %v2033
    %2296 = vmatprep.subr.mxu0 %v2038
    %2297 = vmatpush1.msra.mxu0 %v2037
    %2298 = vmatprep.subr.mxu0 %v2042
    %2299 = vmatpush1.msra.mxu0 %v2041
    %2300 = vmatprep.subr.mxu0 %v2046
    %2301 = vmatpush1.msra.mxu0 %v2045
    %2302 = vmatprep.subr.mxu0 %v2050
    %2303 = vmatpush1.msra.mxu0 %v2049
    %2304 = vmatprep.subr.mxu0 %v2054
    %2305 = vmatpush1.msra.mxu0 %v2053
    %2306 = vmatprep.subr.mxu0 %v2058
    %2307 = vmatpush1.msra.mxu0 %v2057
    %2308 = vmatprep.subr.mxu0 %v2062
    %2309 = vmatpush1.msra.mxu0 %v2061
    %2310 = vmatprep.subr.mxu0 %v2066
    %2311 = vmatpush1.msra.mxu0 %v2065
    %2312 = vmatprep.subr.mxu0 0.0
    %2313 = vmatpush1.msra.mxu0 0.0
    %2314 = vmatprep.subr.mxu0 0.0
    %2315 = vmatpush1.msra.mxu0 0.0
    %2316 = vmatprep.subr.mxu0 0.0
    %2317 = vmatpush1.msra.mxu0 0.0
    %2318 = vmatprep.subr.mxu0 0.0
    %2319 = vmatpush1.msra.mxu0 0.0
    %2320 = vmatprep.subr.mxu0 0.0
    %2321 = vmatpush1.msra.mxu0 0.0
    %2322 = vmatprep.subr.mxu0 0.0
    %2323 = vmatpush1.msra.mxu0 0.0
    %2324 = vmatprep.subr.mxu0 0.0
    %2325 = vmatpush1.msra.mxu0 0.0
    %2326 = vmatprep.subr.mxu0 0.0
    %2327 = vmatpush1.msra.mxu0 0.0
    %2328 = vmatprep.subr.mxu0 0.0
    %2329 = vmatpush1.msra.mxu0 0.0
    %2330 = vmatprep.subr.mxu0 0.0
    %2331 = vmatpush1.msra.mxu0 0.0
    %2332 = vmatprep.subr.mxu0 0.0
    %2333 = vmatpush1.msra.mxu0 0.0
    %2334 = vmatprep.subr.mxu0 0.0
    %2335 = vmatpush1.msra.mxu0 0.0
    %2336 = vmatprep.subr.mxu0 0.0
    %2337 = vmatpush1.msra.mxu0 0.0
    %2338 = vmatprep.subr.mxu0 0.0
    %2339 = vmatpush1.msra.mxu0 0.0
    %2340 = vmatprep.subr.mxu0 0.0
    %2341 = vmatpush1.msra.mxu0 0.0
    %2342 = vmatprep.subr.mxu0 0.0
    %2343 = vmatpush1.msra.mxu0 0.0
    %2344 = vmatprep.mubr.f32.mxu0 0.0
    %2345 = vmatmul.mubr.f32.gmra.mrb[0].mxu0 %v1575
    %v2346 = vpop.f32.mrb[0].mxu0
    %v2347 = vadd.f32 %v2276, %v2346
    %v2348 = vpop.f32.mrb[0].mxu0
    %v2349 = vadd.f32 %v2278, %v2348
    %2350 = vdwg.mxu0
    %v2351 = vxor.u32 %v2205, 2147483648
    %v2352 = vmul.f32 %v2351, 1.442695
    %v2353 = vpow.pop %v2352
    %v2354 = vadd.f32 %v2353, 1.0
    %v2355 = vrcp.pop %v2354
    %v2356 = vmul.f32 1.0, %v2355
    %v2357 = vxor.u32 %v2207, 2147483648
    %v2358 = vmul.f32 %v2357, 1.442695
    %v2359 = vpow.pop %v2358
    %v2360 = vadd.f32 %v2359, 1.0
    %v2361 = vrcp.pop %v2360
    %v2362 = vmul.f32 1.0, %v2361
    %v2363 = vtanh.pop %v2347
    %v2364 = vxor.u32 %v2349, 2147483648
    %v2365 = vmul.f32 %v2364, 1.442695
    %v2366 = vpow.pop %v2365
    %v2367 = vadd.f32 %v2366, 1.0
    %v2368 = vrcp.pop %v2367
    %v2369 = vmul.f32 1.0, %v2368
    %v2370 = vmul.f32 %v2362, %v1573
    %v2371 = vmul.f32 %v2356, %v2363
    %v2372 = vadd.f32 %v2370, %v2371
    %v2373 = vtanh.pop %v2372
    %v2374 = vmul.f32 %v2369, %v2373
    %v2375 = vld [vmem:[%s8] sm:$0xff]
    %v2376 = vld [vmem:[%s8 + $0x8] sm:$0xff]
    %v2377 = vld [vmem:[%s8 + $0x10] sm:$0xff]
    %v2378 = vld [vmem:[%s8 + $0x18] sm:$0xff]
    %v2379 = vld [vmem:[%s8 + $0x20] sm:$0xff]
    %v2380 = vld [vmem:[%s8 + $0x28] sm:$0xff]
    %v2381 = vld [vmem:[%s8 + $0x30] sm:$0xff]
    %v2382 = vld [vmem:[%s8 + $0x38] sm:$0xff]
    %v2383 = vld [vmem:[%s8 + $0x40] sm:$0xff]
    %v2384 = vld [vmem:[%s8 + $0x48] sm:$0xff]
    %v2385 = vld [vmem:[%s8 + $0x50] sm:$0xff]
    %v2386 = vld [vmem:[%s8 + $0x58] sm:$0xff]
    %v2387 = vld [vmem:[%s8 + $0x60] sm:$0xff]
    %v2388 = vld [vmem:[%s8 + $0x68] sm:$0xff]
    %v2389 = vld [vmem:[%s8 + $0x70] sm:$0xff]
    %v2390 = vld [vmem:[%s8 + $0x78] sm:$0xff]
    %2391 = vmatprep.subr.mxu0 0.0
    %2392 = vmatpush1.msra.mxu0 %v2375
    %2393 = vmatprep.subr.mxu0 0.0
    %2394 = vmatpush1.msra.mxu0 %v2376
    %2395 = vmatprep.subr.mxu0 0.0
    %2396 = vmatpush1.msra.mxu0 %v2377
    %2397 = vmatprep.subr.mxu0 0.0
    %2398 = vmatpush1.msra.mxu0 %v2378
    %2399 = vmatprep.subr.mxu0 0.0
    %2400 = vmatpush1.msra.mxu0 %v2379
    %2401 = vmatprep.subr.mxu0 0.0
    %2402 = vmatpush1.msra.mxu0 %v2380
    %2403 = vmatprep.subr.mxu0 0.0
    %2404 = vmatpush1.msra.mxu0 %v2381
    %2405 = vmatprep.subr.mxu0 0.0
    %2406 = vmatpush1.msra.mxu0 %v2382
    %2407 = vmatprep.subr.mxu0 0.0
    %2408 = vmatpush1.msra.mxu0 %v2383
    %2409 = vmatprep.subr.mxu0 0.0
    %2410 = vmatpush1.msra.mxu0 %v2384
    %2411 = vmatprep.subr.mxu0 0.0
    %2412 = vmatpush1.msra.mxu0 %v2385
    %2413 = vmatprep.subr.mxu0 0.0
    %2414 = vmatpush1.msra.mxu0 %v2386
    %2415 = vmatprep.subr.mxu0 0.0
    %2416 = vmatpush1.msra.mxu0 %v2387
    %2417 = vmatprep.subr.mxu0 0.0
    %2418 = vmatpush1.msra.mxu0 %v2388
    %2419 = vmatprep.subr.mxu0 0.0
    %2420 = vmatpush1.msra.mxu0 %v2389
    %2421 = vmatprep.subr.mxu0 0.0
    %2422 = vmatpush1.msra.mxu0 %v2390
    %2423 = vmatprep.subr.mxu0 0.0
    %2424 = vmatpush1.msra.mxu0 0.0
    %2425 = vmatprep.subr.mxu0 0.0
    %2426 = vmatpush1.msra.mxu0 0.0
    %2427 = vmatprep.subr.mxu0 0.0
    %2428 = vmatpush1.msra.mxu0 0.0
    %2429 = vmatprep.subr.mxu0 0.0
    %2430 = vmatpush1.msra.mxu0 0.0
    %2431 = vmatprep.subr.mxu0 0.0
    %2432 = vmatpush1.msra.mxu0 0.0
    %2433 = vmatprep.subr.mxu0 0.0
    %2434 = vmatpush1.msra.mxu0 0.0
    %2435 = vmatprep.subr.mxu0 0.0
    %2436 = vmatpush1.msra.mxu0 0.0
    %2437 = vmatprep.subr.mxu0 0.0
    %2438 = vmatpush1.msra.mxu0 0.0
    %2439 = vmatprep.subr.mxu0 0.0
    %2440 = vmatpush1.msra.mxu0 0.0
    %2441 = vmatprep.subr.mxu0 0.0
    %2442 = vmatpush1.msra.mxu0 0.0
    %2443 = vmatprep.subr.mxu0 0.0
    %2444 = vmatpush1.msra.mxu0 0.0
    %2445 = vmatprep.subr.mxu0 0.0
    %2446 = vmatpush1.msra.mxu0 0.0
    %2447 = vmatprep.subr.mxu0 0.0
    %2448 = vmatpush1.msra.mxu0 0.0
    %2449 = vmatprep.subr.mxu0 0.0
    %2450 = vmatpush1.msra.mxu0 0.0
    %2451 = vmatprep.subr.mxu0 0.0
    %2452 = vmatpush1.msra.mxu0 0.0
    %2453 = vmatprep.subr.mxu0 0.0
    %2454 = vmatpush1.msra.mxu0 0.0
    %2455 = vmatprep.mubr.f32.mxu0 0.0
    %2456 = vmatmul.mubr.f32.gmra.mrb[0].mxu0 %v2374
    %v2457 = vpop.f32.mrb[0].mxu0
    %v2458 = vadd.f32 %v792, %v2457
    %v2459 = vpop.f32.mrb[0].mxu0
    %2460 = vdwg.mxu0
    %s2461 = scalar_lea.vmem %s10, 16
    %2462 = vst [vmem:[%s2461] sm:$0xff] %v2458
    %2463 = vmax.xlane.f32.xlu0 %v2458
    %v2464 = vpop.xlane.xlu0 %2463
    %vm2465 = vcmp.eq.f32.partialorder %v2458, %v2464
    %v2466 = vsel %vm2465, %v59, 128
    %v2467 = vand.u32 %v2466, 65535
    %v2468 = vshra.s32 %v2466, 16
    %v2469 = vcvt.s32.f32 %v2467
    %v2470 = vcvt.s32.f32 %v2468
    %2471 = vmin.xlane.f32.xlu0 %v2470
    %v2472 = vpop.xlane.xlu0 %2471
    %vm2473 = vcmp.eq.f32.partialorder %v2470, %v2472
    %v2474 = vsel %vm2473, %v2469, inf
    %2475 = vmin.xlane.f32.xlu0 %v2474
    %v2476 = vpop.xlane.xlu0 %2475
    %v2477 = vcvt.f32.s32 %v2476
    %v2478 = vcvt.f32.s32 %v2472
    %v2479 = vshll.u32 %v2478, 16
    %v2480 = vadd.s32 %v2479, %v2477
    %vm2481 = vcmp.eq.s32.totalorder %v59, %v2480
    %v2482 = vsel %vm2481, 1, 0
    %v2483 = vcvt.s32.f32 %v2482
    %s2484 = scalar_lea.vmem %s1, 24
    %v2485 = vld [vmem:[%s2484] sm:$0xff]
    %2486 = vset.pattern.permute.xlu0 0
    %2487 = vperm.xlu0 %2486, %v2485
    %v2488 = vpop.permute.xlu0 %2487
    %vm2489 = vcmp.eq.s32.totalorder %v59, %v2488
    %v2490 = vsel %vm2489, 1, 0
    %v2491 = vcvt.s32.f32 %v2490
    %s2492 = sld [smem:[#allocation2 + $0x3]]
    %p2493 = scmp.ne.s32.totalorder %s2492, 0
    %s2494 = scalar_select %p2493, 1, 0
    %s2495 = scvt.s32.f32 %s2494
    %v2496 = vstv %s2495
    %v2497 = vmul.f32 %v2496, %v2491
    %s2498 = ssub.f32 1.0, %s2495
    %v2499 = vstv %s2498
    %v2500 = vmul.f32 %v2499, %v2483
    %v2501 = vadd.f32 %v2497, %v2500
    %v2502 = vld [vmem:[%s5] sm:$0xff]
    %v2503 = vld [vmem:[%s5 + $0x8] sm:$0xff]
    %v2504 = vld [vmem:[%s5 + $0x10] sm:$0xff]
    %v2505 = vld [vmem:[%s5 + $0x18] sm:$0xff]
    %v2506 = vld [vmem:[%s5 + $0x20] sm:$0xff]
    %v2507 = vld [vmem:[%s5 + $0x28] sm:$0xff]
    %v2508 = vld [vmem:[%s5 + $0x30] sm:$0xff]
    %v2509 = vld [vmem:[%s5 + $0x38] sm:$0xff]
    %v2510 = vld [vmem:[%s5 + $0x40] sm:$0xff]
    %v2511 = vld [vmem:[%s5 + $0x48] sm:$0xff]
    %v2512 = vld [vmem:[%s5 + $0x50] sm:$0xff]
    %v2513 = vld [vmem:[%s5 + $0x58] sm:$0xff]
    %v2514 = vld [vmem:[%s5 + $0x60] sm:$0xff]
    %v2515 = vld [vmem:[%s5 + $0x68] sm:$0xff]
    %v2516 = vld [vmem:[%s5 + $0x70] sm:$0xff]
    %v2517 = vld [vmem:[%s5 + $0x78] sm:$0xff]
    %2518 = vmatprep.subr.mxu0 0.0
    %2519 = vmatpush1.msra.mxu0 %v2502
    %2520 = vmatprep.subr.mxu0 0.0
    %2521 = vmatpush1.msra.mxu0 %v2503
    %2522 = vmatprep.subr.mxu0 0.0
    %2523 = vmatpush1.msra.mxu0 %v2504
    %2524 = vmatprep.subr.mxu0 0.0
    %2525 = vmatpush1.msra.mxu0 %v2505
    %2526 = vmatprep.subr.mxu0 0.0
    %2527 = vmatpush1.msra.mxu0 %v2506
    %2528 = vmatprep.subr.mxu0 0.0
    %2529 = vmatpush1.msra.mxu0 %v2507
    %2530 = vmatprep.subr.mxu0 0.0
    %2531 = vmatpush1.msra.mxu0 %v2508
    %2532 = vmatprep.subr.mxu0 0.0
    %2533 = vmatpush1.msra.mxu0 %v2509
    %2534 = vmatprep.subr.mxu0 0.0
    %2535 = vmatpush1.msra.mxu0 %v2510
    %2536 = vmatprep.subr.mxu0 0.0
    %2537 = vmatpush1.msra.mxu0 %v2511
    %2538 = vmatprep.subr.mxu0 0.0
    %2539 = vmatpush1.msra.mxu0 %v2512
    %2540 = vmatprep.subr.mxu0 0.0
    %2541 = vmatpush1.msra.mxu0 %v2513
    %2542 = vmatprep.subr.mxu0 0.0
    %2543 = vmatpush1.msra.mxu0 %v2514
    %2544 = vmatprep.subr.mxu0 0.0
    %2545 = vmatpush1.msra.mxu0 %v2515
    %2546 = vmatprep.subr.mxu0 0.0
    %2547 = vmatpush1.msra.mxu0 %v2516
    %2548 = vmatprep.subr.mxu0 0.0
    %2549 = vmatpush1.msra.mxu0 %v2517
    %2550 = vmatprep.subr.mxu0 0.0
    %2551 = vmatpush1.msra.mxu0 0.0
    %2552 = vmatprep.subr.mxu0 0.0
    %2553 = vmatpush1.msra.mxu0 0.0
    %2554 = vmatprep.subr.mxu0 0.0
    %2555 = vmatpush1.msra.mxu0 0.0
    %2556 = vmatprep.subr.mxu0 0.0
    %2557 = vmatpush1.msra.mxu0 0.0
    %2558 = vmatprep.subr.mxu0 0.0
    %2559 = vmatpush1.msra.mxu0 0.0
    %2560 = vmatprep.subr.mxu0 0.0
    %2561 = vmatpush1.msra.mxu0 0.0
    %2562 = vmatprep.subr.mxu0 0.0
    %2563 = vmatpush1.msra.mxu0 0.0
    %2564 = vmatprep.subr.mxu0 0.0
    %2565 = vmatpush1.msra.mxu0 0.0
    %2566 = vmatprep.subr.mxu0 0.0
    %2567 = vmatpush1.msra.mxu0 0.0
    %2568 = vmatprep.subr.mxu0 0.0
    %2569 = vmatpush1.msra.mxu0 0.0
    %2570 = vmatprep.subr.mxu0 0.0
    %2571 = vmatpush1.msra.mxu0 0.0
    %2572 = vmatprep.subr.mxu0 0.0
    %2573 = vmatpush1.msra.mxu0 0.0
    %2574 = vmatprep.subr.mxu0 0.0
    %2575 = vmatpush1.msra.mxu0 0.0
    %2576 = vmatprep.subr.mxu0 0.0
    %2577 = vmatpush1.msra.mxu0 0.0
    %2578 = vmatprep.subr.mxu0 0.0
    %2579 = vmatpush1.msra.mxu0 0.0
    %2580 = vmatprep.subr.mxu0 0.0
    %2581 = vmatpush1.msra.mxu0 0.0
    %2582 = vmatprep.mubr.f32.mxu0 0.0
    %2583 = vmatmul.mubr.f32.gmra.mrb[0].mxu0 %v2501
    %v2584 = vpop.f32.mrb[0].mxu0
    %v2585 = vadd.f32 0.0, %v2584
    %v2586 = vpop.f32.mrb[0].mxu0
    %2587 = vdwg.mxu0
    %v2588 = vmul.f32 %v48, %v2374
    %v2589 = vmul.f32 %v49, %v2374
    %v2590 = vmul.f32 %v50, %v2374
    %v2591 = vmul.f32 %v51, %v2374
    %v2592 = vmul.f32 %v52, %v2374
    %v2593 = vmul.f32 %v53, %v2374
    %v2594 = vmul.f32 %v54, %v2374
    %v2595 = vmul.f32 %v55, %v2374
    %2596 = vadd.xlane.f32.xlu0 %v2588
    %v2597 = vpop.xlane.xlu0 %2596
    %2598 = vadd.xlane.f32.xlu0 %v2589
    %v2599 = vpop.xlane.xlu0 %2598
    %2600 = vadd.xlane.f32.xlu0 %v2590
    %v2601 = vpop.xlane.xlu0 %2600
    %2602 = vadd.xlane.f32.xlu0 %v2591
    %v2603 = vpop.xlane.xlu0 %2602
    %2604 = vadd.xlane.f32.xlu0 %v2592
    %v2605 = vpop.xlane.xlu0 %2604
    %2606 = vadd.xlane.f32.xlu0 %v2593
    %v2607 = vpop.xlane.xlu0 %2606
    %2608 = vadd.xlane.f32.xlu0 %v2594
    %v2609 = vpop.xlane.xlu0 %2608
    %2610 = vadd.xlane.f32.xlu0 %v2595
    %v2611 = vpop.xlane.xlu0 %2610
    %v2612 = vmax.f32 %v2597, %v2605
    %v2613 = vmax.f32 %v2599, %v2607
    %v2614 = vmax.f32 %v2601, %v2609
    %v2615 = vmax.f32 %v2603, %v2611
    %v2616 = vmax.f32 %v2612, %v2613
    %v2617 = vmax.f32 %v2614, %v2615
    %v2618 = vmax.f32 %v2616, %v2617
    %v2619 = vsub.f32 %v2597, %v2618
    %v2620 = vsub.f32 %v2599, %v2618
    %v2621 = vsub.f32 %v2601, %v2618
    %v2622 = vsub.f32 %v2603, %v2618
    %v2623 = vsub.f32 %v2605, %v2618
    %v2624 = vsub.f32 %v2607, %v2618
    %v2625 = vsub.f32 %v2609, %v2618
    %v2626 = vsub.f32 %v2611, %v2618
    %v2627 = vmul.f32 %v2619, 1.442695
    %v2628 = vpow.pop %v2627
    %v2629 = vmul.f32 %v2620, 1.442695
    %v2630 = vpow.pop %v2629
    %v2631 = vmul.f32 %v2621, 1.442695
    %v2632 = vpow.pop %v2631
    %v2633 = vmul.f32 %v2622, 1.442695
    %v2634 = vpow.pop %v2633
    %v2635 = vmul.f32 %v2623, 1.442695
    %v2636 = vpow.pop %v2635
    %v2637 = vmul.f32 %v2624, 1.442695
    %v2638 = vpow.pop %v2637
    %v2639 = vmul.f32 %v2625, 1.442695
    %v2640 = vpow.pop %v2639
    %v2641 = vmul.f32 %v2626, 1.442695
    %v2642 = vpow.pop %v2641
    %v2643 = vadd.f32 %v2628, %v2630
    %v2644 = vadd.f32 %v2643, %v2632
    %v2645 = vadd.f32 %v2644, %v2634
    %v2646 = vadd.f32 %v2645, %v2636
    %v2647 = vadd.f32 %v2646, %v2638
    %v2648 = vadd.f32 %v2647, %v2640
    %v2649 = vadd.f32 %v2648, %v2642
    %v2650 = vrcp.pop %v2649
    %v2651 = vmul.f32 %v2628, %v2650
    %v2652 = vmul.f32 %v2630, %v2650
    %v2653 = vmul.f32 %v2632, %v2650
    %v2654 = vmul.f32 %v2634, %v2650
    %v2655 = vmul.f32 %v2636, %v2650
    %v2656 = vmul.f32 %v2638, %v2650
    %v2657 = vmul.f32 %v2640, %v2650
    %v2658 = vmul.f32 %v2642, %v2650
    %v2659 = vmul.f32 %v2651, %v48
    %v2660 = vmul.f32 %v2652, %v49
    %v2661 = vmul.f32 %v2653, %v50
    %v2662 = vmul.f32 %v2654, %v51
    %v2663 = vmul.f32 %v2655, %v52
    %v2664 = vmul.f32 %v2656, %v53
    %v2665 = vmul.f32 %v2657, %v54
    %v2666 = vmul.f32 %v2658, %v55
    %v2667 = vadd.f32 %v2659, %v2660
    %v2668 = vadd.f32 %v2667, %v2661
    %v2669 = vadd.f32 %v2668, %v2662
    %v2670 = vadd.f32 %v2669, %v2663
    %v2671 = vadd.f32 %v2670, %v2664
    %v2672 = vadd.f32 %v2671, %v2665
    %v2673 = vadd.f32 %v2672, %v2666
    %v2674 = vld [vmem:[%s6] sm:$0xff]
    %v2675 = vld [vmem:[%s6 + $0x8] sm:$0xff]
    %v2676 = vld [vmem:[%s6 + $0x10] sm:$0xff]
    %v2677 = vld [vmem:[%s6 + $0x18] sm:$0xff]
    %v2678 = vld [vmem:[%s6 + $0x20] sm:$0xff]
    %v2679 = vld [vmem:[%s6 + $0x28] sm:$0xff]
    %v2680 = vld [vmem:[%s6 + $0x30] sm:$0xff]
    %v2681 = vld [vmem:[%s6 + $0x38] sm:$0xff]
    %v2682 = vld [vmem:[%s6 + $0x40] sm:$0xff]
    %v2683 = vld [vmem:[%s6 + $0x48] sm:$0xff]
    %v2684 = vld [vmem:[%s6 + $0x50] sm:$0xff]
    %v2685 = vld [vmem:[%s6 + $0x58] sm:$0xff]
    %v2686 = vld [vmem:[%s6 + $0x60] sm:$0xff]
    %v2687 = vld [vmem:[%s6 + $0x68] sm:$0xff]
    %v2688 = vld [vmem:[%s6 + $0x70] sm:$0xff]
    %v2689 = vld [vmem:[%s6 + $0x78] sm:$0xff]
    %v2690 = vld [vmem:[%s6 + $0x80] sm:$0xff]
    %v2691 = vld [vmem:[%s6 + $0x88] sm:$0xff]
    %v2692 = vld [vmem:[%s6 + $0x90] sm:$0xff]
    %v2693 = vld [vmem:[%s6 + $0x98] sm:$0xff]
    %v2694 = vld [vmem:[%s6 + $0xa0] sm:$0xff]
    %v2695 = vld [vmem:[%s6 + $0xa8] sm:$0xff]
    %v2696 = vld [vmem:[%s6 + $0xb0] sm:$0xff]
    %v2697 = vld [vmem:[%s6 + $0xb8] sm:$0xff]
    %v2698 = vld [vmem:[%s6 + $0xc0] sm:$0xff]
    %v2699 = vld [vmem:[%s6 + $0xc8] sm:$0xff]
    %v2700 = vld [vmem:[%s6 + $0xd0] sm:$0xff]
    %v2701 = vld [vmem:[%s6 + $0xd8] sm:$0xff]
    %v2702 = vld [vmem:[%s6 + $0xe0] sm:$0xff]
    %v2703 = vld [vmem:[%s6 + $0xe8] sm:$0xff]
    %v2704 = vld [vmem:[%s6 + $0xf0] sm:$0xff]
    %v2705 = vld [vmem:[%s6 + $0xf8] sm:$0xff]
    %v2706 = vld [vmem:[%s6 + $0x100] sm:$0xff]
    %v2707 = vld [vmem:[%s6 + $0x108] sm:$0xff]
    %v2708 = vld [vmem:[%s6 + $0x110] sm:$0xff]
    %v2709 = vld [vmem:[%s6 + $0x118] sm:$0xff]
    %v2710 = vld [vmem:[%s6 + $0x120] sm:$0xff]
    %v2711 = vld [vmem:[%s6 + $0x128] sm:$0xff]
    %v2712 = vld [vmem:[%s6 + $0x130] sm:$0xff]
    %v2713 = vld [vmem:[%s6 + $0x138] sm:$0xff]
    %v2714 = vld [vmem:[%s6 + $0x140] sm:$0xff]
    %v2715 = vld [vmem:[%s6 + $0x148] sm:$0xff]
    %v2716 = vld [vmem:[%s6 + $0x150] sm:$0xff]
    %v2717 = vld [vmem:[%s6 + $0x158] sm:$0xff]
    %v2718 = vld [vmem:[%s6 + $0x160] sm:$0xff]
    %v2719 = vld [vmem:[%s6 + $0x168] sm:$0xff]
    %v2720 = vld [vmem:[%s6 + $0x170] sm:$0xff]
    %v2721 = vld [vmem:[%s6 + $0x178] sm:$0xff]
    %v2722 = vld [vmem:[%s6 + $0x180] sm:$0xff]
    %v2723 = vld [vmem:[%s6 + $0x188] sm:$0xff]
    %v2724 = vld [vmem:[%s6 + $0x190] sm:$0xff]
    %v2725 = vld [vmem:[%s6 + $0x198] sm:$0xff]
    %v2726 = vld [vmem:[%s6 + $0x1a0] sm:$0xff]
    %v2727 = vld [vmem:[%s6 + $0x1a8] sm:$0xff]
    %v2728 = vld [vmem:[%s6 + $0x1b0] sm:$0xff]
    %v2729 = vld [vmem:[%s6 + $0x1b8] sm:$0xff]
    %v2730 = vld [vmem:[%s6 + $0x1c0] sm:$0xff]
    %v2731 = vld [vmem:[%s6 + $0x1c8] sm:$0xff]
    %v2732 = vld [vmem:[%s6 + $0x1d0] sm:$0xff]
    %v2733 = vld [vmem:[%s6 + $0x1d8] sm:$0xff]
    %v2734 = vld [vmem:[%s6 + $0x1e0] sm:$0xff]
    %v2735 = vld [vmem:[%s6 + $0x1e8] sm:$0xff]
    %v2736 = vld [vmem:[%s6 + $0x1f0] sm:$0xff]
    %v2737 = vld [vmem:[%s6 + $0x1f8] sm:$0xff]
    %v2738 = vld [vmem:[%s6 + $0x200] sm:$0xff]
    %v2739 = vld [vmem:[%s6 + $0x208] sm:$0xff]
    %v2740 = vld [vmem:[%s6 + $0x210] sm:$0xff]
    %v2741 = vld [vmem:[%s6 + $0x218] sm:$0xff]
    %v2742 = vld [vmem:[%s6 + $0x220] sm:$0xff]
    %v2743 = vld [vmem:[%s6 + $0x228] sm:$0xff]
    %v2744 = vld [vmem:[%s6 + $0x230] sm:$0xff]
    %v2745 = vld [vmem:[%s6 + $0x238] sm:$0xff]
    %v2746 = vld [vmem:[%s6 + $0x240] sm:$0xff]
    %v2747 = vld [vmem:[%s6 + $0x248] sm:$0xff]
    %v2748 = vld [vmem:[%s6 + $0x250] sm:$0xff]
    %v2749 = vld [vmem:[%s6 + $0x258] sm:$0xff]
    %v2750 = vld [vmem:[%s6 + $0x260] sm:$0xff]
    %v2751 = vld [vmem:[%s6 + $0x268] sm:$0xff]
    %v2752 = vld [vmem:[%s6 + $0x270] sm:$0xff]
    %v2753 = vld [vmem:[%s6 + $0x278] sm:$0xff]
    %v2754 = vld [vmem:[%s6 + $0x280] sm:$0xff]
    %v2755 = vld [vmem:[%s6 + $0x288] sm:$0xff]
    %v2756 = vld [vmem:[%s6 + $0x290] sm:$0xff]
    %v2757 = vld [vmem:[%s6 + $0x298] sm:$0xff]
    %v2758 = vld [vmem:[%s6 + $0x2a0] sm:$0xff]
    %v2759 = vld [vmem:[%s6 + $0x2a8] sm:$0xff]
    %v2760 = vld [vmem:[%s6 + $0x2b0] sm:$0xff]
    %v2761 = vld [vmem:[%s6 + $0x2b8] sm:$0xff]
    %v2762 = vld [vmem:[%s6 + $0x2c0] sm:$0xff]
    %v2763 = vld [vmem:[%s6 + $0x2c8] sm:$0xff]
    %v2764 = vld [vmem:[%s6 + $0x2d0] sm:$0xff]
    %v2765 = vld [vmem:[%s6 + $0x2d8] sm:$0xff]
    %v2766 = vld [vmem:[%s6 + $0x2e0] sm:$0xff]
    %v2767 = vld [vmem:[%s6 + $0x2e8] sm:$0xff]
    %v2768 = vld [vmem:[%s6 + $0x2f0] sm:$0xff]
    %v2769 = vld [vmem:[%s6 + $0x2f8] sm:$0xff]
    %v2770 = vld [vmem:[%s6 + $0x300] sm:$0xff]
    %v2771 = vld [vmem:[%s6 + $0x308] sm:$0xff]
    %v2772 = vld [vmem:[%s6 + $0x310] sm:$0xff]
    %v2773 = vld [vmem:[%s6 + $0x318] sm:$0xff]
    %v2774 = vld [vmem:[%s6 + $0x320] sm:$0xff]
    %v2775 = vld [vmem:[%s6 + $0x328] sm:$0xff]
    %v2776 = vld [vmem:[%s6 + $0x330] sm:$0xff]
    %v2777 = vld [vmem:[%s6 + $0x338] sm:$0xff]
    %v2778 = vld [vmem:[%s6 + $0x340] sm:$0xff]
    %v2779 = vld [vmem:[%s6 + $0x348] sm:$0xff]
    %v2780 = vld [vmem:[%s6 + $0x350] sm:$0xff]
    %v2781 = vld [vmem:[%s6 + $0x358] sm:$0xff]
    %v2782 = vld [vmem:[%s6 + $0x360] sm:$0xff]
    %v2783 = vld [vmem:[%s6 + $0x368] sm:$0xff]
    %v2784 = vld [vmem:[%s6 + $0x370] sm:$0xff]
    %v2785 = vld [vmem:[%s6 + $0x378] sm:$0xff]
    %v2786 = vld [vmem:[%s6 + $0x380] sm:$0xff]
    %v2787 = vld [vmem:[%s6 + $0x388] sm:$0xff]
    %v2788 = vld [vmem:[%s6 + $0x390] sm:$0xff]
    %v2789 = vld [vmem:[%s6 + $0x398] sm:$0xff]
    %v2790 = vld [vmem:[%s6 + $0x3a0] sm:$0xff]
    %v2791 = vld [vmem:[%s6 + $0x3a8] sm:$0xff]
    %v2792 = vld [vmem:[%s6 + $0x3b0] sm:$0xff]
    %v2793 = vld [vmem:[%s6 + $0x3b8] sm:$0xff]
    %v2794 = vld [vmem:[%s6 + $0x3c0] sm:$0xff]
    %v2795 = vld [vmem:[%s6 + $0x3c8] sm:$0xff]
    %v2796 = vld [vmem:[%s6 + $0x3d0] sm:$0xff]
    %v2797 = vld [vmem:[%s6 + $0x3d8] sm:$0xff]
    %v2798 = vld [vmem:[%s6 + $0x3e0] sm:$0xff]
    %v2799 = vld [vmem:[%s6 + $0x3e8] sm:$0xff]
    %v2800 = vld [vmem:[%s6 + $0x3f0] sm:$0xff]
    %v2801 = vld [vmem:[%s6 + $0x3f8] sm:$0xff]
    %v2802 = vld [vmem:[%s6 + $0x400] sm:$0xff]
    %v2803 = vld [vmem:[%s6 + $0x408] sm:$0xff]
    %v2804 = vld [vmem:[%s6 + $0x410] sm:$0xff]
    %v2805 = vld [vmem:[%s6 + $0x418] sm:$0xff]
    %v2806 = vld [vmem:[%s6 + $0x420] sm:$0xff]
    %v2807 = vld [vmem:[%s6 + $0x428] sm:$0xff]
    %v2808 = vld [vmem:[%s6 + $0x430] sm:$0xff]
    %v2809 = vld [vmem:[%s6 + $0x438] sm:$0xff]
    %v2810 = vld [vmem:[%s6 + $0x440] sm:$0xff]
    %v2811 = vld [vmem:[%s6 + $0x448] sm:$0xff]
    %v2812 = vld [vmem:[%s6 + $0x450] sm:$0xff]
    %v2813 = vld [vmem:[%s6 + $0x458] sm:$0xff]
    %v2814 = vld [vmem:[%s6 + $0x460] sm:$0xff]
    %v2815 = vld [vmem:[%s6 + $0x468] sm:$0xff]
    %v2816 = vld [vmem:[%s6 + $0x470] sm:$0xff]
    %v2817 = vld [vmem:[%s6 + $0x478] sm:$0xff]
    %v2818 = vld [vmem:[%s6 + $0x480] sm:$0xff]
    %v2819 = vld [vmem:[%s6 + $0x488] sm:$0xff]
    %v2820 = vld [vmem:[%s6 + $0x490] sm:$0xff]
    %v2821 = vld [vmem:[%s6 + $0x498] sm:$0xff]
    %v2822 = vld [vmem:[%s6 + $0x4a0] sm:$0xff]
    %v2823 = vld [vmem:[%s6 + $0x4a8] sm:$0xff]
    %v2824 = vld [vmem:[%s6 + $0x4b0] sm:$0xff]
    %v2825 = vld [vmem:[%s6 + $0x4b8] sm:$0xff]
    %v2826 = vld [vmem:[%s6 + $0x4c0] sm:$0xff]
    %v2827 = vld [vmem:[%s6 + $0x4c8] sm:$0xff]
    %v2828 = vld [vmem:[%s6 + $0x4d0] sm:$0xff]
    %v2829 = vld [vmem:[%s6 + $0x4d8] sm:$0xff]
    %v2830 = vld [vmem:[%s6 + $0x4e0] sm:$0xff]
    %v2831 = vld [vmem:[%s6 + $0x4e8] sm:$0xff]
    %v2832 = vld [vmem:[%s6 + $0x4f0] sm:$0xff]
    %v2833 = vld [vmem:[%s6 + $0x4f8] sm:$0xff]
    %v2834 = vld [vmem:[%s6 + $0x500] sm:$0xff]
    %v2835 = vld [vmem:[%s6 + $0x508] sm:$0xff]
    %v2836 = vld [vmem:[%s6 + $0x510] sm:$0xff]
    %v2837 = vld [vmem:[%s6 + $0x518] sm:$0xff]
    %v2838 = vld [vmem:[%s6 + $0x520] sm:$0xff]
    %v2839 = vld [vmem:[%s6 + $0x528] sm:$0xff]
    %v2840 = vld [vmem:[%s6 + $0x530] sm:$0xff]
    %v2841 = vld [vmem:[%s6 + $0x538] sm:$0xff]
    %v2842 = vld [vmem:[%s6 + $0x540] sm:$0xff]
    %v2843 = vld [vmem:[%s6 + $0x548] sm:$0xff]
    %v2844 = vld [vmem:[%s6 + $0x550] sm:$0xff]
    %v2845 = vld [vmem:[%s6 + $0x558] sm:$0xff]
    %v2846 = vld [vmem:[%s6 + $0x560] sm:$0xff]
    %v2847 = vld [vmem:[%s6 + $0x568] sm:$0xff]
    %v2848 = vld [vmem:[%s6 + $0x570] sm:$0xff]
    %v2849 = vld [vmem:[%s6 + $0x578] sm:$0xff]
    %v2850 = vld [vmem:[%s6 + $0x580] sm:$0xff]
    %v2851 = vld [vmem:[%s6 + $0x588] sm:$0xff]
    %v2852 = vld [vmem:[%s6 + $0x590] sm:$0xff]
    %v2853 = vld [vmem:[%s6 + $0x598] sm:$0xff]
    %v2854 = vld [vmem:[%s6 + $0x5a0] sm:$0xff]
    %v2855 = vld [vmem:[%s6 + $0x5a8] sm:$0xff]
    %v2856 = vld [vmem:[%s6 + $0x5b0] sm:$0xff]
    %v2857 = vld [vmem:[%s6 + $0x5b8] sm:$0xff]
    %v2858 = vld [vmem:[%s6 + $0x5c0] sm:$0xff]
    %v2859 = vld [vmem:[%s6 + $0x5c8] sm:$0xff]
    %v2860 = vld [vmem:[%s6 + $0x5d0] sm:$0xff]
    %v2861 = vld [vmem:[%s6 + $0x5d8] sm:$0xff]
    %v2862 = vld [vmem:[%s6 + $0x5e0] sm:$0xff]
    %v2863 = vld [vmem:[%s6 + $0x5e8] sm:$0xff]
    %v2864 = vld [vmem:[%s6 + $0x5f0] sm:$0xff]
    %v2865 = vld [vmem:[%s6 + $0x5f8] sm:$0xff]
    %2866 = vmatprep.subr.mxu0 %v2675
    %2867 = vmatpush1.msra.mxu0 %v2674
    %2868 = vmatprep.subr.mxu0 %v2679
    %2869 = vmatpush1.msra.mxu0 %v2678
    %2870 = vmatprep.subr.mxu0 %v2683
    %2871 = vmatpush1.msra.mxu0 %v2682
    %2872 = vmatprep.subr.mxu0 %v2687
    %2873 = vmatpush1.msra.mxu0 %v2686
    %2874 = vmatprep.subr.mxu0 %v2691
    %2875 = vmatpush1.msra.mxu0 %v2690
    %2876 = vmatprep.subr.mxu0 %v2695
    %2877 = vmatpush1.msra.mxu0 %v2694
    %2878 = vmatprep.subr.mxu0 %v2699
    %2879 = vmatpush1.msra.mxu0 %v2698
    %2880 = vmatprep.subr.mxu0 %v2703
    %2881 = vmatpush1.msra.mxu0 %v2702
    %2882 = vmatprep.subr.mxu0 %v2707
    %2883 = vmatpush1.msra.mxu0 %v2706
    %2884 = vmatprep.subr.mxu0 %v2711
    %2885 = vmatpush1.msra.mxu0 %v2710
    %2886 = vmatprep.subr.mxu0 %v2715
    %2887 = vmatpush1.msra.mxu0 %v2714
    %2888 = vmatprep.subr.mxu0 %v2719
    %2889 = vmatpush1.msra.mxu0 %v2718
    %2890 = vmatprep.subr.mxu0 %v2723
    %2891 = vmatpush1.msra.mxu0 %v2722
    %2892 = vmatprep.subr.mxu0 %v2727
    %2893 = vmatpush1.msra.mxu0 %v2726
    %2894 = vmatprep.subr.mxu0 %v2731
    %2895 = vmatpush1.msra.mxu0 %v2730
    %2896 = vmatprep.subr.mxu0 %v2735
    %2897 = vmatpush1.msra.mxu0 %v2734
    %2898 = vmatprep.subr.mxu0 %v2739
    %2899 = vmatpush1.msra.mxu0 %v2738
    %2900 = vmatprep.subr.mxu0 %v2743
    %2901 = vmatpush1.msra.mxu0 %v2742
    %2902 = vmatprep.subr.mxu0 %v2747
    %2903 = vmatpush1.msra.mxu0 %v2746
    %2904 = vmatprep.subr.mxu0 %v2751
    %2905 = vmatpush1.msra.mxu0 %v2750
    %2906 = vmatprep.subr.mxu0 %v2755
    %2907 = vmatpush1.msra.mxu0 %v2754
    %2908 = vmatprep.subr.mxu0 %v2759
    %2909 = vmatpush1.msra.mxu0 %v2758
    %2910 = vmatprep.subr.mxu0 %v2763
    %2911 = vmatpush1.msra.mxu0 %v2762
    %2912 = vmatprep.subr.mxu0 %v2767
    %2913 = vmatpush1.msra.mxu0 %v2766
    %2914 = vmatprep.subr.mxu0 %v2771
    %2915 = vmatpush1.msra.mxu0 %v2770
    %2916 = vmatprep.subr.mxu0 %v2775
    %2917 = vmatpush1.msra.mxu0 %v2774
    %2918 = vmatprep.subr.mxu0 %v2779
    %2919 = vmatpush1.msra.mxu0 %v2778
    %2920 = vmatprep.subr.mxu0 %v2783
    %2921 = vmatpush1.msra.mxu0 %v2782
    %2922 = vmatprep.subr.mxu0 %v2787
    %2923 = vmatpush1.msra.mxu0 %v2786
    %2924 = vmatprep.subr.mxu0 %v2791
    %2925 = vmatpush1.msra.mxu0 %v2790
    %2926 = vmatprep.subr.mxu0 %v2795
    %2927 = vmatpush1.msra.mxu0 %v2794
    %2928 = vmatprep.subr.mxu0 %v2799
    %2929 = vmatpush1.msra.mxu0 %v2798
    %2930 = vmatprep.mubr.f32.mxu0 %v2673
    %2931 = vmatmul.mubr.f32.gmra.mrb[0].mxu0 %v2585
    %v2932 = vpop.f32.mrb[0].mxu0
    %v2933 = vadd.f32 %v447, %v2932
    %v2934 = vpop.f32.mrb[0].mxu0
    %v2935 = vadd.f32 %v451, %v2934
    %2936 = vdwg.mxu0
    %2937 = vmatprep.subr.mxu0 %v2803
    %2938 = vmatpush1.msra.mxu0 %v2802
    %2939 = vmatprep.subr.mxu0 %v2807
    %2940 = vmatpush1.msra.mxu0 %v2806
    %2941 = vmatprep.subr.mxu0 %v2811
    %2942 = vmatpush1.msra.mxu0 %v2810
    %2943 = vmatprep.subr.mxu0 %v2815
    %2944 = vmatpush1.msra.mxu0 %v2814
    %2945 = vmatprep.subr.mxu0 %v2819
    %2946 = vmatpush1.msra.mxu0 %v2818
    %2947 = vmatprep.subr.mxu0 %v2823
    %2948 = vmatpush1.msra.mxu0 %v2822
    %2949 = vmatprep.subr.mxu0 %v2827
    %2950 = vmatpush1.msra.mxu0 %v2826
    %2951 = vmatprep.subr.mxu0 %v2831
    %2952 = vmatpush1.msra.mxu0 %v2830
    %2953 = vmatprep.subr.mxu0 %v2835
    %2954 = vmatpush1.msra.mxu0 %v2834
    %2955 = vmatprep.subr.mxu0 %v2839
    %2956 = vmatpush1.msra.mxu0 %v2838
    %2957 = vmatprep.subr.mxu0 %v2843
    %2958 = vmatpush1.msra.mxu0 %v2842
    %2959 = vmatprep.subr.mxu0 %v2847
    %2960 = vmatpush1.msra.mxu0 %v2846
    %2961 = vmatprep.subr.mxu0 %v2851
    %2962 = vmatpush1.msra.mxu0 %v2850
    %2963 = vmatprep.subr.mxu0 %v2855
    %2964 = vmatpush1.msra.mxu0 %v2854
    %2965 = vmatprep.subr.mxu0 %v2859
    %2966 = vmatpush1.msra.mxu0 %v2858
    %2967 = vmatprep.subr.mxu0 %v2863
    %2968 = vmatpush1.msra.mxu0 %v2862
    %2969 = vmatprep.subr.mxu0 0.0
    %2970 = vmatpush1.msra.mxu0 0.0
    %2971 = vmatprep.subr.mxu0 0.0
    %2972 = vmatpush1.msra.mxu0 0.0
    %2973 = vmatprep.subr.mxu0 0.0
    %2974 = vmatpush1.msra.mxu0 0.0
    %2975 = vmatprep.subr.mxu0 0.0
    %2976 = vmatpush1.msra.mxu0 0.0
    %2977 = vmatprep.subr.mxu0 0.0
    %2978 = vmatpush1.msra.mxu0 0.0
    %2979 = vmatprep.subr.mxu0 0.0
    %2980 = vmatpush1.msra.mxu0 0.0
    %2981 = vmatprep.subr.mxu0 0.0
    %2982 = vmatpush1.msra.mxu0 0.0
    %2983 = vmatprep.subr.mxu0 0.0
    %2984 = vmatpush1.msra.mxu0 0.0
    %2985 = vmatprep.subr.mxu0 0.0
    %2986 = vmatpush1.msra.mxu0 0.0
    %2987 = vmatprep.subr.mxu0 0.0
    %2988 = vmatpush1.msra.mxu0 0.0
    %2989 = vmatprep.subr.mxu0 0.0
    %2990 = vmatpush1.msra.mxu0 0.0
    %2991 = vmatprep.subr.mxu0 0.0
    %2992 = vmatpush1.msra.mxu0 0.0
    %2993 = vmatprep.subr.mxu0 0.0
    %2994 = vmatpush1.msra.mxu0 0.0
    %2995 = vmatprep.subr.mxu0 0.0
    %2996 = vmatpush1.msra.mxu0 0.0
    %2997 = vmatprep.subr.mxu0 0.0
    %2998 = vmatpush1.msra.mxu0 0.0
    %2999 = vmatprep.subr.mxu0 0.0
    %3000 = vmatpush1.msra.mxu0 0.0
    %3001 = vmatprep.mubr.f32.mxu0 0.0
    %3002 = vmatmul.mubr.f32.gmra.mrb[0].mxu0 %v2374
    %v3003 = vpop.f32.mrb[0].mxu0
    %v3004 = vadd.f32 %v2933, %v3003
    %v3005 = vpop.f32.mrb[0].mxu0
    %v3006 = vadd.f32 %v2935, %v3005
    %3007 = vdwg.mxu0
    %3008 = vmatprep.subr.mxu0 %v2677
    %3009 = vmatpush1.msra.mxu0 %v2676
    %3010 = vmatprep.subr.mxu0 %v2681
    %3011 = vmatpush1.msra.mxu0 %v2680
    %3012 = vmatprep.subr.mxu0 %v2685
    %3013 = vmatpush1.msra.mxu0 %v2684
    %3014 = vmatprep.subr.mxu0 %v2689
    %3015 = vmatpush1.msra.mxu0 %v2688
    %3016 = vmatprep.subr.mxu0 %v2693
    %3017 = vmatpush1.msra.mxu0 %v2692
    %3018 = vmatprep.subr.mxu0 %v2697
    %3019 = vmatpush1.msra.mxu0 %v2696
    %3020 = vmatprep.subr.mxu0 %v2701
    %3021 = vmatpush1.msra.mxu0 %v2700
    %3022 = vmatprep.subr.mxu0 %v2705
    %3023 = vmatpush1.msra.mxu0 %v2704
    %3024 = vmatprep.subr.mxu0 %v2709
    %3025 = vmatpush1.msra.mxu0 %v2708
    %3026 = vmatprep.subr.mxu0 %v2713
    %3027 = vmatpush1.msra.mxu0 %v2712
    %3028 = vmatprep.subr.mxu0 %v2717
    %3029 = vmatpush1.msra.mxu0 %v2716
    %3030 = vmatprep.subr.mxu0 %v2721
    %3031 = vmatpush1.msra.mxu0 %v2720
    %3032 = vmatprep.subr.mxu0 %v2725
    %3033 = vmatpush1.msra.mxu0 %v2724
    %3034 = vmatprep.subr.mxu0 %v2729
    %3035 = vmatpush1.msra.mxu0 %v2728
    %3036 = vmatprep.subr.mxu0 %v2733
    %3037 = vmatpush1.msra.mxu0 %v2732
    %3038 = vmatprep.subr.mxu0 %v2737
    %3039 = vmatpush1.msra.mxu0 %v2736
    %3040 = vmatprep.subr.mxu0 %v2741
    %3041 = vmatpush1.msra.mxu0 %v2740
    %3042 = vmatprep.subr.mxu0 %v2745
    %3043 = vmatpush1.msra.mxu0 %v2744
    %3044 = vmatprep.subr.mxu0 %v2749
    %3045 = vmatpush1.msra.mxu0 %v2748
    %3046 = vmatprep.subr.mxu0 %v2753
    %3047 = vmatpush1.msra.mxu0 %v2752
    %3048 = vmatprep.subr.mxu0 %v2757
    %3049 = vmatpush1.msra.mxu0 %v2756
    %3050 = vmatprep.subr.mxu0 %v2761
    %3051 = vmatpush1.msra.mxu0 %v2760
    %3052 = vmatprep.subr.mxu0 %v2765
    %3053 = vmatpush1.msra.mxu0 %v2764
    %3054 = vmatprep.subr.mxu0 %v2769
    %3055 = vmatpush1.msra.mxu0 %v2768
    %3056 = vmatprep.subr.mxu0 %v2773
    %3057 = vmatpush1.msra.mxu0 %v2772
    %3058 = vmatprep.subr.mxu0 %v2777
    %3059 = vmatpush1.msra.mxu0 %v2776
    %3060 = vmatprep.subr.mxu0 %v2781
    %3061 = vmatpush1.msra.mxu0 %v2780
    %3062 = vmatprep.subr.mxu0 %v2785
    %3063 = vmatpush1.msra.mxu0 %v2784
    %3064 = vmatprep.subr.mxu0 %v2789
    %3065 = vmatpush1.msra.mxu0 %v2788
    %3066 = vmatprep.subr.mxu0 %v2793
    %3067 = vmatpush1.msra.mxu0 %v2792
    %3068 = vmatprep.subr.mxu0 %v2797
    %3069 = vmatpush1.msra.mxu0 %v2796
    %3070 = vmatprep.subr.mxu0 %v2801
    %3071 = vmatpush1.msra.mxu0 %v2800
    %3072 = vmatprep.mubr.f32.mxu0 %v2673
    %3073 = vmatmul.mubr.f32.gmra.mrb[0].mxu0 %v2585
    %v3074 = vpop.f32.mrb[0].mxu0
    %v3075 = vadd.f32 %v455, %v3074
    %v3076 = vpop.f32.mrb[0].mxu0
    %v3077 = vadd.f32 %v459, %v3076
    %3078 = vdwg.mxu0
    %3079 = vmatprep.subr.mxu0 %v2805
    %3080 = vmatpush1.msra.mxu0 %v2804
    %3081 = vmatprep.subr.mxu0 %v2809
    %3082 = vmatpush1.msra.mxu0 %v2808
    %3083 = vmatprep.subr.mxu0 %v2813
    %3084 = vmatpush1.msra.mxu0 %v2812
    %3085 = vmatprep.subr.mxu0 %v2817
    %3086 = vmatpush1.msra.mxu0 %v2816
    %3087 = vmatprep.subr.mxu0 %v2821
    %3088 = vmatpush1.msra.mxu0 %v2820
    %3089 = vmatprep.subr.mxu0 %v2825
    %3090 = vmatpush1.msra.mxu0 %v2824
    %3091 = vmatprep.subr.mxu0 %v2829
    %3092 = vmatpush1.msra.mxu0 %v2828
    %3093 = vmatprep.subr.mxu0 %v2833
    %3094 = vmatpush1.msra.mxu0 %v2832
    %3095 = vmatprep.subr.mxu0 %v2837
    %3096 = vmatpush1.msra.mxu0 %v2836
    %3097 = vmatprep.subr.mxu0 %v2841
    %3098 = vmatpush1.msra.mxu0 %v2840
    %3099 = vmatprep.subr.mxu0 %v2845
    %3100 = vmatpush1.msra.mxu0 %v2844
    %3101 = vmatprep.subr.mxu0 %v2849
    %3102 = vmatpush1.msra.mxu0 %v2848
    %3103 = vmatprep.subr.mxu0 %v2853
    %3104 = vmatpush1.msra.mxu0 %v2852
    %3105 = vmatprep.subr.mxu0 %v2857
    %3106 = vmatpush1.msra.mxu0 %v2856
    %3107 = vmatprep.subr.mxu0 %v2861
    %3108 = vmatpush1.msra.mxu0 %v2860
    %3109 = vmatprep.subr.mxu0 %v2865
    %3110 = vmatpush1.msra.mxu0 %v2864
    %3111 = vmatprep.subr.mxu0 0.0
    %3112 = vmatpush1.msra.mxu0 0.0
    %3113 = vmatprep.subr.mxu0 0.0
    %3114 = vmatpush1.msra.mxu0 0.0
    %3115 = vmatprep.subr.mxu0 0.0
    %3116 = vmatpush1.msra.mxu0 0.0
    %3117 = vmatprep.subr.mxu0 0.0
    %3118 = vmatpush1.msra.mxu0 0.0
    %3119 = vmatprep.subr.mxu0 0.0
    %3120 = vmatpush1.msra.mxu0 0.0
    %3121 = vmatprep.subr.mxu0 0.0
    %3122 = vmatpush1.msra.mxu0 0.0
    %3123 = vmatprep.subr.mxu0 0.0
    %3124 = vmatpush1.msra.mxu0 0.0
    %3125 = vmatprep.subr.mxu0 0.0
    %3126 = vmatpush1.msra.mxu0 0.0
    %3127 = vmatprep.subr.mxu0 0.0
    %3128 = vmatpush1.msra.mxu0 0.0
    %3129 = vmatprep.subr.mxu0 0.0
    %3130 = vmatpush1.msra.mxu0 0.0
    %3131 = vmatprep.subr.mxu0 0.0
    %3132 = vmatpush1.msra.mxu0 0.0
    %3133 = vmatprep.subr.mxu0 0.0
    %3134 = vmatpush1.msra.mxu0 0.0
    %3135 = vmatprep.subr.mxu0 0.0
    %3136 = vmatpush1.msra.mxu0 0.0
    %3137 = vmatprep.subr.mxu0 0.0
    %3138 = vmatpush1.msra.mxu0 0.0
    %3139 = vmatprep.subr.mxu0 0.0
    %3140 = vmatpush1.msra.mxu0 0.0
    %3141 = vmatprep.subr.mxu0 0.0
    %3142 = vmatpush1.msra.mxu0 0.0
    %3143 = vmatprep.mubr.f32.mxu0 0.0
    %3144 = vmatmul.mubr.f32.gmra.mrb[0].mxu0 %v2374
    %v3145 = vpop.f32.mrb[0].mxu0
    %v3146 = vadd.f32 %v3075, %v3145
    %v3147 = vpop.f32.mrb[0].mxu0
    %v3148 = vadd.f32 %v3077, %v3147
    %3149 = vdwg.mxu0
    %v3150 = vxor.u32 %v3004, 2147483648
    %v3151 = vmul.f32 %v3150, 1.442695
    %v3152 = vpow.pop %v3151
    %v3153 = vadd.f32 %v3152, 1.0
    %v3154 = vrcp.pop %v3153
    %v3155 = vmul.f32 1.0, %v3154
    %v3156 = vxor.u32 %v3006, 2147483648
    %v3157 = vmul.f32 %v3156, 1.442695
    %v3158 = vpow.pop %v3157
    %v3159 = vadd.f32 %v3158, 1.0
    %v3160 = vrcp.pop %v3159
    %v3161 = vmul.f32 1.0, %v3160
    %v3162 = vtanh.pop %v3146
    %v3163 = vxor.u32 %v3148, 2147483648
    %v3164 = vmul.f32 %v3163, 1.442695
    %v3165 = vpow.pop %v3164
    %v3166 = vadd.f32 %v3165, 1.0
    %v3167 = vrcp.pop %v3166
    %v3168 = vmul.f32 1.0, %v3167
    %v3169 = vmul.f32 %v3161, %v2372
    %v3170 = vmul.f32 %v3155, %v3162
    %v3171 = vadd.f32 %v3169, %v3170
    %v3172 = vtanh.pop %v3171
    %v3173 = vmul.f32 %v3168, %v3172
    %v3174 = vld [vmem:[%s8] sm:$0xff]
    %v3175 = vld [vmem:[%s8 + $0x8] sm:$0xff]
    %v3176 = vld [vmem:[%s8 + $0x10] sm:$0xff]
    %v3177 = vld [vmem:[%s8 + $0x18] sm:$0xff]
    %v3178 = vld [vmem:[%s8 + $0x20] sm:$0xff]
    %v3179 = vld [vmem:[%s8 + $0x28] sm:$0xff]
    %v3180 = vld [vmem:[%s8 + $0x30] sm:$0xff]
    %v3181 = vld [vmem:[%s8 + $0x38] sm:$0xff]
    %v3182 = vld [vmem:[%s8 + $0x40] sm:$0xff]
    %v3183 = vld [vmem:[%s8 + $0x48] sm:$0xff]
    %v3184 = vld [vmem:[%s8 + $0x50] sm:$0xff]
    %v3185 = vld [vmem:[%s8 + $0x58] sm:$0xff]
    %v3186 = vld [vmem:[%s8 + $0x60] sm:$0xff]
    %v3187 = vld [vmem:[%s8 + $0x68] sm:$0xff]
    %v3188 = vld [vmem:[%s8 + $0x70] sm:$0xff]
    %v3189 = vld [vmem:[%s8 + $0x78] sm:$0xff]
    %3190 = vmatprep.subr.mxu0 0.0
    %3191 = vmatpush1.msra.mxu0 %v3174
    %3192 = vmatprep.subr.mxu0 0.0
    %3193 = vmatpush1.msra.mxu0 %v3175
    %3194 = vmatprep.subr.mxu0 0.0
    %3195 = vmatpush1.msra.mxu0 %v3176
    %3196 = vmatprep.subr.mxu0 0.0
    %3197 = vmatpush1.msra.mxu0 %v3177
    %3198 = vmatprep.subr.mxu0 0.0
    %3199 = vmatpush1.msra.mxu0 %v3178
    %3200 = vmatprep.subr.mxu0 0.0
    %3201 = vmatpush1.msra.mxu0 %v3179
    %3202 = vmatprep.subr.mxu0 0.0
    %3203 = vmatpush1.msra.mxu0 %v3180
    %3204 = vmatprep.subr.mxu0 0.0
    %3205 = vmatpush1.msra.mxu0 %v3181
    %3206 = vmatprep.subr.mxu0 0.0
    %3207 = vmatpush1.msra.mxu0 %v3182
    %3208 = vmatprep.subr.mxu0 0.0
    %3209 = vmatpush1.msra.mxu0 %v3183
    %3210 = vmatprep.subr.mxu0 0.0
    %3211 = vmatpush1.msra.mxu0 %v3184
    %3212 = vmatprep.subr.mxu0 0.0
    %3213 = vmatpush1.msra.mxu0 %v3185
    %3214 = vmatprep.subr.mxu0 0.0
    %3215 = vmatpush1.msra.mxu0 %v3186
    %3216 = vmatprep.subr.mxu0 0.0
    %3217 = vmatpush1.msra.mxu0 %v3187
    %3218 = vmatprep.subr.mxu0 0.0
    %3219 = vmatpush1.msra.mxu0 %v3188
    %3220 = vmatprep.subr.mxu0 0.0
    %3221 = vmatpush1.msra.mxu0 %v3189
    %3222 = vmatprep.subr.mxu0 0.0
    %3223 = vmatpush1.msra.mxu0 0.0
    %3224 = vmatprep.subr.mxu0 0.0
    %3225 = vmatpush1.msra.mxu0 0.0
    %3226 = vmatprep.subr.mxu0 0.0
    %3227 = vmatpush1.msra.mxu0 0.0
    %3228 = vmatprep.subr.mxu0 0.0
    %3229 = vmatpush1.msra.mxu0 0.0
    %3230 = vmatprep.subr.mxu0 0.0
    %3231 = vmatpush1.msra.mxu0 0.0
    %3232 = vmatprep.subr.mxu0 0.0
    %3233 = vmatpush1.msra.mxu0 0.0
    %3234 = vmatprep.subr.mxu0 0.0
    %3235 = vmatpush1.msra.mxu0 0.0
    %3236 = vmatprep.subr.mxu0 0.0
    %3237 = vmatpush1.msra.mxu0 0.0
    %3238 = vmatprep.subr.mxu0 0.0
    %3239 = vmatpush1.msra.mxu0 0.0
    %3240 = vmatprep.subr.mxu0 0.0
    %3241 = vmatpush1.msra.mxu0 0.0
    %3242 = vmatprep.subr.mxu0 0.0
    %3243 = vmatpush1.msra.mxu0 0.0
    %3244 = vmatprep.subr.mxu0 0.0
    %3245 = vmatpush1.msra.mxu0 0.0
    %3246 = vmatprep.subr.mxu0 0.0
    %3247 = vmatpush1.msra.mxu0 0.0
    %3248 = vmatprep.subr.mxu0 0.0
    %3249 = vmatpush1.msra.mxu0 0.0
    %3250 = vmatprep.subr.mxu0 0.0
    %3251 = vmatpush1.msra.mxu0 0.0
    %3252 = vmatprep.subr.mxu0 0.0
    %3253 = vmatpush1.msra.mxu0 0.0
    %3254 = vmatprep.mubr.f32.mxu0 0.0
    %3255 = vmatmul.mubr.f32.gmra.mrb[0].mxu0 %v3173
    %v3256 = vpop.f32.mrb[0].mxu0
    %v3257 = vadd.f32 %v792, %v3256
    %v3258 = vpop.f32.mrb[0].mxu0
    %3259 = vdwg.mxu0
    %s3260 = scalar_lea.vmem %s10, 24
    %3261 = vst [vmem:[%s3260] sm:$0xff] %v3257
    %3262 = vmax.xlane.f32.xlu0 %v3257
    %v3263 = vpop.xlane.xlu0 %3262
    %vm3264 = vcmp.eq.f32.partialorder %v3257, %v3263
    %v3265 = vsel %vm3264, %v59, 128
    %v3266 = vand.u32 %v3265, 65535
    %v3267 = vshra.s32 %v3265, 16
    %v3268 = vcvt.s32.f32 %v3266
    %v3269 = vcvt.s32.f32 %v3267
    %3270 = vmin.xlane.f32.xlu0 %v3269
    %v3271 = vpop.xlane.xlu0 %3270
    %vm3272 = vcmp.eq.f32.partialorder %v3269, %v3271
    %v3273 = vsel %vm3272, %v3268, inf
    %3274 = vmin.xlane.f32.xlu0 %v3273
    %v3275 = vpop.xlane.xlu0 %3274
    %v3276 = vcvt.f32.s32 %v3275
    %v3277 = vcvt.f32.s32 %v3271
    %v3278 = vshll.u32 %v3277, 16
    %v3279 = vadd.s32 %v3278, %v3276
    %vm3280 = vcmp.eq.s32.totalorder %v59, %v3279
    %v3281 = vsel %vm3280, 1, 0
    %v3282 = vcvt.s32.f32 %v3281
    %s3283 = scalar_lea.vmem %s1, 32
    %v3284 = vld [vmem:[%s3283] sm:$0xff]
    %3285 = vset.pattern.permute.xlu0 0
    %3286 = vperm.xlu0 %3285, %v3284
    %v3287 = vpop.permute.xlu0 %3286
    %vm3288 = vcmp.eq.s32.totalorder %v59, %v3287
    %v3289 = vsel %vm3288, 1, 0
    %v3290 = vcvt.s32.f32 %v3289
    %s3291 = sld [smem:[#allocation2 + $0x4]]
    %p3292 = scmp.ne.s32.totalorder %s3291, 0
    %s3293 = scalar_select %p3292, 1, 0
    %s3294 = scvt.s32.f32 %s3293
    %v3295 = vstv %s3294
    %v3296 = vmul.f32 %v3295, %v3290
    %s3297 = ssub.f32 1.0, %s3294
    %v3298 = vstv %s3297
    %v3299 = vmul.f32 %v3298, %v3282
    %v3300 = vadd.f32 %v3296, %v3299
    %v3301 = vld [vmem:[%s5] sm:$0xff]
    %v3302 = vld [vmem:[%s5 + $0x8] sm:$0xff]
    %v3303 = vld [vmem:[%s5 + $0x10] sm:$0xff]
    %v3304 = vld [vmem:[%s5 + $0x18] sm:$0xff]
    %v3305 = vld [vmem:[%s5 + $0x20] sm:$0xff]
    %v3306 = vld [vmem:[%s5 + $0x28] sm:$0xff]
    %v3307 = vld [vmem:[%s5 + $0x30] sm:$0xff]
    %v3308 = vld [vmem:[%s5 + $0x38] sm:$0xff]
    %v3309 = vld [vmem:[%s5 + $0x40] sm:$0xff]
    %v3310 = vld [vmem:[%s5 + $0x48] sm:$0xff]
    %v3311 = vld [vmem:[%s5 + $0x50] sm:$0xff]
    %v3312 = vld [vmem:[%s5 + $0x58] sm:$0xff]
    %v3313 = vld [vmem:[%s5 + $0x60] sm:$0xff]
    %v3314 = vld [vmem:[%s5 + $0x68] sm:$0xff]
    %v3315 = vld [vmem:[%s5 + $0x70] sm:$0xff]
    %v3316 = vld [vmem:[%s5 + $0x78] sm:$0xff]
    %3317 = vmatprep.subr.mxu0 0.0
    %3318 = vmatpush1.msra.mxu0 %v3301
    %3319 = vmatprep.subr.mxu0 0.0
    %3320 = vmatpush1.msra.mxu0 %v3302
    %3321 = vmatprep.subr.mxu0 0.0
    %3322 = vmatpush1.msra.mxu0 %v3303
    %3323 = vmatprep.subr.mxu0 0.0
    %3324 = vmatpush1.msra.mxu0 %v3304
    %3325 = vmatprep.subr.mxu0 0.0
    %3326 = vmatpush1.msra.mxu0 %v3305
    %3327 = vmatprep.subr.mxu0 0.0
    %3328 = vmatpush1.msra.mxu0 %v3306
    %3329 = vmatprep.subr.mxu0 0.0
    %3330 = vmatpush1.msra.mxu0 %v3307
    %3331 = vmatprep.subr.mxu0 0.0
    %3332 = vmatpush1.msra.mxu0 %v3308
    %3333 = vmatprep.subr.mxu0 0.0
    %3334 = vmatpush1.msra.mxu0 %v3309
    %3335 = vmatprep.subr.mxu0 0.0
    %3336 = vmatpush1.msra.mxu0 %v3310
    %3337 = vmatprep.subr.mxu0 0.0
    %3338 = vmatpush1.msra.mxu0 %v3311
    %3339 = vmatprep.subr.mxu0 0.0
    %3340 = vmatpush1.msra.mxu0 %v3312
    %3341 = vmatprep.subr.mxu0 0.0
    %3342 = vmatpush1.msra.mxu0 %v3313
    %3343 = vmatprep.subr.mxu0 0.0
    %3344 = vmatpush1.msra.mxu0 %v3314
    %3345 = vmatprep.subr.mxu0 0.0
    %3346 = vmatpush1.msra.mxu0 %v3315
    %3347 = vmatprep.subr.mxu0 0.0
    %3348 = vmatpush1.msra.mxu0 %v3316
    %3349 = vmatprep.subr.mxu0 0.0
    %3350 = vmatpush1.msra.mxu0 0.0
    %3351 = vmatprep.subr.mxu0 0.0
    %3352 = vmatpush1.msra.mxu0 0.0
    %3353 = vmatprep.subr.mxu0 0.0
    %3354 = vmatpush1.msra.mxu0 0.0
    %3355 = vmatprep.subr.mxu0 0.0
    %3356 = vmatpush1.msra.mxu0 0.0
    %3357 = vmatprep.subr.mxu0 0.0
    %3358 = vmatpush1.msra.mxu0 0.0
    %3359 = vmatprep.subr.mxu0 0.0
    %3360 = vmatpush1.msra.mxu0 0.0
    %3361 = vmatprep.subr.mxu0 0.0
    %3362 = vmatpush1.msra.mxu0 0.0
    %3363 = vmatprep.subr.mxu0 0.0
    %3364 = vmatpush1.msra.mxu0 0.0
    %3365 = vmatprep.subr.mxu0 0.0
    %3366 = vmatpush1.msra.mxu0 0.0
    %3367 = vmatprep.subr.mxu0 0.0
    %3368 = vmatpush1.msra.mxu0 0.0
    %3369 = vmatprep.subr.mxu0 0.0
    %3370 = vmatpush1.msra.mxu0 0.0
    %3371 = vmatprep.subr.mxu0 0.0
    %3372 = vmatpush1.msra.mxu0 0.0
    %3373 = vmatprep.subr.mxu0 0.0
    %3374 = vmatpush1.msra.mxu0 0.0
    %3375 = vmatprep.subr.mxu0 0.0
    %3376 = vmatpush1.msra.mxu0 0.0
    %3377 = vmatprep.subr.mxu0 0.0
    %3378 = vmatpush1.msra.mxu0 0.0
    %3379 = vmatprep.subr.mxu0 0.0
    %3380 = vmatpush1.msra.mxu0 0.0
    %3381 = vmatprep.mubr.f32.mxu0 0.0
    %3382 = vmatmul.mubr.f32.gmra.mrb[0].mxu0 %v3300
    %v3383 = vpop.f32.mrb[0].mxu0
    %v3384 = vadd.f32 0.0, %v3383
    %v3385 = vpop.f32.mrb[0].mxu0
    %3386 = vdwg.mxu0
    %v3387 = vmul.f32 %v48, %v3173
    %v3388 = vmul.f32 %v49, %v3173
    %v3389 = vmul.f32 %v50, %v3173
    %v3390 = vmul.f32 %v51, %v3173
    %v3391 = vmul.f32 %v52, %v3173
    %v3392 = vmul.f32 %v53, %v3173
    %v3393 = vmul.f32 %v54, %v3173
    %v3394 = vmul.f32 %v55, %v3173
    %3395 = vadd.xlane.f32.xlu0 %v3387
    %v3396 = vpop.xlane.xlu0 %3395
    %3397 = vadd.xlane.f32.xlu0 %v3388
    %v3398 = vpop.xlane.xlu0 %3397
    %3399 = vadd.xlane.f32.xlu0 %v3389
    %v3400 = vpop.xlane.xlu0 %3399
    %3401 = vadd.xlane.f32.xlu0 %v3390
    %v3402 = vpop.xlane.xlu0 %3401
    %3403 = vadd.xlane.f32.xlu0 %v3391
    %v3404 = vpop.xlane.xlu0 %3403
    %3405 = vadd.xlane.f32.xlu0 %v3392
    %v3406 = vpop.xlane.xlu0 %3405
    %3407 = vadd.xlane.f32.xlu0 %v3393
    %v3408 = vpop.xlane.xlu0 %3407
    %3409 = vadd.xlane.f32.xlu0 %v3394
    %v3410 = vpop.xlane.xlu0 %3409
    %v3411 = vmax.f32 %v3396, %v3404
    %v3412 = vmax.f32 %v3398, %v3406
    %v3413 = vmax.f32 %v3400, %v3408
    %v3414 = vmax.f32 %v3402, %v3410
    %v3415 = vmax.f32 %v3411, %v3412
    %v3416 = vmax.f32 %v3413, %v3414
    %v3417 = vmax.f32 %v3415, %v3416
    %v3418 = vsub.f32 %v3396, %v3417
    %v3419 = vsub.f32 %v3398, %v3417
    %v3420 = vsub.f32 %v3400, %v3417
    %v3421 = vsub.f32 %v3402, %v3417
    %v3422 = vsub.f32 %v3404, %v3417
    %v3423 = vsub.f32 %v3406, %v3417
    %v3424 = vsub.f32 %v3408, %v3417
    %v3425 = vsub.f32 %v3410, %v3417
    %v3426 = vmul.f32 %v3418, 1.442695
    %v3427 = vpow.pop %v3426
    %v3428 = vmul.f32 %v3419, 1.442695
    %v3429 = vpow.pop %v3428
    %v3430 = vmul.f32 %v3420, 1.442695
    %v3431 = vpow.pop %v3430
    %v3432 = vmul.f32 %v3421, 1.442695
    %v3433 = vpow.pop %v3432
    %v3434 = vmul.f32 %v3422, 1.442695
    %v3435 = vpow.pop %v3434
    %v3436 = vmul.f32 %v3423, 1.442695
    %v3437 = vpow.pop %v3436
    %v3438 = vmul.f32 %v3424, 1.442695
    %v3439 = vpow.pop %v3438
    %v3440 = vmul.f32 %v3425, 1.442695
    %v3441 = vpow.pop %v3440
    %v3442 = vadd.f32 %v3427, %v3429
    %v3443 = vadd.f32 %v3442, %v3431
    %v3444 = vadd.f32 %v3443, %v3433
    %v3445 = vadd.f32 %v3444, %v3435
    %v3446 = vadd.f32 %v3445, %v3437
    %v3447 = vadd.f32 %v3446, %v3439
    %v3448 = vadd.f32 %v3447, %v3441
    %v3449 = vrcp.pop %v3448
    %v3450 = vmul.f32 %v3427, %v3449
    %v3451 = vmul.f32 %v3429, %v3449
    %v3452 = vmul.f32 %v3431, %v3449
    %v3453 = vmul.f32 %v3433, %v3449
    %v3454 = vmul.f32 %v3435, %v3449
    %v3455 = vmul.f32 %v3437, %v3449
    %v3456 = vmul.f32 %v3439, %v3449
    %v3457 = vmul.f32 %v3441, %v3449
    %v3458 = vmul.f32 %v3450, %v48
    %v3459 = vmul.f32 %v3451, %v49
    %v3460 = vmul.f32 %v3452, %v50
    %v3461 = vmul.f32 %v3453, %v51
    %v3462 = vmul.f32 %v3454, %v52
    %v3463 = vmul.f32 %v3455, %v53
    %v3464 = vmul.f32 %v3456, %v54
    %v3465 = vmul.f32 %v3457, %v55
    %v3466 = vadd.f32 %v3458, %v3459
    %v3467 = vadd.f32 %v3466, %v3460
    %v3468 = vadd.f32 %v3467, %v3461
    %v3469 = vadd.f32 %v3468, %v3462
    %v3470 = vadd.f32 %v3469, %v3463
    %v3471 = vadd.f32 %v3470, %v3464
    %v3472 = vadd.f32 %v3471, %v3465
    %v3473 = vld [vmem:[%s6] sm:$0xff]
    %v3474 = vld [vmem:[%s6 + $0x8] sm:$0xff]
    %v3475 = vld [vmem:[%s6 + $0x10] sm:$0xff]
    %v3476 = vld [vmem:[%s6 + $0x18] sm:$0xff]
    %v3477 = vld [vmem:[%s6 + $0x20] sm:$0xff]
    %v3478 = vld [vmem:[%s6 + $0x28] sm:$0xff]
    %v3479 = vld [vmem:[%s6 + $0x30] sm:$0xff]
    %v3480 = vld [vmem:[%s6 + $0x38] sm:$0xff]
    %v3481 = vld [vmem:[%s6 + $0x40] sm:$0xff]
    %v3482 = vld [vmem:[%s6 + $0x48] sm:$0xff]
    %v3483 = vld [vmem:[%s6 + $0x50] sm:$0xff]
    %v3484 = vld [vmem:[%s6 + $0x58] sm:$0xff]
    %v3485 = vld [vmem:[%s6 + $0x60] sm:$0xff]
    %v3486 = vld [vmem:[%s6 + $0x68] sm:$0xff]
    %v3487 = vld [vmem:[%s6 + $0x70] sm:$0xff]
    %v3488 = vld [vmem:[%s6 + $0x78] sm:$0xff]
    %v3489 = vld [vmem:[%s6 + $0x80] sm:$0xff]
    %v3490 = vld [vmem:[%s6 + $0x88] sm:$0xff]
    %v3491 = vld [vmem:[%s6 + $0x90] sm:$0xff]
    %v3492 = vld [vmem:[%s6 + $0x98] sm:$0xff]
    %v3493 = vld [vmem:[%s6 + $0xa0] sm:$0xff]
    %v3494 = vld [vmem:[%s6 + $0xa8] sm:$0xff]
    %v3495 = vld [vmem:[%s6 + $0xb0] sm:$0xff]
    %v3496 = vld [vmem:[%s6 + $0xb8] sm:$0xff]
    %v3497 = vld [vmem:[%s6 + $0xc0] sm:$0xff]
    %v3498 = vld [vmem:[%s6 + $0xc8] sm:$0xff]
    %v3499 = vld [vmem:[%s6 + $0xd0] sm:$0xff]
    %v3500 = vld [vmem:[%s6 + $0xd8] sm:$0xff]
    %v3501 = vld [vmem:[%s6 + $0xe0] sm:$0xff]
    %v3502 = vld [vmem:[%s6 + $0xe8] sm:$0xff]
    %v3503 = vld [vmem:[%s6 + $0xf0] sm:$0xff]
    %v3504 = vld [vmem:[%s6 + $0xf8] sm:$0xff]
    %v3505 = vld [vmem:[%s6 + $0x100] sm:$0xff]
    %v3506 = vld [vmem:[%s6 + $0x108] sm:$0xff]
    %v3507 = vld [vmem:[%s6 + $0x110] sm:$0xff]
    %v3508 = vld [vmem:[%s6 + $0x118] sm:$0xff]
    %v3509 = vld [vmem:[%s6 + $0x120] sm:$0xff]
    %v3510 = vld [vmem:[%s6 + $0x128] sm:$0xff]
    %v3511 = vld [vmem:[%s6 + $0x130] sm:$0xff]
    %v3512 = vld [vmem:[%s6 + $0x138] sm:$0xff]
    %v3513 = vld [vmem:[%s6 + $0x140] sm:$0xff]
    %v3514 = vld [vmem:[%s6 + $0x148] sm:$0xff]
    %v3515 = vld [vmem:[%s6 + $0x150] sm:$0xff]
    %v3516 = vld [vmem:[%s6 + $0x158] sm:$0xff]
    %v3517 = vld [vmem:[%s6 + $0x160] sm:$0xff]
    %v3518 = vld [vmem:[%s6 + $0x168] sm:$0xff]
    %v3519 = vld [vmem:[%s6 + $0x170] sm:$0xff]
    %v3520 = vld [vmem:[%s6 + $0x178] sm:$0xff]
    %v3521 = vld [vmem:[%s6 + $0x180] sm:$0xff]
    %v3522 = vld [vmem:[%s6 + $0x188] sm:$0xff]
    %v3523 = vld [vmem:[%s6 + $0x190] sm:$0xff]
    %v3524 = vld [vmem:[%s6 + $0x198] sm:$0xff]
    %v3525 = vld [vmem:[%s6 + $0x1a0] sm:$0xff]
    %v3526 = vld [vmem:[%s6 + $0x1a8] sm:$0xff]
    %v3527 = vld [vmem:[%s6 + $0x1b0] sm:$0xff]
    %v3528 = vld [vmem:[%s6 + $0x1b8] sm:$0xff]
    %v3529 = vld [vmem:[%s6 + $0x1c0] sm:$0xff]
    %v3530 = vld [vmem:[%s6 + $0x1c8] sm:$0xff]
    %v3531 = vld [vmem:[%s6 + $0x1d0] sm:$0xff]
    %v3532 = vld [vmem:[%s6 + $0x1d8] sm:$0xff]
    %v3533 = vld [vmem:[%s6 + $0x1e0] sm:$0xff]
    %v3534 = vld [vmem:[%s6 + $0x1e8] sm:$0xff]
    %v3535 = vld [vmem:[%s6 + $0x1f0] sm:$0xff]
    %v3536 = vld [vmem:[%s6 + $0x1f8] sm:$0xff]
    %v3537 = vld [vmem:[%s6 + $0x200] sm:$0xff]
    %v3538 = vld [vmem:[%s6 + $0x208] sm:$0xff]
    %v3539 = vld [vmem:[%s6 + $0x210] sm:$0xff]
    %v3540 = vld [vmem:[%s6 + $0x218] sm:$0xff]
    %v3541 = vld [vmem:[%s6 + $0x220] sm:$0xff]
    %v3542 = vld [vmem:[%s6 + $0x228] sm:$0xff]
    %v3543 = vld [vmem:[%s6 + $0x230] sm:$0xff]
    %v3544 = vld [vmem:[%s6 + $0x238] sm:$0xff]
    %v3545 = vld [vmem:[%s6 + $0x240] sm:$0xff]
    %v3546 = vld [vmem:[%s6 + $0x248] sm:$0xff]
    %v3547 = vld [vmem:[%s6 + $0x250] sm:$0xff]
    %v3548 = vld [vmem:[%s6 + $0x258] sm:$0xff]
    %v3549 = vld [vmem:[%s6 + $0x260] sm:$0xff]
    %v3550 = vld [vmem:[%s6 + $0x268] sm:$0xff]
    %v3551 = vld [vmem:[%s6 + $0x270] sm:$0xff]
    %v3552 = vld [vmem:[%s6 + $0x278] sm:$0xff]
    %v3553 = vld [vmem:[%s6 + $0x280] sm:$0xff]
    %v3554 = vld [vmem:[%s6 + $0x288] sm:$0xff]
    %v3555 = vld [vmem:[%s6 + $0x290] sm:$0xff]
    %v3556 = vld [vmem:[%s6 + $0x298] sm:$0xff]
    %v3557 = vld [vmem:[%s6 + $0x2a0] sm:$0xff]
    %v3558 = vld [vmem:[%s6 + $0x2a8] sm:$0xff]
    %v3559 = vld [vmem:[%s6 + $0x2b0] sm:$0xff]
    %v3560 = vld [vmem:[%s6 + $0x2b8] sm:$0xff]
    %v3561 = vld [vmem:[%s6 + $0x2c0] sm:$0xff]
    %v3562 = vld [vmem:[%s6 + $0x2c8] sm:$0xff]
    %v3563 = vld [vmem:[%s6 + $0x2d0] sm:$0xff]
    %v3564 = vld [vmem:[%s6 + $0x2d8] sm:$0xff]
    %v3565 = vld [vmem:[%s6 + $0x2e0] sm:$0xff]
    %v3566 = vld [vmem:[%s6 + $0x2e8] sm:$0xff]
    %v3567 = vld [vmem:[%s6 + $0x2f0] sm:$0xff]
    %v3568 = vld [vmem:[%s6 + $0x2f8] sm:$0xff]
    %v3569 = vld [vmem:[%s6 + $0x300] sm:$0xff]
    %v3570 = vld [vmem:[%s6 + $0x308] sm:$0xff]
    %v3571 = vld [vmem:[%s6 + $0x310] sm:$0xff]
    %v3572 = vld [vmem:[%s6 + $0x318] sm:$0xff]
    %v3573 = vld [vmem:[%s6 + $0x320] sm:$0xff]
    %v3574 = vld [vmem:[%s6 + $0x328] sm:$0xff]
    %v3575 = vld [vmem:[%s6 + $0x330] sm:$0xff]
    %v3576 = vld [vmem:[%s6 + $0x338] sm:$0xff]
    %v3577 = vld [vmem:[%s6 + $0x340] sm:$0xff]
    %v3578 = vld [vmem:[%s6 + $0x348] sm:$0xff]
    %v3579 = vld [vmem:[%s6 + $0x350] sm:$0xff]
    %v3580 = vld [vmem:[%s6 + $0x358] sm:$0xff]
    %v3581 = vld [vmem:[%s6 + $0x360] sm:$0xff]
    %v3582 = vld [vmem:[%s6 + $0x368] sm:$0xff]
    %v3583 = vld [vmem:[%s6 + $0x370] sm:$0xff]
    %v3584 = vld [vmem:[%s6 + $0x378] sm:$0xff]
    %v3585 = vld [vmem:[%s6 + $0x380] sm:$0xff]
    %v3586 = vld [vmem:[%s6 + $0x388] sm:$0xff]
    %v3587 = vld [vmem:[%s6 + $0x390] sm:$0xff]
    %v3588 = vld [vmem:[%s6 + $0x398] sm:$0xff]
    %v3589 = vld [vmem:[%s6 + $0x3a0] sm:$0xff]
    %v3590 = vld [vmem:[%s6 + $0x3a8] sm:$0xff]
    %v3591 = vld [vmem:[%s6 + $0x3b0] sm:$0xff]
    %v3592 = vld [vmem:[%s6 + $0x3b8] sm:$0xff]
    %v3593 = vld [vmem:[%s6 + $0x3c0] sm:$0xff]
    %v3594 = vld [vmem:[%s6 + $0x3c8] sm:$0xff]
    %v3595 = vld [vmem:[%s6 + $0x3d0] sm:$0xff]
    %v3596 = vld [vmem:[%s6 + $0x3d8] sm:$0xff]
    %v3597 = vld [vmem:[%s6 + $0x3e0] sm:$0xff]
    %v3598 = vld [vmem:[%s6 + $0x3e8] sm:$0xff]
    %v3599 = vld [vmem:[%s6 + $0x3f0] sm:$0xff]
    %v3600 = vld [vmem:[%s6 + $0x3f8] sm:$0xff]
    %v3601 = vld [vmem:[%s6 + $0x400] sm:$0xff]
    %v3602 = vld [vmem:[%s6 + $0x408] sm:$0xff]
    %v3603 = vld [vmem:[%s6 + $0x410] sm:$0xff]
    %v3604 = vld [vmem:[%s6 + $0x418] sm:$0xff]
    %v3605 = vld [vmem:[%s6 + $0x420] sm:$0xff]
    %v3606 = vld [vmem:[%s6 + $0x428] sm:$0xff]
    %v3607 = vld [vmem:[%s6 + $0x430] sm:$0xff]
    %v3608 = vld [vmem:[%s6 + $0x438] sm:$0xff]
    %v3609 = vld [vmem:[%s6 + $0x440] sm:$0xff]
    %v3610 = vld [vmem:[%s6 + $0x448] sm:$0xff]
    %v3611 = vld [vmem:[%s6 + $0x450] sm:$0xff]
    %v3612 = vld [vmem:[%s6 + $0x458] sm:$0xff]
    %v3613 = vld [vmem:[%s6 + $0x460] sm:$0xff]
    %v3614 = vld [vmem:[%s6 + $0x468] sm:$0xff]
    %v3615 = vld [vmem:[%s6 + $0x470] sm:$0xff]
    %v3616 = vld [vmem:[%s6 + $0x478] sm:$0xff]
    %v3617 = vld [vmem:[%s6 + $0x480] sm:$0xff]
    %v3618 = vld [vmem:[%s6 + $0x488] sm:$0xff]
    %v3619 = vld [vmem:[%s6 + $0x490] sm:$0xff]
    %v3620 = vld [vmem:[%s6 + $0x498] sm:$0xff]
    %v3621 = vld [vmem:[%s6 + $0x4a0] sm:$0xff]
    %v3622 = vld [vmem:[%s6 + $0x4a8] sm:$0xff]
    %v3623 = vld [vmem:[%s6 + $0x4b0] sm:$0xff]
    %v3624 = vld [vmem:[%s6 + $0x4b8] sm:$0xff]
    %v3625 = vld [vmem:[%s6 + $0x4c0] sm:$0xff]
    %v3626 = vld [vmem:[%s6 + $0x4c8] sm:$0xff]
    %v3627 = vld [vmem:[%s6 + $0x4d0] sm:$0xff]
    %v3628 = vld [vmem:[%s6 + $0x4d8] sm:$0xff]
    %v3629 = vld [vmem:[%s6 + $0x4e0] sm:$0xff]
    %v3630 = vld [vmem:[%s6 + $0x4e8] sm:$0xff]
    %v3631 = vld [vmem:[%s6 + $0x4f0] sm:$0xff]
    %v3632 = vld [vmem:[%s6 + $0x4f8] sm:$0xff]
    %v3633 = vld [vmem:[%s6 + $0x500] sm:$0xff]
    %v3634 = vld [vmem:[%s6 + $0x508] sm:$0xff]
    %v3635 = vld [vmem:[%s6 + $0x510] sm:$0xff]
    %v3636 = vld [vmem:[%s6 + $0x518] sm:$0xff]
    %v3637 = vld [vmem:[%s6 + $0x520] sm:$0xff]
    %v3638 = vld [vmem:[%s6 + $0x528] sm:$0xff]
    %v3639 = vld [vmem:[%s6 + $0x530] sm:$0xff]
    %v3640 = vld [vmem:[%s6 + $0x538] sm:$0xff]
    %v3641 = vld [vmem:[%s6 + $0x540] sm:$0xff]
    %v3642 = vld [vmem:[%s6 + $0x548] sm:$0xff]
    %v3643 = vld [vmem:[%s6 + $0x550] sm:$0xff]
    %v3644 = vld [vmem:[%s6 + $0x558] sm:$0xff]
    %v3645 = vld [vmem:[%s6 + $0x560] sm:$0xff]
    %v3646 = vld [vmem:[%s6 + $0x568] sm:$0xff]
    %v3647 = vld [vmem:[%s6 + $0x570] sm:$0xff]
    %v3648 = vld [vmem:[%s6 + $0x578] sm:$0xff]
    %v3649 = vld [vmem:[%s6 + $0x580] sm:$0xff]
    %v3650 = vld [vmem:[%s6 + $0x588] sm:$0xff]
    %v3651 = vld [vmem:[%s6 + $0x590] sm:$0xff]
    %v3652 = vld [vmem:[%s6 + $0x598] sm:$0xff]
    %v3653 = vld [vmem:[%s6 + $0x5a0] sm:$0xff]
    %v3654 = vld [vmem:[%s6 + $0x5a8] sm:$0xff]
    %v3655 = vld [vmem:[%s6 + $0x5b0] sm:$0xff]
    %v3656 = vld [vmem:[%s6 + $0x5b8] sm:$0xff]
    %v3657 = vld [vmem:[%s6 + $0x5c0] sm:$0xff]
    %v3658 = vld [vmem:[%s6 + $0x5c8] sm:$0xff]
    %v3659 = vld [vmem:[%s6 + $0x5d0] sm:$0xff]
    %v3660 = vld [vmem:[%s6 + $0x5d8] sm:$0xff]
    %v3661 = vld [vmem:[%s6 + $0x5e0] sm:$0xff]
    %v3662 = vld [vmem:[%s6 + $0x5e8] sm:$0xff]
    %v3663 = vld [vmem:[%s6 + $0x5f0] sm:$0xff]
    %v3664 = vld [vmem:[%s6 + $0x5f8] sm:$0xff]
    %3665 = vmatprep.subr.mxu0 %v3474
    %3666 = vmatpush1.msra.mxu0 %v3473
    %3667 = vmatprep.subr.mxu0 %v3478
    %3668 = vmatpush1.msra.mxu0 %v3477
    %3669 = vmatprep.subr.mxu0 %v3482
    %3670 = vmatpush1.msra.mxu0 %v3481
    %3671 = vmatprep.subr.mxu0 %v3486
    %3672 = vmatpush1.msra.mxu0 %v3485
    %3673 = vmatprep.subr.mxu0 %v3490
    %3674 = vmatpush1.msra.mxu0 %v3489
    %3675 = vmatprep.subr.mxu0 %v3494
    %3676 = vmatpush1.msra.mxu0 %v3493
    %3677 = vmatprep.subr.mxu0 %v3498
    %3678 = vmatpush1.msra.mxu0 %v3497
    %3679 = vmatprep.subr.mxu0 %v3502
    %3680 = vmatpush1.msra.mxu0 %v3501
    %3681 = vmatprep.subr.mxu0 %v3506
    %3682 = vmatpush1.msra.mxu0 %v3505
    %3683 = vmatprep.subr.mxu0 %v3510
    %3684 = vmatpush1.msra.mxu0 %v3509
    %3685 = vmatprep.subr.mxu0 %v3514
    %3686 = vmatpush1.msra.mxu0 %v3513
    %3687 = vmatprep.subr.mxu0 %v3518
    %3688 = vmatpush1.msra.mxu0 %v3517
    %3689 = vmatprep.subr.mxu0 %v3522
    %3690 = vmatpush1.msra.mxu0 %v3521
    %3691 = vmatprep.subr.mxu0 %v3526
    %3692 = vmatpush1.msra.mxu0 %v3525
    %3693 = vmatprep.subr.mxu0 %v3530
    %3694 = vmatpush1.msra.mxu0 %v3529
    %3695 = vmatprep.subr.mxu0 %v3534
    %3696 = vmatpush1.msra.mxu0 %v3533
    %3697 = vmatprep.subr.mxu0 %v3538
    %3698 = vmatpush1.msra.mxu0 %v3537
    %3699 = vmatprep.subr.mxu0 %v3542
    %3700 = vmatpush1.msra.mxu0 %v3541
    %3701 = vmatprep.subr.mxu0 %v3546
    %3702 = vmatpush1.msra.mxu0 %v3545
    %3703 = vmatprep.subr.mxu0 %v3550
    %3704 = vmatpush1.msra.mxu0 %v3549
    %3705 = vmatprep.subr.mxu0 %v3554
    %3706 = vmatpush1.msra.mxu0 %v3553
    %3707 = vmatprep.subr.mxu0 %v3558
    %3708 = vmatpush1.msra.mxu0 %v3557
    %3709 = vmatprep.subr.mxu0 %v3562
    %3710 = vmatpush1.msra.mxu0 %v3561
    %3711 = vmatprep.subr.mxu0 %v3566
    %3712 = vmatpush1.msra.mxu0 %v3565
    %3713 = vmatprep.subr.mxu0 %v3570
    %3714 = vmatpush1.msra.mxu0 %v3569
    %3715 = vmatprep.subr.mxu0 %v3574
    %3716 = vmatpush1.msra.mxu0 %v3573
    %3717 = vmatprep.subr.mxu0 %v3578
    %3718 = vmatpush1.msra.mxu0 %v3577
    %3719 = vmatprep.subr.mxu0 %v3582
    %3720 = vmatpush1.msra.mxu0 %v3581
    %3721 = vmatprep.subr.mxu0 %v3586
    %3722 = vmatpush1.msra.mxu0 %v3585
    %3723 = vmatprep.subr.mxu0 %v3590
    %3724 = vmatpush1.msra.mxu0 %v3589
    %3725 = vmatprep.subr.mxu0 %v3594
    %3726 = vmatpush1.msra.mxu0 %v3593
    %3727 = vmatprep.subr.mxu0 %v3598
    %3728 = vmatpush1.msra.mxu0 %v3597
    %3729 = vmatprep.mubr.f32.mxu0 %v3472
    %3730 = vmatmul.mubr.f32.gmra.mrb[0].mxu0 %v3384
    %v3731 = vpop.f32.mrb[0].mxu0
    %v3732 = vadd.f32 %v447, %v3731
    %v3733 = vpop.f32.mrb[0].mxu0
    %v3734 = vadd.f32 %v451, %v3733
    %3735 = vdwg.mxu0
    %3736 = vmatprep.subr.mxu0 %v3602
    %3737 = vmatpush1.msra.mxu0 %v3601
    %3738 = vmatprep.subr.mxu0 %v3606
    %3739 = vmatpush1.msra.mxu0 %v3605
    %3740 = vmatprep.subr.mxu0 %v3610
    %3741 = vmatpush1.msra.mxu0 %v3609
    %3742 = vmatprep.subr.mxu0 %v3614
    %3743 = vmatpush1.msra.mxu0 %v3613
    %3744 = vmatprep.subr.mxu0 %v3618
    %3745 = vmatpush1.msra.mxu0 %v3617
    %3746 = vmatprep.subr.mxu0 %v3622
    %3747 = vmatpush1.msra.mxu0 %v3621
    %3748 = vmatprep.subr.mxu0 %v3626
    %3749 = vmatpush1.msra.mxu0 %v3625
    %3750 = vmatprep.subr.mxu0 %v3630
    %3751 = vmatpush1.msra.mxu0 %v3629
    %3752 = vmatprep.subr.mxu0 %v3634
    %3753 = vmatpush1.msra.mxu0 %v3633
    %3754 = vmatprep.subr.mxu0 %v3638
    %3755 = vmatpush1.msra.mxu0 %v3637
    %3756 = vmatprep.subr.mxu0 %v3642
    %3757 = vmatpush1.msra.mxu0 %v3641
    %3758 = vmatprep.subr.mxu0 %v3646
    %3759 = vmatpush1.msra.mxu0 %v3645
    %3760 = vmatprep.subr.mxu0 %v3650
    %3761 = vmatpush1.msra.mxu0 %v3649
    %3762 = vmatprep.subr.mxu0 %v3654
    %3763 = vmatpush1.msra.mxu0 %v3653
    %3764 = vmatprep.subr.mxu0 %v3658
    %3765 = vmatpush1.msra.mxu0 %v3657
    %3766 = vmatprep.subr.mxu0 %v3662
    %3767 = vmatpush1.msra.mxu0 %v3661
    %3768 = vmatprep.subr.mxu0 0.0
    %3769 = vmatpush1.msra.mxu0 0.0
    %3770 = vmatprep.subr.mxu0 0.0
    %3771 = vmatpush1.msra.mxu0 0.0
    %3772 = vmatprep.subr.mxu0 0.0
    %3773 = vmatpush1.msra.mxu0 0.0
    %3774 = vmatprep.subr.mxu0 0.0
    %3775 = vmatpush1.msra.mxu0 0.0
    %3776 = vmatprep.subr.mxu0 0.0
    %3777 = vmatpush1.msra.mxu0 0.0
    %3778 = vmatprep.subr.mxu0 0.0
    %3779 = vmatpush1.msra.mxu0 0.0
    %3780 = vmatprep.subr.mxu0 0.0
    %3781 = vmatpush1.msra.mxu0 0.0
    %3782 = vmatprep.subr.mxu0 0.0
    %3783 = vmatpush1.msra.mxu0 0.0
    %3784 = vmatprep.subr.mxu0 0.0
    %3785 = vmatpush1.msra.mxu0 0.0
    %3786 = vmatprep.subr.mxu0 0.0
    %3787 = vmatpush1.msra.mxu0 0.0
    %3788 = vmatprep.subr.mxu0 0.0
    %3789 = vmatpush1.msra.mxu0 0.0
    %3790 = vmatprep.subr.mxu0 0.0
    %3791 = vmatpush1.msra.mxu0 0.0
    %3792 = vmatprep.subr.mxu0 0.0
    %3793 = vmatpush1.msra.mxu0 0.0
    %3794 = vmatprep.subr.mxu0 0.0
    %3795 = vmatpush1.msra.mxu0 0.0
    %3796 = vmatprep.subr.mxu0 0.0
    %3797 = vmatpush1.msra.mxu0 0.0
    %3798 = vmatprep.subr.mxu0 0.0
    %3799 = vmatpush1.msra.mxu0 0.0
    %3800 = vmatprep.mubr.f32.mxu0 0.0
    %3801 = vmatmul.mubr.f32.gmra.mrb[0].mxu0 %v3173
    %v3802 = vpop.f32.mrb[0].mxu0
    %v3803 = vadd.f32 %v3732, %v3802
    %v3804 = vpop.f32.mrb[0].mxu0
    %v3805 = vadd.f32 %v3734, %v3804
    %3806 = vdwg.mxu0
    %3807 = vmatprep.subr.mxu0 %v3476
    %3808 = vmatpush1.msra.mxu0 %v3475
    %3809 = vmatprep.subr.mxu0 %v3480
    %3810 = vmatpush1.msra.mxu0 %v3479
    %3811 = vmatprep.subr.mxu0 %v3484
    %3812 = vmatpush1.msra.mxu0 %v3483
    %3813 = vmatprep.subr.mxu0 %v3488
    %3814 = vmatpush1.msra.mxu0 %v3487
    %3815 = vmatprep.subr.mxu0 %v3492
    %3816 = vmatpush1.msra.mxu0 %v3491
    %3817 = vmatprep.subr.mxu0 %v3496
    %3818 = vmatpush1.msra.mxu0 %v3495
    %3819 = vmatprep.subr.mxu0 %v3500
    %3820 = vmatpush1.msra.mxu0 %v3499
    %3821 = vmatprep.subr.mxu0 %v3504
    %3822 = vmatpush1.msra.mxu0 %v3503
    %3823 = vmatprep.subr.mxu0 %v3508
    %3824 = vmatpush1.msra.mxu0 %v3507
    %3825 = vmatprep.subr.mxu0 %v3512
    %3826 = vmatpush1.msra.mxu0 %v3511
    %3827 = vmatprep.subr.mxu0 %v3516
    %3828 = vmatpush1.msra.mxu0 %v3515
    %3829 = vmatprep.subr.mxu0 %v3520
    %3830 = vmatpush1.msra.mxu0 %v3519
    %3831 = vmatprep.subr.mxu0 %v3524
    %3832 = vmatpush1.msra.mxu0 %v3523
    %3833 = vmatprep.subr.mxu0 %v3528
    %3834 = vmatpush1.msra.mxu0 %v3527
    %3835 = vmatprep.subr.mxu0 %v3532
    %3836 = vmatpush1.msra.mxu0 %v3531
    %3837 = vmatprep.subr.mxu0 %v3536
    %3838 = vmatpush1.msra.mxu0 %v3535
    %3839 = vmatprep.subr.mxu0 %v3540
    %3840 = vmatpush1.msra.mxu0 %v3539
    %3841 = vmatprep.subr.mxu0 %v3544
    %3842 = vmatpush1.msra.mxu0 %v3543
    %3843 = vmatprep.subr.mxu0 %v3548
    %3844 = vmatpush1.msra.mxu0 %v3547
    %3845 = vmatprep.subr.mxu0 %v3552
    %3846 = vmatpush1.msra.mxu0 %v3551
    %3847 = vmatprep.subr.mxu0 %v3556
    %3848 = vmatpush1.msra.mxu0 %v3555
    %3849 = vmatprep.subr.mxu0 %v3560
    %3850 = vmatpush1.msra.mxu0 %v3559
    %3851 = vmatprep.subr.mxu0 %v3564
    %3852 = vmatpush1.msra.mxu0 %v3563
    %3853 = vmatprep.subr.mxu0 %v3568
    %3854 = vmatpush1.msra.mxu0 %v3567
    %3855 = vmatprep.subr.mxu0 %v3572
    %3856 = vmatpush1.msra.mxu0 %v3571
    %3857 = vmatprep.subr.mxu0 %v3576
    %3858 = vmatpush1.msra.mxu0 %v3575
    %3859 = vmatprep.subr.mxu0 %v3580
    %3860 = vmatpush1.msra.mxu0 %v3579
    %3861 = vmatprep.subr.mxu0 %v3584
    %3862 = vmatpush1.msra.mxu0 %v3583
    %3863 = vmatprep.subr.mxu0 %v3588
    %3864 = vmatpush1.msra.mxu0 %v3587
    %3865 = vmatprep.subr.mxu0 %v3592
    %3866 = vmatpush1.msra.mxu0 %v3591
    %3867 = vmatprep.subr.mxu0 %v3596
    %3868 = vmatpush1.msra.mxu0 %v3595
    %3869 = vmatprep.subr.mxu0 %v3600
    %3870 = vmatpush1.msra.mxu0 %v3599
    %3871 = vmatprep.mubr.f32.mxu0 %v3472
    %3872 = vmatmul.mubr.f32.gmra.mrb[0].mxu0 %v3384
    %v3873 = vpop.f32.mrb[0].mxu0
    %v3874 = vadd.f32 %v455, %v3873
    %v3875 = vpop.f32.mrb[0].mxu0
    %v3876 = vadd.f32 %v459, %v3875
    %3877 = vdwg.mxu0
    %3878 = vmatprep.subr.mxu0 %v3604
    %3879 = vmatpush1.msra.mxu0 %v3603
    %3880 = vmatprep.subr.mxu0 %v3608
    %3881 = vmatpush1.msra.mxu0 %v3607
    %3882 = vmatprep.subr.mxu0 %v3612
    %3883 = vmatpush1.msra.mxu0 %v3611
    %3884 = vmatprep.subr.mxu0 %v3616
    %3885 = vmatpush1.msra.mxu0 %v3615
    %3886 = vmatprep.subr.mxu0 %v3620
    %3887 = vmatpush1.msra.mxu0 %v3619
    %3888 = vmatprep.subr.mxu0 %v3624
    %3889 = vmatpush1.msra.mxu0 %v3623
    %3890 = vmatprep.subr.mxu0 %v3628
    %3891 = vmatpush1.msra.mxu0 %v3627
    %3892 = vmatprep.subr.mxu0 %v3632
    %3893 = vmatpush1.msra.mxu0 %v3631
    %3894 = vmatprep.subr.mxu0 %v3636
    %3895 = vmatpush1.msra.mxu0 %v3635
    %3896 = vmatprep.subr.mxu0 %v3640
    %3897 = vmatpush1.msra.mxu0 %v3639
    %3898 = vmatprep.subr.mxu0 %v3644
    %3899 = vmatpush1.msra.mxu0 %v3643
    %3900 = vmatprep.subr.mxu0 %v3648
    %3901 = vmatpush1.msra.mxu0 %v3647
    %3902 = vmatprep.subr.mxu0 %v3652
    %3903 = vmatpush1.msra.mxu0 %v3651
    %3904 = vmatprep.subr.mxu0 %v3656
    %3905 = vmatpush1.msra.mxu0 %v3655
    %3906 = vmatprep.subr.mxu0 %v3660
    %3907 = vmatpush1.msra.mxu0 %v3659
    %3908 = vmatprep.subr.mxu0 %v3664
    %3909 = vmatpush1.msra.mxu0 %v3663
    %3910 = vmatprep.subr.mxu0 0.0
    %3911 = vmatpush1.msra.mxu0 0.0
    %3912 = vmatprep.subr.mxu0 0.0
    %3913 = vmatpush1.msra.mxu0 0.0
    %3914 = vmatprep.subr.mxu0 0.0
    %3915 = vmatpush1.msra.mxu0 0.0
    %3916 = vmatprep.subr.mxu0 0.0
    %3917 = vmatpush1.msra.mxu0 0.0
    %3918 = vmatprep.subr.mxu0 0.0
    %3919 = vmatpush1.msra.mxu0 0.0
    %3920 = vmatprep.subr.mxu0 0.0
    %3921 = vmatpush1.msra.mxu0 0.0
    %3922 = vmatprep.subr.mxu0 0.0
    %3923 = vmatpush1.msra.mxu0 0.0
    %3924 = vmatprep.subr.mxu0 0.0
    %3925 = vmatpush1.msra.mxu0 0.0
    %3926 = vmatprep.subr.mxu0 0.0
    %3927 = vmatpush1.msra.mxu0 0.0
    %3928 = vmatprep.subr.mxu0 0.0
    %3929 = vmatpush1.msra.mxu0 0.0
    %3930 = vmatprep.subr.mxu0 0.0
    %3931 = vmatpush1.msra.mxu0 0.0
    %3932 = vmatprep.subr.mxu0 0.0
    %3933 = vmatpush1.msra.mxu0 0.0
    %3934 = vmatprep.subr.mxu0 0.0
    %3935 = vmatpush1.msra.mxu0 0.0
    %3936 = vmatprep.subr.mxu0 0.0
    %3937 = vmatpush1.msra.mxu0 0.0
    %3938 = vmatprep.subr.mxu0 0.0
    %3939 = vmatpush1.msra.mxu0 0.0
    %3940 = vmatprep.subr.mxu0 0.0
    %3941 = vmatpush1.msra.mxu0 0.0
    %3942 = vmatprep.mubr.f32.mxu0 0.0
    %3943 = vmatmul.mubr.f32.gmra.mrb[0].mxu0 %v3173
    %v3944 = vpop.f32.mrb[0].mxu0
    %v3945 = vadd.f32 %v3874, %v3944
    %v3946 = vpop.f32.mrb[0].mxu0
    %v3947 = vadd.f32 %v3876, %v3946
    %3948 = vdwg.mxu0
    %v3949 = vxor.u32 %v3803, 2147483648
    %v3950 = vmul.f32 %v3949, 1.442695
    %v3951 = vpow.pop %v3950
    %v3952 = vadd.f32 %v3951, 1.0
    %v3953 = vrcp.pop %v3952
    %v3954 = vmul.f32 1.0, %v3953
    %v3955 = vxor.u32 %v3805, 2147483648
    %v3956 = vmul.f32 %v3955, 1.442695
    %v3957 = vpow.pop %v3956
    %v3958 = vadd.f32 %v3957, 1.0
    %v3959 = vrcp.pop %v3958
    %v3960 = vmul.f32 1.0, %v3959
    %v3961 = vtanh.pop %v3945
    %v3962 = vxor.u32 %v3947, 2147483648
    %v3963 = vmul.f32 %v3962, 1.442695
    %v3964 = vpow.pop %v3963
    %v3965 = vadd.f32 %v3964, 1.0
    %v3966 = vrcp.pop %v3965
    %v3967 = vmul.f32 1.0, %v3966
    %v3968 = vmul.f32 %v3960, %v3171
    %v3969 = vmul.f32 %v3954, %v3961
    %v3970 = vadd.f32 %v3968, %v3969
    %v3971 = vtanh.pop %v3970
    %v3972 = vmul.f32 %v3967, %v3971
    %v3973 = vld [vmem:[%s8] sm:$0xff]
    %v3974 = vld [vmem:[%s8 + $0x8] sm:$0xff]
    %v3975 = vld [vmem:[%s8 + $0x10] sm:$0xff]
    %v3976 = vld [vmem:[%s8 + $0x18] sm:$0xff]
    %v3977 = vld [vmem:[%s8 + $0x20] sm:$0xff]
    %v3978 = vld [vmem:[%s8 + $0x28] sm:$0xff]
    %v3979 = vld [vmem:[%s8 + $0x30] sm:$0xff]
    %v3980 = vld [vmem:[%s8 + $0x38] sm:$0xff]
    %v3981 = vld [vmem:[%s8 + $0x40] sm:$0xff]
    %v3982 = vld [vmem:[%s8 + $0x48] sm:$0xff]
    %v3983 = vld [vmem:[%s8 + $0x50] sm:$0xff]
    %v3984 = vld [vmem:[%s8 + $0x58] sm:$0xff]
    %v3985 = vld [vmem:[%s8 + $0x60] sm:$0xff]
    %v3986 = vld [vmem:[%s8 + $0x68] sm:$0xff]
    %v3987 = vld [vmem:[%s8 + $0x70] sm:$0xff]
    %v3988 = vld [vmem:[%s8 + $0x78] sm:$0xff]
    %3989 = vmatprep.subr.mxu0 0.0
    %3990 = vmatpush1.msra.mxu0 %v3973
    %3991 = vmatprep.subr.mxu0 0.0
    %3992 = vmatpush1.msra.mxu0 %v3974
    %3993 = vmatprep.subr.mxu0 0.0
    %3994 = vmatpush1.msra.mxu0 %v3975
    %3995 = vmatprep.subr.mxu0 0.0
    %3996 = vmatpush1.msra.mxu0 %v3976
    %3997 = vmatprep.subr.mxu0 0.0
    %3998 = vmatpush1.msra.mxu0 %v3977
    %3999 = vmatprep.subr.mxu0 0.0
    %4000 = vmatpush1.msra.mxu0 %v3978
    %4001 = vmatprep.subr.mxu0 0.0
    %4002 = vmatpush1.msra.mxu0 %v3979
    %4003 = vmatprep.subr.mxu0 0.0
    %4004 = vmatpush1.msra.mxu0 %v3980
    %4005 = vmatprep.subr.mxu0 0.0
    %4006 = vmatpush1.msra.mxu0 %v3981
    %4007 = vmatprep.subr.mxu0 0.0
    %4008 = vmatpush1.msra.mxu0 %v3982
    %4009 = vmatprep.subr.mxu0 0.0
    %4010 = vmatpush1.msra.mxu0 %v3983
    %4011 = vmatprep.subr.mxu0 0.0
    %4012 = vmatpush1.msra.mxu0 %v3984
    %4013 = vmatprep.subr.mxu0 0.0
    %4014 = vmatpush1.msra.mxu0 %v3985
    %4015 = vmatprep.subr.mxu0 0.0
    %4016 = vmatpush1.msra.mxu0 %v3986
    %4017 = vmatprep.subr.mxu0 0.0
    %4018 = vmatpush1.msra.mxu0 %v3987
    %4019 = vmatprep.subr.mxu0 0.0
    %4020 = vmatpush1.msra.mxu0 %v3988
    %4021 = vmatprep.subr.mxu0 0.0
    %4022 = vmatpush1.msra.mxu0 0.0
    %4023 = vmatprep.subr.mxu0 0.0
    %4024 = vmatpush1.msra.mxu0 0.0
    %4025 = vmatprep.subr.mxu0 0.0
    %4026 = vmatpush1.msra.mxu0 0.0
    %4027 = vmatprep.subr.mxu0 0.0
    %4028 = vmatpush1.msra.mxu0 0.0
    %4029 = vmatprep.subr.mxu0 0.0
    %4030 = vmatpush1.msra.mxu0 0.0
    %4031 = vmatprep.subr.mxu0 0.0
    %4032 = vmatpush1.msra.mxu0 0.0
    %4033 = vmatprep.subr.mxu0 0.0
    %4034 = vmatpush1.msra.mxu0 0.0
    %4035 = vmatprep.subr.mxu0 0.0
    %4036 = vmatpush1.msra.mxu0 0.0
    %4037 = vmatprep.subr.mxu0 0.0
    %4038 = vmatpush1.msra.mxu0 0.0
    %4039 = vmatprep.subr.mxu0 0.0
    %4040 = vmatpush1.msra.mxu0 0.0
    %4041 = vmatprep.subr.mxu0 0.0
    %4042 = vmatpush1.msra.mxu0 0.0
    %4043 = vmatprep.subr.mxu0 0.0
    %4044 = vmatpush1.msra.mxu0 0.0
    %4045 = vmatprep.subr.mxu0 0.0
    %4046 = vmatpush1.msra.mxu0 0.0
    %4047 = vmatprep.subr.mxu0 0.0
    %4048 = vmatpush1.msra.mxu0 0.0
    %4049 = vmatprep.subr.mxu0 0.0
    %4050 = vmatpush1.msra.mxu0 0.0
    %4051 = vmatprep.subr.mxu0 0.0
    %4052 = vmatpush1.msra.mxu0 0.0
    %4053 = vmatprep.mubr.f32.mxu0 0.0
    %4054 = vmatmul.mubr.f32.gmra.mrb[0].mxu0 %v3972
    %v4055 = vpop.f32.mrb[0].mxu0
    %v4056 = vadd.f32 %v792, %v4055
    %v4057 = vpop.f32.mrb[0].mxu0
    %4058 = vdwg.mxu0
    %s4059 = scalar_lea.vmem %s10, 32
    %4060 = vst [vmem:[%s4059] sm:$0xff] %v4056
    %4061 = vmax.xlane.f32.xlu0 %v4056
    %v4062 = vpop.xlane.xlu0 %4061
    %vm4063 = vcmp.eq.f32.partialorder %v4056, %v4062
    %v4064 = vsel %vm4063, %v59, 128
    %v4065 = vand.u32 %v4064, 65535
    %v4066 = vshra.s32 %v4064, 16
    %v4067 = vcvt.s32.f32 %v4065
    %v4068 = vcvt.s32.f32 %v4066
    %4069 = vmin.xlane.f32.xlu0 %v4068
    %v4070 = vpop.xlane.xlu0 %4069
    %vm4071 = vcmp.eq.f32.partialorder %v4068, %v4070
    %v4072 = vsel %vm4071, %v4067, inf
    %4073 = vmin.xlane.f32.xlu0 %v4072
    %v4074 = vpop.xlane.xlu0 %4073
    %v4075 = vcvt.f32.s32 %v4074
    %v4076 = vcvt.f32.s32 %v4070
    %v4077 = vshll.u32 %v4076, 16
    %v4078 = vadd.s32 %v4077, %v4075
    %vm4079 = vcmp.eq.s32.totalorder %v59, %v4078
    %v4080 = vsel %vm4079, 1, 0
    %v4081 = vcvt.s32.f32 %v4080
    %s4082 = scalar_lea.vmem %s1, 40
    %v4083 = vld [vmem:[%s4082] sm:$0xff]
    %4084 = vset.pattern.permute.xlu0 0
    %4085 = vperm.xlu0 %4084, %v4083
    %v4086 = vpop.permute.xlu0 %4085
    %vm4087 = vcmp.eq.s32.totalorder %v59, %v4086
    %v4088 = vsel %vm4087, 1, 0
    %v4089 = vcvt.s32.f32 %v4088
    %s4090 = sld [smem:[#allocation2 + $0x5]]
    %p4091 = scmp.ne.s32.totalorder %s4090, 0
    %s4092 = scalar_select %p4091, 1, 0
    %s4093 = scvt.s32.f32 %s4092
    %v4094 = vstv %s4093
    %v4095 = vmul.f32 %v4094, %v4089
    %s4096 = ssub.f32 1.0, %s4093
    %v4097 = vstv %s4096
    %v4098 = vmul.f32 %v4097, %v4081
    %v4099 = vadd.f32 %v4095, %v4098
    %v4100 = vld [vmem:[%s5] sm:$0xff]
    %v4101 = vld [vmem:[%s5 + $0x8] sm:$0xff]
    %v4102 = vld [vmem:[%s5 + $0x10] sm:$0xff]
    %v4103 = vld [vmem:[%s5 + $0x18] sm:$0xff]
    %v4104 = vld [vmem:[%s5 + $0x20] sm:$0xff]
    %v4105 = vld [vmem:[%s5 + $0x28] sm:$0xff]
    %v4106 = vld [vmem:[%s5 + $0x30] sm:$0xff]
    %v4107 = vld [vmem:[%s5 + $0x38] sm:$0xff]
    %v4108 = vld [vmem:[%s5 + $0x40] sm:$0xff]
    %v4109 = vld [vmem:[%s5 + $0x48] sm:$0xff]
    %v4110 = vld [vmem:[%s5 + $0x50] sm:$0xff]
    %v4111 = vld [vmem:[%s5 + $0x58] sm:$0xff]
    %v4112 = vld [vmem:[%s5 + $0x60] sm:$0xff]
    %v4113 = vld [vmem:[%s5 + $0x68] sm:$0xff]
    %v4114 = vld [vmem:[%s5 + $0x70] sm:$0xff]
    %v4115 = vld [vmem:[%s5 + $0x78] sm:$0xff]
    %4116 = vmatprep.subr.mxu0 0.0
    %4117 = vmatpush1.msra.mxu0 %v4100
    %4118 = vmatprep.subr.mxu0 0.0
    %4119 = vmatpush1.msra.mxu0 %v4101
    %4120 = vmatprep.subr.mxu0 0.0
    %4121 = vmatpush1.msra.mxu0 %v4102
    %4122 = vmatprep.subr.mxu0 0.0
    %4123 = vmatpush1.msra.mxu0 %v4103
    %4124 = vmatprep.subr.mxu0 0.0
    %4125 = vmatpush1.msra.mxu0 %v4104
    %4126 = vmatprep.subr.mxu0 0.0
    %4127 = vmatpush1.msra.mxu0 %v4105
    %4128 = vmatprep.subr.mxu0 0.0
    %4129 = vmatpush1.msra.mxu0 %v4106
    %4130 = vmatprep.subr.mxu0 0.0
    %4131 = vmatpush1.msra.mxu0 %v4107
    %4132 = vmatprep.subr.mxu0 0.0
    %4133 = vmatpush1.msra.mxu0 %v4108
    %4134 = vmatprep.subr.mxu0 0.0
    %4135 = vmatpush1.msra.mxu0 %v4109
    %4136 = vmatprep.subr.mxu0 0.0
    %4137 = vmatpush1.msra.mxu0 %v4110
    %4138 = vmatprep.subr.mxu0 0.0
    %4139 = vmatpush1.msra.mxu0 %v4111
    %4140 = vmatprep.subr.mxu0 0.0
    %4141 = vmatpush1.msra.mxu0 %v4112
    %4142 = vmatprep.subr.mxu0 0.0
    %4143 = vmatpush1.msra.mxu0 %v4113
    %4144 = vmatprep.subr.mxu0 0.0
    %4145 = vmatpush1.msra.mxu0 %v4114
    %4146 = vmatprep.subr.mxu0 0.0
    %4147 = vmatpush1.msra.mxu0 %v4115
    %4148 = vmatprep.subr.mxu0 0.0
    %4149 = vmatpush1.msra.mxu0 0.0
    %4150 = vmatprep.subr.mxu0 0.0
    %4151 = vmatpush1.msra.mxu0 0.0
    %4152 = vmatprep.subr.mxu0 0.0
    %4153 = vmatpush1.msra.mxu0 0.0
    %4154 = vmatprep.subr.mxu0 0.0
    %4155 = vmatpush1.msra.mxu0 0.0
    %4156 = vmatprep.subr.mxu0 0.0
    %4157 = vmatpush1.msra.mxu0 0.0
    %4158 = vmatprep.subr.mxu0 0.0
    %4159 = vmatpush1.msra.mxu0 0.0
    %4160 = vmatprep.subr.mxu0 0.0
    %4161 = vmatpush1.msra.mxu0 0.0
    %4162 = vmatprep.subr.mxu0 0.0
    %4163 = vmatpush1.msra.mxu0 0.0
    %4164 = vmatprep.subr.mxu0 0.0
    %4165 = vmatpush1.msra.mxu0 0.0
    %4166 = vmatprep.subr.mxu0 0.0
    %4167 = vmatpush1.msra.mxu0 0.0
    %4168 = vmatprep.subr.mxu0 0.0
    %4169 = vmatpush1.msra.mxu0 0.0
    %4170 = vmatprep.subr.mxu0 0.0
    %4171 = vmatpush1.msra.mxu0 0.0
    %4172 = vmatprep.subr.mxu0 0.0
    %4173 = vmatpush1.msra.mxu0 0.0
    %4174 = vmatprep.subr.mxu0 0.0
    %4175 = vmatpush1.msra.mxu0 0.0
    %4176 = vmatprep.subr.mxu0 0.0
    %4177 = vmatpush1.msra.mxu0 0.0
    %4178 = vmatprep.subr.mxu0 0.0
    %4179 = vmatpush1.msra.mxu0 0.0
    %4180 = vmatprep.mubr.f32.mxu0 0.0
    %4181 = vmatmul.mubr.f32.gmra.mrb[0].mxu0 %v4099
    %v4182 = vpop.f32.mrb[0].mxu0
    %v4183 = vadd.f32 0.0, %v4182
    %v4184 = vpop.f32.mrb[0].mxu0
    %4185 = vdwg.mxu0
    %v4186 = vmul.f32 %v48, %v3972
    %v4187 = vmul.f32 %v49, %v3972
    %v4188 = vmul.f32 %v50, %v3972
    %v4189 = vmul.f32 %v51, %v3972
    %v4190 = vmul.f32 %v52, %v3972
    %v4191 = vmul.f32 %v53, %v3972
    %v4192 = vmul.f32 %v54, %v3972
    %v4193 = vmul.f32 %v55, %v3972
    %4194 = vadd.xlane.f32.xlu0 %v4186
    %v4195 = vpop.xlane.xlu0 %4194
    %4196 = vadd.xlane.f32.xlu0 %v4187
    %v4197 = vpop.xlane.xlu0 %4196
    %4198 = vadd.xlane.f32.xlu0 %v4188
    %v4199 = vpop.xlane.xlu0 %4198
    %4200 = vadd.xlane.f32.xlu0 %v4189
    %v4201 = vpop.xlane.xlu0 %4200
    %4202 = vadd.xlane.f32.xlu0 %v4190
    %v4203 = vpop.xlane.xlu0 %4202
    %4204 = vadd.xlane.f32.xlu0 %v4191
    %v4205 = vpop.xlane.xlu0 %4204
    %4206 = vadd.xlane.f32.xlu0 %v4192
    %v4207 = vpop.xlane.xlu0 %4206
    %4208 = vadd.xlane.f32.xlu0 %v4193
    %v4209 = vpop.xlane.xlu0 %4208
    %v4210 = vmax.f32 %v4195, %v4203
    %v4211 = vmax.f32 %v4197, %v4205
    %v4212 = vmax.f32 %v4199, %v4207
    %v4213 = vmax.f32 %v4201, %v4209
    %v4214 = vmax.f32 %v4210, %v4211
    %v4215 = vmax.f32 %v4212, %v4213
    %v4216 = vmax.f32 %v4214, %v4215
    %v4217 = vsub.f32 %v4195, %v4216
    %v4218 = vsub.f32 %v4197, %v4216
    %v4219 = vsub.f32 %v4199, %v4216
    %v4220 = vsub.f32 %v4201, %v4216
    %v4221 = vsub.f32 %v4203, %v4216
    %v4222 = vsub.f32 %v4205, %v4216
    %v4223 = vsub.f32 %v4207, %v4216
    %v4224 = vsub.f32 %v4209, %v4216
    %v4225 = vmul.f32 %v4217, 1.442695
    %v4226 = vpow.pop %v4225
    %v4227 = vmul.f32 %v4218, 1.442695
    %v4228 = vpow.pop %v4227
    %v4229 = vmul.f32 %v4219, 1.442695
    %v4230 = vpow.pop %v4229
    %v4231 = vmul.f32 %v4220, 1.442695
    %v4232 = vpow.pop %v4231
    %v4233 = vmul.f32 %v4221, 1.442695
    %v4234 = vpow.pop %v4233
    %v4235 = vmul.f32 %v4222, 1.442695
    %v4236 = vpow.pop %v4235
    %v4237 = vmul.f32 %v4223, 1.442695
    %v4238 = vpow.pop %v4237
    %v4239 = vmul.f32 %v4224, 1.442695
    %v4240 = vpow.pop %v4239
    %v4241 = vadd.f32 %v4226, %v4228
    %v4242 = vadd.f32 %v4241, %v4230
    %v4243 = vadd.f32 %v4242, %v4232
    %v4244 = vadd.f32 %v4243, %v4234
    %v4245 = vadd.f32 %v4244, %v4236
    %v4246 = vadd.f32 %v4245, %v4238
    %v4247 = vadd.f32 %v4246, %v4240
    %v4248 = vrcp.pop %v4247
    %v4249 = vmul.f32 %v4226, %v4248
    %v4250 = vmul.f32 %v4228, %v4248
    %v4251 = vmul.f32 %v4230, %v4248
    %v4252 = vmul.f32 %v4232, %v4248
    %v4253 = vmul.f32 %v4234, %v4248
    %v4254 = vmul.f32 %v4236, %v4248
    %v4255 = vmul.f32 %v4238, %v4248
    %v4256 = vmul.f32 %v4240, %v4248
    %v4257 = vmul.f32 %v4249, %v48
    %v4258 = vmul.f32 %v4250, %v49
    %v4259 = vmul.f32 %v4251, %v50
    %v4260 = vmul.f32 %v4252, %v51
    %v4261 = vmul.f32 %v4253, %v52
    %v4262 = vmul.f32 %v4254, %v53
    %v4263 = vmul.f32 %v4255, %v54
    %v4264 = vmul.f32 %v4256, %v55
    %v4265 = vadd.f32 %v4257, %v4258
    %v4266 = vadd.f32 %v4265, %v4259
    %v4267 = vadd.f32 %v4266, %v4260
    %v4268 = vadd.f32 %v4267, %v4261
    %v4269 = vadd.f32 %v4268, %v4262
    %v4270 = vadd.f32 %v4269, %v4263
    %v4271 = vadd.f32 %v4270, %v4264
    %v4272 = vld [vmem:[%s6] sm:$0xff]
    %v4273 = vld [vmem:[%s6 + $0x8] sm:$0xff]
    %v4274 = vld [vmem:[%s6 + $0x10] sm:$0xff]
    %v4275 = vld [vmem:[%s6 + $0x18] sm:$0xff]
    %v4276 = vld [vmem:[%s6 + $0x20] sm:$0xff]
    %v4277 = vld [vmem:[%s6 + $0x28] sm:$0xff]
    %v4278 = vld [vmem:[%s6 + $0x30] sm:$0xff]
    %v4279 = vld [vmem:[%s6 + $0x38] sm:$0xff]
    %v4280 = vld [vmem:[%s6 + $0x40] sm:$0xff]
    %v4281 = vld [vmem:[%s6 + $0x48] sm:$0xff]
    %v4282 = vld [vmem:[%s6 + $0x50] sm:$0xff]
    %v4283 = vld [vmem:[%s6 + $0x58] sm:$0xff]
    %v4284 = vld [vmem:[%s6 + $0x60] sm:$0xff]
    %v4285 = vld [vmem:[%s6 + $0x68] sm:$0xff]
    %v4286 = vld [vmem:[%s6 + $0x70] sm:$0xff]
    %v4287 = vld [vmem:[%s6 + $0x78] sm:$0xff]
    %v4288 = vld [vmem:[%s6 + $0x80] sm:$0xff]
    %v4289 = vld [vmem:[%s6 + $0x88] sm:$0xff]
    %v4290 = vld [vmem:[%s6 + $0x90] sm:$0xff]
    %v4291 = vld [vmem:[%s6 + $0x98] sm:$0xff]
    %v4292 = vld [vmem:[%s6 + $0xa0] sm:$0xff]
    %v4293 = vld [vmem:[%s6 + $0xa8] sm:$0xff]
    %v4294 = vld [vmem:[%s6 + $0xb0] sm:$0xff]
    %v4295 = vld [vmem:[%s6 + $0xb8] sm:$0xff]
    %v4296 = vld [vmem:[%s6 + $0xc0] sm:$0xff]
    %v4297 = vld [vmem:[%s6 + $0xc8] sm:$0xff]
    %v4298 = vld [vmem:[%s6 + $0xd0] sm:$0xff]
    %v4299 = vld [vmem:[%s6 + $0xd8] sm:$0xff]
    %v4300 = vld [vmem:[%s6 + $0xe0] sm:$0xff]
    %v4301 = vld [vmem:[%s6 + $0xe8] sm:$0xff]
    %v4302 = vld [vmem:[%s6 + $0xf0] sm:$0xff]
    %v4303 = vld [vmem:[%s6 + $0xf8] sm:$0xff]
    %v4304 = vld [vmem:[%s6 + $0x100] sm:$0xff]
    %v4305 = vld [vmem:[%s6 + $0x108] sm:$0xff]
    %v4306 = vld [vmem:[%s6 + $0x110] sm:$0xff]
    %v4307 = vld [vmem:[%s6 + $0x118] sm:$0xff]
    %v4308 = vld [vmem:[%s6 + $0x120] sm:$0xff]
    %v4309 = vld [vmem:[%s6 + $0x128] sm:$0xff]
    %v4310 = vld [vmem:[%s6 + $0x130] sm:$0xff]
    %v4311 = vld [vmem:[%s6 + $0x138] sm:$0xff]
    %v4312 = vld [vmem:[%s6 + $0x140] sm:$0xff]
    %v4313 = vld [vmem:[%s6 + $0x148] sm:$0xff]
    %v4314 = vld [vmem:[%s6 + $0x150] sm:$0xff]
    %v4315 = vld [vmem:[%s6 + $0x158] sm:$0xff]
    %v4316 = vld [vmem:[%s6 + $0x160] sm:$0xff]
    %v4317 = vld [vmem:[%s6 + $0x168] sm:$0xff]
    %v4318 = vld [vmem:[%s6 + $0x170] sm:$0xff]
    %v4319 = vld [vmem:[%s6 + $0x178] sm:$0xff]
    %v4320 = vld [vmem:[%s6 + $0x180] sm:$0xff]
    %v4321 = vld [vmem:[%s6 + $0x188] sm:$0xff]
    %v4322 = vld [vmem:[%s6 + $0x190] sm:$0xff]
    %v4323 = vld [vmem:[%s6 + $0x198] sm:$0xff]
    %v4324 = vld [vmem:[%s6 + $0x1a0] sm:$0xff]
    %v4325 = vld [vmem:[%s6 + $0x1a8] sm:$0xff]
    %v4326 = vld [vmem:[%s6 + $0x1b0] sm:$0xff]
    %v4327 = vld [vmem:[%s6 + $0x1b8] sm:$0xff]
    %v4328 = vld [vmem:[%s6 + $0x1c0] sm:$0xff]
    %v4329 = vld [vmem:[%s6 + $0x1c8] sm:$0xff]
    %v4330 = vld [vmem:[%s6 + $0x1d0] sm:$0xff]
    %v4331 = vld [vmem:[%s6 + $0x1d8] sm:$0xff]
    %v4332 = vld [vmem:[%s6 + $0x1e0] sm:$0xff]
    %v4333 = vld [vmem:[%s6 + $0x1e8] sm:$0xff]
    %v4334 = vld [vmem:[%s6 + $0x1f0] sm:$0xff]
    %v4335 = vld [vmem:[%s6 + $0x1f8] sm:$0xff]
    %v4336 = vld [vmem:[%s6 + $0x200] sm:$0xff]
    %v4337 = vld [vmem:[%s6 + $0x208] sm:$0xff]
    %v4338 = vld [vmem:[%s6 + $0x210] sm:$0xff]
    %v4339 = vld [vmem:[%s6 + $0x218] sm:$0xff]
    %v4340 = vld [vmem:[%s6 + $0x220] sm:$0xff]
    %v4341 = vld [vmem:[%s6 + $0x228] sm:$0xff]
    %v4342 = vld [vmem:[%s6 + $0x230] sm:$0xff]
    %v4343 = vld [vmem:[%s6 + $0x238] sm:$0xff]
    %v4344 = vld [vmem:[%s6 + $0x240] sm:$0xff]
    %v4345 = vld [vmem:[%s6 + $0x248] sm:$0xff]
    %v4346 = vld [vmem:[%s6 + $0x250] sm:$0xff]
    %v4347 = vld [vmem:[%s6 + $0x258] sm:$0xff]
    %v4348 = vld [vmem:[%s6 + $0x260] sm:$0xff]
    %v4349 = vld [vmem:[%s6 + $0x268] sm:$0xff]
    %v4350 = vld [vmem:[%s6 + $0x270] sm:$0xff]
    %v4351 = vld [vmem:[%s6 + $0x278] sm:$0xff]
    %v4352 = vld [vmem:[%s6 + $0x280] sm:$0xff]
    %v4353 = vld [vmem:[%s6 + $0x288] sm:$0xff]
    %v4354 = vld [vmem:[%s6 + $0x290] sm:$0xff]
    %v4355 = vld [vmem:[%s6 + $0x298] sm:$0xff]
    %v4356 = vld [vmem:[%s6 + $0x2a0] sm:$0xff]
    %v4357 = vld [vmem:[%s6 + $0x2a8] sm:$0xff]
    %v4358 = vld [vmem:[%s6 + $0x2b0] sm:$0xff]
    %v4359 = vld [vmem:[%s6 + $0x2b8] sm:$0xff]
    %v4360 = vld [vmem:[%s6 + $0x2c0] sm:$0xff]
    %v4361 = vld [vmem:[%s6 + $0x2c8] sm:$0xff]
    %v4362 = vld [vmem:[%s6 + $0x2d0] sm:$0xff]
    %v4363 = vld [vmem:[%s6 + $0x2d8] sm:$0xff]
    %v4364 = vld [vmem:[%s6 + $0x2e0] sm:$0xff]
    %v4365 = vld [vmem:[%s6 + $0x2e8] sm:$0xff]
    %v4366 = vld [vmem:[%s6 + $0x2f0] sm:$0xff]
    %v4367 = vld [vmem:[%s6 + $0x2f8] sm:$0xff]
    %v4368 = vld [vmem:[%s6 + $0x300] sm:$0xff]
    %v4369 = vld [vmem:[%s6 + $0x308] sm:$0xff]
    %v4370 = vld [vmem:[%s6 + $0x310] sm:$0xff]
    %v4371 = vld [vmem:[%s6 + $0x318] sm:$0xff]
    %v4372 = vld [vmem:[%s6 + $0x320] sm:$0xff]
    %v4373 = vld [vmem:[%s6 + $0x328] sm:$0xff]
    %v4374 = vld [vmem:[%s6 + $0x330] sm:$0xff]
    %v4375 = vld [vmem:[%s6 + $0x338] sm:$0xff]
    %v4376 = vld [vmem:[%s6 + $0x340] sm:$0xff]
    %v4377 = vld [vmem:[%s6 + $0x348] sm:$0xff]
    %v4378 = vld [vmem:[%s6 + $0x350] sm:$0xff]
    %v4379 = vld [vmem:[%s6 + $0x358] sm:$0xff]
    %v4380 = vld [vmem:[%s6 + $0x360] sm:$0xff]
    %v4381 = vld [vmem:[%s6 + $0x368] sm:$0xff]
    %v4382 = vld [vmem:[%s6 + $0x370] sm:$0xff]
    %v4383 = vld [vmem:[%s6 + $0x378] sm:$0xff]
    %v4384 = vld [vmem:[%s6 + $0x380] sm:$0xff]
    %v4385 = vld [vmem:[%s6 + $0x388] sm:$0xff]
    %v4386 = vld [vmem:[%s6 + $0x390] sm:$0xff]
    %v4387 = vld [vmem:[%s6 + $0x398] sm:$0xff]
    %v4388 = vld [vmem:[%s6 + $0x3a0] sm:$0xff]
    %v4389 = vld [vmem:[%s6 + $0x3a8] sm:$0xff]
    %v4390 = vld [vmem:[%s6 + $0x3b0] sm:$0xff]
    %v4391 = vld [vmem:[%s6 + $0x3b8] sm:$0xff]
    %v4392 = vld [vmem:[%s6 + $0x3c0] sm:$0xff]
    %v4393 = vld [vmem:[%s6 + $0x3c8] sm:$0xff]
    %v4394 = vld [vmem:[%s6 + $0x3d0] sm:$0xff]
    %v4395 = vld [vmem:[%s6 + $0x3d8] sm:$0xff]
    %v4396 = vld [vmem:[%s6 + $0x3e0] sm:$0xff]
    %v4397 = vld [vmem:[%s6 + $0x3e8] sm:$0xff]
    %v4398 = vld [vmem:[%s6 + $0x3f0] sm:$0xff]
    %v4399 = vld [vmem:[%s6 + $0x3f8] sm:$0xff]
    %v4400 = vld [vmem:[%s6 + $0x400] sm:$0xff]
    %v4401 = vld [vmem:[%s6 + $0x408] sm:$0xff]
    %v4402 = vld [vmem:[%s6 + $0x410] sm:$0xff]
    %v4403 = vld [vmem:[%s6 + $0x418] sm:$0xff]
    %v4404 = vld [vmem:[%s6 + $0x420] sm:$0xff]
    %v4405 = vld [vmem:[%s6 + $0x428] sm:$0xff]
    %v4406 = vld [vmem:[%s6 + $0x430] sm:$0xff]
    %v4407 = vld [vmem:[%s6 + $0x438] sm:$0xff]
    %v4408 = vld [vmem:[%s6 + $0x440] sm:$0xff]
    %v4409 = vld [vmem:[%s6 + $0x448] sm:$0xff]
    %v4410 = vld [vmem:[%s6 + $0x450] sm:$0xff]
    %v4411 = vld [vmem:[%s6 + $0x458] sm:$0xff]
    %v4412 = vld [vmem:[%s6 + $0x460] sm:$0xff]
    %v4413 = vld [vmem:[%s6 + $0x468] sm:$0xff]
    %v4414 = vld [vmem:[%s6 + $0x470] sm:$0xff]
    %v4415 = vld [vmem:[%s6 + $0x478] sm:$0xff]
    %v4416 = vld [vmem:[%s6 + $0x480] sm:$0xff]
    %v4417 = vld [vmem:[%s6 + $0x488] sm:$0xff]
    %v4418 = vld [vmem:[%s6 + $0x490] sm:$0xff]
    %v4419 = vld [vmem:[%s6 + $0x498] sm:$0xff]
    %v4420 = vld [vmem:[%s6 + $0x4a0] sm:$0xff]
    %v4421 = vld [vmem:[%s6 + $0x4a8] sm:$0xff]
    %v4422 = vld [vmem:[%s6 + $0x4b0] sm:$0xff]
    %v4423 = vld [vmem:[%s6 + $0x4b8] sm:$0xff]
    %v4424 = vld [vmem:[%s6 + $0x4c0] sm:$0xff]
    %v4425 = vld [vmem:[%s6 + $0x4c8] sm:$0xff]
    %v4426 = vld [vmem:[%s6 + $0x4d0] sm:$0xff]
    %v4427 = vld [vmem:[%s6 + $0x4d8] sm:$0xff]
    %v4428 = vld [vmem:[%s6 + $0x4e0] sm:$0xff]
    %v4429 = vld [vmem:[%s6 + $0x4e8] sm:$0xff]
    %v4430 = vld [vmem:[%s6 + $0x4f0] sm:$0xff]
    %v4431 = vld [vmem:[%s6 + $0x4f8] sm:$0xff]
    %v4432 = vld [vmem:[%s6 + $0x500] sm:$0xff]
    %v4433 = vld [vmem:[%s6 + $0x508] sm:$0xff]
    %v4434 = vld [vmem:[%s6 + $0x510] sm:$0xff]
    %v4435 = vld [vmem:[%s6 + $0x518] sm:$0xff]
    %v4436 = vld [vmem:[%s6 + $0x520] sm:$0xff]
    %v4437 = vld [vmem:[%s6 + $0x528] sm:$0xff]
    %v4438 = vld [vmem:[%s6 + $0x530] sm:$0xff]
    %v4439 = vld [vmem:[%s6 + $0x538] sm:$0xff]
    %v4440 = vld [vmem:[%s6 + $0x540] sm:$0xff]
    %v4441 = vld [vmem:[%s6 + $0x548] sm:$0xff]
    %v4442 = vld [vmem:[%s6 + $0x550] sm:$0xff]
    %v4443 = vld [vmem:[%s6 + $0x558] sm:$0xff]
    %v4444 = vld [vmem:[%s6 + $0x560] sm:$0xff]
    %v4445 = vld [vmem:[%s6 + $0x568] sm:$0xff]
    %v4446 = vld [vmem:[%s6 + $0x570] sm:$0xff]
    %v4447 = vld [vmem:[%s6 + $0x578] sm:$0xff]
    %v4448 = vld [vmem:[%s6 + $0x580] sm:$0xff]
    %v4449 = vld [vmem:[%s6 + $0x588] sm:$0xff]
    %v4450 = vld [vmem:[%s6 + $0x590] sm:$0xff]
    %v4451 = vld [vmem:[%s6 + $0x598] sm:$0xff]
    %v4452 = vld [vmem:[%s6 + $0x5a0] sm:$0xff]
    %v4453 = vld [vmem:[%s6 + $0x5a8] sm:$0xff]
    %v4454 = vld [vmem:[%s6 + $0x5b0] sm:$0xff]
    %v4455 = vld [vmem:[%s6 + $0x5b8] sm:$0xff]
    %v4456 = vld [vmem:[%s6 + $0x5c0] sm:$0xff]
    %v4457 = vld [vmem:[%s6 + $0x5c8] sm:$0xff]
    %v4458 = vld [vmem:[%s6 + $0x5d0] sm:$0xff]
    %v4459 = vld [vmem:[%s6 + $0x5d8] sm:$0xff]
    %v4460 = vld [vmem:[%s6 + $0x5e0] sm:$0xff]
    %v4461 = vld [vmem:[%s6 + $0x5e8] sm:$0xff]
    %v4462 = vld [vmem:[%s6 + $0x5f0] sm:$0xff]
    %v4463 = vld [vmem:[%s6 + $0x5f8] sm:$0xff]
    %4464 = vmatprep.subr.mxu0 %v4273
    %4465 = vmatpush1.msra.mxu0 %v4272
    %4466 = vmatprep.subr.mxu0 %v4277
    %4467 = vmatpush1.msra.mxu0 %v4276
    %4468 = vmatprep.subr.mxu0 %v4281
    %4469 = vmatpush1.msra.mxu0 %v4280
    %4470 = vmatprep.subr.mxu0 %v4285
    %4471 = vmatpush1.msra.mxu0 %v4284
    %4472 = vmatprep.subr.mxu0 %v4289
    %4473 = vmatpush1.msra.mxu0 %v4288
    %4474 = vmatprep.subr.mxu0 %v4293
    %4475 = vmatpush1.msra.mxu0 %v4292
    %4476 = vmatprep.subr.mxu0 %v4297
    %4477 = vmatpush1.msra.mxu0 %v4296
    %4478 = vmatprep.subr.mxu0 %v4301
    %4479 = vmatpush1.msra.mxu0 %v4300
    %4480 = vmatprep.subr.mxu0 %v4305
    %4481 = vmatpush1.msra.mxu0 %v4304
    %4482 = vmatprep.subr.mxu0 %v4309
    %4483 = vmatpush1.msra.mxu0 %v4308
    %4484 = vmatprep.subr.mxu0 %v4313
    %4485 = vmatpush1.msra.mxu0 %v4312
    %4486 = vmatprep.subr.mxu0 %v4317
    %4487 = vmatpush1.msra.mxu0 %v4316
    %4488 = vmatprep.subr.mxu0 %v4321
    %4489 = vmatpush1.msra.mxu0 %v4320
    %4490 = vmatprep.subr.mxu0 %v4325
    %4491 = vmatpush1.msra.mxu0 %v4324
    %4492 = vmatprep.subr.mxu0 %v4329
    %4493 = vmatpush1.msra.mxu0 %v4328
    %4494 = vmatprep.subr.mxu0 %v4333
    %4495 = vmatpush1.msra.mxu0 %v4332
    %4496 = vmatprep.subr.mxu0 %v4337
    %4497 = vmatpush1.msra.mxu0 %v4336
    %4498 = vmatprep.subr.mxu0 %v4341
    %4499 = vmatpush1.msra.mxu0 %v4340
    %4500 = vmatprep.subr.mxu0 %v4345
    %4501 = vmatpush1.msra.mxu0 %v4344
    %4502 = vmatprep.subr.mxu0 %v4349
    %4503 = vmatpush1.msra.mxu0 %v4348
    %4504 = vmatprep.subr.mxu0 %v4353
    %4505 = vmatpush1.msra.mxu0 %v4352
    %4506 = vmatprep.subr.mxu0 %v4357
    %4507 = vmatpush1.msra.mxu0 %v4356
    %4508 = vmatprep.subr.mxu0 %v4361
    %4509 = vmatpush1.msra.mxu0 %v4360
    %4510 = vmatprep.subr.mxu0 %v4365
    %4511 = vmatpush1.msra.mxu0 %v4364
    %4512 = vmatprep.subr.mxu0 %v4369
    %4513 = vmatpush1.msra.mxu0 %v4368
    %4514 = vmatprep.subr.mxu0 %v4373
    %4515 = vmatpush1.msra.mxu0 %v4372
    %4516 = vmatprep.subr.mxu0 %v4377
    %4517 = vmatpush1.msra.mxu0 %v4376
    %4518 = vmatprep.subr.mxu0 %v4381
    %4519 = vmatpush1.msra.mxu0 %v4380
    %4520 = vmatprep.subr.mxu0 %v4385
    %4521 = vmatpush1.msra.mxu0 %v4384
    %4522 = vmatprep.subr.mxu0 %v4389
    %4523 = vmatpush1.msra.mxu0 %v4388
    %4524 = vmatprep.subr.mxu0 %v4393
    %4525 = vmatpush1.msra.mxu0 %v4392
    %4526 = vmatprep.subr.mxu0 %v4397
    %4527 = vmatpush1.msra.mxu0 %v4396
    %4528 = vmatprep.mubr.f32.mxu0 %v4271
    %4529 = vmatmul.mubr.f32.gmra.mrb[0].mxu0 %v4183
    %v4530 = vpop.f32.mrb[0].mxu0
    %v4531 = vadd.f32 %v447, %v4530
    %v4532 = vpop.f32.mrb[0].mxu0
    %v4533 = vadd.f32 %v451, %v4532
    %4534 = vdwg.mxu0
    %4535 = vmatprep.subr.mxu0 %v4401
    %4536 = vmatpush1.msra.mxu0 %v4400
    %4537 = vmatprep.subr.mxu0 %v4405
    %4538 = vmatpush1.msra.mxu0 %v4404
    %4539 = vmatprep.subr.mxu0 %v4409
    %4540 = vmatpush1.msra.mxu0 %v4408
    %4541 = vmatprep.subr.mxu0 %v4413
    %4542 = vmatpush1.msra.mxu0 %v4412
    %4543 = vmatprep.subr.mxu0 %v4417
    %4544 = vmatpush1.msra.mxu0 %v4416
    %4545 = vmatprep.subr.mxu0 %v4421
    %4546 = vmatpush1.msra.mxu0 %v4420
    %4547 = vmatprep.subr.mxu0 %v4425
    %4548 = vmatpush1.msra.mxu0 %v4424
    %4549 = vmatprep.subr.mxu0 %v4429
    %4550 = vmatpush1.msra.mxu0 %v4428
    %4551 = vmatprep.subr.mxu0 %v4433
    %4552 = vmatpush1.msra.mxu0 %v4432
    %4553 = vmatprep.subr.mxu0 %v4437
    %4554 = vmatpush1.msra.mxu0 %v4436
    %4555 = vmatprep.subr.mxu0 %v4441
    %4556 = vmatpush1.msra.mxu0 %v4440
    %4557 = vmatprep.subr.mxu0 %v4445
    %4558 = vmatpush1.msra.mxu0 %v4444
    %4559 = vmatprep.subr.mxu0 %v4449
    %4560 = vmatpush1.msra.mxu0 %v4448
    %4561 = vmatprep.subr.mxu0 %v4453
    %4562 = vmatpush1.msra.mxu0 %v4452
    %4563 = vmatprep.subr.mxu0 %v4457
    %4564 = vmatpush1.msra.mxu0 %v4456
    %4565 = vmatprep.subr.mxu0 %v4461
    %4566 = vmatpush1.msra.mxu0 %v4460
    %4567 = vmatprep.subr.mxu0 0.0
    %4568 = vmatpush1.msra.mxu0 0.0
    %4569 = vmatprep.subr.mxu0 0.0
    %4570 = vmatpush1.msra.mxu0 0.0
    %4571 = vmatprep.subr.mxu0 0.0
    %4572 = vmatpush1.msra.mxu0 0.0
    %4573 = vmatprep.subr.mxu0 0.0
    %4574 = vmatpush1.msra.mxu0 0.0
    %4575 = vmatprep.subr.mxu0 0.0
    %4576 = vmatpush1.msra.mxu0 0.0
    %4577 = vmatprep.subr.mxu0 0.0
    %4578 = vmatpush1.msra.mxu0 0.0
    %4579 = vmatprep.subr.mxu0 0.0
    %4580 = vmatpush1.msra.mxu0 0.0
    %4581 = vmatprep.subr.mxu0 0.0
    %4582 = vmatpush1.msra.mxu0 0.0
    %4583 = vmatprep.subr.mxu0 0.0
    %4584 = vmatpush1.msra.mxu0 0.0
    %4585 = vmatprep.subr.mxu0 0.0
    %4586 = vmatpush1.msra.mxu0 0.0
    %4587 = vmatprep.subr.mxu0 0.0
    %4588 = vmatpush1.msra.mxu0 0.0
    %4589 = vmatprep.subr.mxu0 0.0
    %4590 = vmatpush1.msra.mxu0 0.0
    %4591 = vmatprep.subr.mxu0 0.0
    %4592 = vmatpush1.msra.mxu0 0.0
    %4593 = vmatprep.subr.mxu0 0.0
    %4594 = vmatpush1.msra.mxu0 0.0
    %4595 = vmatprep.subr.mxu0 0.0
    %4596 = vmatpush1.msra.mxu0 0.0
    %4597 = vmatprep.subr.mxu0 0.0
    %4598 = vmatpush1.msra.mxu0 0.0
    %4599 = vmatprep.mubr.f32.mxu0 0.0
    %4600 = vmatmul.mubr.f32.gmra.mrb[0].mxu0 %v3972
    %v4601 = vpop.f32.mrb[0].mxu0
    %v4602 = vadd.f32 %v4531, %v4601
    %v4603 = vpop.f32.mrb[0].mxu0
    %v4604 = vadd.f32 %v4533, %v4603
    %4605 = vdwg.mxu0
    %4606 = vmatprep.subr.mxu0 %v4275
    %4607 = vmatpush1.msra.mxu0 %v4274
    %4608 = vmatprep.subr.mxu0 %v4279
    %4609 = vmatpush1.msra.mxu0 %v4278
    %4610 = vmatprep.subr.mxu0 %v4283
    %4611 = vmatpush1.msra.mxu0 %v4282
    %4612 = vmatprep.subr.mxu0 %v4287
    %4613 = vmatpush1.msra.mxu0 %v4286
    %4614 = vmatprep.subr.mxu0 %v4291
    %4615 = vmatpush1.msra.mxu0 %v4290
    %4616 = vmatprep.subr.mxu0 %v4295
    %4617 = vmatpush1.msra.mxu0 %v4294
    %4618 = vmatprep.subr.mxu0 %v4299
    %4619 = vmatpush1.msra.mxu0 %v4298
    %4620 = vmatprep.subr.mxu0 %v4303
    %4621 = vmatpush1.msra.mxu0 %v4302
    %4622 = vmatprep.subr.mxu0 %v4307
    %4623 = vmatpush1.msra.mxu0 %v4306
    %4624 = vmatprep.subr.mxu0 %v4311
    %4625 = vmatpush1.msra.mxu0 %v4310
    %4626 = vmatprep.subr.mxu0 %v4315
    %4627 = vmatpush1.msra.mxu0 %v4314
    %4628 = vmatprep.subr.mxu0 %v4319
    %4629 = vmatpush1.msra.mxu0 %v4318
    %4630 = vmatprep.subr.mxu0 %v4323
    %4631 = vmatpush1.msra.mxu0 %v4322
    %4632 = vmatprep.subr.mxu0 %v4327
    %4633 = vmatpush1.msra.mxu0 %v4326
    %4634 = vmatprep.subr.mxu0 %v4331
    %4635 = vmatpush1.msra.mxu0 %v4330
    %4636 = vmatprep.subr.mxu0 %v4335
    %4637 = vmatpush1.msra.mxu0 %v4334
    %4638 = vmatprep.subr.mxu0 %v4339
    %4639 = vmatpush1.msra.mxu0 %v4338
    %4640 = vmatprep.subr.mxu0 %v4343
    %4641 = vmatpush1.msra.mxu0 %v4342
    %4642 = vmatprep.subr.mxu0 %v4347
    %4643 = vmatpush1.msra.mxu0 %v4346
    %4644 = vmatprep.subr.mxu0 %v4351
    %4645 = vmatpush1.msra.mxu0 %v4350
    %4646 = vmatprep.subr.mxu0 %v4355
    %4647 = vmatpush1.msra.mxu0 %v4354
    %4648 = vmatprep.subr.mxu0 %v4359
    %4649 = vmatpush1.msra.mxu0 %v4358
    %4650 = vmatprep.subr.mxu0 %v4363
    %4651 = vmatpush1.msra.mxu0 %v4362
    %4652 = vmatprep.subr.mxu0 %v4367
    %4653 = vmatpush1.msra.mxu0 %v4366
    %4654 = vmatprep.subr.mxu0 %v4371
    %4655 = vmatpush1.msra.mxu0 %v4370
    %4656 = vmatprep.subr.mxu0 %v4375
    %4657 = vmatpush1.msra.mxu0 %v4374
    %4658 = vmatprep.subr.mxu0 %v4379
    %4659 = vmatpush1.msra.mxu0 %v4378
    %4660 = vmatprep.subr.mxu0 %v4383
    %4661 = vmatpush1.msra.mxu0 %v4382
    %4662 = vmatprep.subr.mxu0 %v4387
    %4663 = vmatpush1.msra.mxu0 %v4386
    %4664 = vmatprep.subr.mxu0 %v4391
    %4665 = vmatpush1.msra.mxu0 %v4390
    %4666 = vmatprep.subr.mxu0 %v4395
    %4667 = vmatpush1.msra.mxu0 %v4394
    %4668 = vmatprep.subr.mxu0 %v4399
    %4669 = vmatpush1.msra.mxu0 %v4398
    %4670 = vmatprep.mubr.f32.mxu0 %v4271
    %4671 = vmatmul.mubr.f32.gmra.mrb[0].mxu0 %v4183
    %v4672 = vpop.f32.mrb[0].mxu0
    %v4673 = vadd.f32 %v455, %v4672
    %v4674 = vpop.f32.mrb[0].mxu0
    %v4675 = vadd.f32 %v459, %v4674
    %4676 = vdwg.mxu0
    %4677 = vmatprep.subr.mxu0 %v4403
    %4678 = vmatpush1.msra.mxu0 %v4402
    %4679 = vmatprep.subr.mxu0 %v4407
    %4680 = vmatpush1.msra.mxu0 %v4406
    %4681 = vmatprep.subr.mxu0 %v4411
    %4682 = vmatpush1.msra.mxu0 %v4410
    %4683 = vmatprep.subr.mxu0 %v4415
    %4684 = vmatpush1.msra.mxu0 %v4414
    %4685 = vmatprep.subr.mxu0 %v4419
    %4686 = vmatpush1.msra.mxu0 %v4418
    %4687 = vmatprep.subr.mxu0 %v4423
    %4688 = vmatpush1.msra.mxu0 %v4422
    %4689 = vmatprep.subr.mxu0 %v4427
    %4690 = vmatpush1.msra.mxu0 %v4426
    %4691 = vmatprep.subr.mxu0 %v4431
    %4692 = vmatpush1.msra.mxu0 %v4430
    %4693 = vmatprep.subr.mxu0 %v4435
    %4694 = vmatpush1.msra.mxu0 %v4434
    %4695 = vmatprep.subr.mxu0 %v4439
    %4696 = vmatpush1.msra.mxu0 %v4438
    %4697 = vmatprep.subr.mxu0 %v4443
    %4698 = vmatpush1.msra.mxu0 %v4442
    %4699 = vmatprep.subr.mxu0 %v4447
    %4700 = vmatpush1.msra.mxu0 %v4446
    %4701 = vmatprep.subr.mxu0 %v4451
    %4702 = vmatpush1.msra.mxu0 %v4450
    %4703 = vmatprep.subr.mxu0 %v4455
    %4704 = vmatpush1.msra.mxu0 %v4454
    %4705 = vmatprep.subr.mxu0 %v4459
    %4706 = vmatpush1.msra.mxu0 %v4458
    %4707 = vmatprep.subr.mxu0 %v4463
    %4708 = vmatpush1.msra.mxu0 %v4462
    %4709 = vmatprep.subr.mxu0 0.0
    %4710 = vmatpush1.msra.mxu0 0.0
    %4711 = vmatprep.subr.mxu0 0.0
    %4712 = vmatpush1.msra.mxu0 0.0
    %4713 = vmatprep.subr.mxu0 0.0
    %4714 = vmatpush1.msra.mxu0 0.0
    %4715 = vmatprep.subr.mxu0 0.0
    %4716 = vmatpush1.msra.mxu0 0.0
    %4717 = vmatprep.subr.mxu0 0.0
    %4718 = vmatpush1.msra.mxu0 0.0
    %4719 = vmatprep.subr.mxu0 0.0
    %4720 = vmatpush1.msra.mxu0 0.0
    %4721 = vmatprep.subr.mxu0 0.0
    %4722 = vmatpush1.msra.mxu0 0.0
    %4723 = vmatprep.subr.mxu0 0.0
    %4724 = vmatpush1.msra.mxu0 0.0
    %4725 = vmatprep.subr.mxu0 0.0
    %4726 = vmatpush1.msra.mxu0 0.0
    %4727 = vmatprep.subr.mxu0 0.0
    %4728 = vmatpush1.msra.mxu0 0.0
    %4729 = vmatprep.subr.mxu0 0.0
    %4730 = vmatpush1.msra.mxu0 0.0
    %4731 = vmatprep.subr.mxu0 0.0
    %4732 = vmatpush1.msra.mxu0 0.0
    %4733 = vmatprep.subr.mxu0 0.0
    %4734 = vmatpush1.msra.mxu0 0.0
    %4735 = vmatprep.subr.mxu0 0.0
    %4736 = vmatpush1.msra.mxu0 0.0
    %4737 = vmatprep.subr.mxu0 0.0
    %4738 = vmatpush1.msra.mxu0 0.0
    %4739 = vmatprep.subr.mxu0 0.0
    %4740 = vmatpush1.msra.mxu0 0.0
    %4741 = vmatprep.mubr.f32.mxu0 0.0
    %4742 = vmatmul.mubr.f32.gmra.mrb[0].mxu0 %v3972
    %v4743 = vpop.f32.mrb[0].mxu0
    %v4744 = vadd.f32 %v4673, %v4743
    %v4745 = vpop.f32.mrb[0].mxu0
    %v4746 = vadd.f32 %v4675, %v4745
    %4747 = vdwg.mxu0
    %v4748 = vxor.u32 %v4602, 2147483648
    %v4749 = vmul.f32 %v4748, 1.442695
    %v4750 = vpow.pop %v4749
    %v4751 = vadd.f32 %v4750, 1.0
    %v4752 = vrcp.pop %v4751
    %v4753 = vmul.f32 1.0, %v4752
    %v4754 = vxor.u32 %v4604, 2147483648
    %v4755 = vmul.f32 %v4754, 1.442695
    %v4756 = vpow.pop %v4755
    %v4757 = vadd.f32 %v4756, 1.0
    %v4758 = vrcp.pop %v4757
    %v4759 = vmul.f32 1.0, %v4758
    %v4760 = vtanh.pop %v4744
    %v4761 = vxor.u32 %v4746, 2147483648
    %v4762 = vmul.f32 %v4761, 1.442695
    %v4763 = vpow.pop %v4762
    %v4764 = vadd.f32 %v4763, 1.0
    %v4765 = vrcp.pop %v4764
    %v4766 = vmul.f32 1.0, %v4765
    %v4767 = vmul.f32 %v4759, %v3970
    %v4768 = vmul.f32 %v4753, %v4760
    %v4769 = vadd.f32 %v4767, %v4768
    %v4770 = vtanh.pop %v4769
    %v4771 = vmul.f32 %v4766, %v4770
    %v4772 = vld [vmem:[%s8] sm:$0xff]
    %v4773 = vld [vmem:[%s8 + $0x8] sm:$0xff]
    %v4774 = vld [vmem:[%s8 + $0x10] sm:$0xff]
    %v4775 = vld [vmem:[%s8 + $0x18] sm:$0xff]
    %v4776 = vld [vmem:[%s8 + $0x20] sm:$0xff]
    %v4777 = vld [vmem:[%s8 + $0x28] sm:$0xff]
    %v4778 = vld [vmem:[%s8 + $0x30] sm:$0xff]
    %v4779 = vld [vmem:[%s8 + $0x38] sm:$0xff]
    %v4780 = vld [vmem:[%s8 + $0x40] sm:$0xff]
    %v4781 = vld [vmem:[%s8 + $0x48] sm:$0xff]
    %v4782 = vld [vmem:[%s8 + $0x50] sm:$0xff]
    %v4783 = vld [vmem:[%s8 + $0x58] sm:$0xff]
    %v4784 = vld [vmem:[%s8 + $0x60] sm:$0xff]
    %v4785 = vld [vmem:[%s8 + $0x68] sm:$0xff]
    %v4786 = vld [vmem:[%s8 + $0x70] sm:$0xff]
    %v4787 = vld [vmem:[%s8 + $0x78] sm:$0xff]
    %4788 = vmatprep.subr.mxu0 0.0
    %4789 = vmatpush1.msra.mxu0 %v4772
    %4790 = vmatprep.subr.mxu0 0.0
    %4791 = vmatpush1.msra.mxu0 %v4773
    %4792 = vmatprep.subr.mxu0 0.0
    %4793 = vmatpush1.msra.mxu0 %v4774
    %4794 = vmatprep.subr.mxu0 0.0
    %4795 = vmatpush1.msra.mxu0 %v4775
    %4796 = vmatprep.subr.mxu0 0.0
    %4797 = vmatpush1.msra.mxu0 %v4776
    %4798 = vmatprep.subr.mxu0 0.0
    %4799 = vmatpush1.msra.mxu0 %v4777
    %4800 = vmatprep.subr.mxu0 0.0
    %4801 = vmatpush1.msra.mxu0 %v4778
    %4802 = vmatprep.subr.mxu0 0.0
    %4803 = vmatpush1.msra.mxu0 %v4779
    %4804 = vmatprep.subr.mxu0 0.0
    %4805 = vmatpush1.msra.mxu0 %v4780
    %4806 = vmatprep.subr.mxu0 0.0
    %4807 = vmatpush1.msra.mxu0 %v4781
    %4808 = vmatprep.subr.mxu0 0.0
    %4809 = vmatpush1.msra.mxu0 %v4782
    %4810 = vmatprep.subr.mxu0 0.0
    %4811 = vmatpush1.msra.mxu0 %v4783
    %4812 = vmatprep.subr.mxu0 0.0
    %4813 = vmatpush1.msra.mxu0 %v4784
    %4814 = vmatprep.subr.mxu0 0.0
    %4815 = vmatpush1.msra.mxu0 %v4785
    %4816 = vmatprep.subr.mxu0 0.0
    %4817 = vmatpush1.msra.mxu0 %v4786
    %4818 = vmatprep.subr.mxu0 0.0
    %4819 = vmatpush1.msra.mxu0 %v4787
    %4820 = vmatprep.subr.mxu0 0.0
    %4821 = vmatpush1.msra.mxu0 0.0
    %4822 = vmatprep.subr.mxu0 0.0
    %4823 = vmatpush1.msra.mxu0 0.0
    %4824 = vmatprep.subr.mxu0 0.0
    %4825 = vmatpush1.msra.mxu0 0.0
    %4826 = vmatprep.subr.mxu0 0.0
    %4827 = vmatpush1.msra.mxu0 0.0
    %4828 = vmatprep.subr.mxu0 0.0
    %4829 = vmatpush1.msra.mxu0 0.0
    %4830 = vmatprep.subr.mxu0 0.0
    %4831 = vmatpush1.msra.mxu0 0.0
    %4832 = vmatprep.subr.mxu0 0.0
    %4833 = vmatpush1.msra.mxu0 0.0
    %4834 = vmatprep.subr.mxu0 0.0
    %4835 = vmatpush1.msra.mxu0 0.0
    %4836 = vmatprep.subr.mxu0 0.0
    %4837 = vmatpush1.msra.mxu0 0.0
    %4838 = vmatprep.subr.mxu0 0.0
    %4839 = vmatpush1.msra.mxu0 0.0
    %4840 = vmatprep.subr.mxu0 0.0
    %4841 = vmatpush1.msra.mxu0 0.0
    %4842 = vmatprep.subr.mxu0 0.0
    %4843 = vmatpush1.msra.mxu0 0.0
    %4844 = vmatprep.subr.mxu0 0.0
    %4845 = vmatpush1.msra.mxu0 0.0
    %4846 = vmatprep.subr.mxu0 0.0
    %4847 = vmatpush1.msra.mxu0 0.0
    %4848 = vmatprep.subr.mxu0 0.0
    %4849 = vmatpush1.msra.mxu0 0.0
    %4850 = vmatprep.subr.mxu0 0.0
    %4851 = vmatpush1.msra.mxu0 0.0
    %4852 = vmatprep.mubr.f32.mxu0 0.0
    %4853 = vmatmul.mubr.f32.gmra.mrb[0].mxu0 %v4771
    %v4854 = vpop.f32.mrb[0].mxu0
    %v4855 = vadd.f32 %v792, %v4854
    %v4856 = vpop.f32.mrb[0].mxu0
    %4857 = vdwg.mxu0
    %s4858 = scalar_lea.vmem %s10, 40
    %4859 = vst [vmem:[%s4858] sm:$0xff] %v4855
    %4860 = vmax.xlane.f32.xlu0 %v4855
    %v4861 = vpop.xlane.xlu0 %4860
    %vm4862 = vcmp.eq.f32.partialorder %v4855, %v4861
    %v4863 = vsel %vm4862, %v59, 128
    %v4864 = vand.u32 %v4863, 65535
    %v4865 = vshra.s32 %v4863, 16
    %v4866 = vcvt.s32.f32 %v4864
    %v4867 = vcvt.s32.f32 %v4865
    %4868 = vmin.xlane.f32.xlu0 %v4867
    %v4869 = vpop.xlane.xlu0 %4868
    %vm4870 = vcmp.eq.f32.partialorder %v4867, %v4869
    %v4871 = vsel %vm4870, %v4866, inf
    %4872 = vmin.xlane.f32.xlu0 %v4871
    %v4873 = vpop.xlane.xlu0 %4872
    %v4874 = vcvt.f32.s32 %v4873
    %v4875 = vcvt.f32.s32 %v4869
    %v4876 = vshll.u32 %v4875, 16
    %v4877 = vadd.s32 %v4876, %v4874
    %vm4878 = vcmp.eq.s32.totalorder %v59, %v4877
    %v4879 = vsel %vm4878, 1, 0
    %v4880 = vcvt.s32.f32 %v4879
    %s4881 = scalar_lea.vmem %s1, 48
    %v4882 = vld [vmem:[%s4881] sm:$0xff]
    %4883 = vset.pattern.permute.xlu0 0
    %4884 = vperm.xlu0 %4883, %v4882
    %v4885 = vpop.permute.xlu0 %4884
    %vm4886 = vcmp.eq.s32.totalorder %v59, %v4885
    %v4887 = vsel %vm4886, 1, 0
    %v4888 = vcvt.s32.f32 %v4887
    %s4889 = sld [smem:[#allocation2 + $0x6]]
    %p4890 = scmp.ne.s32.totalorder %s4889, 0
    %s4891 = scalar_select %p4890, 1, 0
    %s4892 = scvt.s32.f32 %s4891
    %v4893 = vstv %s4892
    %v4894 = vmul.f32 %v4893, %v4888
    %s4895 = ssub.f32 1.0, %s4892
    %v4896 = vstv %s4895
    %v4897 = vmul.f32 %v4896, %v4880
    %v4898 = vadd.f32 %v4894, %v4897
    %v4899 = vld [vmem:[%s5] sm:$0xff]
    %v4900 = vld [vmem:[%s5 + $0x8] sm:$0xff]
    %v4901 = vld [vmem:[%s5 + $0x10] sm:$0xff]
    %v4902 = vld [vmem:[%s5 + $0x18] sm:$0xff]
    %v4903 = vld [vmem:[%s5 + $0x20] sm:$0xff]
    %v4904 = vld [vmem:[%s5 + $0x28] sm:$0xff]
    %v4905 = vld [vmem:[%s5 + $0x30] sm:$0xff]
    %v4906 = vld [vmem:[%s5 + $0x38] sm:$0xff]
    %v4907 = vld [vmem:[%s5 + $0x40] sm:$0xff]
    %v4908 = vld [vmem:[%s5 + $0x48] sm:$0xff]
    %v4909 = vld [vmem:[%s5 + $0x50] sm:$0xff]
    %v4910 = vld [vmem:[%s5 + $0x58] sm:$0xff]
    %v4911 = vld [vmem:[%s5 + $0x60] sm:$0xff]
    %v4912 = vld [vmem:[%s5 + $0x68] sm:$0xff]
    %v4913 = vld [vmem:[%s5 + $0x70] sm:$0xff]
    %v4914 = vld [vmem:[%s5 + $0x78] sm:$0xff]
    %4915 = vmatprep.subr.mxu0 0.0
    %4916 = vmatpush1.msra.mxu0 %v4899
    %4917 = vmatprep.subr.mxu0 0.0
    %4918 = vmatpush1.msra.mxu0 %v4900
    %4919 = vmatprep.subr.mxu0 0.0
    %4920 = vmatpush1.msra.mxu0 %v4901
    %4921 = vmatprep.subr.mxu0 0.0
    %4922 = vmatpush1.msra.mxu0 %v4902
    %4923 = vmatprep.subr.mxu0 0.0
    %4924 = vmatpush1.msra.mxu0 %v4903
    %4925 = vmatprep.subr.mxu0 0.0
    %4926 = vmatpush1.msra.mxu0 %v4904
    %4927 = vmatprep.subr.mxu0 0.0
    %4928 = vmatpush1.msra.mxu0 %v4905
    %4929 = vmatprep.subr.mxu0 0.0
    %4930 = vmatpush1.msra.mxu0 %v4906
    %4931 = vmatprep.subr.mxu0 0.0
    %4932 = vmatpush1.msra.mxu0 %v4907
    %4933 = vmatprep.subr.mxu0 0.0
    %4934 = vmatpush1.msra.mxu0 %v4908
    %4935 = vmatprep.subr.mxu0 0.0
    %4936 = vmatpush1.msra.mxu0 %v4909
    %4937 = vmatprep.subr.mxu0 0.0
    %4938 = vmatpush1.msra.mxu0 %v4910
    %4939 = vmatprep.subr.mxu0 0.0
    %4940 = vmatpush1.msra.mxu0 %v4911
    %4941 = vmatprep.subr.mxu0 0.0
    %4942 = vmatpush1.msra.mxu0 %v4912
    %4943 = vmatprep.subr.mxu0 0.0
    %4944 = vmatpush1.msra.mxu0 %v4913
    %4945 = vmatprep.subr.mxu0 0.0
    %4946 = vmatpush1.msra.mxu0 %v4914
    %4947 = vmatprep.subr.mxu0 0.0
    %4948 = vmatpush1.msra.mxu0 0.0
    %4949 = vmatprep.subr.mxu0 0.0
    %4950 = vmatpush1.msra.mxu0 0.0
    %4951 = vmatprep.subr.mxu0 0.0
    %4952 = vmatpush1.msra.mxu0 0.0
    %4953 = vmatprep.subr.mxu0 0.0
    %4954 = vmatpush1.msra.mxu0 0.0
    %4955 = vmatprep.subr.mxu0 0.0
    %4956 = vmatpush1.msra.mxu0 0.0
    %4957 = vmatprep.subr.mxu0 0.0
    %4958 = vmatpush1.msra.mxu0 0.0
    %4959 = vmatprep.subr.mxu0 0.0
    %4960 = vmatpush1.msra.mxu0 0.0
    %4961 = vmatprep.subr.mxu0 0.0
    %4962 = vmatpush1.msra.mxu0 0.0
    %4963 = vmatprep.subr.mxu0 0.0
    %4964 = vmatpush1.msra.mxu0 0.0
    %4965 = vmatprep.subr.mxu0 0.0
    %4966 = vmatpush1.msra.mxu0 0.0
    %4967 = vmatprep.subr.mxu0 0.0
    %4968 = vmatpush1.msra.mxu0 0.0
    %4969 = vmatprep.subr.mxu0 0.0
    %4970 = vmatpush1.msra.mxu0 0.0
    %4971 = vmatprep.subr.mxu0 0.0
    %4972 = vmatpush1.msra.mxu0 0.0
    %4973 = vmatprep.subr.mxu0 0.0
    %4974 = vmatpush1.msra.mxu0 0.0
    %4975 = vmatprep.subr.mxu0 0.0
    %4976 = vmatpush1.msra.mxu0 0.0
    %4977 = vmatprep.subr.mxu0 0.0
    %4978 = vmatpush1.msra.mxu0 0.0
    %4979 = vmatprep.mubr.f32.mxu0 0.0
    %4980 = vmatmul.mubr.f32.gmra.mrb[0].mxu0 %v4898
    %v4981 = vpop.f32.mrb[0].mxu0
    %v4982 = vadd.f32 0.0, %v4981
    %v4983 = vpop.f32.mrb[0].mxu0
    %4984 = vdwg.mxu0
    %v4985 = vmul.f32 %v48, %v4771
    %v4986 = vmul.f32 %v49, %v4771
    %v4987 = vmul.f32 %v50, %v4771
    %v4988 = vmul.f32 %v51, %v4771
    %v4989 = vmul.f32 %v52, %v4771
    %v4990 = vmul.f32 %v53, %v4771
    %v4991 = vmul.f32 %v54, %v4771
    %v4992 = vmul.f32 %v55, %v4771
    %4993 = vadd.xlane.f32.xlu0 %v4985
    %v4994 = vpop.xlane.xlu0 %4993
    %4995 = vadd.xlane.f32.xlu0 %v4986
    %v4996 = vpop.xlane.xlu0 %4995
    %4997 = vadd.xlane.f32.xlu0 %v4987
    %v4998 = vpop.xlane.xlu0 %4997
    %4999 = vadd.xlane.f32.xlu0 %v4988
    %v5000 = vpop.xlane.xlu0 %4999
    %5001 = vadd.xlane.f32.xlu0 %v4989
    %v5002 = vpop.xlane.xlu0 %5001
    %5003 = vadd.xlane.f32.xlu0 %v4990
    %v5004 = vpop.xlane.xlu0 %5003
    %5005 = vadd.xlane.f32.xlu0 %v4991
    %v5006 = vpop.xlane.xlu0 %5005
    %5007 = vadd.xlane.f32.xlu0 %v4992
    %v5008 = vpop.xlane.xlu0 %5007
    %v5009 = vmax.f32 %v4994, %v5002
    %v5010 = vmax.f32 %v4996, %v5004
    %v5011 = vmax.f32 %v4998, %v5006
    %v5012 = vmax.f32 %v5000, %v5008
    %v5013 = vmax.f32 %v5009, %v5010
    %v5014 = vmax.f32 %v5011, %v5012
    %v5015 = vmax.f32 %v5013, %v5014
    %v5016 = vsub.f32 %v4994, %v5015
    %v5017 = vsub.f32 %v4996, %v5015
    %v5018 = vsub.f32 %v4998, %v5015
    %v5019 = vsub.f32 %v5000, %v5015
    %v5020 = vsub.f32 %v5002, %v5015
    %v5021 = vsub.f32 %v5004, %v5015
    %v5022 = vsub.f32 %v5006, %v5015
    %v5023 = vsub.f32 %v5008, %v5015
    %v5024 = vmul.f32 %v5016, 1.442695
    %v5025 = vpow.pop %v5024
    %v5026 = vmul.f32 %v5017, 1.442695
    %v5027 = vpow.pop %v5026
    %v5028 = vmul.f32 %v5018, 1.442695
    %v5029 = vpow.pop %v5028
    %v5030 = vmul.f32 %v5019, 1.442695
    %v5031 = vpow.pop %v5030
    %v5032 = vmul.f32 %v5020, 1.442695
    %v5033 = vpow.pop %v5032
    %v5034 = vmul.f32 %v5021, 1.442695
    %v5035 = vpow.pop %v5034
    %v5036 = vmul.f32 %v5022, 1.442695
    %v5037 = vpow.pop %v5036
    %v5038 = vmul.f32 %v5023, 1.442695
    %v5039 = vpow.pop %v5038
    %v5040 = vadd.f32 %v5025, %v5027
    %v5041 = vadd.f32 %v5040, %v5029
    %v5042 = vadd.f32 %v5041, %v5031
    %v5043 = vadd.f32 %v5042, %v5033
    %v5044 = vadd.f32 %v5043, %v5035
    %v5045 = vadd.f32 %v5044, %v5037
    %v5046 = vadd.f32 %v5045, %v5039
    %v5047 = vrcp.pop %v5046
    %v5048 = vmul.f32 %v5025, %v5047
    %v5049 = vmul.f32 %v5027, %v5047
    %v5050 = vmul.f32 %v5029, %v5047
    %v5051 = vmul.f32 %v5031, %v5047
    %v5052 = vmul.f32 %v5033, %v5047
    %v5053 = vmul.f32 %v5035, %v5047
    %v5054 = vmul.f32 %v5037, %v5047
    %v5055 = vmul.f32 %v5039, %v5047
    %v5056 = vmul.f32 %v5048, %v48
    %v5057 = vmul.f32 %v5049, %v49
    %v5058 = vmul.f32 %v5050, %v50
    %v5059 = vmul.f32 %v5051, %v51
    %v5060 = vmul.f32 %v5052, %v52
    %v5061 = vmul.f32 %v5053, %v53
    %v5062 = vmul.f32 %v5054, %v54
    %v5063 = vmul.f32 %v5055, %v55
    %v5064 = vadd.f32 %v5056, %v5057
    %v5065 = vadd.f32 %v5064, %v5058
    %v5066 = vadd.f32 %v5065, %v5059
    %v5067 = vadd.f32 %v5066, %v5060
    %v5068 = vadd.f32 %v5067, %v5061
    %v5069 = vadd.f32 %v5068, %v5062
    %v5070 = vadd.f32 %v5069, %v5063
    %v5071 = vld [vmem:[%s6] sm:$0xff]
    %v5072 = vld [vmem:[%s6 + $0x8] sm:$0xff]
    %v5073 = vld [vmem:[%s6 + $0x10] sm:$0xff]
    %v5074 = vld [vmem:[%s6 + $0x18] sm:$0xff]
    %v5075 = vld [vmem:[%s6 + $0x20] sm:$0xff]
    %v5076 = vld [vmem:[%s6 + $0x28] sm:$0xff]
    %v5077 = vld [vmem:[%s6 + $0x30] sm:$0xff]
    %v5078 = vld [vmem:[%s6 + $0x38] sm:$0xff]
    %v5079 = vld [vmem:[%s6 + $0x40] sm:$0xff]
    %v5080 = vld [vmem:[%s6 + $0x48] sm:$0xff]
    %v5081 = vld [vmem:[%s6 + $0x50] sm:$0xff]
    %v5082 = vld [vmem:[%s6 + $0x58] sm:$0xff]
    %v5083 = vld [vmem:[%s6 + $0x60] sm:$0xff]
    %v5084 = vld [vmem:[%s6 + $0x68] sm:$0xff]
    %v5085 = vld [vmem:[%s6 + $0x70] sm:$0xff]
    %v5086 = vld [vmem:[%s6 + $0x78] sm:$0xff]
    %v5087 = vld [vmem:[%s6 + $0x80] sm:$0xff]
    %v5088 = vld [vmem:[%s6 + $0x88] sm:$0xff]
    %v5089 = vld [vmem:[%s6 + $0x90] sm:$0xff]
    %v5090 = vld [vmem:[%s6 + $0x98] sm:$0xff]
    %v5091 = vld [vmem:[%s6 + $0xa0] sm:$0xff]
    %v5092 = vld [vmem:[%s6 + $0xa8] sm:$0xff]
    %v5093 = vld [vmem:[%s6 + $0xb0] sm:$0xff]
    %v5094 = vld [vmem:[%s6 + $0xb8] sm:$0xff]
    %v5095 = vld [vmem:[%s6 + $0xc0] sm:$0xff]
    %v5096 = vld [vmem:[%s6 + $0xc8] sm:$0xff]
    %v5097 = vld [vmem:[%s6 + $0xd0] sm:$0xff]
    %v5098 = vld [vmem:[%s6 + $0xd8] sm:$0xff]
    %v5099 = vld [vmem:[%s6 + $0xe0] sm:$0xff]
    %v5100 = vld [vmem:[%s6 + $0xe8] sm:$0xff]
    %v5101 = vld [vmem:[%s6 + $0xf0] sm:$0xff]
    %v5102 = vld [vmem:[%s6 + $0xf8] sm:$0xff]
    %v5103 = vld [vmem:[%s6 + $0x100] sm:$0xff]
    %v5104 = vld [vmem:[%s6 + $0x108] sm:$0xff]
    %v5105 = vld [vmem:[%s6 + $0x110] sm:$0xff]
    %v5106 = vld [vmem:[%s6 + $0x118] sm:$0xff]
    %v5107 = vld [vmem:[%s6 + $0x120] sm:$0xff]
    %v5108 = vld [vmem:[%s6 + $0x128] sm:$0xff]
    %v5109 = vld [vmem:[%s6 + $0x130] sm:$0xff]
    %v5110 = vld [vmem:[%s6 + $0x138] sm:$0xff]
    %v5111 = vld [vmem:[%s6 + $0x140] sm:$0xff]
    %v5112 = vld [vmem:[%s6 + $0x148] sm:$0xff]
    %v5113 = vld [vmem:[%s6 + $0x150] sm:$0xff]
    %v5114 = vld [vmem:[%s6 + $0x158] sm:$0xff]
    %v5115 = vld [vmem:[%s6 + $0x160] sm:$0xff]
    %v5116 = vld [vmem:[%s6 + $0x168] sm:$0xff]
    %v5117 = vld [vmem:[%s6 + $0x170] sm:$0xff]
    %v5118 = vld [vmem:[%s6 + $0x178] sm:$0xff]
    %v5119 = vld [vmem:[%s6 + $0x180] sm:$0xff]
    %v5120 = vld [vmem:[%s6 + $0x188] sm:$0xff]
    %v5121 = vld [vmem:[%s6 + $0x190] sm:$0xff]
    %v5122 = vld [vmem:[%s6 + $0x198] sm:$0xff]
    %v5123 = vld [vmem:[%s6 + $0x1a0] sm:$0xff]
    %v5124 = vld [vmem:[%s6 + $0x1a8] sm:$0xff]
    %v5125 = vld [vmem:[%s6 + $0x1b0] sm:$0xff]
    %v5126 = vld [vmem:[%s6 + $0x1b8] sm:$0xff]
    %v5127 = vld [vmem:[%s6 + $0x1c0] sm:$0xff]
    %v5128 = vld [vmem:[%s6 + $0x1c8] sm:$0xff]
    %v5129 = vld [vmem:[%s6 + $0x1d0] sm:$0xff]
    %v5130 = vld [vmem:[%s6 + $0x1d8] sm:$0xff]
    %v5131 = vld [vmem:[%s6 + $0x1e0] sm:$0xff]
    %v5132 = vld [vmem:[%s6 + $0x1e8] sm:$0xff]
    %v5133 = vld [vmem:[%s6 + $0x1f0] sm:$0xff]
    %v5134 = vld [vmem:[%s6 + $0x1f8] sm:$0xff]
    %v5135 = vld [vmem:[%s6 + $0x200] sm:$0xff]
    %v5136 = vld [vmem:[%s6 + $0x208] sm:$0xff]
    %v5137 = vld [vmem:[%s6 + $0x210] sm:$0xff]
    %v5138 = vld [vmem:[%s6 + $0x218] sm:$0xff]
    %v5139 = vld [vmem:[%s6 + $0x220] sm:$0xff]
    %v5140 = vld [vmem:[%s6 + $0x228] sm:$0xff]
    %v5141 = vld [vmem:[%s6 + $0x230] sm:$0xff]
    %v5142 = vld [vmem:[%s6 + $0x238] sm:$0xff]
    %v5143 = vld [vmem:[%s6 + $0x240] sm:$0xff]
    %v5144 = vld [vmem:[%s6 + $0x248] sm:$0xff]
    %v5145 = vld [vmem:[%s6 + $0x250] sm:$0xff]
    %v5146 = vld [vmem:[%s6 + $0x258] sm:$0xff]
    %v5147 = vld [vmem:[%s6 + $0x260] sm:$0xff]
    %v5148 = vld [vmem:[%s6 + $0x268] sm:$0xff]
    %v5149 = vld [vmem:[%s6 + $0x270] sm:$0xff]
    %v5150 = vld [vmem:[%s6 + $0x278] sm:$0xff]
    %v5151 = vld [vmem:[%s6 + $0x280] sm:$0xff]
    %v5152 = vld [vmem:[%s6 + $0x288] sm:$0xff]
    %v5153 = vld [vmem:[%s6 + $0x290] sm:$0xff]
    %v5154 = vld [vmem:[%s6 + $0x298] sm:$0xff]
    %v5155 = vld [vmem:[%s6 + $0x2a0] sm:$0xff]
    %v5156 = vld [vmem:[%s6 + $0x2a8] sm:$0xff]
    %v5157 = vld [vmem:[%s6 + $0x2b0] sm:$0xff]
    %v5158 = vld [vmem:[%s6 + $0x2b8] sm:$0xff]
    %v5159 = vld [vmem:[%s6 + $0x2c0] sm:$0xff]
    %v5160 = vld [vmem:[%s6 + $0x2c8] sm:$0xff]
    %v5161 = vld [vmem:[%s6 + $0x2d0] sm:$0xff]
    %v5162 = vld [vmem:[%s6 + $0x2d8] sm:$0xff]
    %v5163 = vld [vmem:[%s6 + $0x2e0] sm:$0xff]
    %v5164 = vld [vmem:[%s6 + $0x2e8] sm:$0xff]
    %v5165 = vld [vmem:[%s6 + $0x2f0] sm:$0xff]
    %v5166 = vld [vmem:[%s6 + $0x2f8] sm:$0xff]
    %v5167 = vld [vmem:[%s6 + $0x300] sm:$0xff]
    %v5168 = vld [vmem:[%s6 + $0x308] sm:$0xff]
    %v5169 = vld [vmem:[%s6 + $0x310] sm:$0xff]
    %v5170 = vld [vmem:[%s6 + $0x318] sm:$0xff]
    %v5171 = vld [vmem:[%s6 + $0x320] sm:$0xff]
    %v5172 = vld [vmem:[%s6 + $0x328] sm:$0xff]
    %v5173 = vld [vmem:[%s6 + $0x330] sm:$0xff]
    %v5174 = vld [vmem:[%s6 + $0x338] sm:$0xff]
    %v5175 = vld [vmem:[%s6 + $0x340] sm:$0xff]
    %v5176 = vld [vmem:[%s6 + $0x348] sm:$0xff]
    %v5177 = vld [vmem:[%s6 + $0x350] sm:$0xff]
    %v5178 = vld [vmem:[%s6 + $0x358] sm:$0xff]
    %v5179 = vld [vmem:[%s6 + $0x360] sm:$0xff]
    %v5180 = vld [vmem:[%s6 + $0x368] sm:$0xff]
    %v5181 = vld [vmem:[%s6 + $0x370] sm:$0xff]
    %v5182 = vld [vmem:[%s6 + $0x378] sm:$0xff]
    %v5183 = vld [vmem:[%s6 + $0x380] sm:$0xff]
    %v5184 = vld [vmem:[%s6 + $0x388] sm:$0xff]
    %v5185 = vld [vmem:[%s6 + $0x390] sm:$0xff]
    %v5186 = vld [vmem:[%s6 + $0x398] sm:$0xff]
    %v5187 = vld [vmem:[%s6 + $0x3a0] sm:$0xff]
    %v5188 = vld [vmem:[%s6 + $0x3a8] sm:$0xff]
    %v5189 = vld [vmem:[%s6 + $0x3b0] sm:$0xff]
    %v5190 = vld [vmem:[%s6 + $0x3b8] sm:$0xff]
    %v5191 = vld [vmem:[%s6 + $0x3c0] sm:$0xff]
    %v5192 = vld [vmem:[%s6 + $0x3c8] sm:$0xff]
    %v5193 = vld [vmem:[%s6 + $0x3d0] sm:$0xff]
    %v5194 = vld [vmem:[%s6 + $0x3d8] sm:$0xff]
    %v5195 = vld [vmem:[%s6 + $0x3e0] sm:$0xff]
    %v5196 = vld [vmem:[%s6 + $0x3e8] sm:$0xff]
    %v5197 = vld [vmem:[%s6 + $0x3f0] sm:$0xff]
    %v5198 = vld [vmem:[%s6 + $0x3f8] sm:$0xff]
    %v5199 = vld [vmem:[%s6 + $0x400] sm:$0xff]
    %v5200 = vld [vmem:[%s6 + $0x408] sm:$0xff]
    %v5201 = vld [vmem:[%s6 + $0x410] sm:$0xff]
    %v5202 = vld [vmem:[%s6 + $0x418] sm:$0xff]
    %v5203 = vld [vmem:[%s6 + $0x420] sm:$0xff]
    %v5204 = vld [vmem:[%s6 + $0x428] sm:$0xff]
    %v5205 = vld [vmem:[%s6 + $0x430] sm:$0xff]
    %v5206 = vld [vmem:[%s6 + $0x438] sm:$0xff]
    %v5207 = vld [vmem:[%s6 + $0x440] sm:$0xff]
    %v5208 = vld [vmem:[%s6 + $0x448] sm:$0xff]
    %v5209 = vld [vmem:[%s6 + $0x450] sm:$0xff]
    %v5210 = vld [vmem:[%s6 + $0x458] sm:$0xff]
    %v5211 = vld [vmem:[%s6 + $0x460] sm:$0xff]
    %v5212 = vld [vmem:[%s6 + $0x468] sm:$0xff]
    %v5213 = vld [vmem:[%s6 + $0x470] sm:$0xff]
    %v5214 = vld [vmem:[%s6 + $0x478] sm:$0xff]
    %v5215 = vld [vmem:[%s6 + $0x480] sm:$0xff]
    %v5216 = vld [vmem:[%s6 + $0x488] sm:$0xff]
    %v5217 = vld [vmem:[%s6 + $0x490] sm:$0xff]
    %v5218 = vld [vmem:[%s6 + $0x498] sm:$0xff]
    %v5219 = vld [vmem:[%s6 + $0x4a0] sm:$0xff]
    %v5220 = vld [vmem:[%s6 + $0x4a8] sm:$0xff]
    %v5221 = vld [vmem:[%s6 + $0x4b0] sm:$0xff]
    %v5222 = vld [vmem:[%s6 + $0x4b8] sm:$0xff]
    %v5223 = vld [vmem:[%s6 + $0x4c0] sm:$0xff]
    %v5224 = vld [vmem:[%s6 + $0x4c8] sm:$0xff]
    %v5225 = vld [vmem:[%s6 + $0x4d0] sm:$0xff]
    %v5226 = vld [vmem:[%s6 + $0x4d8] sm:$0xff]
    %v5227 = vld [vmem:[%s6 + $0x4e0] sm:$0xff]
    %v5228 = vld [vmem:[%s6 + $0x4e8] sm:$0xff]
    %v5229 = vld [vmem:[%s6 + $0x4f0] sm:$0xff]
    %v5230 = vld [vmem:[%s6 + $0x4f8] sm:$0xff]
    %v5231 = vld [vmem:[%s6 + $0x500] sm:$0xff]
    %v5232 = vld [vmem:[%s6 + $0x508] sm:$0xff]
    %v5233 = vld [vmem:[%s6 + $0x510] sm:$0xff]
    %v5234 = vld [vmem:[%s6 + $0x518] sm:$0xff]
    %v5235 = vld [vmem:[%s6 + $0x520] sm:$0xff]
    %v5236 = vld [vmem:[%s6 + $0x528] sm:$0xff]
    %v5237 = vld [vmem:[%s6 + $0x530] sm:$0xff]
    %v5238 = vld [vmem:[%s6 + $0x538] sm:$0xff]
    %v5239 = vld [vmem:[%s6 + $0x540] sm:$0xff]
    %v5240 = vld [vmem:[%s6 + $0x548] sm:$0xff]
    %v5241 = vld [vmem:[%s6 + $0x550] sm:$0xff]
    %v5242 = vld [vmem:[%s6 + $0x558] sm:$0xff]
    %v5243 = vld [vmem:[%s6 + $0x560] sm:$0xff]
    %v5244 = vld [vmem:[%s6 + $0x568] sm:$0xff]
    %v5245 = vld [vmem:[%s6 + $0x570] sm:$0xff]
    %v5246 = vld [vmem:[%s6 + $0x578] sm:$0xff]
    %v5247 = vld [vmem:[%s6 + $0x580] sm:$0xff]
    %v5248 = vld [vmem:[%s6 + $0x588] sm:$0xff]
    %v5249 = vld [vmem:[%s6 + $0x590] sm:$0xff]
    %v5250 = vld [vmem:[%s6 + $0x598] sm:$0xff]
    %v5251 = vld [vmem:[%s6 + $0x5a0] sm:$0xff]
    %v5252 = vld [vmem:[%s6 + $0x5a8] sm:$0xff]
    %v5253 = vld [vmem:[%s6 + $0x5b0] sm:$0xff]
    %v5254 = vld [vmem:[%s6 + $0x5b8] sm:$0xff]
    %v5255 = vld [vmem:[%s6 + $0x5c0] sm:$0xff]
    %v5256 = vld [vmem:[%s6 + $0x5c8] sm:$0xff]
    %v5257 = vld [vmem:[%s6 + $0x5d0] sm:$0xff]
    %v5258 = vld [vmem:[%s6 + $0x5d8] sm:$0xff]
    %v5259 = vld [vmem:[%s6 + $0x5e0] sm:$0xff]
    %v5260 = vld [vmem:[%s6 + $0x5e8] sm:$0xff]
    %v5261 = vld [vmem:[%s6 + $0x5f0] sm:$0xff]
    %v5262 = vld [vmem:[%s6 + $0x5f8] sm:$0xff]
    %5263 = vmatprep.subr.mxu0 %v5072
    %5264 = vmatpush1.msra.mxu0 %v5071
    %5265 = vmatprep.subr.mxu0 %v5076
    %5266 = vmatpush1.msra.mxu0 %v5075
    %5267 = vmatprep.subr.mxu0 %v5080
    %5268 = vmatpush1.msra.mxu0 %v5079
    %5269 = vmatprep.subr.mxu0 %v5084
    %5270 = vmatpush1.msra.mxu0 %v5083
    %5271 = vmatprep.subr.mxu0 %v5088
    %5272 = vmatpush1.msra.mxu0 %v5087
    %5273 = vmatprep.subr.mxu0 %v5092
    %5274 = vmatpush1.msra.mxu0 %v5091
    %5275 = vmatprep.subr.mxu0 %v5096
    %5276 = vmatpush1.msra.mxu0 %v5095
    %5277 = vmatprep.subr.mxu0 %v5100
    %5278 = vmatpush1.msra.mxu0 %v5099
    %5279 = vmatprep.subr.mxu0 %v5104
    %5280 = vmatpush1.msra.mxu0 %v5103
    %5281 = vmatprep.subr.mxu0 %v5108
    %5282 = vmatpush1.msra.mxu0 %v5107
    %5283 = vmatprep.subr.mxu0 %v5112
    %5284 = vmatpush1.msra.mxu0 %v5111
    %5285 = vmatprep.subr.mxu0 %v5116
    %5286 = vmatpush1.msra.mxu0 %v5115
    %5287 = vmatprep.subr.mxu0 %v5120
    %5288 = vmatpush1.msra.mxu0 %v5119
    %5289 = vmatprep.subr.mxu0 %v5124
    %5290 = vmatpush1.msra.mxu0 %v5123
    %5291 = vmatprep.subr.mxu0 %v5128
    %5292 = vmatpush1.msra.mxu0 %v5127
    %5293 = vmatprep.subr.mxu0 %v5132
    %5294 = vmatpush1.msra.mxu0 %v5131
    %5295 = vmatprep.subr.mxu0 %v5136
    %5296 = vmatpush1.msra.mxu0 %v5135
    %5297 = vmatprep.subr.mxu0 %v5140
    %5298 = vmatpush1.msra.mxu0 %v5139
    %5299 = vmatprep.subr.mxu0 %v5144
    %5300 = vmatpush1.msra.mxu0 %v5143
    %5301 = vmatprep.subr.mxu0 %v5148
    %5302 = vmatpush1.msra.mxu0 %v5147
    %5303 = vmatprep.subr.mxu0 %v5152
    %5304 = vmatpush1.msra.mxu0 %v5151
    %5305 = vmatprep.subr.mxu0 %v5156
    %5306 = vmatpush1.msra.mxu0 %v5155
    %5307 = vmatprep.subr.mxu0 %v5160
    %5308 = vmatpush1.msra.mxu0 %v5159
    %5309 = vmatprep.subr.mxu0 %v5164
    %5310 = vmatpush1.msra.mxu0 %v5163
    %5311 = vmatprep.subr.mxu0 %v5168
    %5312 = vmatpush1.msra.mxu0 %v5167
    %5313 = vmatprep.subr.mxu0 %v5172
    %5314 = vmatpush1.msra.mxu0 %v5171
    %5315 = vmatprep.subr.mxu0 %v5176
    %5316 = vmatpush1.msra.mxu0 %v5175
    %5317 = vmatprep.subr.mxu0 %v5180
    %5318 = vmatpush1.msra.mxu0 %v5179
    %5319 = vmatprep.subr.mxu0 %v5184
    %5320 = vmatpush1.msra.mxu0 %v5183
    %5321 = vmatprep.subr.mxu0 %v5188
    %5322 = vmatpush1.msra.mxu0 %v5187
    %5323 = vmatprep.subr.mxu0 %v5192
    %5324 = vmatpush1.msra.mxu0 %v5191
    %5325 = vmatprep.subr.mxu0 %v5196
    %5326 = vmatpush1.msra.mxu0 %v5195
    %5327 = vmatprep.mubr.f32.mxu0 %v5070
    %5328 = vmatmul.mubr.f32.gmra.mrb[0].mxu0 %v4982
    %v5329 = vpop.f32.mrb[0].mxu0
    %v5330 = vadd.f32 %v447, %v5329
    %v5331 = vpop.f32.mrb[0].mxu0
    %v5332 = vadd.f32 %v451, %v5331
    %5333 = vdwg.mxu0
    %5334 = vmatprep.subr.mxu0 %v5200
    %5335 = vmatpush1.msra.mxu0 %v5199
    %5336 = vmatprep.subr.mxu0 %v5204
    %5337 = vmatpush1.msra.mxu0 %v5203
    %5338 = vmatprep.subr.mxu0 %v5208
    %5339 = vmatpush1.msra.mxu0 %v5207
    %5340 = vmatprep.subr.mxu0 %v5212
    %5341 = vmatpush1.msra.mxu0 %v5211
    %5342 = vmatprep.subr.mxu0 %v5216
    %5343 = vmatpush1.msra.mxu0 %v5215
    %5344 = vmatprep.subr.mxu0 %v5220
    %5345 = vmatpush1.msra.mxu0 %v5219
    %5346 = vmatprep.subr.mxu0 %v5224
    %5347 = vmatpush1.msra.mxu0 %v5223
    %5348 = vmatprep.subr.mxu0 %v5228
    %5349 = vmatpush1.msra.mxu0 %v5227
    %5350 = vmatprep.subr.mxu0 %v5232
    %5351 = vmatpush1.msra.mxu0 %v5231
    %5352 = vmatprep.subr.mxu0 %v5236
    %5353 = vmatpush1.msra.mxu0 %v5235
    %5354 = vmatprep.subr.mxu0 %v5240
    %5355 = vmatpush1.msra.mxu0 %v5239
    %5356 = vmatprep.subr.mxu0 %v5244
    %5357 = vmatpush1.msra.mxu0 %v5243
    %5358 = vmatprep.subr.mxu0 %v5248
    %5359 = vmatpush1.msra.mxu0 %v5247
    %5360 = vmatprep.subr.mxu0 %v5252
    %5361 = vmatpush1.msra.mxu0 %v5251
    %5362 = vmatprep.subr.mxu0 %v5256
    %5363 = vmatpush1.msra.mxu0 %v5255
    %5364 = vmatprep.subr.mxu0 %v5260
    %5365 = vmatpush1.msra.mxu0 %v5259
    %5366 = vmatprep.subr.mxu0 0.0
    %5367 = vmatpush1.msra.mxu0 0.0
    %5368 = vmatprep.subr.mxu0 0.0
    %5369 = vmatpush1.msra.mxu0 0.0
    %5370 = vmatprep.subr.mxu0 0.0
    %5371 = vmatpush1.msra.mxu0 0.0
    %5372 = vmatprep.subr.mxu0 0.0
    %5373 = vmatpush1.msra.mxu0 0.0
    %5374 = vmatprep.subr.mxu0 0.0
    %5375 = vmatpush1.msra.mxu0 0.0
    %5376 = vmatprep.subr.mxu0 0.0
    %5377 = vmatpush1.msra.mxu0 0.0
    %5378 = vmatprep.subr.mxu0 0.0
    %5379 = vmatpush1.msra.mxu0 0.0
    %5380 = vmatprep.subr.mxu0 0.0
    %5381 = vmatpush1.msra.mxu0 0.0
    %5382 = vmatprep.subr.mxu0 0.0
    %5383 = vmatpush1.msra.mxu0 0.0
    %5384 = vmatprep.subr.mxu0 0.0
    %5385 = vmatpush1.msra.mxu0 0.0
    %5386 = vmatprep.subr.mxu0 0.0
    %5387 = vmatpush1.msra.mxu0 0.0
    %5388 = vmatprep.subr.mxu0 0.0
    %5389 = vmatpush1.msra.mxu0 0.0
    %5390 = vmatprep.subr.mxu0 0.0
    %5391 = vmatpush1.msra.mxu0 0.0
    %5392 = vmatprep.subr.mxu0 0.0
    %5393 = vmatpush1.msra.mxu0 0.0
    %5394 = vmatprep.subr.mxu0 0.0
    %5395 = vmatpush1.msra.mxu0 0.0
    %5396 = vmatprep.subr.mxu0 0.0
    %5397 = vmatpush1.msra.mxu0 0.0
    %5398 = vmatprep.mubr.f32.mxu0 0.0
    %5399 = vmatmul.mubr.f32.gmra.mrb[0].mxu0 %v4771
    %v5400 = vpop.f32.mrb[0].mxu0
    %v5401 = vadd.f32 %v5330, %v5400
    %v5402 = vpop.f32.mrb[0].mxu0
    %v5403 = vadd.f32 %v5332, %v5402
    %5404 = vdwg.mxu0
    %5405 = vmatprep.subr.mxu0 %v5074
    %5406 = vmatpush1.msra.mxu0 %v5073
    %5407 = vmatprep.subr.mxu0 %v5078
    %5408 = vmatpush1.msra.mxu0 %v5077
    %5409 = vmatprep.subr.mxu0 %v5082
    %5410 = vmatpush1.msra.mxu0 %v5081
    %5411 = vmatprep.subr.mxu0 %v5086
    %5412 = vmatpush1.msra.mxu0 %v5085
    %5413 = vmatprep.subr.mxu0 %v5090
    %5414 = vmatpush1.msra.mxu0 %v5089
    %5415 = vmatprep.subr.mxu0 %v5094
    %5416 = vmatpush1.msra.mxu0 %v5093
    %5417 = vmatprep.subr.mxu0 %v5098
    %5418 = vmatpush1.msra.mxu0 %v5097
    %5419 = vmatprep.subr.mxu0 %v5102
    %5420 = vmatpush1.msra.mxu0 %v5101
    %5421 = vmatprep.subr.mxu0 %v5106
    %5422 = vmatpush1.msra.mxu0 %v5105
    %5423 = vmatprep.subr.mxu0 %v5110
    %5424 = vmatpush1.msra.mxu0 %v5109
    %5425 = vmatprep.subr.mxu0 %v5114
    %5426 = vmatpush1.msra.mxu0 %v5113
    %5427 = vmatprep.subr.mxu0 %v5118
    %5428 = vmatpush1.msra.mxu0 %v5117
    %5429 = vmatprep.subr.mxu0 %v5122
    %5430 = vmatpush1.msra.mxu0 %v5121
    %5431 = vmatprep.subr.mxu0 %v5126
    %5432 = vmatpush1.msra.mxu0 %v5125
    %5433 = vmatprep.subr.mxu0 %v5130
    %5434 = vmatpush1.msra.mxu0 %v5129
    %5435 = vmatprep.subr.mxu0 %v5134
    %5436 = vmatpush1.msra.mxu0 %v5133
    %5437 = vmatprep.subr.mxu0 %v5138
    %5438 = vmatpush1.msra.mxu0 %v5137
    %5439 = vmatprep.subr.mxu0 %v5142
    %5440 = vmatpush1.msra.mxu0 %v5141
    %5441 = vmatprep.subr.mxu0 %v5146
    %5442 = vmatpush1.msra.mxu0 %v5145
    %5443 = vmatprep.subr.mxu0 %v5150
    %5444 = vmatpush1.msra.mxu0 %v5149
    %5445 = vmatprep.subr.mxu0 %v5154
    %5446 = vmatpush1.msra.mxu0 %v5153
    %5447 = vmatprep.subr.mxu0 %v5158
    %5448 = vmatpush1.msra.mxu0 %v5157
    %5449 = vmatprep.subr.mxu0 %v5162
    %5450 = vmatpush1.msra.mxu0 %v5161
    %5451 = vmatprep.subr.mxu0 %v5166
    %5452 = vmatpush1.msra.mxu0 %v5165
    %5453 = vmatprep.subr.mxu0 %v5170
    %5454 = vmatpush1.msra.mxu0 %v5169
    %5455 = vmatprep.subr.mxu0 %v5174
    %5456 = vmatpush1.msra.mxu0 %v5173
    %5457 = vmatprep.subr.mxu0 %v5178
    %5458 = vmatpush1.msra.mxu0 %v5177
    %5459 = vmatprep.subr.mxu0 %v5182
    %5460 = vmatpush1.msra.mxu0 %v5181
    %5461 = vmatprep.subr.mxu0 %v5186
    %5462 = vmatpush1.msra.mxu0 %v5185
    %5463 = vmatprep.subr.mxu0 %v5190
    %5464 = vmatpush1.msra.mxu0 %v5189
    %5465 = vmatprep.subr.mxu0 %v5194
    %5466 = vmatpush1.msra.mxu0 %v5193
    %5467 = vmatprep.subr.mxu0 %v5198
    %5468 = vmatpush1.msra.mxu0 %v5197
    %5469 = vmatprep.mubr.f32.mxu0 %v5070
    %5470 = vmatmul.mubr.f32.gmra.mrb[0].mxu0 %v4982
    %v5471 = vpop.f32.mrb[0].mxu0
    %v5472 = vadd.f32 %v455, %v5471
    %v5473 = vpop.f32.mrb[0].mxu0
    %v5474 = vadd.f32 %v459, %v5473
    %5475 = vdwg.mxu0
    %5476 = vmatprep.subr.mxu0 %v5202
    %5477 = vmatpush1.msra.mxu0 %v5201
    %5478 = vmatprep.subr.mxu0 %v5206
    %5479 = vmatpush1.msra.mxu0 %v5205
    %5480 = vmatprep.subr.mxu0 %v5210
    %5481 = vmatpush1.msra.mxu0 %v5209
    %5482 = vmatprep.subr.mxu0 %v5214
    %5483 = vmatpush1.msra.mxu0 %v5213
    %5484 = vmatprep.subr.mxu0 %v5218
    %5485 = vmatpush1.msra.mxu0 %v5217
    %5486 = vmatprep.subr.mxu0 %v5222
    %5487 = vmatpush1.msra.mxu0 %v5221
    %5488 = vmatprep.subr.mxu0 %v5226
    %5489 = vmatpush1.msra.mxu0 %v5225
    %5490 = vmatprep.subr.mxu0 %v5230
    %5491 = vmatpush1.msra.mxu0 %v5229
    %5492 = vmatprep.subr.mxu0 %v5234
    %5493 = vmatpush1.msra.mxu0 %v5233
    %5494 = vmatprep.subr.mxu0 %v5238
    %5495 = vmatpush1.msra.mxu0 %v5237
    %5496 = vmatprep.subr.mxu0 %v5242
    %5497 = vmatpush1.msra.mxu0 %v5241
    %5498 = vmatprep.subr.mxu0 %v5246
    %5499 = vmatpush1.msra.mxu0 %v5245
    %5500 = vmatprep.subr.mxu0 %v5250
    %5501 = vmatpush1.msra.mxu0 %v5249
    %5502 = vmatprep.subr.mxu0 %v5254
    %5503 = vmatpush1.msra.mxu0 %v5253
    %5504 = vmatprep.subr.mxu0 %v5258
    %5505 = vmatpush1.msra.mxu0 %v5257
    %5506 = vmatprep.subr.mxu0 %v5262
    %5507 = vmatpush1.msra.mxu0 %v5261
    %5508 = vmatprep.subr.mxu0 0.0
    %5509 = vmatpush1.msra.mxu0 0.0
    %5510 = vmatprep.subr.mxu0 0.0
    %5511 = vmatpush1.msra.mxu0 0.0
    %5512 = vmatprep.subr.mxu0 0.0
    %5513 = vmatpush1.msra.mxu0 0.0
    %5514 = vmatprep.subr.mxu0 0.0
    %5515 = vmatpush1.msra.mxu0 0.0
    %5516 = vmatprep.subr.mxu0 0.0
    %5517 = vmatpush1.msra.mxu0 0.0
    %5518 = vmatprep.subr.mxu0 0.0
    %5519 = vmatpush1.msra.mxu0 0.0
    %5520 = vmatprep.subr.mxu0 0.0
    %5521 = vmatpush1.msra.mxu0 0.0
    %5522 = vmatprep.subr.mxu0 0.0
    %5523 = vmatpush1.msra.mxu0 0.0
    %5524 = vmatprep.subr.mxu0 0.0
    %5525 = vmatpush1.msra.mxu0 0.0
    %5526 = vmatprep.subr.mxu0 0.0
    %5527 = vmatpush1.msra.mxu0 0.0
    %5528 = vmatprep.subr.mxu0 0.0
    %5529 = vmatpush1.msra.mxu0 0.0
    %5530 = vmatprep.subr.mxu0 0.0
    %5531 = vmatpush1.msra.mxu0 0.0
    %5532 = vmatprep.subr.mxu0 0.0
    %5533 = vmatpush1.msra.mxu0 0.0
    %5534 = vmatprep.subr.mxu0 0.0
    %5535 = vmatpush1.msra.mxu0 0.0
    %5536 = vmatprep.subr.mxu0 0.0
    %5537 = vmatpush1.msra.mxu0 0.0
    %5538 = vmatprep.subr.mxu0 0.0
    %5539 = vmatpush1.msra.mxu0 0.0
    %5540 = vmatprep.mubr.f32.mxu0 0.0
    %5541 = vmatmul.mubr.f32.gmra.mrb[0].mxu0 %v4771
    %v5542 = vpop.f32.mrb[0].mxu0
    %v5543 = vadd.f32 %v5472, %v5542
    %v5544 = vpop.f32.mrb[0].mxu0
    %v5545 = vadd.f32 %v5474, %v5544
    %5546 = vdwg.mxu0
    %v5547 = vxor.u32 %v5401, 2147483648
    %v5548 = vmul.f32 %v5547, 1.442695
    %v5549 = vpow.pop %v5548
    %v5550 = vadd.f32 %v5549, 1.0
    %v5551 = vrcp.pop %v5550
    %v5552 = vmul.f32 1.0, %v5551
    %v5553 = vxor.u32 %v5403, 2147483648
    %v5554 = vmul.f32 %v5553, 1.442695
    %v5555 = vpow.pop %v5554
    %v5556 = vadd.f32 %v5555, 1.0
    %v5557 = vrcp.pop %v5556
    %v5558 = vmul.f32 1.0, %v5557
    %v5559 = vtanh.pop %v5543
    %v5560 = vxor.u32 %v5545, 2147483648
    %v5561 = vmul.f32 %v5560, 1.442695
    %v5562 = vpow.pop %v5561
    %v5563 = vadd.f32 %v5562, 1.0
    %v5564 = vrcp.pop %v5563
    %v5565 = vmul.f32 1.0, %v5564
    %v5566 = vmul.f32 %v5558, %v4769
    %v5567 = vmul.f32 %v5552, %v5559
    %v5568 = vadd.f32 %v5566, %v5567
    %v5569 = vtanh.pop %v5568
    %v5570 = vmul.f32 %v5565, %v5569
    %v5571 = vld [vmem:[%s8] sm:$0xff]
    %v5572 = vld [vmem:[%s8 + $0x8] sm:$0xff]
    %v5573 = vld [vmem:[%s8 + $0x10] sm:$0xff]
    %v5574 = vld [vmem:[%s8 + $0x18] sm:$0xff]
    %v5575 = vld [vmem:[%s8 + $0x20] sm:$0xff]
    %v5576 = vld [vmem:[%s8 + $0x28] sm:$0xff]
    %v5577 = vld [vmem:[%s8 + $0x30] sm:$0xff]
    %v5578 = vld [vmem:[%s8 + $0x38] sm:$0xff]
    %v5579 = vld [vmem:[%s8 + $0x40] sm:$0xff]
    %v5580 = vld [vmem:[%s8 + $0x48] sm:$0xff]
    %v5581 = vld [vmem:[%s8 + $0x50] sm:$0xff]
    %v5582 = vld [vmem:[%s8 + $0x58] sm:$0xff]
    %v5583 = vld [vmem:[%s8 + $0x60] sm:$0xff]
    %v5584 = vld [vmem:[%s8 + $0x68] sm:$0xff]
    %v5585 = vld [vmem:[%s8 + $0x70] sm:$0xff]
    %v5586 = vld [vmem:[%s8 + $0x78] sm:$0xff]
    %5587 = vmatprep.subr.mxu0 0.0
    %5588 = vmatpush1.msra.mxu0 %v5571
    %5589 = vmatprep.subr.mxu0 0.0
    %5590 = vmatpush1.msra.mxu0 %v5572
    %5591 = vmatprep.subr.mxu0 0.0
    %5592 = vmatpush1.msra.mxu0 %v5573
    %5593 = vmatprep.subr.mxu0 0.0
    %5594 = vmatpush1.msra.mxu0 %v5574
    %5595 = vmatprep.subr.mxu0 0.0
    %5596 = vmatpush1.msra.mxu0 %v5575
    %5597 = vmatprep.subr.mxu0 0.0
    %5598 = vmatpush1.msra.mxu0 %v5576
    %5599 = vmatprep.subr.mxu0 0.0
    %5600 = vmatpush1.msra.mxu0 %v5577
    %5601 = vmatprep.subr.mxu0 0.0
    %5602 = vmatpush1.msra.mxu0 %v5578
    %5603 = vmatprep.subr.mxu0 0.0
    %5604 = vmatpush1.msra.mxu0 %v5579
    %5605 = vmatprep.subr.mxu0 0.0
    %5606 = vmatpush1.msra.mxu0 %v5580
    %5607 = vmatprep.subr.mxu0 0.0
    %5608 = vmatpush1.msra.mxu0 %v5581
    %5609 = vmatprep.subr.mxu0 0.0
    %5610 = vmatpush1.msra.mxu0 %v5582
    %5611 = vmatprep.subr.mxu0 0.0
    %5612 = vmatpush1.msra.mxu0 %v5583
    %5613 = vmatprep.subr.mxu0 0.0
    %5614 = vmatpush1.msra.mxu0 %v5584
    %5615 = vmatprep.subr.mxu0 0.0
    %5616 = vmatpush1.msra.mxu0 %v5585
    %5617 = vmatprep.subr.mxu0 0.0
    %5618 = vmatpush1.msra.mxu0 %v5586
    %5619 = vmatprep.subr.mxu0 0.0
    %5620 = vmatpush1.msra.mxu0 0.0
    %5621 = vmatprep.subr.mxu0 0.0
    %5622 = vmatpush1.msra.mxu0 0.0
    %5623 = vmatprep.subr.mxu0 0.0
    %5624 = vmatpush1.msra.mxu0 0.0
    %5625 = vmatprep.subr.mxu0 0.0
    %5626 = vmatpush1.msra.mxu0 0.0
    %5627 = vmatprep.subr.mxu0 0.0
    %5628 = vmatpush1.msra.mxu0 0.0
    %5629 = vmatprep.subr.mxu0 0.0
    %5630 = vmatpush1.msra.mxu0 0.0
    %5631 = vmatprep.subr.mxu0 0.0
    %5632 = vmatpush1.msra.mxu0 0.0
    %5633 = vmatprep.subr.mxu0 0.0
    %5634 = vmatpush1.msra.mxu0 0.0
    %5635 = vmatprep.subr.mxu0 0.0
    %5636 = vmatpush1.msra.mxu0 0.0
    %5637 = vmatprep.subr.mxu0 0.0
    %5638 = vmatpush1.msra.mxu0 0.0
    %5639 = vmatprep.subr.mxu0 0.0
    %5640 = vmatpush1.msra.mxu0 0.0
    %5641 = vmatprep.subr.mxu0 0.0
    %5642 = vmatpush1.msra.mxu0 0.0
    %5643 = vmatprep.subr.mxu0 0.0
    %5644 = vmatpush1.msra.mxu0 0.0
    %5645 = vmatprep.subr.mxu0 0.0
    %5646 = vmatpush1.msra.mxu0 0.0
    %5647 = vmatprep.subr.mxu0 0.0
    %5648 = vmatpush1.msra.mxu0 0.0
    %5649 = vmatprep.subr.mxu0 0.0
    %5650 = vmatpush1.msra.mxu0 0.0
    %5651 = vmatprep.mubr.f32.mxu0 0.0
    %5652 = vmatmul.mubr.f32.gmra.mrb[0].mxu0 %v5570
    %v5653 = vpop.f32.mrb[0].mxu0
    %v5654 = vadd.f32 %v792, %v5653
    %v5655 = vpop.f32.mrb[0].mxu0
    %5656 = vdwg.mxu0
    %s5657 = scalar_lea.vmem %s10, 48
    %5658 = vst [vmem:[%s5657] sm:$0xff] %v5654
    // Predicated region
    $region46: #{_forward_impl.3} parent=1 // pred_check
      _
    $region47: #{_forward_impl.3} parent=1 // pred_check_branch
      %5660 = sbr.rel (0) target = $region49
    $region48: #{_forward_impl.3} parent=1 // pred_region
      _
    $region49: #{_forward_impl.3} parent=1 // pred_fallthru
      _
    // Predicated region
    $region50: #{_forward_impl.3} parent=1 // pred_check
      _
    $region51: #{_forward_impl.3} parent=1 // pred_check_branch
      %5662 = sbr.rel (0) target = $region53
    $region52: #{_forward_impl.3} parent=1 // pred_region
      _
    $region53: #{_forward_impl.3} parent=1 // pred_fallthru
      _
    %5663 = vsyncpa [#allocation3], 1

</llo_original>
